<compile_context>
chip_gen: v5e
topology: v5e:2x2
jax: 0.10.0
libtpu: 0.0.40
codegen_flags: <defaults>
</compile_context>

<pallas_src>
import functools

import jax
import jax.numpy as jnp
from jax.experimental import pallas as pl
from jax.experimental.pallas import tpu as pltpu

# MXU operand dtype (accumulation is always f32).  jnp.float32 = exact escape
# hatch for validation against an f32 reference.
MXU_DTYPE = jnp.bfloat16


def _maybe_mxu_dtype(w):
    """Pre-cast MXU-bound weights once at trace time; tiny-contract weights
    (VPU broadcast-FMA path in the kernel) stay f32."""
    return w.astype(MXU_DTYPE) if w.shape[-1] >= 8 else w.astype(jnp.float32)


# ----------------------------------------------------------------------------
# Fused whole-trunk kernel (single grid step, batch stacked on sublanes)
# ----------------------------------------------------------------------------
def _make_fused_kernel(batch, dil, k_order, kt, ntp):
    tap0 = (kt - 1) // 2
    bc = batch * dil          # stacked (batch, channel) rows of every block output

    def kernel(x_ref, scale_ref, shift_ref, gmat_ref, tmask_ref, *rest):
        o_ref = rest[-1]
        wrefs = rest[:-1]     # 6 packed weight/bias refs per block, 3 blocks

        def mm(w, v):
            """(rows, c) @ (c, ntp); tiny contract dims skip the MXU (VPU FMA)."""
            c = w.shape[-1]
            if c < 8:
                out = w[:, 0:1] * v[0:1, :]
                for ci in range(1, c):
                    out = out + w[:, ci:ci + 1] * v[ci:ci + 1, :]
                return out
            return jnp.dot(w.astype(MXU_DTYPE), v.astype(MXU_DTYPE),
                           preferred_element_type=jnp.float32)

        def temporal_conv(v, w_ref, b_ref):
            """(1, kt) conv with zero temporal padding (roll + boundary masks);
            all kt taps merged into one matmul by stacking rolled copies on the
            contract (sublane) axis."""
            pieces = []
            for k in range(kt):
                d = k - tap0
                vs = v if d == 0 else pltpu.roll(v, (-d) % ntp, 1)
                pieces.append(vs * tmask_ref[k])          # (1, ntp) lane mask
            stacked = jnp.concatenate(pieces, axis=0)     # (kt*rows(v), ntp)
            return mm(w_ref[...], stacked) + b_ref[...]

        def st_block(v, wt1, bt1, wg, bg, wt2, bt2):
            # (1) temporal conv with the residual 1x1 conv stacked part-major.
            y1 = temporal_conv(v, wt1, bt1)               # (2*bc, ntp)
            x1, res = y1[:bc], y1[bc:]

            # (2) Chebyshev graph conv fused with the w_g 1x1 conv:
            #     one wide lane-side matmul for all K-1 graph operators, then
            #     one channel matmul over the stacked [x1, z_1, ..., z_{K-1}].
            x1_bf = x1.astype(MXU_DTYPE)
            zcat = jnp.dot(x1_bf, gmat_ref[...],
                           preferred_element_type=jnp.float32)   # (bc, (K-1)*ntp)
            pieces = [x1_bf] + [
                zcat[:, k * ntp:(k + 1) * ntp].astype(MXU_DTYPE)
                for k in range(k_order - 1)]
            x2 = mm(wg[...], jnp.concatenate(pieces, axis=0)) + bg[...]
            x2 = jnp.where(x2 > 0, x2, 0.01 * x2)         # leaky_relu

            # (3) gated temporal conv -> (filt | gate), GLU epilogue fused.
            y3 = temporal_conv(x2, wt2, bt2)              # (2*bc, ntp)
            filt, gate = y3[:bc], y3[bc:]
            return (filt + res) * jax.nn.sigmoid(gate)

        # Folded BatchNorm (per-(batch, channel)-row scale/shift).
        h = x_ref[...] * scale_ref[...] + shift_ref[...]
        for blk in range(3):
            h = st_block(h, *wrefs[6 * blk:6 * (blk + 1)])
        o_ref[...] = h

    return kernel


# ----------------------------------------------------------------------------
# Trace-time preparation (plain JAX, tiny)
# ----------------------------------------------------------------------------
def _build_graph_ops(adj, k_order, n, t, ntp):
    """Lane-side graph operators P_k = T_k(adj)^T kron I_T for k=1..K-1,
    zero-padded to ntp and concatenated along the output-lane axis."""
    adj = adj.astype(jnp.float32)
    terms = [jnp.eye(n, dtype=jnp.float32)]
    if k_order > 1:
        terms.append(adj)
    for _ in range(2, k_order):
        terms.append(2.0 * adj @ terms[-1] - terms[-2])
    eye_t = jnp.eye(t, dtype=jnp.float32)
    ops = []
    for k in range(1, k_order):
        p = jnp.kron(terms[k].T, eye_t)                       # (n*t, n*t)
        p = jnp.pad(p, ((0, ntp - n * t), (0, ntp - n * t)))  # zero pad: no lane leakage
        ops.append(p)
    return jnp.concatenate(ops, axis=1).astype(MXU_DTYPE)     # (ntp, (K-1)*ntp)


def _build_temporal_masks(kt, n, t, ntp):
    """Validity mask per tap offset d = k - (kt-1)//2 (emulates zero padding)."""
    tap0 = (kt - 1) // 2
    m = jnp.arange(ntp)
    tt = m % t
    valid = m < n * t
    rows = []
    for k in range(kt):
        d = k - tap0
        rows.append(valid & (tt + d >= 0) & (tt + d <= t - 1))
    return jnp.stack(rows, axis=0).astype(jnp.float32).reshape(kt, 1, ntp)


def _prepare_block(blk, c_in, c_out, k_order, kt, batch):
    """Re-pack PyTorch-style weights into fused layouts: block-diagonal over
    batch, taps / Chebyshev orders stacked along the contract axis, and
    (filter|residual) resp. (filter|gate) halves stacked part-major along the
    output axis.  Orderings: rows = (part, batch, channel),
    cols = (tap_or_k, batch, channel)."""
    tap0 = (kt - 1) // 2
    eye_b = jnp.eye(batch, dtype=jnp.float32)
    bd = lambda w: jnp.kron(eye_b, w)                         # batch block-diag

    w_t1 = blk["w_t1"].reshape(c_out, c_in, kt)               # flat col = ci*kt + k
    zeros_res = jnp.zeros_like(blk["w_res"])
    wt1 = jnp.concatenate(
        [jnp.concatenate([bd(w_t1[:, :, k]) for k in range(kt)], axis=1),
         jnp.concatenate([bd(blk["w_res"] if k == tap0 else zeros_res)
                          for k in range(kt)], axis=1)], axis=0)
    bt1 = jnp.concatenate([jnp.tile(blk["b_t1"], (batch, 1)),
                           jnp.tile(blk["b_res"], (batch, 1))], axis=0)

    w_g = blk["w_g"].reshape(c_out, c_out, k_order)           # flat col = c*K + k
    wg = jnp.concatenate([bd(w_g[:, :, k]) for k in range(k_order)], axis=1)
    bg = jnp.tile(blk["b_g"], (batch, 1))

    w_t2 = blk["w_t2"].reshape(2 * c_out, c_out, kt)
    wt2 = jnp.concatenate(
        [jnp.concatenate([bd(w_t2[:c_out, :, k]) for k in range(kt)], axis=1),
         jnp.concatenate([bd(w_t2[c_out:, :, k]) for k in range(kt)], axis=1)],
        axis=0)
    bt2 = jnp.concatenate([jnp.tile(blk["b_t2"][:c_out], (batch, 1)),
                           jnp.tile(blk["b_t2"][c_out:], (batch, 1))], axis=0)

    return (_maybe_mxu_dtype(wt1), bt1.astype(jnp.float32),
            _maybe_mxu_dtype(wg), bg.astype(jnp.float32),
            _maybe_mxu_dtype(wt2), bt2.astype(jnp.float32))


# ----------------------------------------------------------------------------
# Model forward
# ----------------------------------------------------------------------------
def gated_stgcn_forward(params, x, adj, *, k_order=3, kt=3, dil=32, out_dim=12):
    b, c_in, n, t = x.shape
    nt = n * t
    ntp = max(128, ((nt + 127) // 128) * 128)

    # BatchNorm2d(in_dim, affine=False), train-mode batch statistics, folded
    # into a per-row scale/shift applied inside the kernel (exact: temporal
    # zero-padding is emulated by masks applied after normalization).
    mean = x.mean(axis=(0, 2, 3))
    var = x.var(axis=(0, 2, 3))
    inv_std = 1.0 / jnp.sqrt(var + 1e-5)
    scale = jnp.tile(inv_std.reshape(c_in, 1), (b, 1)).astype(jnp.float32)
    shift = jnp.tile((-mean * inv_std).reshape(c_in, 1), (b, 1)).astype(jnp.float32)

    gmat = _build_graph_ops(adj, k_order, n, t, ntp)
    tmask = _build_temporal_masks(kt, n, t, ntp)

    # Batch-stacked, lane-dense activations: rows = (batch, channel), lane =
    # n*T + t padded to a multiple of 128; this layout persists through all
    # three blocks inside the single fused kernel.
    xq = jnp.pad(x.reshape(b, c_in, nt).astype(jnp.float32),
                 ((0, 0), (0, 0), (0, ntp - nt))).reshape(b * c_in, ntp)

    p1 = _prepare_block(params["block1"], c_in, dil, k_order, kt, b)
    p2 = _prepare_block(params["block2"], dil, dil, k_order, kt, b)
    p3 = _prepare_block(params["block3"], dil, dil, k_order, kt, b)

    operands = (xq, scale, shift, gmat, tmask) + p1 + p2 + p3

    def _full(shape):
        zeros = (0,) * len(shape)
        return pl.BlockSpec(shape, lambda i: zeros)

    kernel = _make_fused_kernel(b, dil, k_order, kt, ntp)
    h = pl.pallas_call(
        kernel,
        out_shape=jax.ShapeDtypeStruct((b * dil, ntp), jnp.float32),
        grid=(1,),
        in_specs=[_full(op.shape) for op in operands],
        out_specs=pl.BlockSpec((b * dil, ntp), lambda i: (0, 0)),
        compiler_params=pltpu.CompilerParams(
            dimension_semantics=("arbitrary",)),
    )(*operands)

    # conv1: Conv2d(dil, 12, kernel_size=(1, tem_size)) collapses T -> 1.
    # Output is only (B, 12, N): too small to amortize the in-kernel (n,t)
    # lane->sublane regrouping it would need, so it stays in plain JAX.
    hv = h.reshape(b, dil, ntp)[:, :, :nt].reshape(b, dil, n, t)
    w_out = params["w_out"].reshape(out_dim, dil, t)          # flat col = ci*T + t
    y = jnp.einsum("oct,bcnt->bon", w_out, hv) + params["b_out"].reshape(1, out_dim, 1)
    return y[..., None], adj, adj


# ----------------------------------------------------------------------------
# Deterministic parameter construction (PyTorch-like flat layouts)
# ----------------------------------------------------------------------------
def make_block_params(key, c_in, c_out, k_order, kt, scale=0.1):
    ks = jax.random.split(key, 8)
    return {
        "w_res": scale * jax.random.normal(ks[0], (c_out, c_in), jnp.float32),
        "b_res": scale * jax.random.normal(ks[1], (c_out, 1), jnp.float32),
        "w_t1": scale * jax.random.normal(ks[2], (c_out, c_in * kt), jnp.float32),
        "b_t1": scale * jax.random.normal(ks[3], (c_out, 1), jnp.float32),
        "w_g": scale * jax.random.normal(ks[4], (c_out, c_out * k_order), jnp.float32),
        "b_g": scale * jax.random.normal(ks[5], (c_out, 1), jnp.float32),
        "w_t2": scale * jax.random.normal(ks[6], (2 * c_out, c_out * kt), jnp.float32),
        "b_t2": scale * jax.random.normal(ks[7], (2 * c_out, 1), jnp.float32),
    }


def make_params(key, in_dim, dil, tem_size, out_dim, k_order, kt, scale=0.1):
    k1, k2, k3, k4, k5 = jax.random.split(key, 5)
    return {
        "block1": make_block_params(k1, in_dim, dil, k_order, kt, scale),
        "block2": make_block_params(k2, dil, dil, k_order, kt, scale),
        "block3": make_block_params(k3, dil, dil, k_order, kt, scale),
        "w_out": scale * jax.random.normal(k4, (out_dim, dil * tem_size), jnp.float32),
        "b_out": scale * jax.random.normal(k5, (out_dim, 1), jnp.float32),
    }


if __name__ == "__main__":
    # Module defaults: in_dim=1, length (tem_size)=12, dilation_channels=32,
    # K=3, Kt=3, out_dim=12; small batch / node count.
    B, IN_DIM, NUM_NODES, TEM = 2, 1, 16, 12
    DIL, OUT_DIM, K_ORDER, KT = 32, 12, 3, 3

    root = jax.random.PRNGKey(0)
    k_x, k_adj, k_p = jax.random.split(root, 3)

    x_in = jax.random.normal(k_x, (B, IN_DIM, NUM_NODES, TEM), jnp.float32)

    # synthetic support: symmetric, row-normalized adjacency
    a = jax.random.uniform(k_adj, (NUM_NODES, NUM_NODES), jnp.float32)
    a = 0.5 * (a + a.T)
    adj = a / jnp.sum(a, axis=-1, keepdims=True)

    params = make_params(k_p, IN_DIM, DIL, TEM, OUT_DIM, K_ORDER, KT)

    fwd = jax.jit(functools.partial(
        gated_stgcn_forward, k_order=K_ORDER, kt=KT, dil=DIL, out_dim=OUT_DIM))

    out, a1, a2 = fwd(params, x_in, adj)
    out = jax.block_until_ready(out)

    assert out.shape == (B, OUT_DIM, NUM_NODES, 1), out.shape
    assert a1.shape == (NUM_NODES, NUM_NODES)
    assert bool(jnp.all(jnp.isfinite(out)))
    print("KERNEL_OK")
</pallas_src>

<mosaic_0001>
module attributes {stable_mosaic.version = 11 : i64} {
  func.func @kernel(%arg0: i32, %arg1: memref<2x256xf32, #tpu.memory_space<vmem>>, %arg2: memref<2x1xf32, #tpu.memory_space<vmem>>, %arg3: memref<2x1xf32, #tpu.memory_space<vmem>>, %arg4: memref<256x512xbf16, #tpu.memory_space<vmem>>, %arg5: memref<3x1x256xf32, #tpu.memory_space<vmem>>, %arg6: memref<128x6xf32, #tpu.memory_space<vmem>>, %arg7: memref<128x1xf32, #tpu.memory_space<vmem>>, %arg8: memref<64x192xbf16, #tpu.memory_space<vmem>>, %arg9: memref<64x1xf32, #tpu.memory_space<vmem>>, %arg10: memref<128x192xbf16, #tpu.memory_space<vmem>>, %arg11: memref<128x1xf32, #tpu.memory_space<vmem>>, %arg12: memref<128x192xbf16, #tpu.memory_space<vmem>>, %arg13: memref<128x1xf32, #tpu.memory_space<vmem>>, %arg14: memref<64x192xbf16, #tpu.memory_space<vmem>>, %arg15: memref<64x1xf32, #tpu.memory_space<vmem>>, %arg16: memref<128x192xbf16, #tpu.memory_space<vmem>>, %arg17: memref<128x1xf32, #tpu.memory_space<vmem>>, %arg18: memref<128x192xbf16, #tpu.memory_space<vmem>>, %arg19: memref<128x1xf32, #tpu.memory_space<vmem>>, %arg20: memref<64x192xbf16, #tpu.memory_space<vmem>>, %arg21: memref<64x1xf32, #tpu.memory_space<vmem>>, %arg22: memref<128x192xbf16, #tpu.memory_space<vmem>>, %arg23: memref<128x1xf32, #tpu.memory_space<vmem>>, %arg24: memref<64x256xf32, #tpu.memory_space<vmem>>) attributes {dimension_semantics = [#tpu.dimension_semantics<arbitrary>], iteration_bounds = array<i64: 1>, scalar_prefetch = 0 : i64, scratch_operands = 0 : i64, tpu.core_type = #tpu.core_type<tc>, window_params = [{pipeline_mode = #tpu.pipeline_mode<synchronous>, transform_indices = @transform_0, window_bounds = array<i64: 2, 256>}, {pipeline_mode = #tpu.pipeline_mode<synchronous>, transform_indices = @transform_1, window_bounds = array<i64: 2, 1>}, {pipeline_mode = #tpu.pipeline_mode<synchronous>, transform_indices = @transform_2, window_bounds = array<i64: 2, 1>}, {pipeline_mode = #tpu.pipeline_mode<synchronous>, transform_indices = @transform_3, window_bounds = array<i64: 256, 512>}, {pipeline_mode = #tpu.pipeline_mode<synchronous>, transform_indices = @transform_4, window_bounds = array<i64: 3, 1, 256>}, {pipeline_mode = #tpu.pipeline_mode<synchronous>, transform_indices = @transform_5, window_bounds = array<i64: 128, 6>}, {pipeline_mode = #tpu.pipeline_mode<synchronous>, transform_indices = @transform_6, window_bounds = array<i64: 128, 1>}, {pipeline_mode = #tpu.pipeline_mode<synchronous>, transform_indices = @transform_7, window_bounds = array<i64: 64, 192>}, {pipeline_mode = #tpu.pipeline_mode<synchronous>, transform_indices = @transform_8, window_bounds = array<i64: 64, 1>}, {pipeline_mode = #tpu.pipeline_mode<synchronous>, transform_indices = @transform_9, window_bounds = array<i64: 128, 192>}, {pipeline_mode = #tpu.pipeline_mode<synchronous>, transform_indices = @transform_10, window_bounds = array<i64: 128, 1>}, {pipeline_mode = #tpu.pipeline_mode<synchronous>, transform_indices = @transform_11, window_bounds = array<i64: 128, 192>}, {pipeline_mode = #tpu.pipeline_mode<synchronous>, transform_indices = @transform_12, window_bounds = array<i64: 128, 1>}, {pipeline_mode = #tpu.pipeline_mode<synchronous>, transform_indices = @transform_13, window_bounds = array<i64: 64, 192>}, {pipeline_mode = #tpu.pipeline_mode<synchronous>, transform_indices = @transform_14, window_bounds = array<i64: 64, 1>}, {pipeline_mode = #tpu.pipeline_mode<synchronous>, transform_indices = @transform_15, window_bounds = array<i64: 128, 192>}, {pipeline_mode = #tpu.pipeline_mode<synchronous>, transform_indices = @transform_16, window_bounds = array<i64: 128, 1>}, {pipeline_mode = #tpu.pipeline_mode<synchronous>, transform_indices = @transform_17, window_bounds = array<i64: 128, 192>}, {pipeline_mode = #tpu.pipeline_mode<synchronous>, transform_indices = @transform_18, window_bounds = array<i64: 128, 1>}, {pipeline_mode = #tpu.pipeline_mode<synchronous>, transform_indices = @transform_19, window_bounds = array<i64: 64, 192>}, {pipeline_mode = #tpu.pipeline_mode<synchronous>, transform_indices = @transform_20, window_bounds = array<i64: 64, 1>}, {pipeline_mode = #tpu.pipeline_mode<synchronous>, transform_indices = @transform_21, window_bounds = array<i64: 128, 192>}, {pipeline_mode = #tpu.pipeline_mode<synchronous>, transform_indices = @transform_22, window_bounds = array<i64: 128, 1>}, {pipeline_mode = #tpu.pipeline_mode<synchronous>, transform_indices = @transform_23, window_bounds = array<i64: 64, 256>}]} {
    %c0 = arith.constant 0 : index
    %c0_0 = arith.constant 0 : index
    %0 = vector.load %arg1[%c0, %c0_0] : memref<2x256xf32, #tpu.memory_space<vmem>>, vector<2x256xf32>
    %c0_1 = arith.constant 0 : index
    %c0_2 = arith.constant 0 : index
    %1 = vector.load %arg2[%c0_1, %c0_2] : memref<2x1xf32, #tpu.memory_space<vmem>>, vector<2x1xf32>
    %2 = vector.broadcast %1 : vector<2x1xf32> to vector<2x256xf32>
    %3 = arith.mulf %0, %2 : vector<2x256xf32>
    %c0_3 = arith.constant 0 : index
    %c0_4 = arith.constant 0 : index
    %4 = vector.load %arg3[%c0_3, %c0_4] : memref<2x1xf32, #tpu.memory_space<vmem>>, vector<2x1xf32>
    %5 = vector.broadcast %4 : vector<2x1xf32> to vector<2x256xf32>
    %6 = arith.addf %3, %5 : vector<2x256xf32>
    %c1_i32 = arith.constant 1 : i32
    %7 = tpu.dynamic_rotate %6 by %c1_i32 dim 1 : vector<2x256xf32>, i32 -> vector<2x256xf32>
    %c0_5 = arith.constant 0 : index
    %c0_6 = arith.constant 0 : index
    %c0_7 = arith.constant 0 : index
    %8 = vector.load %arg5[%c0_5, %c0_6, %c0_7] : memref<3x1x256xf32, #tpu.memory_space<vmem>>, vector<1x1x256xf32>
    %9 = vector.shape_cast %8 : vector<1x1x256xf32> to vector<1x256xf32>
    %10 = vector.broadcast %9 : vector<1x256xf32> to vector<2x256xf32>
    %11 = arith.mulf %7, %10 : vector<2x256xf32>
    %c1 = arith.constant 1 : index
    %c0_8 = arith.constant 0 : index
    %c0_9 = arith.constant 0 : index
    %12 = vector.load %arg5[%c1, %c0_8, %c0_9] : memref<3x1x256xf32, #tpu.memory_space<vmem>>, vector<1x1x256xf32>
    %13 = vector.shape_cast %12 : vector<1x1x256xf32> to vector<1x256xf32>
    %14 = vector.broadcast %13 : vector<1x256xf32> to vector<2x256xf32>
    %15 = arith.mulf %6, %14 : vector<2x256xf32>
    %c255_i32 = arith.constant 255 : i32
    %16 = tpu.dynamic_rotate %6 by %c255_i32 dim 1 : vector<2x256xf32>, i32 -> vector<2x256xf32>
    %c2 = arith.constant 2 : index
    %c0_10 = arith.constant 0 : index
    %c0_11 = arith.constant 0 : index
    %17 = vector.load %arg5[%c2, %c0_10, %c0_11] : memref<3x1x256xf32, #tpu.memory_space<vmem>>, vector<1x1x256xf32>
    %18 = vector.shape_cast %17 : vector<1x1x256xf32> to vector<1x256xf32>
    %19 = vector.broadcast %18 : vector<1x256xf32> to vector<2x256xf32>
    %20 = arith.mulf %16, %19 : vector<2x256xf32>
    %21 = tpu.concatenate %11, %15, %20 in 0 : vector<2x256xf32>, vector<2x256xf32>, vector<2x256xf32> -> vector<6x256xf32>
    %c0_12 = arith.constant 0 : index
    %c0_13 = arith.constant 0 : index
    %22 = vector.load %arg6[%c0_12, %c0_13] : memref<128x6xf32, #tpu.memory_space<vmem>>, vector<128x6xf32>
    %23 = vector.extract_strided_slice %22 {offsets = [0, 0], sizes = [128, 1], strides = [1, 1]} : vector<128x6xf32> to vector<128x1xf32>
    %24 = vector.extract_strided_slice %21 {offsets = [0, 0], sizes = [1, 256], strides = [1, 1]} : vector<6x256xf32> to vector<1x256xf32>
    %25 = vector.broadcast %23 : vector<128x1xf32> to vector<128x256xf32>
    %26 = vector.broadcast %24 : vector<1x256xf32> to vector<128x256xf32>
    %27 = arith.mulf %25, %26 : vector<128x256xf32>
    %28 = vector.extract_strided_slice %22 {offsets = [0, 1], sizes = [128, 1], strides = [1, 1]} : vector<128x6xf32> to vector<128x1xf32>
    %29 = vector.extract_strided_slice %21 {offsets = [1, 0], sizes = [1, 256], strides = [1, 1]} : vector<6x256xf32> to vector<1x256xf32>
    %30 = vector.broadcast %28 : vector<128x1xf32> to vector<128x256xf32>
    %31 = vector.broadcast %29 : vector<1x256xf32> to vector<128x256xf32>
    %32 = arith.mulf %30, %31 : vector<128x256xf32>
    %33 = arith.addf %27, %32 : vector<128x256xf32>
    %34 = vector.extract_strided_slice %22 {offsets = [0, 2], sizes = [128, 1], strides = [1, 1]} : vector<128x6xf32> to vector<128x1xf32>
    %35 = vector.extract_strided_slice %21 {offsets = [2, 0], sizes = [1, 256], strides = [1, 1]} : vector<6x256xf32> to vector<1x256xf32>
    %36 = vector.broadcast %34 : vector<128x1xf32> to vector<128x256xf32>
    %37 = vector.broadcast %35 : vector<1x256xf32> to vector<128x256xf32>
    %38 = arith.mulf %36, %37 : vector<128x256xf32>
    %39 = arith.addf %33, %38 : vector<128x256xf32>
    %40 = vector.extract_strided_slice %22 {offsets = [0, 3], sizes = [128, 1], strides = [1, 1]} : vector<128x6xf32> to vector<128x1xf32>
    %41 = vector.extract_strided_slice %21 {offsets = [3, 0], sizes = [1, 256], strides = [1, 1]} : vector<6x256xf32> to vector<1x256xf32>
    %42 = vector.broadcast %40 : vector<128x1xf32> to vector<128x256xf32>
    %43 = vector.broadcast %41 : vector<1x256xf32> to vector<128x256xf32>
    %44 = arith.mulf %42, %43 : vector<128x256xf32>
    %45 = arith.addf %39, %44 : vector<128x256xf32>
    %46 = vector.extract_strided_slice %22 {offsets = [0, 4], sizes = [128, 1], strides = [1, 1]} : vector<128x6xf32> to vector<128x1xf32>
    %47 = vector.extract_strided_slice %21 {offsets = [4, 0], sizes = [1, 256], strides = [1, 1]} : vector<6x256xf32> to vector<1x256xf32>
    %48 = vector.broadcast %46 : vector<128x1xf32> to vector<128x256xf32>
    %49 = vector.broadcast %47 : vector<1x256xf32> to vector<128x256xf32>
    %50 = arith.mulf %48, %49 : vector<128x256xf32>
    %51 = arith.addf %45, %50 : vector<128x256xf32>
    %52 = vector.extract_strided_slice %22 {offsets = [0, 5], sizes = [128, 1], strides = [1, 1]} : vector<128x6xf32> to vector<128x1xf32>
    %53 = vector.extract_strided_slice %21 {offsets = [5, 0], sizes = [1, 256], strides = [1, 1]} : vector<6x256xf32> to vector<1x256xf32>
    %54 = vector.broadcast %52 : vector<128x1xf32> to vector<128x256xf32>
    %55 = vector.broadcast %53 : vector<1x256xf32> to vector<128x256xf32>
    %56 = arith.mulf %54, %55 : vector<128x256xf32>
    %57 = arith.addf %51, %56 : vector<128x256xf32>
    %c0_14 = arith.constant 0 : index
    %c0_15 = arith.constant 0 : index
    %58 = vector.load %arg7[%c0_14, %c0_15] : memref<128x1xf32, #tpu.memory_space<vmem>>, vector<128x1xf32>
    %59 = vector.broadcast %58 : vector<128x1xf32> to vector<128x256xf32>
    %60 = arith.addf %57, %59 : vector<128x256xf32>
    %61 = vector.extract_strided_slice %60 {offsets = [0, 0], sizes = [64, 256], strides = [1, 1]} : vector<128x256xf32> to vector<64x256xf32>
    %62 = vector.extract_strided_slice %60 {offsets = [64, 0], sizes = [64, 256], strides = [1, 1]} : vector<128x256xf32> to vector<64x256xf32>
    %63 = arith.truncf %61 : vector<64x256xf32> to vector<64x256xbf16>
    %c0_16 = arith.constant 0 : index
    %c0_17 = arith.constant 0 : index
    %64 = vector.load %arg4[%c0_16, %c0_17] : memref<256x512xbf16, #tpu.memory_space<vmem>>, vector<256x512xbf16>
    %cst = arith.constant dense<0.000000e+00> : vector<64x512xf32>
    %65 = tpu.matmul %63, %64, %cst {dimension_numbers = #tpu.dot_dimension_numbers<[1], [0], [0], [1], [0, 0, 1, 1], [], []>} : vector<64x256xbf16>, vector<256x512xbf16>, vector<64x512xf32> -> vector<64x512xf32>
    %66 = vector.extract_strided_slice %65 {offsets = [0, 0], sizes = [64, 256], strides = [1, 1]} : vector<64x512xf32> to vector<64x256xf32>
    %67 = arith.truncf %66 : vector<64x256xf32> to vector<64x256xbf16>
    %68 = vector.extract_strided_slice %65 {offsets = [0, 256], sizes = [64, 256], strides = [1, 1]} : vector<64x512xf32> to vector<64x256xf32>
    %69 = arith.truncf %68 : vector<64x256xf32> to vector<64x256xbf16>
    %c0_18 = arith.constant 0 : index
    %c0_19 = arith.constant 0 : index
    %70 = vector.load %arg8[%c0_18, %c0_19] : memref<64x192xbf16, #tpu.memory_space<vmem>>, vector<64x192xbf16>
    %71 = tpu.concatenate %63, %67, %69 in 0 : vector<64x256xbf16>, vector<64x256xbf16>, vector<64x256xbf16> -> vector<192x256xbf16>
    %cst_20 = arith.constant dense<0.000000e+00> : vector<64x256xf32>
    %72 = tpu.matmul %70, %71, %cst_20 {dimension_numbers = #tpu.dot_dimension_numbers<[1], [0], [0], [1], [0, 0, 1, 1], [], []>} : vector<64x192xbf16>, vector<192x256xbf16>, vector<64x256xf32> -> vector<64x256xf32>
    %c0_21 = arith.constant 0 : index
    %c0_22 = arith.constant 0 : index
    %73 = vector.load %arg9[%c0_21, %c0_22] : memref<64x1xf32, #tpu.memory_space<vmem>>, vector<64x1xf32>
    %74 = vector.broadcast %73 : vector<64x1xf32> to vector<64x256xf32>
    %75 = arith.addf %72, %74 : vector<64x256xf32>
    %cst_23 = arith.constant 0.000000e+00 : f32
    %76 = vector.broadcast %cst_23 : f32 to vector<64x256xf32>
    %77 = arith.cmpf ogt, %75, %76 : vector<64x256xf32>
    %cst_24 = arith.constant 0.00999999977 : f32
    %78 = vector.broadcast %cst_24 : f32 to vector<64x256xf32>
    %79 = arith.mulf %78, %75 : vector<64x256xf32>
    %80 = arith.select %77, %75, %79 : vector<64x256xi1>, vector<64x256xf32>
    %c1_i32_25 = arith.constant 1 : i32
    %81 = tpu.dynamic_rotate %80 by %c1_i32_25 dim 1 : vector<64x256xf32>, i32 -> vector<64x256xf32>
    %c0_26 = arith.constant 0 : index
    %c0_27 = arith.constant 0 : index
    %c0_28 = arith.constant 0 : index
    %82 = vector.load %arg5[%c0_26, %c0_27, %c0_28] : memref<3x1x256xf32, #tpu.memory_space<vmem>>, vector<1x1x256xf32>
    %83 = vector.shape_cast %82 : vector<1x1x256xf32> to vector<1x256xf32>
    %84 = vector.broadcast %83 : vector<1x256xf32> to vector<64x256xf32>
    %85 = arith.mulf %81, %84 : vector<64x256xf32>
    %c1_29 = arith.constant 1 : index
    %c0_30 = arith.constant 0 : index
    %c0_31 = arith.constant 0 : index
    %86 = vector.load %arg5[%c1_29, %c0_30, %c0_31] : memref<3x1x256xf32, #tpu.memory_space<vmem>>, vector<1x1x256xf32>
    %87 = vector.shape_cast %86 : vector<1x1x256xf32> to vector<1x256xf32>
    %88 = vector.broadcast %87 : vector<1x256xf32> to vector<64x256xf32>
    %89 = arith.mulf %80, %88 : vector<64x256xf32>
    %c255_i32_32 = arith.constant 255 : i32
    %90 = tpu.dynamic_rotate %80 by %c255_i32_32 dim 1 : vector<64x256xf32>, i32 -> vector<64x256xf32>
    %c2_33 = arith.constant 2 : index
    %c0_34 = arith.constant 0 : index
    %c0_35 = arith.constant 0 : index
    %91 = vector.load %arg5[%c2_33, %c0_34, %c0_35] : memref<3x1x256xf32, #tpu.memory_space<vmem>>, vector<1x1x256xf32>
    %92 = vector.shape_cast %91 : vector<1x1x256xf32> to vector<1x256xf32>
    %93 = vector.broadcast %92 : vector<1x256xf32> to vector<64x256xf32>
    %94 = arith.mulf %90, %93 : vector<64x256xf32>
    %95 = tpu.concatenate %85, %89, %94 in 0 : vector<64x256xf32>, vector<64x256xf32>, vector<64x256xf32> -> vector<192x256xf32>
    %c0_36 = arith.constant 0 : index
    %c0_37 = arith.constant 0 : index
    %96 = vector.load %arg10[%c0_36, %c0_37] : memref<128x192xbf16, #tpu.memory_space<vmem>>, vector<128x192xbf16>
    %97 = arith.truncf %95 : vector<192x256xf32> to vector<192x256xbf16>
    %cst_38 = arith.constant dense<0.000000e+00> : vector<128x256xf32>
    %98 = tpu.matmul %96, %97, %cst_38 {dimension_numbers = #tpu.dot_dimension_numbers<[1], [0], [0], [1], [0, 0, 1, 1], [], []>} : vector<128x192xbf16>, vector<192x256xbf16>, vector<128x256xf32> -> vector<128x256xf32>
    %c0_39 = arith.constant 0 : index
    %c0_40 = arith.constant 0 : index
    %99 = vector.load %arg11[%c0_39, %c0_40] : memref<128x1xf32, #tpu.memory_space<vmem>>, vector<128x1xf32>
    %100 = vector.broadcast %99 : vector<128x1xf32> to vector<128x256xf32>
    %101 = arith.addf %98, %100 : vector<128x256xf32>
    %102 = vector.extract_strided_slice %101 {offsets = [0, 0], sizes = [64, 256], strides = [1, 1]} : vector<128x256xf32> to vector<64x256xf32>
    %103 = vector.extract_strided_slice %101 {offsets = [64, 0], sizes = [64, 256], strides = [1, 1]} : vector<128x256xf32> to vector<64x256xf32>
    %104 = arith.addf %102, %62 : vector<64x256xf32>
    %105 = arith.negf %103 : vector<64x256xf32>
    %106 = math.exp %105 : vector<64x256xf32>
    %cst_41 = arith.constant 1.000000e+00 : f32
    %107 = vector.broadcast %cst_41 : f32 to vector<64x256xf32>
    %108 = arith.addf %107, %106 : vector<64x256xf32>
    %109 = arith.divf %107, %108 : vector<64x256xf32>
    %110 = arith.mulf %104, %109 : vector<64x256xf32>
    %c1_i32_42 = arith.constant 1 : i32
    %111 = tpu.dynamic_rotate %110 by %c1_i32_42 dim 1 : vector<64x256xf32>, i32 -> vector<64x256xf32>
    %c0_43 = arith.constant 0 : index
    %c0_44 = arith.constant 0 : index
    %c0_45 = arith.constant 0 : index
    %112 = vector.load %arg5[%c0_43, %c0_44, %c0_45] : memref<3x1x256xf32, #tpu.memory_space<vmem>>, vector<1x1x256xf32>
    %113 = vector.shape_cast %112 : vector<1x1x256xf32> to vector<1x256xf32>
    %114 = vector.broadcast %113 : vector<1x256xf32> to vector<64x256xf32>
    %115 = arith.mulf %111, %114 : vector<64x256xf32>
    %c1_46 = arith.constant 1 : index
    %c0_47 = arith.constant 0 : index
    %c0_48 = arith.constant 0 : index
    %116 = vector.load %arg5[%c1_46, %c0_47, %c0_48] : memref<3x1x256xf32, #tpu.memory_space<vmem>>, vector<1x1x256xf32>
    %117 = vector.shape_cast %116 : vector<1x1x256xf32> to vector<1x256xf32>
    %118 = vector.broadcast %117 : vector<1x256xf32> to vector<64x256xf32>
    %119 = arith.mulf %110, %118 : vector<64x256xf32>
    %c255_i32_49 = arith.constant 255 : i32
    %120 = tpu.dynamic_rotate %110 by %c255_i32_49 dim 1 : vector<64x256xf32>, i32 -> vector<64x256xf32>
    %c2_50 = arith.constant 2 : index
    %c0_51 = arith.constant 0 : index
    %c0_52 = arith.constant 0 : index
    %121 = vector.load %arg5[%c2_50, %c0_51, %c0_52] : memref<3x1x256xf32, #tpu.memory_space<vmem>>, vector<1x1x256xf32>
    %122 = vector.shape_cast %121 : vector<1x1x256xf32> to vector<1x256xf32>
    %123 = vector.broadcast %122 : vector<1x256xf32> to vector<64x256xf32>
    %124 = arith.mulf %120, %123 : vector<64x256xf32>
    %125 = tpu.concatenate %115, %119, %124 in 0 : vector<64x256xf32>, vector<64x256xf32>, vector<64x256xf32> -> vector<192x256xf32>
    %c0_53 = arith.constant 0 : index
    %c0_54 = arith.constant 0 : index
    %126 = vector.load %arg12[%c0_53, %c0_54] : memref<128x192xbf16, #tpu.memory_space<vmem>>, vector<128x192xbf16>
    %127 = arith.truncf %125 : vector<192x256xf32> to vector<192x256xbf16>
    %cst_55 = arith.constant dense<0.000000e+00> : vector<128x256xf32>
    %128 = tpu.matmul %126, %127, %cst_55 {dimension_numbers = #tpu.dot_dimension_numbers<[1], [0], [0], [1], [0, 0, 1, 1], [], []>} : vector<128x192xbf16>, vector<192x256xbf16>, vector<128x256xf32> -> vector<128x256xf32>
    %c0_56 = arith.constant 0 : index
    %c0_57 = arith.constant 0 : index
    %129 = vector.load %arg13[%c0_56, %c0_57] : memref<128x1xf32, #tpu.memory_space<vmem>>, vector<128x1xf32>
    %130 = vector.broadcast %129 : vector<128x1xf32> to vector<128x256xf32>
    %131 = arith.addf %128, %130 : vector<128x256xf32>
    %132 = vector.extract_strided_slice %131 {offsets = [0, 0], sizes = [64, 256], strides = [1, 1]} : vector<128x256xf32> to vector<64x256xf32>
    %133 = vector.extract_strided_slice %131 {offsets = [64, 0], sizes = [64, 256], strides = [1, 1]} : vector<128x256xf32> to vector<64x256xf32>
    %134 = arith.truncf %132 : vector<64x256xf32> to vector<64x256xbf16>
    %c0_58 = arith.constant 0 : index
    %c0_59 = arith.constant 0 : index
    %135 = vector.load %arg4[%c0_58, %c0_59] : memref<256x512xbf16, #tpu.memory_space<vmem>>, vector<256x512xbf16>
    %cst_60 = arith.constant dense<0.000000e+00> : vector<64x512xf32>
    %136 = tpu.matmul %134, %135, %cst_60 {dimension_numbers = #tpu.dot_dimension_numbers<[1], [0], [0], [1], [0, 0, 1, 1], [], []>} : vector<64x256xbf16>, vector<256x512xbf16>, vector<64x512xf32> -> vector<64x512xf32>
    %137 = vector.extract_strided_slice %136 {offsets = [0, 0], sizes = [64, 256], strides = [1, 1]} : vector<64x512xf32> to vector<64x256xf32>
    %138 = arith.truncf %137 : vector<64x256xf32> to vector<64x256xbf16>
    %139 = vector.extract_strided_slice %136 {offsets = [0, 256], sizes = [64, 256], strides = [1, 1]} : vector<64x512xf32> to vector<64x256xf32>
    %140 = arith.truncf %139 : vector<64x256xf32> to vector<64x256xbf16>
    %c0_61 = arith.constant 0 : index
    %c0_62 = arith.constant 0 : index
    %141 = vector.load %arg14[%c0_61, %c0_62] : memref<64x192xbf16, #tpu.memory_space<vmem>>, vector<64x192xbf16>
    %142 = tpu.concatenate %134, %138, %140 in 0 : vector<64x256xbf16>, vector<64x256xbf16>, vector<64x256xbf16> -> vector<192x256xbf16>
    %cst_63 = arith.constant dense<0.000000e+00> : vector<64x256xf32>
    %143 = tpu.matmul %141, %142, %cst_63 {dimension_numbers = #tpu.dot_dimension_numbers<[1], [0], [0], [1], [0, 0, 1, 1], [], []>} : vector<64x192xbf16>, vector<192x256xbf16>, vector<64x256xf32> -> vector<64x256xf32>
    %c0_64 = arith.constant 0 : index
    %c0_65 = arith.constant 0 : index
    %144 = vector.load %arg15[%c0_64, %c0_65] : memref<64x1xf32, #tpu.memory_space<vmem>>, vector<64x1xf32>
    %145 = vector.broadcast %144 : vector<64x1xf32> to vector<64x256xf32>
    %146 = arith.addf %143, %145 : vector<64x256xf32>
    %cst_66 = arith.constant 0.000000e+00 : f32
    %147 = vector.broadcast %cst_66 : f32 to vector<64x256xf32>
    %148 = arith.cmpf ogt, %146, %147 : vector<64x256xf32>
    %cst_67 = arith.constant 0.00999999977 : f32
    %149 = vector.broadcast %cst_67 : f32 to vector<64x256xf32>
    %150 = arith.mulf %149, %146 : vector<64x256xf32>
    %151 = arith.select %148, %146, %150 : vector<64x256xi1>, vector<64x256xf32>
    %c1_i32_68 = arith.constant 1 : i32
    %152 = tpu.dynamic_rotate %151 by %c1_i32_68 dim 1 : vector<64x256xf32>, i32 -> vector<64x256xf32>
    %c0_69 = arith.constant 0 : index
    %c0_70 = arith.constant 0 : index
    %c0_71 = arith.constant 0 : index
    %153 = vector.load %arg5[%c0_69, %c0_70, %c0_71] : memref<3x1x256xf32, #tpu.memory_space<vmem>>, vector<1x1x256xf32>
    %154 = vector.shape_cast %153 : vector<1x1x256xf32> to vector<1x256xf32>
    %155 = vector.broadcast %154 : vector<1x256xf32> to vector<64x256xf32>
    %156 = arith.mulf %152, %155 : vector<64x256xf32>
    %c1_72 = arith.constant 1 : index
    %c0_73 = arith.constant 0 : index
    %c0_74 = arith.constant 0 : index
    %157 = vector.load %arg5[%c1_72, %c0_73, %c0_74] : memref<3x1x256xf32, #tpu.memory_space<vmem>>, vector<1x1x256xf32>
    %158 = vector.shape_cast %157 : vector<1x1x256xf32> to vector<1x256xf32>
    %159 = vector.broadcast %158 : vector<1x256xf32> to vector<64x256xf32>
    %160 = arith.mulf %151, %159 : vector<64x256xf32>
    %c255_i32_75 = arith.constant 255 : i32
    %161 = tpu.dynamic_rotate %151 by %c255_i32_75 dim 1 : vector<64x256xf32>, i32 -> vector<64x256xf32>
    %c2_76 = arith.constant 2 : index
    %c0_77 = arith.constant 0 : index
    %c0_78 = arith.constant 0 : index
    %162 = vector.load %arg5[%c2_76, %c0_77, %c0_78] : memref<3x1x256xf32, #tpu.memory_space<vmem>>, vector<1x1x256xf32>
    %163 = vector.shape_cast %162 : vector<1x1x256xf32> to vector<1x256xf32>
    %164 = vector.broadcast %163 : vector<1x256xf32> to vector<64x256xf32>
    %165 = arith.mulf %161, %164 : vector<64x256xf32>
    %166 = tpu.concatenate %156, %160, %165 in 0 : vector<64x256xf32>, vector<64x256xf32>, vector<64x256xf32> -> vector<192x256xf32>
    %c0_79 = arith.constant 0 : index
    %c0_80 = arith.constant 0 : index
    %167 = vector.load %arg16[%c0_79, %c0_80] : memref<128x192xbf16, #tpu.memory_space<vmem>>, vector<128x192xbf16>
    %168 = arith.truncf %166 : vector<192x256xf32> to vector<192x256xbf16>
    %cst_81 = arith.constant dense<0.000000e+00> : vector<128x256xf32>
    %169 = tpu.matmul %167, %168, %cst_81 {dimension_numbers = #tpu.dot_dimension_numbers<[1], [0], [0], [1], [0, 0, 1, 1], [], []>} : vector<128x192xbf16>, vector<192x256xbf16>, vector<128x256xf32> -> vector<128x256xf32>
    %c0_82 = arith.constant 0 : index
    %c0_83 = arith.constant 0 : index
    %170 = vector.load %arg17[%c0_82, %c0_83] : memref<128x1xf32, #tpu.memory_space<vmem>>, vector<128x1xf32>
    %171 = vector.broadcast %170 : vector<128x1xf32> to vector<128x256xf32>
    %172 = arith.addf %169, %171 : vector<128x256xf32>
    %173 = vector.extract_strided_slice %172 {offsets = [0, 0], sizes = [64, 256], strides = [1, 1]} : vector<128x256xf32> to vector<64x256xf32>
    %174 = vector.extract_strided_slice %172 {offsets = [64, 0], sizes = [64, 256], strides = [1, 1]} : vector<128x256xf32> to vector<64x256xf32>
    %175 = arith.addf %173, %133 : vector<64x256xf32>
    %176 = arith.negf %174 : vector<64x256xf32>
    %177 = math.exp %176 : vector<64x256xf32>
    %cst_84 = arith.constant 1.000000e+00 : f32
    %178 = vector.broadcast %cst_84 : f32 to vector<64x256xf32>
    %179 = arith.addf %178, %177 : vector<64x256xf32>
    %180 = arith.divf %178, %179 : vector<64x256xf32>
    %181 = arith.mulf %175, %180 : vector<64x256xf32>
    %c1_i32_85 = arith.constant 1 : i32
    %182 = tpu.dynamic_rotate %181 by %c1_i32_85 dim 1 : vector<64x256xf32>, i32 -> vector<64x256xf32>
    %c0_86 = arith.constant 0 : index
    %c0_87 = arith.constant 0 : index
    %c0_88 = arith.constant 0 : index
    %183 = vector.load %arg5[%c0_86, %c0_87, %c0_88] : memref<3x1x256xf32, #tpu.memory_space<vmem>>, vector<1x1x256xf32>
    %184 = vector.shape_cast %183 : vector<1x1x256xf32> to vector<1x256xf32>
    %185 = vector.broadcast %184 : vector<1x256xf32> to vector<64x256xf32>
    %186 = arith.mulf %182, %185 : vector<64x256xf32>
    %c1_89 = arith.constant 1 : index
    %c0_90 = arith.constant 0 : index
    %c0_91 = arith.constant 0 : index
    %187 = vector.load %arg5[%c1_89, %c0_90, %c0_91] : memref<3x1x256xf32, #tpu.memory_space<vmem>>, vector<1x1x256xf32>
    %188 = vector.shape_cast %187 : vector<1x1x256xf32> to vector<1x256xf32>
    %189 = vector.broadcast %188 : vector<1x256xf32> to vector<64x256xf32>
    %190 = arith.mulf %181, %189 : vector<64x256xf32>
    %c255_i32_92 = arith.constant 255 : i32
    %191 = tpu.dynamic_rotate %181 by %c255_i32_92 dim 1 : vector<64x256xf32>, i32 -> vector<64x256xf32>
    %c2_93 = arith.constant 2 : index
    %c0_94 = arith.constant 0 : index
    %c0_95 = arith.constant 0 : index
    %192 = vector.load %arg5[%c2_93, %c0_94, %c0_95] : memref<3x1x256xf32, #tpu.memory_space<vmem>>, vector<1x1x256xf32>
    %193 = vector.shape_cast %192 : vector<1x1x256xf32> to vector<1x256xf32>
    %194 = vector.broadcast %193 : vector<1x256xf32> to vector<64x256xf32>
    %195 = arith.mulf %191, %194 : vector<64x256xf32>
    %196 = tpu.concatenate %186, %190, %195 in 0 : vector<64x256xf32>, vector<64x256xf32>, vector<64x256xf32> -> vector<192x256xf32>
    %c0_96 = arith.constant 0 : index
    %c0_97 = arith.constant 0 : index
    %197 = vector.load %arg18[%c0_96, %c0_97] : memref<128x192xbf16, #tpu.memory_space<vmem>>, vector<128x192xbf16>
    %198 = arith.truncf %196 : vector<192x256xf32> to vector<192x256xbf16>
    %cst_98 = arith.constant dense<0.000000e+00> : vector<128x256xf32>
    %199 = tpu.matmul %197, %198, %cst_98 {dimension_numbers = #tpu.dot_dimension_numbers<[1], [0], [0], [1], [0, 0, 1, 1], [], []>} : vector<128x192xbf16>, vector<192x256xbf16>, vector<128x256xf32> -> vector<128x256xf32>
    %c0_99 = arith.constant 0 : index
    %c0_100 = arith.constant 0 : index
    %200 = vector.load %arg19[%c0_99, %c0_100] : memref<128x1xf32, #tpu.memory_space<vmem>>, vector<128x1xf32>
    %201 = vector.broadcast %200 : vector<128x1xf32> to vector<128x256xf32>
    %202 = arith.addf %199, %201 : vector<128x256xf32>
    %203 = vector.extract_strided_slice %202 {offsets = [0, 0], sizes = [64, 256], strides = [1, 1]} : vector<128x256xf32> to vector<64x256xf32>
    %204 = vector.extract_strided_slice %202 {offsets = [64, 0], sizes = [64, 256], strides = [1, 1]} : vector<128x256xf32> to vector<64x256xf32>
    %205 = arith.truncf %203 : vector<64x256xf32> to vector<64x256xbf16>
    %c0_101 = arith.constant 0 : index
    %c0_102 = arith.constant 0 : index
    %206 = vector.load %arg4[%c0_101, %c0_102] : memref<256x512xbf16, #tpu.memory_space<vmem>>, vector<256x512xbf16>
    %cst_103 = arith.constant dense<0.000000e+00> : vector<64x512xf32>
    %207 = tpu.matmul %205, %206, %cst_103 {dimension_numbers = #tpu.dot_dimension_numbers<[1], [0], [0], [1], [0, 0, 1, 1], [], []>} : vector<64x256xbf16>, vector<256x512xbf16>, vector<64x512xf32> -> vector<64x512xf32>
    %208 = vector.extract_strided_slice %207 {offsets = [0, 0], sizes = [64, 256], strides = [1, 1]} : vector<64x512xf32> to vector<64x256xf32>
    %209 = arith.truncf %208 : vector<64x256xf32> to vector<64x256xbf16>
    %210 = vector.extract_strided_slice %207 {offsets = [0, 256], sizes = [64, 256], strides = [1, 1]} : vector<64x512xf32> to vector<64x256xf32>
    %211 = arith.truncf %210 : vector<64x256xf32> to vector<64x256xbf16>
    %c0_104 = arith.constant 0 : index
    %c0_105 = arith.constant 0 : index
    %212 = vector.load %arg20[%c0_104, %c0_105] : memref<64x192xbf16, #tpu.memory_space<vmem>>, vector<64x192xbf16>
    %213 = tpu.concatenate %205, %209, %211 in 0 : vector<64x256xbf16>, vector<64x256xbf16>, vector<64x256xbf16> -> vector<192x256xbf16>
    %cst_106 = arith.constant dense<0.000000e+00> : vector<64x256xf32>
    %214 = tpu.matmul %212, %213, %cst_106 {dimension_numbers = #tpu.dot_dimension_numbers<[1], [0], [0], [1], [0, 0, 1, 1], [], []>} : vector<64x192xbf16>, vector<192x256xbf16>, vector<64x256xf32> -> vector<64x256xf32>
    %c0_107 = arith.constant 0 : index
    %c0_108 = arith.constant 0 : index
    %215 = vector.load %arg21[%c0_107, %c0_108] : memref<64x1xf32, #tpu.memory_space<vmem>>, vector<64x1xf32>
    %216 = vector.broadcast %215 : vector<64x1xf32> to vector<64x256xf32>
    %217 = arith.addf %214, %216 : vector<64x256xf32>
    %cst_109 = arith.constant 0.000000e+00 : f32
    %218 = vector.broadcast %cst_109 : f32 to vector<64x256xf32>
    %219 = arith.cmpf ogt, %217, %218 : vector<64x256xf32>
    %cst_110 = arith.constant 0.00999999977 : f32
    %220 = vector.broadcast %cst_110 : f32 to vector<64x256xf32>
    %221 = arith.mulf %220, %217 : vector<64x256xf32>
    %222 = arith.select %219, %217, %221 : vector<64x256xi1>, vector<64x256xf32>
    %c1_i32_111 = arith.constant 1 : i32
    %223 = tpu.dynamic_rotate %222 by %c1_i32_111 dim 1 : vector<64x256xf32>, i32 -> vector<64x256xf32>
    %c0_112 = arith.constant 0 : index
    %c0_113 = arith.constant 0 : index
    %c0_114 = arith.constant 0 : index
    %224 = vector.load %arg5[%c0_112, %c0_113, %c0_114] : memref<3x1x256xf32, #tpu.memory_space<vmem>>, vector<1x1x256xf32>
    %225 = vector.shape_cast %224 : vector<1x1x256xf32> to vector<1x256xf32>
    %226 = vector.broadcast %225 : vector<1x256xf32> to vector<64x256xf32>
    %227 = arith.mulf %223, %226 : vector<64x256xf32>
    %c1_115 = arith.constant 1 : index
    %c0_116 = arith.constant 0 : index
    %c0_117 = arith.constant 0 : index
    %228 = vector.load %arg5[%c1_115, %c0_116, %c0_117] : memref<3x1x256xf32, #tpu.memory_space<vmem>>, vector<1x1x256xf32>
    %229 = vector.shape_cast %228 : vector<1x1x256xf32> to vector<1x256xf32>
    %230 = vector.broadcast %229 : vector<1x256xf32> to vector<64x256xf32>
    %231 = arith.mulf %222, %230 : vector<64x256xf32>
    %c255_i32_118 = arith.constant 255 : i32
    %232 = tpu.dynamic_rotate %222 by %c255_i32_118 dim 1 : vector<64x256xf32>, i32 -> vector<64x256xf32>
    %c2_119 = arith.constant 2 : index
    %c0_120 = arith.constant 0 : index
    %c0_121 = arith.constant 0 : index
    %233 = vector.load %arg5[%c2_119, %c0_120, %c0_121] : memref<3x1x256xf32, #tpu.memory_space<vmem>>, vector<1x1x256xf32>
    %234 = vector.shape_cast %233 : vector<1x1x256xf32> to vector<1x256xf32>
    %235 = vector.broadcast %234 : vector<1x256xf32> to vector<64x256xf32>
    %236 = arith.mulf %232, %235 : vector<64x256xf32>
    %237 = tpu.concatenate %227, %231, %236 in 0 : vector<64x256xf32>, vector<64x256xf32>, vector<64x256xf32> -> vector<192x256xf32>
    %c0_122 = arith.constant 0 : index
    %c0_123 = arith.constant 0 : index
    %238 = vector.load %arg22[%c0_122, %c0_123] : memref<128x192xbf16, #tpu.memory_space<vmem>>, vector<128x192xbf16>
    %239 = arith.truncf %237 : vector<192x256xf32> to vector<192x256xbf16>
    %cst_124 = arith.constant dense<0.000000e+00> : vector<128x256xf32>
    %240 = tpu.matmul %238, %239, %cst_124 {dimension_numbers = #tpu.dot_dimension_numbers<[1], [0], [0], [1], [0, 0, 1, 1], [], []>} : vector<128x192xbf16>, vector<192x256xbf16>, vector<128x256xf32> -> vector<128x256xf32>
    %c0_125 = arith.constant 0 : index
    %c0_126 = arith.constant 0 : index
    %241 = vector.load %arg23[%c0_125, %c0_126] : memref<128x1xf32, #tpu.memory_space<vmem>>, vector<128x1xf32>
    %242 = vector.broadcast %241 : vector<128x1xf32> to vector<128x256xf32>
    %243 = arith.addf %240, %242 : vector<128x256xf32>
    %244 = vector.extract_strided_slice %243 {offsets = [0, 0], sizes = [64, 256], strides = [1, 1]} : vector<128x256xf32> to vector<64x256xf32>
    %245 = vector.extract_strided_slice %243 {offsets = [64, 0], sizes = [64, 256], strides = [1, 1]} : vector<128x256xf32> to vector<64x256xf32>
    %246 = arith.addf %244, %204 : vector<64x256xf32>
    %247 = arith.negf %245 : vector<64x256xf32>
    %248 = math.exp %247 : vector<64x256xf32>
    %cst_127 = arith.constant 1.000000e+00 : f32
    %249 = vector.broadcast %cst_127 : f32 to vector<64x256xf32>
    %250 = arith.addf %249, %248 : vector<64x256xf32>
    %251 = arith.divf %249, %250 : vector<64x256xf32>
    %252 = arith.mulf %246, %251 : vector<64x256xf32>
    %c0_128 = arith.constant 0 : index
    %c0_129 = arith.constant 0 : index
    %253 = vector.load %arg24[%c0_128, %c0_129] : memref<64x256xf32, #tpu.memory_space<vmem>>, vector<64x256xf32>
    tpu.vector_store %arg24[%c0_128, %c0_129], %252 {strides = array<i32>} : memref<64x256xf32, #tpu.memory_space<vmem>>, vector<64x256xf32>,
    return
  }
  func.func @transform_0(%arg0: i32) -> (i32, i32) {
    %c0_i32 = arith.constant 0 : i32
    %c0_i32_0 = arith.constant 0 : i32
    %c0_i32_1 = arith.constant 0 : i32
    return %c0_i32, %c0_i32_0 : i32, i32
  }
  func.func @transform_1(%arg0: i32) -> (i32, i32) {
    %c0_i32 = arith.constant 0 : i32
    %c0_i32_0 = arith.constant 0 : i32
    %c0_i32_1 = arith.constant 0 : i32
    return %c0_i32, %c0_i32_0 : i32, i32
  }
  func.func @transform_2(%arg0: i32) -> (i32, i32) {
    %c0_i32 = arith.constant 0 : i32
    %c0_i32_0 = arith.constant 0 : i32
    %c0_i32_1 = arith.constant 0 : i32
    return %c0_i32, %c0_i32_0 : i32, i32
  }
  func.func @transform_3(%arg0: i32) -> (i32, i32) {
    %c0_i32 = arith.constant 0 : i32
    %c0_i32_0 = arith.constant 0 : i32
    %c0_i32_1 = arith.constant 0 : i32
    return %c0_i32, %c0_i32_0 : i32, i32
  }
  func.func @transform_4(%arg0: i32) -> (i32, i32, i32) {
    %c0_i32 = arith.constant 0 : i32
    %c0_i32_0 = arith.constant 0 : i32
    %c0_i32_1 = arith.constant 0 : i32
    %c0_i32_2 = arith.constant 0 : i32
    return %c0_i32, %c0_i32_0, %c0_i32_1 : i32, i32, i32
  }
  func.func @transform_5(%arg0: i32) -> (i32, i32) {
    %c0_i32 = arith.constant 0 : i32
    %c0_i32_0 = arith.constant 0 : i32
    %c0_i32_1 = arith.constant 0 : i32
    return %c0_i32, %c0_i32_0 : i32, i32
  }
  func.func @transform_6(%arg0: i32) -> (i32, i32) {
    %c0_i32 = arith.constant 0 : i32
    %c0_i32_0 = arith.constant 0 : i32
    %c0_i32_1 = arith.constant 0 : i32
    return %c0_i32, %c0_i32_0 : i32, i32
  }
  func.func @transform_7(%arg0: i32) -> (i32, i32) {
    %c0_i32 = arith.constant 0 : i32
    %c0_i32_0 = arith.constant 0 : i32
    %c0_i32_1 = arith.constant 0 : i32
    return %c0_i32, %c0_i32_0 : i32, i32
  }
  func.func @transform_8(%arg0: i32) -> (i32, i32) {
    %c0_i32 = arith.constant 0 : i32
    %c0_i32_0 = arith.constant 0 : i32
    %c0_i32_1 = arith.constant 0 : i32
    return %c0_i32, %c0_i32_0 : i32, i32
  }
  func.func @transform_9(%arg0: i32) -> (i32, i32) {
    %c0_i32 = arith.constant 0 : i32
    %c0_i32_0 = arith.constant 0 : i32
    %c0_i32_1 = arith.constant 0 : i32
    return %c0_i32, %c0_i32_0 : i32, i32
  }
  func.func @transform_10(%arg0: i32) -> (i32, i32) {
    %c0_i32 = arith.constant 0 : i32
    %c0_i32_0 = arith.constant 0 : i32
    %c0_i32_1 = arith.constant 0 : i32
    return %c0_i32, %c0_i32_0 : i32, i32
  }
  func.func @transform_11(%arg0: i32) -> (i32, i32) {
    %c0_i32 = arith.constant 0 : i32
    %c0_i32_0 = arith.constant 0 : i32
    %c0_i32_1 = arith.constant 0 : i32
    return %c0_i32, %c0_i32_0 : i32, i32
  }
  func.func @transform_12(%arg0: i32) -> (i32, i32) {
    %c0_i32 = arith.constant 0 : i32
    %c0_i32_0 = arith.constant 0 : i32
    %c0_i32_1 = arith.constant 0 : i32
    return %c0_i32, %c0_i32_0 : i32, i32
  }
  func.func @transform_13(%arg0: i32) -> (i32, i32) {
    %c0_i32 = arith.constant 0 : i32
    %c0_i32_0 = arith.constant 0 : i32
    %c0_i32_1 = arith.constant 0 : i32
    return %c0_i32, %c0_i32_0 : i32, i32
  }
  func.func @transform_14(%arg0: i32) -> (i32, i32) {
    %c0_i32 = arith.constant 0 : i32
    %c0_i32_0 = arith.constant 0 : i32
    %c0_i32_1 = arith.constant 0 : i32
    return %c0_i32, %c0_i32_0 : i32, i32
  }
  func.func @transform_15(%arg0: i32) -> (i32, i32) {
    %c0_i32 = arith.constant 0 : i32
    %c0_i32_0 = arith.constant 0 : i32
    %c0_i32_1 = arith.constant 0 : i32
    return %c0_i32, %c0_i32_0 : i32, i32
  }
  func.func @transform_16(%arg0: i32) -> (i32, i32) {
    %c0_i32 = arith.constant 0 : i32
    %c0_i32_0 = arith.constant 0 : i32
    %c0_i32_1 = arith.constant 0 : i32
    return %c0_i32, %c0_i32_0 : i32, i32
  }
  func.func @transform_17(%arg0: i32) -> (i32, i32) {
    %c0_i32 = arith.constant 0 : i32
    %c0_i32_0 = arith.constant 0 : i32
    %c0_i32_1 = arith.constant 0 : i32
    return %c0_i32, %c0_i32_0 : i32, i32
  }
  func.func @transform_18(%arg0: i32) -> (i32, i32) {
    %c0_i32 = arith.constant 0 : i32
    %c0_i32_0 = arith.constant 0 : i32
    %c0_i32_1 = arith.constant 0 : i32
    return %c0_i32, %c0_i32_0 : i32, i32
  }
  func.func @transform_19(%arg0: i32) -> (i32, i32) {
    %c0_i32 = arith.constant 0 : i32
    %c0_i32_0 = arith.constant 0 : i32
    %c0_i32_1 = arith.constant 0 : i32
    return %c0_i32, %c0_i32_0 : i32, i32
  }
  func.func @transform_20(%arg0: i32) -> (i32, i32) {
    %c0_i32 = arith.constant 0 : i32
    %c0_i32_0 = arith.constant 0 : i32
    %c0_i32_1 = arith.constant 0 : i32
    return %c0_i32, %c0_i32_0 : i32, i32
  }
  func.func @transform_21(%arg0: i32) -> (i32, i32) {
    %c0_i32 = arith.constant 0 : i32
    %c0_i32_0 = arith.constant 0 : i32
    %c0_i32_1 = arith.constant 0 : i32
    return %c0_i32, %c0_i32_0 : i32, i32
  }
  func.func @transform_22(%arg0: i32) -> (i32, i32) {
    %c0_i32 = arith.constant 0 : i32
    %c0_i32_0 = arith.constant 0 : i32
    %c0_i32_1 = arith.constant 0 : i32
    return %c0_i32, %c0_i32_0 : i32, i32
  }
  func.func @transform_23(%arg0: i32) -> (i32, i32) {
    %c0_i32 = arith.constant 0 : i32
    %c0_i32_0 = arith.constant 0 : i32
    %c0_i32_1 = arith.constant 0 : i32
    return %c0_i32, %c0_i32_0 : i32, i32
  }
}

</mosaic_0001>

<llo_original>
// kernel: gated_stgcn_forward.1
$region0: #{gated_stgcn_forward.1}
  #allocation0 [shape = 'u32[]', space=smem, size = 0x4, offset = 0x4, fixed_abs, tag = 'smem constant byte address 0x4 - core index']
  #allocation1 [shape = 'u32[72,128]{1,0:T(1,128)}', space=vmem, size = 0x9000, scoped, tag = 'internal scratch']
  %s0 = inlined_call_operand.vmem [shape: f32[2,256], index: 0, kind: input, shape index: {}]
  %s1 = inlined_call_operand.vmem [shape: f32[2,1], index: 1, kind: input, shape index: {}]
  %s2 = inlined_call_operand.vmem [shape: f32[2,1], index: 2, kind: input, shape index: {}]
  %s3 = inlined_call_operand.vmem [shape: bf16[256,512], index: 3, kind: input, shape index: {}]
  %s4 = inlined_call_operand.vmem [shape: f32[3,1,256], index: 4, kind: input, shape index: {}]
  %s5 = inlined_call_operand.vmem [shape: f32[128,6], index: 5, kind: input, shape index: {}]
  %s6 = inlined_call_operand.vmem [shape: f32[128,1], index: 6, kind: input, shape index: {}]
  %s7 = inlined_call_operand.vmem [shape: bf16[64,192], index: 7, kind: input, shape index: {}]
  %s8 = inlined_call_operand.vmem [shape: f32[64,1], index: 8, kind: input, shape index: {}]
  %s9 = inlined_call_operand.vmem [shape: bf16[128,192], index: 9, kind: input, shape index: {}]
  %s10 = inlined_call_operand.vmem [shape: f32[128,1], index: 10, kind: input, shape index: {}]
  %s11 = inlined_call_operand.vmem [shape: bf16[128,192], index: 11, kind: input, shape index: {}]
  %s12 = inlined_call_operand.vmem [shape: f32[128,1], index: 12, kind: input, shape index: {}]
  %s13 = inlined_call_operand.vmem [shape: bf16[64,192], index: 13, kind: input, shape index: {}]
  %s14 = inlined_call_operand.vmem [shape: f32[64,1], index: 14, kind: input, shape index: {}]
  %s15 = inlined_call_operand.vmem [shape: bf16[128,192], index: 15, kind: input, shape index: {}]
  %s16 = inlined_call_operand.vmem [shape: f32[128,1], index: 16, kind: input, shape index: {}]
  %s17 = inlined_call_operand.vmem [shape: bf16[128,192], index: 17, kind: input, shape index: {}]
  %s18 = inlined_call_operand.vmem [shape: f32[128,1], index: 18, kind: input, shape index: {}]
  %s19 = inlined_call_operand.vmem [shape: bf16[64,192], index: 19, kind: input, shape index: {}]
  %s20 = inlined_call_operand.vmem [shape: f32[64,1], index: 20, kind: input, shape index: {}]
  %s21 = inlined_call_operand.vmem [shape: bf16[128,192], index: 21, kind: input, shape index: {}]
  %s22 = inlined_call_operand.vmem [shape: f32[128,1], index: 22, kind: input, shape index: {}]
  %s23 = inlined_call_operand.vmem [shape: f32[64,256], index: 23, kind: output, shape index: {}]
  %s24 = sld [smem:[#allocation0]]
  $region102: #{gated_stgcn_forward.1} parent=0
    _
  %s26 = ssub.s32 1, %s24
  %s27 = scalar_select 0, %s26, %s24
  // Predicated region
  $region2: #{gated_stgcn_forward.1} parent=0 // pred_check
    _
  $region3: #{gated_stgcn_forward.1} parent=0 // pred_check_branch
    %29 = sbr.rel (0) target = $region5
  $region4: #{gated_stgcn_forward.1} parent=0 // pred_region
    _
  $region5: #{gated_stgcn_forward.1} parent=0 // pred_fallthru
    _
  // Predicated region
  $region6: #{gated_stgcn_forward.1} parent=0 // pred_check
    _
  $region7: #{gated_stgcn_forward.1} parent=0 // pred_check_branch
    %31 = sbr.rel (0) target = $region9
  $region8: #{gated_stgcn_forward.1} parent=0 // pred_region
    _
  $region9: #{gated_stgcn_forward.1} parent=0 // pred_fallthru
    _
  // Predicated region
  $region10: #{gated_stgcn_forward.1} parent=0 // pred_check
    _
  $region11: #{gated_stgcn_forward.1} parent=0 // pred_check_branch
    %33 = sbr.rel (0) target = $region13
  $region12: #{gated_stgcn_forward.1} parent=0 // pred_region
    _
  $region13: #{gated_stgcn_forward.1} parent=0 // pred_fallthru
    _
  // Predicated region
  $region14: #{gated_stgcn_forward.1} parent=0 // pred_check
    _
  $region15: #{gated_stgcn_forward.1} parent=0 // pred_check_branch
    %35 = sbr.rel (0) target = $region17
  $region16: #{gated_stgcn_forward.1} parent=0 // pred_region
    _
  $region17: #{gated_stgcn_forward.1} parent=0 // pred_fallthru
    _
  // Predicated region
  $region18: #{gated_stgcn_forward.1} parent=0 // pred_check
    _
  $region19: #{gated_stgcn_forward.1} parent=0 // pred_check_branch
    %37 = sbr.rel (0) target = $region21
  $region20: #{gated_stgcn_forward.1} parent=0 // pred_region
    _
  $region21: #{gated_stgcn_forward.1} parent=0 // pred_fallthru
    _
  // Predicated region
  $region22: #{gated_stgcn_forward.1} parent=0 // pred_check
    _
  $region23: #{gated_stgcn_forward.1} parent=0 // pred_check_branch
    %39 = sbr.rel (0) target = $region25
  $region24: #{gated_stgcn_forward.1} parent=0 // pred_region
    _
  $region25: #{gated_stgcn_forward.1} parent=0 // pred_fallthru
    _
  // Predicated region
  $region26: #{gated_stgcn_forward.1} parent=0 // pred_check
    _
  $region27: #{gated_stgcn_forward.1} parent=0 // pred_check_branch
    %41 = sbr.rel (0) target = $region29
  $region28: #{gated_stgcn_forward.1} parent=0 // pred_region
    _
  $region29: #{gated_stgcn_forward.1} parent=0 // pred_fallthru
    _
  // Predicated region
  $region30: #{gated_stgcn_forward.1} parent=0 // pred_check
    _
  $region31: #{gated_stgcn_forward.1} parent=0 // pred_check_branch
    %43 = sbr.rel (0) target = $region33
  $region32: #{gated_stgcn_forward.1} parent=0 // pred_region
    _
  $region33: #{gated_stgcn_forward.1} parent=0 // pred_fallthru
    _
  // Predicated region
  $region34: #{gated_stgcn_forward.1} parent=0 // pred_check
    _
  $region35: #{gated_stgcn_forward.1} parent=0 // pred_check_branch
    %45 = sbr.rel (0) target = $region37
  $region36: #{gated_stgcn_forward.1} parent=0 // pred_region
    _
  $region37: #{gated_stgcn_forward.1} parent=0 // pred_fallthru
    _
  // Predicated region
  $region38: #{gated_stgcn_forward.1} parent=0 // pred_check
    _
  $region39: #{gated_stgcn_forward.1} parent=0 // pred_check_branch
    %47 = sbr.rel (0) target = $region41
  $region40: #{gated_stgcn_forward.1} parent=0 // pred_region
    _
  $region41: #{gated_stgcn_forward.1} parent=0 // pred_fallthru
    _
  // Predicated region
  $region42: #{gated_stgcn_forward.1} parent=0 // pred_check
    _
  $region43: #{gated_stgcn_forward.1} parent=0 // pred_check_branch
    %49 = sbr.rel (0) target = $region45
  $region44: #{gated_stgcn_forward.1} parent=0 // pred_region
    _
  $region45: #{gated_stgcn_forward.1} parent=0 // pred_fallthru
    _
  // Predicated region
  $region46: #{gated_stgcn_forward.1} parent=0 // pred_check
    _
  $region47: #{gated_stgcn_forward.1} parent=0 // pred_check_branch
    %51 = sbr.rel (0) target = $region49
  $region48: #{gated_stgcn_forward.1} parent=0 // pred_region
    _
  $region49: #{gated_stgcn_forward.1} parent=0 // pred_fallthru
    _
  // Predicated region
  $region50: #{gated_stgcn_forward.1} parent=0 // pred_check
    _
  $region51: #{gated_stgcn_forward.1} parent=0 // pred_check_branch
    %53 = sbr.rel (0) target = $region53
  $region52: #{gated_stgcn_forward.1} parent=0 // pred_region
    _
  $region53: #{gated_stgcn_forward.1} parent=0 // pred_fallthru
    _
  // Predicated region
  $region54: #{gated_stgcn_forward.1} parent=0 // pred_check
    _
  $region55: #{gated_stgcn_forward.1} parent=0 // pred_check_branch
    %55 = sbr.rel (0) target = $region57
  $region56: #{gated_stgcn_forward.1} parent=0 // pred_region
    _
  $region57: #{gated_stgcn_forward.1} parent=0 // pred_fallthru
    _
  // Predicated region
  $region58: #{gated_stgcn_forward.1} parent=0 // pred_check
    _
  $region59: #{gated_stgcn_forward.1} parent=0 // pred_check_branch
    %57 = sbr.rel (0) target = $region61
  $region60: #{gated_stgcn_forward.1} parent=0 // pred_region
    _
  $region61: #{gated_stgcn_forward.1} parent=0 // pred_fallthru
    _
  // Predicated region
  $region62: #{gated_stgcn_forward.1} parent=0 // pred_check
    _
  $region63: #{gated_stgcn_forward.1} parent=0 // pred_check_branch
    %59 = sbr.rel (0) target = $region65
  $region64: #{gated_stgcn_forward.1} parent=0 // pred_region
    _
  $region65: #{gated_stgcn_forward.1} parent=0 // pred_fallthru
    _
  // Predicated region
  $region66: #{gated_stgcn_forward.1} parent=0 // pred_check
    _
  $region67: #{gated_stgcn_forward.1} parent=0 // pred_check_branch
    %61 = sbr.rel (0) target = $region69
  $region68: #{gated_stgcn_forward.1} parent=0 // pred_region
    _
  $region69: #{gated_stgcn_forward.1} parent=0 // pred_fallthru
    _
  // Predicated region
  $region70: #{gated_stgcn_forward.1} parent=0 // pred_check
    _
  $region71: #{gated_stgcn_forward.1} parent=0 // pred_check_branch
    %63 = sbr.rel (0) target = $region73
  $region72: #{gated_stgcn_forward.1} parent=0 // pred_region
    _
  $region73: #{gated_stgcn_forward.1} parent=0 // pred_fallthru
    _
  // Predicated region
  $region74: #{gated_stgcn_forward.1} parent=0 // pred_check
    _
  $region75: #{gated_stgcn_forward.1} parent=0 // pred_check_branch
    %65 = sbr.rel (0) target = $region77
  $region76: #{gated_stgcn_forward.1} parent=0 // pred_region
    _
  $region77: #{gated_stgcn_forward.1} parent=0 // pred_fallthru
    _
  // Predicated region
  $region78: #{gated_stgcn_forward.1} parent=0 // pred_check
    _
  $region79: #{gated_stgcn_forward.1} parent=0 // pred_check_branch
    %67 = sbr.rel (0) target = $region81
  $region80: #{gated_stgcn_forward.1} parent=0 // pred_region
    _
  $region81: #{gated_stgcn_forward.1} parent=0 // pred_fallthru
    _
  // Predicated region
  $region82: #{gated_stgcn_forward.1} parent=0 // pred_check
    _
  $region83: #{gated_stgcn_forward.1} parent=0 // pred_check_branch
    %69 = sbr.rel (0) target = $region85
  $region84: #{gated_stgcn_forward.1} parent=0 // pred_region
    _
  $region85: #{gated_stgcn_forward.1} parent=0 // pred_fallthru
    _
  // Predicated region
  $region86: #{gated_stgcn_forward.1} parent=0 // pred_check
    _
  $region87: #{gated_stgcn_forward.1} parent=0 // pred_check_branch
    %71 = sbr.rel (0) target = $region89
  $region88: #{gated_stgcn_forward.1} parent=0 // pred_region
    _
  $region89: #{gated_stgcn_forward.1} parent=0 // pred_fallthru
    _
  // Predicated region
  $region90: #{gated_stgcn_forward.1} parent=0 // pred_check
    _
  $region91: #{gated_stgcn_forward.1} parent=0 // pred_check_branch
    %73 = sbr.rel (0) target = $region93
  $region92: #{gated_stgcn_forward.1} parent=0 // pred_region
    _
  $region93: #{gated_stgcn_forward.1} parent=0 // pred_fallthru
    _
  %v75 = vld [vmem:[%s0] sm:$0xf]
  %v76 = vld [vmem:[%s1] sm:$0x3]
  %78 = vset.pattern.permute.xlu0 0
  %79 = vperm.xlu0 %78, %v76
  %v80 = vpop.permute.xlu0 %79
  %v82 = vunpack.c.l.s4 269488144
  %v83 = vunpack.c.0.s8 %v82
  %v84 = vperm.slane %v80, %v83
  %v86 = vmul.f32 %v75, %v84
  %v87 = vld [vmem:[%s2] sm:$0x3]
  %89 = vset.pattern.permute.xlu0 0
  %90 = vperm.xlu0 %89, %v87
  %v91 = vpop.permute.xlu0 %90
  %v93 = vunpack.c.l.s4 269488144
  %v94 = vunpack.c.0.s8 %v93
  %v95 = vperm.slane %v91, %v94
  %v97 = vadd.f32 %v86, %v95
  %99 = vst [vmem:[#allocation1] ss:$4 sm:$0xff] %v97
  %v100 = vld.sshfl [vmem:[#allocation1] sm:$0xff pattern:$0x73625140]
  %v101 = vld.sshfl [vmem:[#allocation1 + $0x8] sm:$0xff pattern:$0x73625140]
  %104 = vrot.lane.b32.xlu0 %v100, 1
  %v105 = vpop.permute.xlu0 %104
  %106 = vrot.lane.b32.xlu0 %v101, 1
  %v107 = vpop.permute.xlu0 %106
  %v108 = vlaneseq
  %v109 = vand.u32 %v108, 127
  %vm110 = vcmp.lt.s32.totalorder %v109, 1
  %v111 = vsel %vm110, %v105, %v107
  %v112 = vsel %vm110, %v107, %v105
  %v113 = vld [vmem:[%s4] sm:$0x3]
  %v115 = vperm.slane %v113, 0
  %v116 = vperm.slane %v113, 1
  %v119 = vmul.f32 %v112, %v115
  %v120 = vmul.f32 %v111, %v116
  %s121 = scalar_lea.vmem %s4, 2
  %v122 = vld [vmem:[%s121] sm:$0x3]
  %v124 = vperm.slane %v122, 0
  %v125 = vperm.slane %v122, 1
  %v126 = vrot.slane %v125, 6
  %vm127 = vcmask 1041408
  %v128 = vsel %vm127, %v124, %v126
  %v130 = vmul.f32 %v97, %v128
  %131 = vst [vmem:[#allocation1] ss:$4 sm:$0xff] %v97
  %v132 = vld.sshfl [vmem:[#allocation1] sm:$0xff pattern:$0x73625140]
  %v133 = vld.sshfl [vmem:[#allocation1 + $0x8] sm:$0xff pattern:$0x73625140]
  %136 = vrot.lane.b32.xlu0 %v132, 127
  %v137 = vpop.permute.xlu0 %136
  %138 = vrot.lane.b32.xlu0 %v133, 127
  %v139 = vpop.permute.xlu0 %138
  %vm140 = vcmp.lt.s32.totalorder %v109, 127
  %v141 = vsel %vm140, %v137, %v139
  %v142 = vsel %vm140, %v139, %v137
  %s143 = scalar_lea.vmem %s4, 4
  %v144 = vld [vmem:[%s143] sm:$0x3]
  %v146 = vperm.slane %v144, 0
  %v147 = vperm.slane %v144, 1
  %v150 = vmul.f32 %v141, %v146
  %v151 = vmul.f32 %v142, %v147
  %s153 = scalar_lea.vmem [#allocation1], 1
  %154 = vst [vmem:[%s153] ss:$4 sm:$0xff] %v130
  %v155 = vld.sshfl [vmem:[#allocation1] sm:$0xff pattern:$0x73625140]
  %v156 = vld.sshfl [vmem:[#allocation1 + $0x8] sm:$0xff pattern:$0x73625140]
  %v161 = vrot.slane %v150, 4
  %v162 = vrot.slane %v151, 4
  %v165 = vsel %vm127, %v119, %v155
  %v166 = vsel %vm127, %v120, %v156
  %vm167 = vcmask 1043456
  %v168 = vsel %vm167, %v165, %v161
  %v169 = vsel %vm167, %v166, %v162
  %v170 = vld [vmem:[%s5] sm:$0xff]
  %v171 = vld [vmem:[%s5 + $0x8] sm:$0xff]
  %v172 = vld [vmem:[%s5 + $0x10] sm:$0xff]
  %v173 = vld [vmem:[%s5 + $0x18] sm:$0xff]
  %v174 = vld [vmem:[%s5 + $0x20] sm:$0xff]
  %v175 = vld [vmem:[%s5 + $0x28] sm:$0xff]
  %v176 = vld [vmem:[%s5 + $0x30] sm:$0xff]
  %v177 = vld [vmem:[%s5 + $0x38] sm:$0xff]
  %v178 = vld [vmem:[%s5 + $0x40] sm:$0xff]
  %v179 = vld [vmem:[%s5 + $0x48] sm:$0xff]
  %v180 = vld [vmem:[%s5 + $0x50] sm:$0xff]
  %v181 = vld [vmem:[%s5 + $0x58] sm:$0xff]
  %v182 = vld [vmem:[%s5 + $0x60] sm:$0xff]
  %v183 = vld [vmem:[%s5 + $0x68] sm:$0xff]
  %v184 = vld [vmem:[%s5 + $0x70] sm:$0xff]
  %v185 = vld [vmem:[%s5 + $0x78] sm:$0xff]
  %187 = vset.pattern.permute.xlu0 0
  %188 = vperm.xlu0 %187, %v170
  %v189 = vpop.permute.xlu0 %188
  %192 = vset.pattern.permute.xlu0 0
  %193 = vperm.xlu0 %192, %v171
  %v194 = vpop.permute.xlu0 %193
  %197 = vset.pattern.permute.xlu0 0
  %198 = vperm.xlu0 %197, %v172
  %v199 = vpop.permute.xlu0 %198
  %202 = vset.pattern.permute.xlu0 0
  %203 = vperm.xlu0 %202, %v173
  %v204 = vpop.permute.xlu0 %203
  %207 = vset.pattern.permute.xlu0 0
  %208 = vperm.xlu0 %207, %v174
  %v209 = vpop.permute.xlu0 %208
  %212 = vset.pattern.permute.xlu0 0
  %213 = vperm.xlu0 %212, %v175
  %v214 = vpop.permute.xlu0 %213
  %217 = vset.pattern.permute.xlu0 0
  %218 = vperm.xlu0 %217, %v176
  %v219 = vpop.permute.xlu0 %218
  %222 = vset.pattern.permute.xlu0 0
  %223 = vperm.xlu0 %222, %v177
  %v224 = vpop.permute.xlu0 %223
  %227 = vset.pattern.permute.xlu0 0
  %228 = vperm.xlu0 %227, %v178
  %v229 = vpop.permute.xlu0 %228
  %232 = vset.pattern.permute.xlu0 0
  %233 = vperm.xlu0 %232, %v179
  %v234 = vpop.permute.xlu0 %233
  %237 = vset.pattern.permute.xlu0 0
  %238 = vperm.xlu0 %237, %v180
  %v239 = vpop.permute.xlu0 %238
  %242 = vset.pattern.permute.xlu0 0
  %243 = vperm.xlu0 %242, %v181
  %v244 = vpop.permute.xlu0 %243
  %247 = vset.pattern.permute.xlu0 0
  %248 = vperm.xlu0 %247, %v182
  %v249 = vpop.permute.xlu0 %248
  %252 = vset.pattern.permute.xlu0 0
  %253 = vperm.xlu0 %252, %v183
  %v254 = vpop.permute.xlu0 %253
  %257 = vset.pattern.permute.xlu0 0
  %258 = vperm.xlu0 %257, %v184
  %v259 = vpop.permute.xlu0 %258
  %262 = vset.pattern.permute.xlu0 0
  %263 = vperm.xlu0 %262, %v185
  %v264 = vpop.permute.xlu0 %263
  %v266 = vperm.slane %v168, 0
  %v267 = vperm.slane %v169, 0
  %v268 = vmul.f32 %v189, %v266
  %v269 = vmul.f32 %v189, %v267
  %v270 = vmul.f32 %v194, %v266
  %v271 = vmul.f32 %v194, %v267
  %v272 = vmul.f32 %v199, %v266
  %v273 = vmul.f32 %v199, %v267
  %v274 = vmul.f32 %v204, %v266
  %v275 = vmul.f32 %v204, %v267
  %v276 = vmul.f32 %v209, %v266
  %v277 = vmul.f32 %v209, %v267
  %v278 = vmul.f32 %v214, %v266
  %v279 = vmul.f32 %v214, %v267
  %v280 = vmul.f32 %v219, %v266
  %v281 = vmul.f32 %v219, %v267
  %v282 = vmul.f32 %v224, %v266
  %v283 = vmul.f32 %v224, %v267
  %v284 = vmul.f32 %v229, %v266
  %v285 = vmul.f32 %v229, %v267
  %v286 = vmul.f32 %v234, %v266
  %v287 = vmul.f32 %v234, %v267
  %v288 = vmul.f32 %v239, %v266
  %v289 = vmul.f32 %v239, %v267
  %v290 = vmul.f32 %v244, %v266
  %v291 = vmul.f32 %v244, %v267
  %v292 = vmul.f32 %v249, %v266
  %v293 = vmul.f32 %v249, %v267
  %v294 = vmul.f32 %v254, %v266
  %v295 = vmul.f32 %v254, %v267
  %v296 = vmul.f32 %v259, %v266
  %v297 = vmul.f32 %v259, %v267
  %v298 = vmul.f32 %v264, %v266
  %v299 = vmul.f32 %v264, %v267
  %300 = vset.pattern.permute.xlu0 1
  %301 = vperm.xlu0 %300, %v170
  %v302 = vpop.permute.xlu0 %301
  %304 = vset.pattern.permute.xlu0 1
  %305 = vperm.xlu0 %304, %v171
  %v306 = vpop.permute.xlu0 %305
  %308 = vset.pattern.permute.xlu0 1
  %309 = vperm.xlu0 %308, %v172
  %v310 = vpop.permute.xlu0 %309
  %312 = vset.pattern.permute.xlu0 1
  %313 = vperm.xlu0 %312, %v173
  %v314 = vpop.permute.xlu0 %313
  %316 = vset.pattern.permute.xlu0 1
  %317 = vperm.xlu0 %316, %v174
  %v318 = vpop.permute.xlu0 %317
  %320 = vset.pattern.permute.xlu0 1
  %321 = vperm.xlu0 %320, %v175
  %v322 = vpop.permute.xlu0 %321
  %324 = vset.pattern.permute.xlu0 1
  %325 = vperm.xlu0 %324, %v176
  %v326 = vpop.permute.xlu0 %325
  %328 = vset.pattern.permute.xlu0 1
  %329 = vperm.xlu0 %328, %v177
  %v330 = vpop.permute.xlu0 %329
  %332 = vset.pattern.permute.xlu0 1
  %333 = vperm.xlu0 %332, %v178
  %v334 = vpop.permute.xlu0 %333
  %336 = vset.pattern.permute.xlu0 1
  %337 = vperm.xlu0 %336, %v179
  %v338 = vpop.permute.xlu0 %337
  %340 = vset.pattern.permute.xlu0 1
  %341 = vperm.xlu0 %340, %v180
  %v342 = vpop.permute.xlu0 %341
  %344 = vset.pattern.permute.xlu0 1
  %345 = vperm.xlu0 %344, %v181
  %v346 = vpop.permute.xlu0 %345
  %348 = vset.pattern.permute.xlu0 1
  %349 = vperm.xlu0 %348, %v182
  %v350 = vpop.permute.xlu0 %349
  %352 = vset.pattern.permute.xlu0 1
  %353 = vperm.xlu0 %352, %v183
  %v354 = vpop.permute.xlu0 %353
  %356 = vset.pattern.permute.xlu0 1
  %357 = vperm.xlu0 %356, %v184
  %v358 = vpop.permute.xlu0 %357
  %360 = vset.pattern.permute.xlu0 1
  %361 = vperm.xlu0 %360, %v185
  %v362 = vpop.permute.xlu0 %361
  %v364 = vperm.slane %v168, 1
  %v365 = vperm.slane %v169, 1
  %v366 = vmul.f32 %v302, %v364
  %v367 = vmul.f32 %v302, %v365
  %v368 = vmul.f32 %v306, %v364
  %v369 = vmul.f32 %v306, %v365
  %v370 = vmul.f32 %v310, %v364
  %v371 = vmul.f32 %v310, %v365
  %v372 = vmul.f32 %v314, %v364
  %v373 = vmul.f32 %v314, %v365
  %v374 = vmul.f32 %v318, %v364
  %v375 = vmul.f32 %v318, %v365
  %v376 = vmul.f32 %v322, %v364
  %v377 = vmul.f32 %v322, %v365
  %v378 = vmul.f32 %v326, %v364
  %v379 = vmul.f32 %v326, %v365
  %v380 = vmul.f32 %v330, %v364
  %v381 = vmul.f32 %v330, %v365
  %v382 = vmul.f32 %v334, %v364
  %v383 = vmul.f32 %v334, %v365
  %v384 = vmul.f32 %v338, %v364
  %v385 = vmul.f32 %v338, %v365
  %v386 = vmul.f32 %v342, %v364
  %v387 = vmul.f32 %v342, %v365
  %v388 = vmul.f32 %v346, %v364
  %v389 = vmul.f32 %v346, %v365
  %v390 = vmul.f32 %v350, %v364
  %v391 = vmul.f32 %v350, %v365
  %v392 = vmul.f32 %v354, %v364
  %v393 = vmul.f32 %v354, %v365
  %v394 = vmul.f32 %v358, %v364
  %v395 = vmul.f32 %v358, %v365
  %v396 = vmul.f32 %v362, %v364
  %v397 = vmul.f32 %v362, %v365
  %v398 = vadd.f32 %v268, %v366
  %v399 = vadd.f32 %v269, %v367
  %v400 = vadd.f32 %v270, %v368
  %v401 = vadd.f32 %v271, %v369
  %v402 = vadd.f32 %v272, %v370
  %v403 = vadd.f32 %v273, %v371
  %v404 = vadd.f32 %v274, %v372
  %v405 = vadd.f32 %v275, %v373
  %v406 = vadd.f32 %v276, %v374
  %v407 = vadd.f32 %v277, %v375
  %v408 = vadd.f32 %v278, %v376
  %v409 = vadd.f32 %v279, %v377
  %v410 = vadd.f32 %v280, %v378
  %v411 = vadd.f32 %v281, %v379
  %v412 = vadd.f32 %v282, %v380
  %v413 = vadd.f32 %v283, %v381
  %v414 = vadd.f32 %v284, %v382
  %v415 = vadd.f32 %v285, %v383
  %v416 = vadd.f32 %v286, %v384
  %v417 = vadd.f32 %v287, %v385
  %v418 = vadd.f32 %v288, %v386
  %v419 = vadd.f32 %v289, %v387
  %v420 = vadd.f32 %v290, %v388
  %v421 = vadd.f32 %v291, %v389
  %v422 = vadd.f32 %v292, %v390
  %v423 = vadd.f32 %v293, %v391
  %v424 = vadd.f32 %v294, %v392
  %v425 = vadd.f32 %v295, %v393
  %v426 = vadd.f32 %v296, %v394
  %v427 = vadd.f32 %v297, %v395
  %v428 = vadd.f32 %v298, %v396
  %v429 = vadd.f32 %v299, %v397
  %430 = vset.pattern.permute.xlu0 2
  %431 = vperm.xlu0 %430, %v170
  %v432 = vpop.permute.xlu0 %431
  %434 = vset.pattern.permute.xlu0 2
  %435 = vperm.xlu0 %434, %v171
  %v436 = vpop.permute.xlu0 %435
  %438 = vset.pattern.permute.xlu0 2
  %439 = vperm.xlu0 %438, %v172
  %v440 = vpop.permute.xlu0 %439
  %442 = vset.pattern.permute.xlu0 2
  %443 = vperm.xlu0 %442, %v173
  %v444 = vpop.permute.xlu0 %443
  %446 = vset.pattern.permute.xlu0 2
  %447 = vperm.xlu0 %446, %v174
  %v448 = vpop.permute.xlu0 %447
  %450 = vset.pattern.permute.xlu0 2
  %451 = vperm.xlu0 %450, %v175
  %v452 = vpop.permute.xlu0 %451
  %454 = vset.pattern.permute.xlu0 2
  %455 = vperm.xlu0 %454, %v176
  %v456 = vpop.permute.xlu0 %455
  %458 = vset.pattern.permute.xlu0 2
  %459 = vperm.xlu0 %458, %v177
  %v460 = vpop.permute.xlu0 %459
  %462 = vset.pattern.permute.xlu0 2
  %463 = vperm.xlu0 %462, %v178
  %v464 = vpop.permute.xlu0 %463
  %466 = vset.pattern.permute.xlu0 2
  %467 = vperm.xlu0 %466, %v179
  %v468 = vpop.permute.xlu0 %467
  %470 = vset.pattern.permute.xlu0 2
  %471 = vperm.xlu0 %470, %v180
  %v472 = vpop.permute.xlu0 %471
  %474 = vset.pattern.permute.xlu0 2
  %475 = vperm.xlu0 %474, %v181
  %v476 = vpop.permute.xlu0 %475
  %478 = vset.pattern.permute.xlu0 2
  %479 = vperm.xlu0 %478, %v182
  %v480 = vpop.permute.xlu0 %479
  %482 = vset.pattern.permute.xlu0 2
  %483 = vperm.xlu0 %482, %v183
  %v484 = vpop.permute.xlu0 %483
  %486 = vset.pattern.permute.xlu0 2
  %487 = vperm.xlu0 %486, %v184
  %v488 = vpop.permute.xlu0 %487
  %490 = vset.pattern.permute.xlu0 2
  %491 = vperm.xlu0 %490, %v185
  %v492 = vpop.permute.xlu0 %491
  %v494 = vperm.slane %v168, 2
  %v495 = vperm.slane %v169, 2
  %v496 = vmul.f32 %v432, %v494
  %v497 = vmul.f32 %v432, %v495
  %v498 = vmul.f32 %v436, %v494
  %v499 = vmul.f32 %v436, %v495
  %v500 = vmul.f32 %v440, %v494
  %v501 = vmul.f32 %v440, %v495
  %v502 = vmul.f32 %v444, %v494
  %v503 = vmul.f32 %v444, %v495
  %v504 = vmul.f32 %v448, %v494
  %v505 = vmul.f32 %v448, %v495
  %v506 = vmul.f32 %v452, %v494
  %v507 = vmul.f32 %v452, %v495
  %v508 = vmul.f32 %v456, %v494
  %v509 = vmul.f32 %v456, %v495
  %v510 = vmul.f32 %v460, %v494
  %v511 = vmul.f32 %v460, %v495
  %v512 = vmul.f32 %v464, %v494
  %v513 = vmul.f32 %v464, %v495
  %v514 = vmul.f32 %v468, %v494
  %v515 = vmul.f32 %v468, %v495
  %v516 = vmul.f32 %v472, %v494
  %v517 = vmul.f32 %v472, %v495
  %v518 = vmul.f32 %v476, %v494
  %v519 = vmul.f32 %v476, %v495
  %v520 = vmul.f32 %v480, %v494
  %v521 = vmul.f32 %v480, %v495
  %v522 = vmul.f32 %v484, %v494
  %v523 = vmul.f32 %v484, %v495
  %v524 = vmul.f32 %v488, %v494
  %v525 = vmul.f32 %v488, %v495
  %v526 = vmul.f32 %v492, %v494
  %v527 = vmul.f32 %v492, %v495
  %v528 = vadd.f32 %v398, %v496
  %v529 = vadd.f32 %v399, %v497
  %v530 = vadd.f32 %v400, %v498
  %v531 = vadd.f32 %v401, %v499
  %v532 = vadd.f32 %v402, %v500
  %v533 = vadd.f32 %v403, %v501
  %v534 = vadd.f32 %v404, %v502
  %v535 = vadd.f32 %v405, %v503
  %v536 = vadd.f32 %v406, %v504
  %v537 = vadd.f32 %v407, %v505
  %v538 = vadd.f32 %v408, %v506
  %v539 = vadd.f32 %v409, %v507
  %v540 = vadd.f32 %v410, %v508
  %v541 = vadd.f32 %v411, %v509
  %v542 = vadd.f32 %v412, %v510
  %v543 = vadd.f32 %v413, %v511
  %v544 = vadd.f32 %v414, %v512
  %v545 = vadd.f32 %v415, %v513
  %v546 = vadd.f32 %v416, %v514
  %v547 = vadd.f32 %v417, %v515
  %v548 = vadd.f32 %v418, %v516
  %v549 = vadd.f32 %v419, %v517
  %v550 = vadd.f32 %v420, %v518
  %v551 = vadd.f32 %v421, %v519
  %v552 = vadd.f32 %v422, %v520
  %v553 = vadd.f32 %v423, %v521
  %v554 = vadd.f32 %v424, %v522
  %v555 = vadd.f32 %v425, %v523
  %v556 = vadd.f32 %v426, %v524
  %v557 = vadd.f32 %v427, %v525
  %v558 = vadd.f32 %v428, %v526
  %v559 = vadd.f32 %v429, %v527
  %560 = vset.pattern.permute.xlu0 3
  %561 = vperm.xlu0 %560, %v170
  %v562 = vpop.permute.xlu0 %561
  %564 = vset.pattern.permute.xlu0 3
  %565 = vperm.xlu0 %564, %v171
  %v566 = vpop.permute.xlu0 %565
  %568 = vset.pattern.permute.xlu0 3
  %569 = vperm.xlu0 %568, %v172
  %v570 = vpop.permute.xlu0 %569
  %572 = vset.pattern.permute.xlu0 3
  %573 = vperm.xlu0 %572, %v173
  %v574 = vpop.permute.xlu0 %573
  %576 = vset.pattern.permute.xlu0 3
  %577 = vperm.xlu0 %576, %v174
  %v578 = vpop.permute.xlu0 %577
  %580 = vset.pattern.permute.xlu0 3
  %581 = vperm.xlu0 %580, %v175
  %v582 = vpop.permute.xlu0 %581
  %584 = vset.pattern.permute.xlu0 3
  %585 = vperm.xlu0 %584, %v176
  %v586 = vpop.permute.xlu0 %585
  %588 = vset.pattern.permute.xlu0 3
  %589 = vperm.xlu0 %588, %v177
  %v590 = vpop.permute.xlu0 %589
  %592 = vset.pattern.permute.xlu0 3
  %593 = vperm.xlu0 %592, %v178
  %v594 = vpop.permute.xlu0 %593
  %596 = vset.pattern.permute.xlu0 3
  %597 = vperm.xlu0 %596, %v179
  %v598 = vpop.permute.xlu0 %597
  %600 = vset.pattern.permute.xlu0 3
  %601 = vperm.xlu0 %600, %v180
  %v602 = vpop.permute.xlu0 %601
  %604 = vset.pattern.permute.xlu0 3
  %605 = vperm.xlu0 %604, %v181
  %v606 = vpop.permute.xlu0 %605
  %608 = vset.pattern.permute.xlu0 3
  %609 = vperm.xlu0 %608, %v182
  %v610 = vpop.permute.xlu0 %609
  %612 = vset.pattern.permute.xlu0 3
  %613 = vperm.xlu0 %612, %v183
  %v614 = vpop.permute.xlu0 %613
  %616 = vset.pattern.permute.xlu0 3
  %617 = vperm.xlu0 %616, %v184
  %v618 = vpop.permute.xlu0 %617
  %620 = vset.pattern.permute.xlu0 3
  %621 = vperm.xlu0 %620, %v185
  %v622 = vpop.permute.xlu0 %621
  %v624 = vperm.slane %v168, 3
  %v625 = vperm.slane %v169, 3
  %v626 = vmul.f32 %v562, %v624
  %v627 = vmul.f32 %v562, %v625
  %v628 = vmul.f32 %v566, %v624
  %v629 = vmul.f32 %v566, %v625
  %v630 = vmul.f32 %v570, %v624
  %v631 = vmul.f32 %v570, %v625
  %v632 = vmul.f32 %v574, %v624
  %v633 = vmul.f32 %v574, %v625
  %v634 = vmul.f32 %v578, %v624
  %v635 = vmul.f32 %v578, %v625
  %v636 = vmul.f32 %v582, %v624
  %v637 = vmul.f32 %v582, %v625
  %v638 = vmul.f32 %v586, %v624
  %v639 = vmul.f32 %v586, %v625
  %v640 = vmul.f32 %v590, %v624
  %v641 = vmul.f32 %v590, %v625
  %v642 = vmul.f32 %v594, %v624
  %v643 = vmul.f32 %v594, %v625
  %v644 = vmul.f32 %v598, %v624
  %v645 = vmul.f32 %v598, %v625
  %v646 = vmul.f32 %v602, %v624
  %v647 = vmul.f32 %v602, %v625
  %v648 = vmul.f32 %v606, %v624
  %v649 = vmul.f32 %v606, %v625
  %v650 = vmul.f32 %v610, %v624
  %v651 = vmul.f32 %v610, %v625
  %v652 = vmul.f32 %v614, %v624
  %v653 = vmul.f32 %v614, %v625
  %v654 = vmul.f32 %v618, %v624
  %v655 = vmul.f32 %v618, %v625
  %v656 = vmul.f32 %v622, %v624
  %v657 = vmul.f32 %v622, %v625
  %v658 = vadd.f32 %v528, %v626
  %v659 = vadd.f32 %v529, %v627
  %v660 = vadd.f32 %v530, %v628
  %v661 = vadd.f32 %v531, %v629
  %v662 = vadd.f32 %v532, %v630
  %v663 = vadd.f32 %v533, %v631
  %v664 = vadd.f32 %v534, %v632
  %v665 = vadd.f32 %v535, %v633
  %v666 = vadd.f32 %v536, %v634
  %v667 = vadd.f32 %v537, %v635
  %v668 = vadd.f32 %v538, %v636
  %v669 = vadd.f32 %v539, %v637
  %v670 = vadd.f32 %v540, %v638
  %v671 = vadd.f32 %v541, %v639
  %v672 = vadd.f32 %v542, %v640
  %v673 = vadd.f32 %v543, %v641
  %v674 = vadd.f32 %v544, %v642
  %v675 = vadd.f32 %v545, %v643
  %v676 = vadd.f32 %v546, %v644
  %v677 = vadd.f32 %v547, %v645
  %v678 = vadd.f32 %v548, %v646
  %v679 = vadd.f32 %v549, %v647
  %v680 = vadd.f32 %v550, %v648
  %v681 = vadd.f32 %v551, %v649
  %v682 = vadd.f32 %v552, %v650
  %v683 = vadd.f32 %v553, %v651
  %v684 = vadd.f32 %v554, %v652
  %v685 = vadd.f32 %v555, %v653
  %v686 = vadd.f32 %v556, %v654
  %v687 = vadd.f32 %v557, %v655
  %v688 = vadd.f32 %v558, %v656
  %v689 = vadd.f32 %v559, %v657
  %690 = vset.pattern.permute.xlu0 4
  %691 = vperm.xlu0 %690, %v170
  %v692 = vpop.permute.xlu0 %691
  %694 = vset.pattern.permute.xlu0 4
  %695 = vperm.xlu0 %694, %v171
  %v696 = vpop.permute.xlu0 %695
  %698 = vset.pattern.permute.xlu0 4
  %699 = vperm.xlu0 %698, %v172
  %v700 = vpop.permute.xlu0 %699
  %702 = vset.pattern.permute.xlu0 4
  %703 = vperm.xlu0 %702, %v173
  %v704 = vpop.permute.xlu0 %703
  %706 = vset.pattern.permute.xlu0 4
  %707 = vperm.xlu0 %706, %v174
  %v708 = vpop.permute.xlu0 %707
  %710 = vset.pattern.permute.xlu0 4
  %711 = vperm.xlu0 %710, %v175
  %v712 = vpop.permute.xlu0 %711
  %714 = vset.pattern.permute.xlu0 4
  %715 = vperm.xlu0 %714, %v176
  %v716 = vpop.permute.xlu0 %715
  %718 = vset.pattern.permute.xlu0 4
  %719 = vperm.xlu0 %718, %v177
  %v720 = vpop.permute.xlu0 %719
  %722 = vset.pattern.permute.xlu0 4
  %723 = vperm.xlu0 %722, %v178
  %v724 = vpop.permute.xlu0 %723
  %726 = vset.pattern.permute.xlu0 4
  %727 = vperm.xlu0 %726, %v179
  %v728 = vpop.permute.xlu0 %727
  %730 = vset.pattern.permute.xlu0 4
  %731 = vperm.xlu0 %730, %v180
  %v732 = vpop.permute.xlu0 %731
  %734 = vset.pattern.permute.xlu0 4
  %735 = vperm.xlu0 %734, %v181
  %v736 = vpop.permute.xlu0 %735
  %738 = vset.pattern.permute.xlu0 4
  %739 = vperm.xlu0 %738, %v182
  %v740 = vpop.permute.xlu0 %739
  %742 = vset.pattern.permute.xlu0 4
  %743 = vperm.xlu0 %742, %v183
  %v744 = vpop.permute.xlu0 %743
  %746 = vset.pattern.permute.xlu0 4
  %747 = vperm.xlu0 %746, %v184
  %v748 = vpop.permute.xlu0 %747
  %750 = vset.pattern.permute.xlu0 4
  %751 = vperm.xlu0 %750, %v185
  %v752 = vpop.permute.xlu0 %751
  %v754 = vperm.slane %v168, 4
  %v755 = vperm.slane %v169, 4
  %v756 = vmul.f32 %v692, %v754
  %v757 = vmul.f32 %v692, %v755
  %v758 = vmul.f32 %v696, %v754
  %v759 = vmul.f32 %v696, %v755
  %v760 = vmul.f32 %v700, %v754
  %v761 = vmul.f32 %v700, %v755
  %v762 = vmul.f32 %v704, %v754
  %v763 = vmul.f32 %v704, %v755
  %v764 = vmul.f32 %v708, %v754
  %v765 = vmul.f32 %v708, %v755
  %v766 = vmul.f32 %v712, %v754
  %v767 = vmul.f32 %v712, %v755
  %v768 = vmul.f32 %v716, %v754
  %v769 = vmul.f32 %v716, %v755
  %v770 = vmul.f32 %v720, %v754
  %v771 = vmul.f32 %v720, %v755
  %v772 = vmul.f32 %v724, %v754
  %v773 = vmul.f32 %v724, %v755
  %v774 = vmul.f32 %v728, %v754
  %v775 = vmul.f32 %v728, %v755
  %v776 = vmul.f32 %v732, %v754
  %v777 = vmul.f32 %v732, %v755
  %v778 = vmul.f32 %v736, %v754
  %v779 = vmul.f32 %v736, %v755
  %v780 = vmul.f32 %v740, %v754
  %v781 = vmul.f32 %v740, %v755
  %v782 = vmul.f32 %v744, %v754
  %v783 = vmul.f32 %v744, %v755
  %v784 = vmul.f32 %v748, %v754
  %v785 = vmul.f32 %v748, %v755
  %v786 = vmul.f32 %v752, %v754
  %v787 = vmul.f32 %v752, %v755
  %v788 = vadd.f32 %v658, %v756
  %v789 = vadd.f32 %v659, %v757
  %v790 = vadd.f32 %v660, %v758
  %v791 = vadd.f32 %v661, %v759
  %v792 = vadd.f32 %v662, %v760
  %v793 = vadd.f32 %v663, %v761
  %v794 = vadd.f32 %v664, %v762
  %v795 = vadd.f32 %v665, %v763
  %v796 = vadd.f32 %v666, %v764
  %v797 = vadd.f32 %v667, %v765
  %v798 = vadd.f32 %v668, %v766
  %v799 = vadd.f32 %v669, %v767
  %v800 = vadd.f32 %v670, %v768
  %v801 = vadd.f32 %v671, %v769
  %v802 = vadd.f32 %v672, %v770
  %v803 = vadd.f32 %v673, %v771
  %v804 = vadd.f32 %v674, %v772
  %v805 = vadd.f32 %v675, %v773
  %v806 = vadd.f32 %v676, %v774
  %v807 = vadd.f32 %v677, %v775
  %v808 = vadd.f32 %v678, %v776
  %v809 = vadd.f32 %v679, %v777
  %v810 = vadd.f32 %v680, %v778
  %v811 = vadd.f32 %v681, %v779
  %v812 = vadd.f32 %v682, %v780
  %v813 = vadd.f32 %v683, %v781
  %v814 = vadd.f32 %v684, %v782
  %v815 = vadd.f32 %v685, %v783
  %v816 = vadd.f32 %v686, %v784
  %v817 = vadd.f32 %v687, %v785
  %v818 = vadd.f32 %v688, %v786
  %v819 = vadd.f32 %v689, %v787
  %820 = vset.pattern.permute.xlu0 5
  %821 = vperm.xlu0 %820, %v170
  %v822 = vpop.permute.xlu0 %821
  %824 = vset.pattern.permute.xlu0 5
  %825 = vperm.xlu0 %824, %v171
  %v826 = vpop.permute.xlu0 %825
  %828 = vset.pattern.permute.xlu0 5
  %829 = vperm.xlu0 %828, %v172
  %v830 = vpop.permute.xlu0 %829
  %832 = vset.pattern.permute.xlu0 5
  %833 = vperm.xlu0 %832, %v173
  %v834 = vpop.permute.xlu0 %833
  %836 = vset.pattern.permute.xlu0 5
  %837 = vperm.xlu0 %836, %v174
  %v838 = vpop.permute.xlu0 %837
  %840 = vset.pattern.permute.xlu0 5
  %841 = vperm.xlu0 %840, %v175
  %v842 = vpop.permute.xlu0 %841
  %844 = vset.pattern.permute.xlu0 5
  %845 = vperm.xlu0 %844, %v176
  %v846 = vpop.permute.xlu0 %845
  %848 = vset.pattern.permute.xlu0 5
  %849 = vperm.xlu0 %848, %v177
  %v850 = vpop.permute.xlu0 %849
  %852 = vset.pattern.permute.xlu0 5
  %853 = vperm.xlu0 %852, %v178
  %v854 = vpop.permute.xlu0 %853
  %856 = vset.pattern.permute.xlu0 5
  %857 = vperm.xlu0 %856, %v179
  %v858 = vpop.permute.xlu0 %857
  %860 = vset.pattern.permute.xlu0 5
  %861 = vperm.xlu0 %860, %v180
  %v862 = vpop.permute.xlu0 %861
  %864 = vset.pattern.permute.xlu0 5
  %865 = vperm.xlu0 %864, %v181
  %v866 = vpop.permute.xlu0 %865
  %868 = vset.pattern.permute.xlu0 5
  %869 = vperm.xlu0 %868, %v182
  %v870 = vpop.permute.xlu0 %869
  %872 = vset.pattern.permute.xlu0 5
  %873 = vperm.xlu0 %872, %v183
  %v874 = vpop.permute.xlu0 %873
  %876 = vset.pattern.permute.xlu0 5
  %877 = vperm.xlu0 %876, %v184
  %v878 = vpop.permute.xlu0 %877
  %880 = vset.pattern.permute.xlu0 5
  %881 = vperm.xlu0 %880, %v185
  %v882 = vpop.permute.xlu0 %881
  %v884 = vperm.slane %v168, 5
  %v885 = vperm.slane %v169, 5
  %v886 = vmul.f32 %v822, %v884
  %v887 = vmul.f32 %v822, %v885
  %v888 = vmul.f32 %v826, %v884
  %v889 = vmul.f32 %v826, %v885
  %v890 = vmul.f32 %v830, %v884
  %v891 = vmul.f32 %v830, %v885
  %v892 = vmul.f32 %v834, %v884
  %v893 = vmul.f32 %v834, %v885
  %v894 = vmul.f32 %v838, %v884
  %v895 = vmul.f32 %v838, %v885
  %v896 = vmul.f32 %v842, %v884
  %v897 = vmul.f32 %v842, %v885
  %v898 = vmul.f32 %v846, %v884
  %v899 = vmul.f32 %v846, %v885
  %v900 = vmul.f32 %v850, %v884
  %v901 = vmul.f32 %v850, %v885
  %v902 = vmul.f32 %v854, %v884
  %v903 = vmul.f32 %v854, %v885
  %v904 = vmul.f32 %v858, %v884
  %v905 = vmul.f32 %v858, %v885
  %v906 = vmul.f32 %v862, %v884
  %v907 = vmul.f32 %v862, %v885
  %v908 = vmul.f32 %v866, %v884
  %v909 = vmul.f32 %v866, %v885
  %v910 = vmul.f32 %v870, %v884
  %v911 = vmul.f32 %v870, %v885
  %v912 = vmul.f32 %v874, %v884
  %v913 = vmul.f32 %v874, %v885
  %v914 = vmul.f32 %v878, %v884
  %v915 = vmul.f32 %v878, %v885
  %v916 = vmul.f32 %v882, %v884
  %v917 = vmul.f32 %v882, %v885
  %v918 = vadd.f32 %v788, %v886
  %v919 = vadd.f32 %v789, %v887
  %v920 = vadd.f32 %v790, %v888
  %v921 = vadd.f32 %v791, %v889
  %v922 = vadd.f32 %v792, %v890
  %v923 = vadd.f32 %v793, %v891
  %v924 = vadd.f32 %v794, %v892
  %v925 = vadd.f32 %v795, %v893
  %v926 = vadd.f32 %v796, %v894
  %v927 = vadd.f32 %v797, %v895
  %v928 = vadd.f32 %v798, %v896
  %v929 = vadd.f32 %v799, %v897
  %v930 = vadd.f32 %v800, %v898
  %v931 = vadd.f32 %v801, %v899
  %v932 = vadd.f32 %v802, %v900
  %v933 = vadd.f32 %v803, %v901
  %v934 = vadd.f32 %v804, %v902
  %v935 = vadd.f32 %v805, %v903
  %v936 = vadd.f32 %v806, %v904
  %v937 = vadd.f32 %v807, %v905
  %v938 = vadd.f32 %v808, %v906
  %v939 = vadd.f32 %v809, %v907
  %v940 = vadd.f32 %v810, %v908
  %v941 = vadd.f32 %v811, %v909
  %v942 = vadd.f32 %v812, %v910
  %v943 = vadd.f32 %v813, %v911
  %v944 = vadd.f32 %v814, %v912
  %v945 = vadd.f32 %v815, %v913
  %v946 = vadd.f32 %v816, %v914
  %v947 = vadd.f32 %v817, %v915
  %v948 = vadd.f32 %v818, %v916
  %v949 = vadd.f32 %v819, %v917
  %v950 = vld [vmem:[%s6] sm:$0xff]
  %v951 = vld [vmem:[%s6 + $0x8] sm:$0xff]
  %v952 = vld [vmem:[%s6 + $0x10] sm:$0xff]
  %v953 = vld [vmem:[%s6 + $0x18] sm:$0xff]
  %v954 = vld [vmem:[%s6 + $0x20] sm:$0xff]
  %v955 = vld [vmem:[%s6 + $0x28] sm:$0xff]
  %v956 = vld [vmem:[%s6 + $0x30] sm:$0xff]
  %v957 = vld [vmem:[%s6 + $0x38] sm:$0xff]
  %v958 = vld [vmem:[%s6 + $0x40] sm:$0xff]
  %v959 = vld [vmem:[%s6 + $0x48] sm:$0xff]
  %v960 = vld [vmem:[%s6 + $0x50] sm:$0xff]
  %v961 = vld [vmem:[%s6 + $0x58] sm:$0xff]
  %v962 = vld [vmem:[%s6 + $0x60] sm:$0xff]
  %v963 = vld [vmem:[%s6 + $0x68] sm:$0xff]
  %v964 = vld [vmem:[%s6 + $0x70] sm:$0xff]
  %v965 = vld [vmem:[%s6 + $0x78] sm:$0xff]
  %967 = vset.pattern.permute.xlu0 0
  %968 = vperm.xlu0 %967, %v950
  %v969 = vpop.permute.xlu0 %968
  %972 = vset.pattern.permute.xlu0 0
  %973 = vperm.xlu0 %972, %v951
  %v974 = vpop.permute.xlu0 %973
  %977 = vset.pattern.permute.xlu0 0
  %978 = vperm.xlu0 %977, %v952
  %v979 = vpop.permute.xlu0 %978
  %982 = vset.pattern.permute.xlu0 0
  %983 = vperm.xlu0 %982, %v953
  %v984 = vpop.permute.xlu0 %983
  %987 = vset.pattern.permute.xlu0 0
  %988 = vperm.xlu0 %987, %v954
  %v989 = vpop.permute.xlu0 %988
  %992 = vset.pattern.permute.xlu0 0
  %993 = vperm.xlu0 %992, %v955
  %v994 = vpop.permute.xlu0 %993
  %997 = vset.pattern.permute.xlu0 0
  %998 = vperm.xlu0 %997, %v956
  %v999 = vpop.permute.xlu0 %998
  %1002 = vset.pattern.permute.xlu0 0
  %1003 = vperm.xlu0 %1002, %v957
  %v1004 = vpop.permute.xlu0 %1003
  %1007 = vset.pattern.permute.xlu0 0
  %1008 = vperm.xlu0 %1007, %v958
  %v1009 = vpop.permute.xlu0 %1008
  %1012 = vset.pattern.permute.xlu0 0
  %1013 = vperm.xlu0 %1012, %v959
  %v1014 = vpop.permute.xlu0 %1013
  %1017 = vset.pattern.permute.xlu0 0
  %1018 = vperm.xlu0 %1017, %v960
  %v1019 = vpop.permute.xlu0 %1018
  %1022 = vset.pattern.permute.xlu0 0
  %1023 = vperm.xlu0 %1022, %v961
  %v1024 = vpop.permute.xlu0 %1023
  %1027 = vset.pattern.permute.xlu0 0
  %1028 = vperm.xlu0 %1027, %v962
  %v1029 = vpop.permute.xlu0 %1028
  %1032 = vset.pattern.permute.xlu0 0
  %1033 = vperm.xlu0 %1032, %v963
  %v1034 = vpop.permute.xlu0 %1033
  %1037 = vset.pattern.permute.xlu0 0
  %1038 = vperm.xlu0 %1037, %v964
  %v1039 = vpop.permute.xlu0 %1038
  %1042 = vset.pattern.permute.xlu0 0
  %1043 = vperm.xlu0 %1042, %v965
  %v1044 = vpop.permute.xlu0 %1043
  %v1046 = vadd.f32 %v918, %v969
  %v1047 = vadd.f32 %v919, %v969
  %v1048 = vadd.f32 %v920, %v974
  %v1049 = vadd.f32 %v921, %v974
  %v1050 = vadd.f32 %v922, %v979
  %v1051 = vadd.f32 %v923, %v979
  %v1052 = vadd.f32 %v924, %v984
  %v1053 = vadd.f32 %v925, %v984
  %v1054 = vadd.f32 %v926, %v989
  %v1055 = vadd.f32 %v927, %v989
  %v1056 = vadd.f32 %v928, %v994
  %v1057 = vadd.f32 %v929, %v994
  %v1058 = vadd.f32 %v930, %v999
  %v1059 = vadd.f32 %v931, %v999
  %v1060 = vadd.f32 %v932, %v1004
  %v1061 = vadd.f32 %v933, %v1004
  %v1062 = vadd.f32 %v934, %v1009
  %v1063 = vadd.f32 %v935, %v1009
  %v1064 = vadd.f32 %v936, %v1014
  %v1065 = vadd.f32 %v937, %v1014
  %v1066 = vadd.f32 %v938, %v1019
  %v1067 = vadd.f32 %v939, %v1019
  %v1068 = vadd.f32 %v940, %v1024
  %v1069 = vadd.f32 %v941, %v1024
  %v1070 = vadd.f32 %v942, %v1029
  %v1071 = vadd.f32 %v943, %v1029
  %v1072 = vadd.f32 %v944, %v1034
  %v1073 = vadd.f32 %v945, %v1034
  %v1074 = vadd.f32 %v946, %v1039
  %v1075 = vadd.f32 %v947, %v1039
  %v1076 = vadd.f32 %v948, %v1044
  %v1077 = vadd.f32 %v949, %v1044
  %v1078 = vpack.c.bf16 %v1047, %v1046
  %v1079 = vpack.c.bf16 %v1049, %v1048
  %v1080 = vpack.c.bf16 %v1051, %v1050
  %v1081 = vpack.c.bf16 %v1053, %v1052
  %v1082 = vpack.c.bf16 %v1055, %v1054
  %v1083 = vpack.c.bf16 %v1057, %v1056
  %v1084 = vpack.c.bf16 %v1059, %v1058
  %v1085 = vpack.c.bf16 %v1061, %v1060
  %v1086 = vld [vmem:[%s3] sm:$0xff]
  %v1087 = vld [vmem:[%s3 + $0x8] sm:$0xff]
  %v1088 = vld [vmem:[%s3 + $0x10] sm:$0xff]
  %v1089 = vld [vmem:[%s3 + $0x18] sm:$0xff]
  %v1090 = vld [vmem:[%s3 + $0x20] sm:$0xff]
  %v1091 = vld [vmem:[%s3 + $0x28] sm:$0xff]
  %v1092 = vld [vmem:[%s3 + $0x30] sm:$0xff]
  %v1093 = vld [vmem:[%s3 + $0x38] sm:$0xff]
  %v1094 = vld [vmem:[%s3 + $0x40] sm:$0xff]
  %v1095 = vld [vmem:[%s3 + $0x48] sm:$0xff]
  %v1096 = vld [vmem:[%s3 + $0x50] sm:$0xff]
  %v1097 = vld [vmem:[%s3 + $0x58] sm:$0xff]
  %v1098 = vld [vmem:[%s3 + $0x60] sm:$0xff]
  %v1099 = vld [vmem:[%s3 + $0x68] sm:$0xff]
  %v1100 = vld [vmem:[%s3 + $0x70] sm:$0xff]
  %v1101 = vld [vmem:[%s3 + $0x78] sm:$0xff]
  %v1102 = vld [vmem:[%s3 + $0x80] sm:$0xff]
  %v1103 = vld [vmem:[%s3 + $0x88] sm:$0xff]
  %v1104 = vld [vmem:[%s3 + $0x90] sm:$0xff]
  %v1105 = vld [vmem:[%s3 + $0x98] sm:$0xff]
  %v1106 = vld [vmem:[%s3 + $0xa0] sm:$0xff]
  %v1107 = vld [vmem:[%s3 + $0xa8] sm:$0xff]
  %v1108 = vld [vmem:[%s3 + $0xb0] sm:$0xff]
  %v1109 = vld [vmem:[%s3 + $0xb8] sm:$0xff]
  %v1110 = vld [vmem:[%s3 + $0xc0] sm:$0xff]
  %v1111 = vld [vmem:[%s3 + $0xc8] sm:$0xff]
  %v1112 = vld [vmem:[%s3 + $0xd0] sm:$0xff]
  %v1113 = vld [vmem:[%s3 + $0xd8] sm:$0xff]
  %v1114 = vld [vmem:[%s3 + $0xe0] sm:$0xff]
  %v1115 = vld [vmem:[%s3 + $0xe8] sm:$0xff]
  %v1116 = vld [vmem:[%s3 + $0xf0] sm:$0xff]
  %v1117 = vld [vmem:[%s3 + $0xf8] sm:$0xff]
  %v1118 = vld [vmem:[%s3 + $0x100] sm:$0xff]
  %v1119 = vld [vmem:[%s3 + $0x108] sm:$0xff]
  %v1120 = vld [vmem:[%s3 + $0x110] sm:$0xff]
  %v1121 = vld [vmem:[%s3 + $0x118] sm:$0xff]
  %v1122 = vld [vmem:[%s3 + $0x120] sm:$0xff]
  %v1123 = vld [vmem:[%s3 + $0x128] sm:$0xff]
  %v1124 = vld [vmem:[%s3 + $0x130] sm:$0xff]
  %v1125 = vld [vmem:[%s3 + $0x138] sm:$0xff]
  %v1126 = vld [vmem:[%s3 + $0x140] sm:$0xff]
  %v1127 = vld [vmem:[%s3 + $0x148] sm:$0xff]
  %v1128 = vld [vmem:[%s3 + $0x150] sm:$0xff]
  %v1129 = vld [vmem:[%s3 + $0x158] sm:$0xff]
  %v1130 = vld [vmem:[%s3 + $0x160] sm:$0xff]
  %v1131 = vld [vmem:[%s3 + $0x168] sm:$0xff]
  %v1132 = vld [vmem:[%s3 + $0x170] sm:$0xff]
  %v1133 = vld [vmem:[%s3 + $0x178] sm:$0xff]
  %v1134 = vld [vmem:[%s3 + $0x180] sm:$0xff]
  %v1135 = vld [vmem:[%s3 + $0x188] sm:$0xff]
  %v1136 = vld [vmem:[%s3 + $0x190] sm:$0xff]
  %v1137 = vld [vmem:[%s3 + $0x198] sm:$0xff]
  %v1138 = vld [vmem:[%s3 + $0x1a0] sm:$0xff]
  %v1139 = vld [vmem:[%s3 + $0x1a8] sm:$0xff]
  %v1140 = vld [vmem:[%s3 + $0x1b0] sm:$0xff]
  %v1141 = vld [vmem:[%s3 + $0x1b8] sm:$0xff]
  %v1142 = vld [vmem:[%s3 + $0x1c0] sm:$0xff]
  %v1143 = vld [vmem:[%s3 + $0x1c8] sm:$0xff]
  %v1144 = vld [vmem:[%s3 + $0x1d0] sm:$0xff]
  %v1145 = vld [vmem:[%s3 + $0x1d8] sm:$0xff]
  %v1146 = vld [vmem:[%s3 + $0x1e0] sm:$0xff]
  %v1147 = vld [vmem:[%s3 + $0x1e8] sm:$0xff]
  %v1148 = vld [vmem:[%s3 + $0x1f0] sm:$0xff]
  %v1149 = vld [vmem:[%s3 + $0x1f8] sm:$0xff]
  %v1158 = vunpack.c.l.b16 %v1078
  %v1159 = vunpack.c.h.b16 %v1078
  %v1160 = vunpack.c.l.b16 %v1079
  %v1161 = vunpack.c.h.b16 %v1079
  %v1162 = vunpack.c.l.b16 %v1080
  %v1163 = vunpack.c.h.b16 %v1080
  %v1164 = vunpack.c.l.b16 %v1081
  %v1165 = vunpack.c.h.b16 %v1081
  %v1166 = vunpack.c.l.b16 %v1082
  %v1167 = vunpack.c.h.b16 %v1082
  %v1168 = vunpack.c.l.b16 %v1083
  %v1169 = vunpack.c.h.b16 %v1083
  %v1170 = vunpack.c.l.b16 %v1084
  %v1171 = vunpack.c.h.b16 %v1084
  %v1172 = vunpack.c.l.b16 %v1085
  %v1173 = vunpack.c.h.b16 %v1085
  %v1174 = vpack.c.b16 %v1160, %v1158
  %v1175 = vpack.c.b16 %v1161, %v1159
  %v1176 = vpack.c.b16 %v1164, %v1162
  %v1177 = vpack.c.b16 %v1165, %v1163
  %v1178 = vpack.c.b16 %v1168, %v1166
  %v1179 = vpack.c.b16 %v1169, %v1167
  %v1180 = vpack.c.b16 %v1172, %v1170
  %v1181 = vpack.c.b16 %v1173, %v1171
  %v1254 = vunpack.c.l.b16 %v1086
  %v1255 = vunpack.c.h.b16 %v1086
  %v1256 = vunpack.c.l.b16 %v1087
  %v1257 = vunpack.c.h.b16 %v1087
  %v1258 = vunpack.c.l.b16 %v1088
  %v1259 = vunpack.c.h.b16 %v1088
  %v1260 = vunpack.c.l.b16 %v1089
  %v1261 = vunpack.c.h.b16 %v1089
  %v1262 = vunpack.c.l.b16 %v1090
  %v1263 = vunpack.c.h.b16 %v1090
  %v1264 = vunpack.c.l.b16 %v1091
  %v1265 = vunpack.c.h.b16 %v1091
  %v1266 = vunpack.c.l.b16 %v1092
  %v1267 = vunpack.c.h.b16 %v1092
  %v1268 = vunpack.c.l.b16 %v1093
  %v1269 = vunpack.c.h.b16 %v1093
  %v1270 = vunpack.c.l.b16 %v1094
  %v1271 = vunpack.c.h.b16 %v1094
  %v1272 = vunpack.c.l.b16 %v1095
  %v1273 = vunpack.c.h.b16 %v1095
  %v1274 = vunpack.c.l.b16 %v1096
  %v1275 = vunpack.c.h.b16 %v1096
  %v1276 = vunpack.c.l.b16 %v1097
  %v1277 = vunpack.c.h.b16 %v1097
  %v1278 = vunpack.c.l.b16 %v1098
  %v1279 = vunpack.c.h.b16 %v1098
  %v1280 = vunpack.c.l.b16 %v1099
  %v1281 = vunpack.c.h.b16 %v1099
  %v1282 = vunpack.c.l.b16 %v1100
  %v1283 = vunpack.c.h.b16 %v1100
  %v1284 = vunpack.c.l.b16 %v1101
  %v1285 = vunpack.c.h.b16 %v1101
  %v1286 = vunpack.c.l.b16 %v1102
  %v1287 = vunpack.c.h.b16 %v1102
  %v1288 = vunpack.c.l.b16 %v1103
  %v1289 = vunpack.c.h.b16 %v1103
  %v1290 = vunpack.c.l.b16 %v1104
  %v1291 = vunpack.c.h.b16 %v1104
  %v1292 = vunpack.c.l.b16 %v1105
  %v1293 = vunpack.c.h.b16 %v1105
  %v1294 = vunpack.c.l.b16 %v1106
  %v1295 = vunpack.c.h.b16 %v1106
  %v1296 = vunpack.c.l.b16 %v1107
  %v1297 = vunpack.c.h.b16 %v1107
  %v1298 = vunpack.c.l.b16 %v1108
  %v1299 = vunpack.c.h.b16 %v1108
  %v1300 = vunpack.c.l.b16 %v1109
  %v1301 = vunpack.c.h.b16 %v1109
  %v1302 = vunpack.c.l.b16 %v1110
  %v1303 = vunpack.c.h.b16 %v1110
  %v1304 = vunpack.c.l.b16 %v1111
  %v1305 = vunpack.c.h.b16 %v1111
  %v1306 = vunpack.c.l.b16 %v1112
  %v1307 = vunpack.c.h.b16 %v1112
  %v1308 = vunpack.c.l.b16 %v1113
  %v1309 = vunpack.c.h.b16 %v1113
  %v1310 = vunpack.c.l.b16 %v1114
  %v1311 = vunpack.c.h.b16 %v1114
  %v1312 = vunpack.c.l.b16 %v1115
  %v1313 = vunpack.c.h.b16 %v1115
  %v1314 = vunpack.c.l.b16 %v1116
  %v1315 = vunpack.c.h.b16 %v1116
  %v1316 = vunpack.c.l.b16 %v1117
  %v1317 = vunpack.c.h.b16 %v1117
  %v1318 = vunpack.c.l.b16 %v1118
  %v1319 = vunpack.c.h.b16 %v1118
  %v1320 = vunpack.c.l.b16 %v1119
  %v1321 = vunpack.c.h.b16 %v1119
  %v1322 = vunpack.c.l.b16 %v1120
  %v1323 = vunpack.c.h.b16 %v1120
  %v1324 = vunpack.c.l.b16 %v1121
  %v1325 = vunpack.c.h.b16 %v1121
  %v1326 = vunpack.c.l.b16 %v1122
  %v1327 = vunpack.c.h.b16 %v1122
  %v1328 = vunpack.c.l.b16 %v1123
  %v1329 = vunpack.c.h.b16 %v1123
  %v1330 = vunpack.c.l.b16 %v1124
  %v1331 = vunpack.c.h.b16 %v1124
  %v1332 = vunpack.c.l.b16 %v1125
  %v1333 = vunpack.c.h.b16 %v1125
  %v1334 = vunpack.c.l.b16 %v1126
  %v1335 = vunpack.c.h.b16 %v1126
  %v1336 = vunpack.c.l.b16 %v1127
  %v1337 = vunpack.c.h.b16 %v1127
  %v1338 = vunpack.c.l.b16 %v1128
  %v1339 = vunpack.c.h.b16 %v1128
  %v1340 = vunpack.c.l.b16 %v1129
  %v1341 = vunpack.c.h.b16 %v1129
  %v1342 = vunpack.c.l.b16 %v1130
  %v1343 = vunpack.c.h.b16 %v1130
  %v1344 = vunpack.c.l.b16 %v1131
  %v1345 = vunpack.c.h.b16 %v1131
  %v1346 = vunpack.c.l.b16 %v1132
  %v1347 = vunpack.c.h.b16 %v1132
  %v1348 = vunpack.c.l.b16 %v1133
  %v1349 = vunpack.c.h.b16 %v1133
  %v1350 = vunpack.c.l.b16 %v1134
  %v1351 = vunpack.c.h.b16 %v1134
  %v1352 = vunpack.c.l.b16 %v1135
  %v1353 = vunpack.c.h.b16 %v1135
  %v1354 = vunpack.c.l.b16 %v1136
  %v1355 = vunpack.c.h.b16 %v1136
  %v1356 = vunpack.c.l.b16 %v1137
  %v1357 = vunpack.c.h.b16 %v1137
  %v1358 = vunpack.c.l.b16 %v1138
  %v1359 = vunpack.c.h.b16 %v1138
  %v1360 = vunpack.c.l.b16 %v1139
  %v1361 = vunpack.c.h.b16 %v1139
  %v1362 = vunpack.c.l.b16 %v1140
  %v1363 = vunpack.c.h.b16 %v1140
  %v1364 = vunpack.c.l.b16 %v1141
  %v1365 = vunpack.c.h.b16 %v1141
  %v1366 = vunpack.c.l.b16 %v1142
  %v1367 = vunpack.c.h.b16 %v1142
  %v1368 = vunpack.c.l.b16 %v1143
  %v1369 = vunpack.c.h.b16 %v1143
  %v1370 = vunpack.c.l.b16 %v1144
  %v1371 = vunpack.c.h.b16 %v1144
  %v1372 = vunpack.c.l.b16 %v1145
  %v1373 = vunpack.c.h.b16 %v1145
  %v1374 = vunpack.c.l.b16 %v1146
  %v1375 = vunpack.c.h.b16 %v1146
  %v1376 = vunpack.c.l.b16 %v1147
  %v1377 = vunpack.c.h.b16 %v1147
  %v1378 = vunpack.c.l.b16 %v1148
  %v1379 = vunpack.c.h.b16 %v1148
  %v1380 = vunpack.c.l.b16 %v1149
  %v1381 = vunpack.c.h.b16 %v1149
  %v1382 = vpack.c.b16 %v1258, %v1254
  %v1383 = vpack.c.b16 %v1259, %v1255
  %v1384 = vpack.c.b16 %v1260, %v1256
  %v1385 = vpack.c.b16 %v1261, %v1257
  %v1386 = vpack.c.b16 %v1266, %v1262
  %v1387 = vpack.c.b16 %v1267, %v1263
  %v1388 = vpack.c.b16 %v1268, %v1264
  %v1389 = vpack.c.b16 %v1269, %v1265
  %v1390 = vpack.c.b16 %v1274, %v1270
  %v1391 = vpack.c.b16 %v1275, %v1271
  %v1392 = vpack.c.b16 %v1276, %v1272
  %v1393 = vpack.c.b16 %v1277, %v1273
  %v1394 = vpack.c.b16 %v1282, %v1278
  %v1395 = vpack.c.b16 %v1283, %v1279
  %v1396 = vpack.c.b16 %v1284, %v1280
  %v1397 = vpack.c.b16 %v1285, %v1281
  %v1398 = vpack.c.b16 %v1290, %v1286
  %v1399 = vpack.c.b16 %v1291, %v1287
  %v1400 = vpack.c.b16 %v1292, %v1288
  %v1401 = vpack.c.b16 %v1293, %v1289
  %v1402 = vpack.c.b16 %v1298, %v1294
  %v1403 = vpack.c.b16 %v1299, %v1295
  %v1404 = vpack.c.b16 %v1300, %v1296
  %v1405 = vpack.c.b16 %v1301, %v1297
  %v1406 = vpack.c.b16 %v1306, %v1302
  %v1407 = vpack.c.b16 %v1307, %v1303
  %v1408 = vpack.c.b16 %v1308, %v1304
  %v1409 = vpack.c.b16 %v1309, %v1305
  %v1410 = vpack.c.b16 %v1314, %v1310
  %v1411 = vpack.c.b16 %v1315, %v1311
  %v1412 = vpack.c.b16 %v1316, %v1312
  %v1413 = vpack.c.b16 %v1317, %v1313
  %v1414 = vpack.c.b16 %v1322, %v1318
  %v1415 = vpack.c.b16 %v1323, %v1319
  %v1416 = vpack.c.b16 %v1324, %v1320
  %v1417 = vpack.c.b16 %v1325, %v1321
  %v1418 = vpack.c.b16 %v1330, %v1326
  %v1419 = vpack.c.b16 %v1331, %v1327
  %v1420 = vpack.c.b16 %v1332, %v1328
  %v1421 = vpack.c.b16 %v1333, %v1329
  %v1422 = vpack.c.b16 %v1338, %v1334
  %v1423 = vpack.c.b16 %v1339, %v1335
  %v1424 = vpack.c.b16 %v1340, %v1336
  %v1425 = vpack.c.b16 %v1341, %v1337
  %v1426 = vpack.c.b16 %v1346, %v1342
  %v1427 = vpack.c.b16 %v1347, %v1343
  %v1428 = vpack.c.b16 %v1348, %v1344
  %v1429 = vpack.c.b16 %v1349, %v1345
  %v1430 = vpack.c.b16 %v1354, %v1350
  %v1431 = vpack.c.b16 %v1355, %v1351
  %v1432 = vpack.c.b16 %v1356, %v1352
  %v1433 = vpack.c.b16 %v1357, %v1353
  %v1434 = vpack.c.b16 %v1362, %v1358
  %v1435 = vpack.c.b16 %v1363, %v1359
  %v1436 = vpack.c.b16 %v1364, %v1360
  %v1437 = vpack.c.b16 %v1365, %v1361
  %v1438 = vpack.c.b16 %v1370, %v1366
  %v1439 = vpack.c.b16 %v1371, %v1367
  %v1440 = vpack.c.b16 %v1372, %v1368
  %v1441 = vpack.c.b16 %v1373, %v1369
  %v1442 = vpack.c.b16 %v1378, %v1374
  %v1443 = vpack.c.b16 %v1379, %v1375
  %v1444 = vpack.c.b16 %v1380, %v1376
  %v1445 = vpack.c.b16 %v1381, %v1377
  %1510 = vmatpush.bf16.msra.mxu0 %v1410
  %1511 = vmatpush.bf16.msra.mxu0 %v1406
  %1512 = vmatpush.bf16.msra.mxu0 %v1402
  %1513 = vmatpush.bf16.msra.mxu0 %v1398
  %1514 = vmatpush.bf16.msra.mxu0 %v1394
  %1515 = vmatpush.bf16.msra.mxu0 %v1390
  %1516 = vmatpush.bf16.msra.mxu0 %v1386
  %1517 = vmatpush.bf16.msra.mxu0 %v1382
  %1518 = vmatmul.bf16.gmra.mxu0 %v1174
  %v1519 = vpop.f32.mrf.mxu0
  %v1520 = vadd.f32 0.0, %v1519
  %v1521 = vpop.f32.mrf.mxu0
  %v1522 = vadd.f32 0.0, %v1521
  %1523 = vmatmul.bf16.gmra.mxu0 %v1176
  %v1524 = vpop.f32.mrf.mxu0
  %v1525 = vadd.f32 0.0, %v1524
  %v1526 = vpop.f32.mrf.mxu0
  %v1527 = vadd.f32 0.0, %v1526
  %1528 = vmatmul.bf16.gmra.mxu0 %v1178
  %v1529 = vpop.f32.mrf.mxu0
  %v1530 = vadd.f32 0.0, %v1529
  %v1531 = vpop.f32.mrf.mxu0
  %v1532 = vadd.f32 0.0, %v1531
  %1533 = vmatmul.bf16.gmra.mxu0 %v1180
  %v1534 = vpop.f32.mrf.mxu0
  %v1535 = vadd.f32 0.0, %v1534
  %v1536 = vpop.f32.mrf.mxu0
  %v1537 = vadd.f32 0.0, %v1536
  %1538 = vdwg.mxu0
  %1539 = vmatpush.bf16.msra.mxu0 %v1442
  %1540 = vmatpush.bf16.msra.mxu0 %v1438
  %1541 = vmatpush.bf16.msra.mxu0 %v1434
  %1542 = vmatpush.bf16.msra.mxu0 %v1430
  %1543 = vmatpush.bf16.msra.mxu0 %v1426
  %1544 = vmatpush.bf16.msra.mxu0 %v1422
  %1545 = vmatpush.bf16.msra.mxu0 %v1418
  %1546 = vmatpush.bf16.msra.mxu0 %v1414
  %1547 = vmatmul.bf16.gmra.mxu0 %v1175
  %v1548 = vpop.f32.mrf.mxu0
  %v1549 = vadd.f32 %v1520, %v1548
  %v1550 = vpop.f32.mrf.mxu0
  %v1551 = vadd.f32 %v1522, %v1550
  %1552 = vmatmul.bf16.gmra.mxu0 %v1177
  %v1553 = vpop.f32.mrf.mxu0
  %v1554 = vadd.f32 %v1525, %v1553
  %v1555 = vpop.f32.mrf.mxu0
  %v1556 = vadd.f32 %v1527, %v1555
  %1557 = vmatmul.bf16.gmra.mxu0 %v1179
  %v1558 = vpop.f32.mrf.mxu0
  %v1559 = vadd.f32 %v1530, %v1558
  %v1560 = vpop.f32.mrf.mxu0
  %v1561 = vadd.f32 %v1532, %v1560
  %1562 = vmatmul.bf16.gmra.mxu0 %v1181
  %v1563 = vpop.f32.mrf.mxu0
  %v1564 = vadd.f32 %v1535, %v1563
  %v1565 = vpop.f32.mrf.mxu0
  %v1566 = vadd.f32 %v1537, %v1565
  %1567 = vdwg.mxu0
  %1568 = vmatpush.bf16.msra.mxu0 %v1411
  %1569 = vmatpush.bf16.msra.mxu0 %v1407
  %1570 = vmatpush.bf16.msra.mxu0 %v1403
  %1571 = vmatpush.bf16.msra.mxu0 %v1399
  %1572 = vmatpush.bf16.msra.mxu0 %v1395
  %1573 = vmatpush.bf16.msra.mxu0 %v1391
  %1574 = vmatpush.bf16.msra.mxu0 %v1387
  %1575 = vmatpush.bf16.msra.mxu0 %v1383
  %1576 = vmatmul.bf16.gmra.mxu0 %v1174
  %v1577 = vpop.f32.mrf.mxu0
  %v1578 = vadd.f32 0.0, %v1577
  %v1579 = vpop.f32.mrf.mxu0
  %v1580 = vadd.f32 0.0, %v1579
  %1581 = vmatmul.bf16.gmra.mxu0 %v1176
  %v1582 = vpop.f32.mrf.mxu0
  %v1583 = vadd.f32 0.0, %v1582
  %v1584 = vpop.f32.mrf.mxu0
  %v1585 = vadd.f32 0.0, %v1584
  %1586 = vmatmul.bf16.gmra.mxu0 %v1178
  %v1587 = vpop.f32.mrf.mxu0
  %v1588 = vadd.f32 0.0, %v1587
  %v1589 = vpop.f32.mrf.mxu0
  %v1590 = vadd.f32 0.0, %v1589
  %1591 = vmatmul.bf16.gmra.mxu0 %v1180
  %v1592 = vpop.f32.mrf.mxu0
  %v1593 = vadd.f32 0.0, %v1592
  %v1594 = vpop.f32.mrf.mxu0
  %v1595 = vadd.f32 0.0, %v1594
  %1596 = vdwg.mxu0
  %1597 = vmatpush.bf16.msra.mxu0 %v1443
  %1598 = vmatpush.bf16.msra.mxu0 %v1439
  %1599 = vmatpush.bf16.msra.mxu0 %v1435
  %1600 = vmatpush.bf16.msra.mxu0 %v1431
  %1601 = vmatpush.bf16.msra.mxu0 %v1427
  %1602 = vmatpush.bf16.msra.mxu0 %v1423
  %1603 = vmatpush.bf16.msra.mxu0 %v1419
  %1604 = vmatpush.bf16.msra.mxu0 %v1415
  %1605 = vmatmul.bf16.gmra.mxu0 %v1175
  %v1606 = vpop.f32.mrf.mxu0
  %v1607 = vadd.f32 %v1578, %v1606
  %v1608 = vpop.f32.mrf.mxu0
  %v1609 = vadd.f32 %v1580, %v1608
  %1610 = vmatmul.bf16.gmra.mxu0 %v1177
  %v1611 = vpop.f32.mrf.mxu0
  %v1612 = vadd.f32 %v1583, %v1611
  %v1613 = vpop.f32.mrf.mxu0
  %v1614 = vadd.f32 %v1585, %v1613
  %1615 = vmatmul.bf16.gmra.mxu0 %v1179
  %v1616 = vpop.f32.mrf.mxu0
  %v1617 = vadd.f32 %v1588, %v1616
  %v1618 = vpop.f32.mrf.mxu0
  %v1619 = vadd.f32 %v1590, %v1618
  %1620 = vmatmul.bf16.gmra.mxu0 %v1181
  %v1621 = vpop.f32.mrf.mxu0
  %v1622 = vadd.f32 %v1593, %v1621
  %v1623 = vpop.f32.mrf.mxu0
  %v1624 = vadd.f32 %v1595, %v1623
  %1625 = vdwg.mxu0
  %1626 = vmatpush.bf16.msra.mxu0 %v1412
  %1627 = vmatpush.bf16.msra.mxu0 %v1408
  %1628 = vmatpush.bf16.msra.mxu0 %v1404
  %1629 = vmatpush.bf16.msra.mxu0 %v1400
  %1630 = vmatpush.bf16.msra.mxu0 %v1396
  %1631 = vmatpush.bf16.msra.mxu0 %v1392
  %1632 = vmatpush.bf16.msra.mxu0 %v1388
  %1633 = vmatpush.bf16.msra.mxu0 %v1384
  %1634 = vmatmul.bf16.gmra.mxu0 %v1174
  %v1635 = vpop.f32.mrf.mxu0
  %v1636 = vadd.f32 0.0, %v1635
  %v1637 = vpop.f32.mrf.mxu0
  %v1638 = vadd.f32 0.0, %v1637
  %1639 = vmatmul.bf16.gmra.mxu0 %v1176
  %v1640 = vpop.f32.mrf.mxu0
  %v1641 = vadd.f32 0.0, %v1640
  %v1642 = vpop.f32.mrf.mxu0
  %v1643 = vadd.f32 0.0, %v1642
  %1644 = vmatmul.bf16.gmra.mxu0 %v1178
  %v1645 = vpop.f32.mrf.mxu0
  %v1646 = vadd.f32 0.0, %v1645
  %v1647 = vpop.f32.mrf.mxu0
  %v1648 = vadd.f32 0.0, %v1647
  %1649 = vmatmul.bf16.gmra.mxu0 %v1180
  %v1650 = vpop.f32.mrf.mxu0
  %v1651 = vadd.f32 0.0, %v1650
  %v1652 = vpop.f32.mrf.mxu0
  %v1653 = vadd.f32 0.0, %v1652
  %1654 = vdwg.mxu0
  %1655 = vmatpush.bf16.msra.mxu0 %v1444
  %1656 = vmatpush.bf16.msra.mxu0 %v1440
  %1657 = vmatpush.bf16.msra.mxu0 %v1436
  %1658 = vmatpush.bf16.msra.mxu0 %v1432
  %1659 = vmatpush.bf16.msra.mxu0 %v1428
  %1660 = vmatpush.bf16.msra.mxu0 %v1424
  %1661 = vmatpush.bf16.msra.mxu0 %v1420
  %1662 = vmatpush.bf16.msra.mxu0 %v1416
  %1663 = vmatmul.bf16.gmra.mxu0 %v1175
  %v1664 = vpop.f32.mrf.mxu0
  %v1665 = vadd.f32 %v1636, %v1664
  %v1666 = vpop.f32.mrf.mxu0
  %v1667 = vadd.f32 %v1638, %v1666
  %1668 = vmatmul.bf16.gmra.mxu0 %v1177
  %v1669 = vpop.f32.mrf.mxu0
  %v1670 = vadd.f32 %v1641, %v1669
  %v1671 = vpop.f32.mrf.mxu0
  %v1672 = vadd.f32 %v1643, %v1671
  %1673 = vmatmul.bf16.gmra.mxu0 %v1179
  %v1674 = vpop.f32.mrf.mxu0
  %v1675 = vadd.f32 %v1646, %v1674
  %v1676 = vpop.f32.mrf.mxu0
  %v1677 = vadd.f32 %v1648, %v1676
  %1678 = vmatmul.bf16.gmra.mxu0 %v1181
  %v1679 = vpop.f32.mrf.mxu0
  %v1680 = vadd.f32 %v1651, %v1679
  %v1681 = vpop.f32.mrf.mxu0
  %v1682 = vadd.f32 %v1653, %v1681
  %1683 = vdwg.mxu0
  %1684 = vmatpush.bf16.msra.mxu0 %v1413
  %1685 = vmatpush.bf16.msra.mxu0 %v1409
  %1686 = vmatpush.bf16.msra.mxu0 %v1405
  %1687 = vmatpush.bf16.msra.mxu0 %v1401
  %1688 = vmatpush.bf16.msra.mxu0 %v1397
  %1689 = vmatpush.bf16.msra.mxu0 %v1393
  %1690 = vmatpush.bf16.msra.mxu0 %v1389
  %1691 = vmatpush.bf16.msra.mxu0 %v1385
  %1692 = vmatmul.bf16.gmra.mxu0 %v1174
  %v1693 = vpop.f32.mrf.mxu0
  %v1694 = vadd.f32 0.0, %v1693
  %v1695 = vpop.f32.mrf.mxu0
  %v1696 = vadd.f32 0.0, %v1695
  %1697 = vmatmul.bf16.gmra.mxu0 %v1176
  %v1698 = vpop.f32.mrf.mxu0
  %v1699 = vadd.f32 0.0, %v1698
  %v1700 = vpop.f32.mrf.mxu0
  %v1701 = vadd.f32 0.0, %v1700
  %1702 = vmatmul.bf16.gmra.mxu0 %v1178
  %v1703 = vpop.f32.mrf.mxu0
  %v1704 = vadd.f32 0.0, %v1703
  %v1705 = vpop.f32.mrf.mxu0
  %v1706 = vadd.f32 0.0, %v1705
  %1707 = vmatmul.bf16.gmra.mxu0 %v1180
  %v1708 = vpop.f32.mrf.mxu0
  %v1709 = vadd.f32 0.0, %v1708
  %v1710 = vpop.f32.mrf.mxu0
  %v1711 = vadd.f32 0.0, %v1710
  %1712 = vdwg.mxu0
  %1713 = vmatpush.bf16.msra.mxu0 %v1445
  %1714 = vmatpush.bf16.msra.mxu0 %v1441
  %1715 = vmatpush.bf16.msra.mxu0 %v1437
  %1716 = vmatpush.bf16.msra.mxu0 %v1433
  %1717 = vmatpush.bf16.msra.mxu0 %v1429
  %1718 = vmatpush.bf16.msra.mxu0 %v1425
  %1719 = vmatpush.bf16.msra.mxu0 %v1421
  %1720 = vmatpush.bf16.msra.mxu0 %v1417
  %1721 = vmatmul.bf16.gmra.mxu0 %v1175
  %v1722 = vpop.f32.mrf.mxu0
  %v1723 = vadd.f32 %v1694, %v1722
  %v1724 = vpop.f32.mrf.mxu0
  %v1725 = vadd.f32 %v1696, %v1724
  %1726 = vmatmul.bf16.gmra.mxu0 %v1177
  %v1727 = vpop.f32.mrf.mxu0
  %v1728 = vadd.f32 %v1699, %v1727
  %v1729 = vpop.f32.mrf.mxu0
  %v1730 = vadd.f32 %v1701, %v1729
  %1731 = vmatmul.bf16.gmra.mxu0 %v1179
  %v1732 = vpop.f32.mrf.mxu0
  %v1733 = vadd.f32 %v1704, %v1732
  %v1734 = vpop.f32.mrf.mxu0
  %v1735 = vadd.f32 %v1706, %v1734
  %1736 = vmatmul.bf16.gmra.mxu0 %v1181
  %v1737 = vpop.f32.mrf.mxu0
  %v1738 = vadd.f32 %v1709, %v1737
  %v1739 = vpop.f32.mrf.mxu0
  %v1740 = vadd.f32 %v1711, %v1739
  %1741 = vdwg.mxu0
  %v1742 = vpack.c.bf16 %v1607, %v1549
  %v1743 = vpack.c.bf16 %v1609, %v1551
  %v1744 = vpack.c.bf16 %v1612, %v1554
  %v1745 = vpack.c.bf16 %v1614, %v1556
  %v1746 = vpack.c.bf16 %v1617, %v1559
  %v1747 = vpack.c.bf16 %v1619, %v1561
  %v1748 = vpack.c.bf16 %v1622, %v1564
  %v1749 = vpack.c.bf16 %v1624, %v1566
  %v1750 = vpack.c.bf16 %v1723, %v1665
  %v1751 = vpack.c.bf16 %v1725, %v1667
  %v1752 = vpack.c.bf16 %v1728, %v1670
  %v1753 = vpack.c.bf16 %v1730, %v1672
  %v1754 = vpack.c.bf16 %v1733, %v1675
  %v1755 = vpack.c.bf16 %v1735, %v1677
  %v1756 = vpack.c.bf16 %v1738, %v1680
  %v1757 = vpack.c.bf16 %v1740, %v1682
  %v1758 = vld [vmem:[%s7] sm:$0xff]
  %v1759 = vld [vmem:[%s7 + $0x8] sm:$0xff]
  %v1760 = vld [vmem:[%s7 + $0x10] sm:$0xff]
  %v1761 = vld [vmem:[%s7 + $0x18] sm:$0xff]
  %v1762 = vld [vmem:[%s7 + $0x20] sm:$0xff]
  %v1763 = vld [vmem:[%s7 + $0x28] sm:$0xff]
  %v1764 = vld [vmem:[%s7 + $0x30] sm:$0xff]
  %v1765 = vld [vmem:[%s7 + $0x38] sm:$0xff]
  %v1774 = vunpack.c.l.b16 %v1742
  %v1775 = vunpack.c.h.b16 %v1742
  %v1776 = vunpack.c.l.b16 %v1743
  %v1777 = vunpack.c.h.b16 %v1743
  %v1778 = vunpack.c.l.b16 %v1744
  %v1779 = vunpack.c.h.b16 %v1744
  %v1780 = vunpack.c.l.b16 %v1745
  %v1781 = vunpack.c.h.b16 %v1745
  %v1782 = vunpack.c.l.b16 %v1746
  %v1783 = vunpack.c.h.b16 %v1746
  %v1784 = vunpack.c.l.b16 %v1747
  %v1785 = vunpack.c.h.b16 %v1747
  %v1786 = vunpack.c.l.b16 %v1748
  %v1787 = vunpack.c.h.b16 %v1748
  %v1788 = vunpack.c.l.b16 %v1749
  %v1789 = vunpack.c.h.b16 %v1749
  %v1790 = vpack.c.b16 %v1776, %v1774
  %v1791 = vpack.c.b16 %v1777, %v1775
  %v1792 = vpack.c.b16 %v1780, %v1778
  %v1793 = vpack.c.b16 %v1781, %v1779
  %v1794 = vpack.c.b16 %v1784, %v1782
  %v1795 = vpack.c.b16 %v1785, %v1783
  %v1796 = vpack.c.b16 %v1788, %v1786
  %v1797 = vpack.c.b16 %v1789, %v1787
  %v1814 = vunpack.c.l.b16 %v1750
  %v1815 = vunpack.c.h.b16 %v1750
  %v1816 = vunpack.c.l.b16 %v1751
  %v1817 = vunpack.c.h.b16 %v1751
  %v1818 = vunpack.c.l.b16 %v1752
  %v1819 = vunpack.c.h.b16 %v1752
  %v1820 = vunpack.c.l.b16 %v1753
  %v1821 = vunpack.c.h.b16 %v1753
  %v1822 = vunpack.c.l.b16 %v1754
  %v1823 = vunpack.c.h.b16 %v1754
  %v1824 = vunpack.c.l.b16 %v1755
  %v1825 = vunpack.c.h.b16 %v1755
  %v1826 = vunpack.c.l.b16 %v1756
  %v1827 = vunpack.c.h.b16 %v1756
  %v1828 = vunpack.c.l.b16 %v1757
  %v1829 = vunpack.c.h.b16 %v1757
  %v1830 = vpack.c.b16 %v1816, %v1814
  %v1831 = vpack.c.b16 %v1817, %v1815
  %v1832 = vpack.c.b16 %v1820, %v1818
  %v1833 = vpack.c.b16 %v1821, %v1819
  %v1834 = vpack.c.b16 %v1824, %v1822
  %v1835 = vpack.c.b16 %v1825, %v1823
  %v1836 = vpack.c.b16 %v1828, %v1826
  %v1837 = vpack.c.b16 %v1829, %v1827
  %v1846 = vld [vmem:[%s8] sm:$0xff]
  %v1847 = vld [vmem:[%s8 + $0x8] sm:$0xff]
  %v1848 = vld [vmem:[%s8 + $0x10] sm:$0xff]
  %v1849 = vld [vmem:[%s8 + $0x18] sm:$0xff]
  %v1850 = vld [vmem:[%s8 + $0x20] sm:$0xff]
  %v1851 = vld [vmem:[%s8 + $0x28] sm:$0xff]
  %v1852 = vld [vmem:[%s8 + $0x30] sm:$0xff]
  %v1853 = vld [vmem:[%s8 + $0x38] sm:$0xff]
  %1855 = vset.pattern.permute.xlu0 0
  %1856 = vperm.xlu0 %1855, %v1846
  %v1857 = vpop.permute.xlu0 %1856
  %1860 = vset.pattern.permute.xlu0 0
  %1861 = vperm.xlu0 %1860, %v1847
  %v1862 = vpop.permute.xlu0 %1861
  %1865 = vset.pattern.permute.xlu0 0
  %1866 = vperm.xlu0 %1865, %v1848
  %v1867 = vpop.permute.xlu0 %1866
  %1870 = vset.pattern.permute.xlu0 0
  %1871 = vperm.xlu0 %1870, %v1849
  %v1872 = vpop.permute.xlu0 %1871
  %1875 = vset.pattern.permute.xlu0 0
  %1876 = vperm.xlu0 %1875, %v1850
  %v1877 = vpop.permute.xlu0 %1876
  %1880 = vset.pattern.permute.xlu0 0
  %1881 = vperm.xlu0 %1880, %v1851
  %v1882 = vpop.permute.xlu0 %1881
  %1885 = vset.pattern.permute.xlu0 0
  %1886 = vperm.xlu0 %1885, %v1852
  %v1887 = vpop.permute.xlu0 %1886
  %1890 = vset.pattern.permute.xlu0 0
  %1891 = vperm.xlu0 %1890, %v1853
  %v1892 = vpop.permute.xlu0 %1891
  %v1902 = vunpack.c.l.b16 %v1758
  %v1903 = vunpack.c.h.b16 %v1758
  %v1904 = vunpack.c.l.b16 %v1759
  %v1905 = vunpack.c.h.b16 %v1759
  %v1906 = vunpack.c.l.b16 %v1760
  %v1907 = vunpack.c.h.b16 %v1760
  %v1908 = vunpack.c.l.b16 %v1761
  %v1909 = vunpack.c.h.b16 %v1761
  %v1910 = vunpack.c.l.b16 %v1762
  %v1911 = vunpack.c.h.b16 %v1762
  %v1912 = vunpack.c.l.b16 %v1763
  %v1913 = vunpack.c.h.b16 %v1763
  %v1914 = vunpack.c.l.b16 %v1764
  %v1915 = vunpack.c.h.b16 %v1764
  %v1916 = vunpack.c.l.b16 %v1765
  %v1917 = vunpack.c.h.b16 %v1765
  %v1918 = vpack.c.b16 %v1904, %v1902
  %v1919 = vpack.c.b16 %v1905, %v1903
  %v1920 = vpack.c.b16 %v1908, %v1906
  %v1921 = vpack.c.b16 %v1909, %v1907
  %v1922 = vpack.c.b16 %v1912, %v1910
  %v1923 = vpack.c.b16 %v1913, %v1911
  %v1924 = vpack.c.b16 %v1916, %v1914
  %v1925 = vpack.c.b16 %v1917, %v1915
  %vm1930 = vcmask 523264
  %v1932 = vsel %vm1930, %v1919, 0
  %v1935 = vsel %vm1930, %v1921, 0
  %v1938 = vsel %vm1930, %v1923, 0
  %v1941 = vsel %vm1930, %v1925, 0
  %1943 = vmatpush.bf16.msra.mxu0 %v1796
  %1944 = vmatpush.bf16.msra.mxu0 %v1794
  %1945 = vmatpush.bf16.msra.mxu0 %v1792
  %1946 = vmatpush.bf16.msra.mxu0 %v1790
  %1947 = vmatpush.bf16.msra.mxu0 %v1180
  %1948 = vmatpush.bf16.msra.mxu0 %v1178
  %1949 = vmatpush.bf16.msra.mxu0 %v1176
  %1950 = vmatpush.bf16.msra.mxu0 %v1174
  %1951 = vmatmul.bf16.gmra.mxu0 %v1918
  %v1952 = vpop.f32.mrf.mxu0
  %v1953 = vadd.f32 %v1857, %v1952
  %v1954 = vpop.f32.mrf.mxu0
  %v1955 = vadd.f32 %v1862, %v1954
  %1956 = vmatmul.bf16.gmra.mxu0 %v1920
  %v1957 = vpop.f32.mrf.mxu0
  %v1958 = vadd.f32 %v1867, %v1957
  %v1959 = vpop.f32.mrf.mxu0
  %v1960 = vadd.f32 %v1872, %v1959
  %1961 = vmatmul.bf16.gmra.mxu0 %v1922
  %v1962 = vpop.f32.mrf.mxu0
  %v1963 = vadd.f32 %v1877, %v1962
  %v1964 = vpop.f32.mrf.mxu0
  %v1965 = vadd.f32 %v1882, %v1964
  %1966 = vmatmul.bf16.gmra.mxu0 %v1924
  %v1967 = vpop.f32.mrf.mxu0
  %v1968 = vadd.f32 %v1887, %v1967
  %v1969 = vpop.f32.mrf.mxu0
  %v1970 = vadd.f32 %v1892, %v1969
  %1971 = vdwg.mxu0
  %1972 = vmatpush.bf16.msra.mxu0 0
  %1973 = vmatpush.bf16.msra.mxu0 0
  %1974 = vmatpush.bf16.msra.mxu0 0
  %1975 = vmatpush.bf16.msra.mxu0 0
  %1976 = vmatpush.bf16.msra.mxu0 %v1836
  %1977 = vmatpush.bf16.msra.mxu0 %v1834
  %1978 = vmatpush.bf16.msra.mxu0 %v1832
  %1979 = vmatpush.bf16.msra.mxu0 %v1830
  %1980 = vmatmul.bf16.gmra.mxu0 %v1932
  %v1981 = vpop.f32.mrf.mxu0
  %v1982 = vadd.f32 %v1953, %v1981
  %v1983 = vpop.f32.mrf.mxu0
  %v1984 = vadd.f32 %v1955, %v1983
  %1985 = vmatmul.bf16.gmra.mxu0 %v1935
  %v1986 = vpop.f32.mrf.mxu0
  %v1987 = vadd.f32 %v1958, %v1986
  %v1988 = vpop.f32.mrf.mxu0
  %v1989 = vadd.f32 %v1960, %v1988
  %1990 = vmatmul.bf16.gmra.mxu0 %v1938
  %v1991 = vpop.f32.mrf.mxu0
  %v1992 = vadd.f32 %v1963, %v1991
  %v1993 = vpop.f32.mrf.mxu0
  %v1994 = vadd.f32 %v1965, %v1993
  %1995 = vmatmul.bf16.gmra.mxu0 %v1941
  %v1996 = vpop.f32.mrf.mxu0
  %v1997 = vadd.f32 %v1968, %v1996
  %v1998 = vpop.f32.mrf.mxu0
  %v1999 = vadd.f32 %v1970, %v1998
  %2000 = vdwg.mxu0
  %2001 = vmatpush.bf16.msra.mxu0 %v1797
  %2002 = vmatpush.bf16.msra.mxu0 %v1795
  %2003 = vmatpush.bf16.msra.mxu0 %v1793
  %2004 = vmatpush.bf16.msra.mxu0 %v1791
  %2005 = vmatpush.bf16.msra.mxu0 %v1181
  %2006 = vmatpush.bf16.msra.mxu0 %v1179
  %2007 = vmatpush.bf16.msra.mxu0 %v1177
  %2008 = vmatpush.bf16.msra.mxu0 %v1175
  %2009 = vmatmul.bf16.gmra.mxu0 %v1918
  %v2010 = vpop.f32.mrf.mxu0
  %v2011 = vadd.f32 %v1857, %v2010
  %v2012 = vpop.f32.mrf.mxu0
  %v2013 = vadd.f32 %v1862, %v2012
  %2014 = vmatmul.bf16.gmra.mxu0 %v1920
  %v2015 = vpop.f32.mrf.mxu0
  %v2016 = vadd.f32 %v1867, %v2015
  %v2017 = vpop.f32.mrf.mxu0
  %v2018 = vadd.f32 %v1872, %v2017
  %2019 = vmatmul.bf16.gmra.mxu0 %v1922
  %v2020 = vpop.f32.mrf.mxu0
  %v2021 = vadd.f32 %v1877, %v2020
  %v2022 = vpop.f32.mrf.mxu0
  %v2023 = vadd.f32 %v1882, %v2022
  %2024 = vmatmul.bf16.gmra.mxu0 %v1924
  %v2025 = vpop.f32.mrf.mxu0
  %v2026 = vadd.f32 %v1887, %v2025
  %v2027 = vpop.f32.mrf.mxu0
  %v2028 = vadd.f32 %v1892, %v2027
  %2029 = vdwg.mxu0
  %2030 = vmatpush.bf16.msra.mxu0 0
  %2031 = vmatpush.bf16.msra.mxu0 0
  %2032 = vmatpush.bf16.msra.mxu0 0
  %2033 = vmatpush.bf16.msra.mxu0 0
  %2034 = vmatpush.bf16.msra.mxu0 %v1837
  %2035 = vmatpush.bf16.msra.mxu0 %v1835
  %2036 = vmatpush.bf16.msra.mxu0 %v1833
  %2037 = vmatpush.bf16.msra.mxu0 %v1831
  %2038 = vmatmul.bf16.gmra.mxu0 %v1932
  %v2039 = vpop.f32.mrf.mxu0
  %v2040 = vadd.f32 %v2011, %v2039
  %v2041 = vpop.f32.mrf.mxu0
  %v2042 = vadd.f32 %v2013, %v2041
  %2043 = vmatmul.bf16.gmra.mxu0 %v1935
  %v2044 = vpop.f32.mrf.mxu0
  %v2045 = vadd.f32 %v2016, %v2044
  %v2046 = vpop.f32.mrf.mxu0
  %v2047 = vadd.f32 %v2018, %v2046
  %2048 = vmatmul.bf16.gmra.mxu0 %v1938
  %v2049 = vpop.f32.mrf.mxu0
  %v2050 = vadd.f32 %v2021, %v2049
  %v2051 = vpop.f32.mrf.mxu0
  %v2052 = vadd.f32 %v2023, %v2051
  %2053 = vmatmul.bf16.gmra.mxu0 %v1941
  %v2054 = vpop.f32.mrf.mxu0
  %v2055 = vadd.f32 %v2026, %v2054
  %v2056 = vpop.f32.mrf.mxu0
  %v2057 = vadd.f32 %v2028, %v2056
  %2058 = vdwg.mxu0
  %vm2059 = vcmp.gt.f32.partialorder %v1982, 0.0
  %vm2060 = vcmp.gt.f32.partialorder %v2040, 0.0
  %vm2061 = vcmp.gt.f32.partialorder %v1984, 0.0
  %vm2062 = vcmp.gt.f32.partialorder %v2042, 0.0
  %vm2063 = vcmp.gt.f32.partialorder %v1987, 0.0
  %vm2064 = vcmp.gt.f32.partialorder %v2045, 0.0
  %vm2065 = vcmp.gt.f32.partialorder %v1989, 0.0
  %vm2066 = vcmp.gt.f32.partialorder %v2047, 0.0
  %vm2067 = vcmp.gt.f32.partialorder %v1992, 0.0
  %vm2068 = vcmp.gt.f32.partialorder %v2050, 0.0
  %vm2069 = vcmp.gt.f32.partialorder %v1994, 0.0
  %vm2070 = vcmp.gt.f32.partialorder %v2052, 0.0
  %vm2071 = vcmp.gt.f32.partialorder %v1997, 0.0
  %vm2072 = vcmp.gt.f32.partialorder %v2055, 0.0
  %vm2073 = vcmp.gt.f32.partialorder %v1999, 0.0
  %vm2074 = vcmp.gt.f32.partialorder %v2057, 0.0
  %v2075 = vmul.f32 %v1982, 0.01
  %v2076 = vmul.f32 %v2040, 0.01
  %v2077 = vmul.f32 %v1984, 0.01
  %v2078 = vmul.f32 %v2042, 0.01
  %v2079 = vmul.f32 %v1987, 0.01
  %v2080 = vmul.f32 %v2045, 0.01
  %v2081 = vmul.f32 %v1989, 0.01
  %v2082 = vmul.f32 %v2047, 0.01
  %v2083 = vmul.f32 %v1992, 0.01
  %v2084 = vmul.f32 %v2050, 0.01
  %v2085 = vmul.f32 %v1994, 0.01
  %v2086 = vmul.f32 %v2052, 0.01
  %v2087 = vmul.f32 %v1997, 0.01
  %v2088 = vmul.f32 %v2055, 0.01
  %v2089 = vmul.f32 %v1999, 0.01
  %v2090 = vmul.f32 %v2057, 0.01
  %v2091 = vsel %vm2059, %v1982, %v2075
  %v2092 = vsel %vm2060, %v2040, %v2076
  %v2093 = vsel %vm2061, %v1984, %v2077
  %v2094 = vsel %vm2062, %v2042, %v2078
  %v2095 = vsel %vm2063, %v1987, %v2079
  %v2096 = vsel %vm2064, %v2045, %v2080
  %v2097 = vsel %vm2065, %v1989, %v2081
  %v2098 = vsel %vm2066, %v2047, %v2082
  %v2099 = vsel %vm2067, %v1992, %v2083
  %v2100 = vsel %vm2068, %v2050, %v2084
  %v2101 = vsel %vm2069, %v1994, %v2085
  %v2102 = vsel %vm2070, %v2052, %v2086
  %v2103 = vsel %vm2071, %v1997, %v2087
  %v2104 = vsel %vm2072, %v2055, %v2088
  %v2105 = vsel %vm2073, %v1999, %v2089
  %v2106 = vsel %vm2074, %v2057, %v2090
  %2107 = vrot.lane.b32.xlu0 %v2091, 1
  %v2108 = vpop.permute.xlu0 %2107
  %2109 = vrot.lane.b32.xlu0 %v2093, 1
  %v2110 = vpop.permute.xlu0 %2109
  %2111 = vrot.lane.b32.xlu0 %v2095, 1
  %v2112 = vpop.permute.xlu0 %2111
  %2113 = vrot.lane.b32.xlu0 %v2097, 1
  %v2114 = vpop.permute.xlu0 %2113
  %2115 = vrot.lane.b32.xlu0 %v2099, 1
  %v2116 = vpop.permute.xlu0 %2115
  %2117 = vrot.lane.b32.xlu0 %v2101, 1
  %v2118 = vpop.permute.xlu0 %2117
  %2119 = vrot.lane.b32.xlu0 %v2103, 1
  %v2120 = vpop.permute.xlu0 %2119
  %2121 = vrot.lane.b32.xlu0 %v2105, 1
  %v2122 = vpop.permute.xlu0 %2121
  %2123 = vrot.lane.b32.xlu0 %v2092, 1
  %v2124 = vpop.permute.xlu0 %2123
  %2125 = vrot.lane.b32.xlu0 %v2094, 1
  %v2126 = vpop.permute.xlu0 %2125
  %2127 = vrot.lane.b32.xlu0 %v2096, 1
  %v2128 = vpop.permute.xlu0 %2127
  %2129 = vrot.lane.b32.xlu0 %v2098, 1
  %v2130 = vpop.permute.xlu0 %2129
  %2131 = vrot.lane.b32.xlu0 %v2100, 1
  %v2132 = vpop.permute.xlu0 %2131
  %2133 = vrot.lane.b32.xlu0 %v2102, 1
  %v2134 = vpop.permute.xlu0 %2133
  %2135 = vrot.lane.b32.xlu0 %v2104, 1
  %v2136 = vpop.permute.xlu0 %2135
  %2137 = vrot.lane.b32.xlu0 %v2106, 1
  %v2138 = vpop.permute.xlu0 %2137
  %v2139 = vsel %vm110, %v2108, %v2124
  %v2140 = vsel %vm110, %v2110, %v2126
  %v2141 = vsel %vm110, %v2112, %v2128
  %v2142 = vsel %vm110, %v2114, %v2130
  %v2143 = vsel %vm110, %v2116, %v2132
  %v2144 = vsel %vm110, %v2118, %v2134
  %v2145 = vsel %vm110, %v2120, %v2136
  %v2146 = vsel %vm110, %v2122, %v2138
  %v2147 = vsel %vm110, %v2124, %v2108
  %v2148 = vsel %vm110, %v2126, %v2110
  %v2149 = vsel %vm110, %v2128, %v2112
  %v2150 = vsel %vm110, %v2130, %v2114
  %v2151 = vsel %vm110, %v2132, %v2116
  %v2152 = vsel %vm110, %v2134, %v2118
  %v2153 = vsel %vm110, %v2136, %v2120
  %v2154 = vsel %vm110, %v2138, %v2122
  %v2155 = vmul.f32 %v2147, %v115
  %v2156 = vmul.f32 %v2139, %v116
  %v2157 = vmul.f32 %v2148, %v115
  %v2158 = vmul.f32 %v2140, %v116
  %v2159 = vmul.f32 %v2149, %v115
  %v2160 = vmul.f32 %v2141, %v116
  %v2161 = vmul.f32 %v2150, %v115
  %v2162 = vmul.f32 %v2142, %v116
  %v2163 = vmul.f32 %v2151, %v115
  %v2164 = vmul.f32 %v2143, %v116
  %v2165 = vmul.f32 %v2152, %v115
  %v2166 = vmul.f32 %v2144, %v116
  %v2167 = vmul.f32 %v2153, %v115
  %v2168 = vmul.f32 %v2145, %v116
  %v2169 = vmul.f32 %v2154, %v115
  %v2170 = vmul.f32 %v2146, %v116
  %v2173 = vmul.f32 %v2091, %v124
  %v2174 = vmul.f32 %v2092, %v125
  %v2175 = vmul.f32 %v2093, %v124
  %v2176 = vmul.f32 %v2094, %v125
  %v2177 = vmul.f32 %v2095, %v124
  %v2178 = vmul.f32 %v2096, %v125
  %v2179 = vmul.f32 %v2097, %v124
  %v2180 = vmul.f32 %v2098, %v125
  %v2181 = vmul.f32 %v2099, %v124
  %v2182 = vmul.f32 %v2100, %v125
  %v2183 = vmul.f32 %v2101, %v124
  %v2184 = vmul.f32 %v2102, %v125
  %v2185 = vmul.f32 %v2103, %v124
  %v2186 = vmul.f32 %v2104, %v125
  %v2187 = vmul.f32 %v2105, %v124
  %v2188 = vmul.f32 %v2106, %v125
  %2189 = vrot.lane.b32.xlu0 %v2091, 127
  %v2190 = vpop.permute.xlu0 %2189
  %2191 = vrot.lane.b32.xlu0 %v2093, 127
  %v2192 = vpop.permute.xlu0 %2191
  %2193 = vrot.lane.b32.xlu0 %v2095, 127
  %v2194 = vpop.permute.xlu0 %2193
  %2195 = vrot.lane.b32.xlu0 %v2097, 127
  %v2196 = vpop.permute.xlu0 %2195
  %2197 = vrot.lane.b32.xlu0 %v2099, 127
  %v2198 = vpop.permute.xlu0 %2197
  %2199 = vrot.lane.b32.xlu0 %v2101, 127
  %v2200 = vpop.permute.xlu0 %2199
  %2201 = vrot.lane.b32.xlu0 %v2103, 127
  %v2202 = vpop.permute.xlu0 %2201
  %2203 = vrot.lane.b32.xlu0 %v2105, 127
  %v2204 = vpop.permute.xlu0 %2203
  %2205 = vrot.lane.b32.xlu0 %v2092, 127
  %v2206 = vpop.permute.xlu0 %2205
  %2207 = vrot.lane.b32.xlu0 %v2094, 127
  %v2208 = vpop.permute.xlu0 %2207
  %2209 = vrot.lane.b32.xlu0 %v2096, 127
  %v2210 = vpop.permute.xlu0 %2209
  %2211 = vrot.lane.b32.xlu0 %v2098, 127
  %v2212 = vpop.permute.xlu0 %2211
  %2213 = vrot.lane.b32.xlu0 %v2100, 127
  %v2214 = vpop.permute.xlu0 %2213
  %2215 = vrot.lane.b32.xlu0 %v2102, 127
  %v2216 = vpop.permute.xlu0 %2215
  %2217 = vrot.lane.b32.xlu0 %v2104, 127
  %v2218 = vpop.permute.xlu0 %2217
  %2219 = vrot.lane.b32.xlu0 %v2106, 127
  %v2220 = vpop.permute.xlu0 %2219
  %v2221 = vsel %vm140, %v2190, %v2206
  %v2222 = vsel %vm140, %v2192, %v2208
  %v2223 = vsel %vm140, %v2194, %v2210
  %v2224 = vsel %vm140, %v2196, %v2212
  %v2225 = vsel %vm140, %v2198, %v2214
  %v2226 = vsel %vm140, %v2200, %v2216
  %v2227 = vsel %vm140, %v2202, %v2218
  %v2228 = vsel %vm140, %v2204, %v2220
  %v2229 = vsel %vm140, %v2206, %v2190
  %v2230 = vsel %vm140, %v2208, %v2192
  %v2231 = vsel %vm140, %v2210, %v2194
  %v2232 = vsel %vm140, %v2212, %v2196
  %v2233 = vsel %vm140, %v2214, %v2198
  %v2234 = vsel %vm140, %v2216, %v2200
  %v2235 = vsel %vm140, %v2218, %v2202
  %v2236 = vsel %vm140, %v2220, %v2204
  %v2237 = vmul.f32 %v2221, %v146
  %v2238 = vmul.f32 %v2229, %v147
  %v2239 = vmul.f32 %v2222, %v146
  %v2240 = vmul.f32 %v2230, %v147
  %v2241 = vmul.f32 %v2223, %v146
  %v2242 = vmul.f32 %v2231, %v147
  %v2243 = vmul.f32 %v2224, %v146
  %v2244 = vmul.f32 %v2232, %v147
  %v2245 = vmul.f32 %v2225, %v146
  %v2246 = vmul.f32 %v2233, %v147
  %v2247 = vmul.f32 %v2226, %v146
  %v2248 = vmul.f32 %v2234, %v147
  %v2249 = vmul.f32 %v2227, %v146
  %v2250 = vmul.f32 %v2235, %v147
  %v2251 = vmul.f32 %v2228, %v146
  %v2252 = vmul.f32 %v2236, %v147
  %v2253 = vld [vmem:[%s9] sm:$0xff]
  %v2254 = vld [vmem:[%s9 + $0x8] sm:$0xff]
  %v2255 = vld [vmem:[%s9 + $0x10] sm:$0xff]
  %v2256 = vld [vmem:[%s9 + $0x18] sm:$0xff]
  %v2257 = vld [vmem:[%s9 + $0x20] sm:$0xff]
  %v2258 = vld [vmem:[%s9 + $0x28] sm:$0xff]
  %v2259 = vld [vmem:[%s9 + $0x30] sm:$0xff]
  %v2260 = vld [vmem:[%s9 + $0x38] sm:$0xff]
  %v2261 = vld [vmem:[%s9 + $0x40] sm:$0xff]
  %v2262 = vld [vmem:[%s9 + $0x48] sm:$0xff]
  %v2263 = vld [vmem:[%s9 + $0x50] sm:$0xff]
  %v2264 = vld [vmem:[%s9 + $0x58] sm:$0xff]
  %v2265 = vld [vmem:[%s9 + $0x60] sm:$0xff]
  %v2266 = vld [vmem:[%s9 + $0x68] sm:$0xff]
  %v2267 = vld [vmem:[%s9 + $0x70] sm:$0xff]
  %v2268 = vld [vmem:[%s9 + $0x78] sm:$0xff]
  %v2269 = vpack.c.bf16 %v2157, %v2155
  %v2270 = vpack.c.bf16 %v2158, %v2156
  %v2271 = vpack.c.bf16 %v2161, %v2159
  %v2272 = vpack.c.bf16 %v2162, %v2160
  %v2273 = vpack.c.bf16 %v2165, %v2163
  %v2274 = vpack.c.bf16 %v2166, %v2164
  %v2275 = vpack.c.bf16 %v2169, %v2167
  %v2276 = vpack.c.bf16 %v2170, %v2168
  %v2277 = vpack.c.bf16 %v2175, %v2173
  %v2278 = vpack.c.bf16 %v2176, %v2174
  %v2279 = vpack.c.bf16 %v2179, %v2177
  %v2280 = vpack.c.bf16 %v2180, %v2178
  %v2281 = vpack.c.bf16 %v2183, %v2181
  %v2282 = vpack.c.bf16 %v2184, %v2182
  %v2283 = vpack.c.bf16 %v2187, %v2185
  %v2284 = vpack.c.bf16 %v2188, %v2186
  %v2285 = vpack.c.bf16 %v2239, %v2237
  %v2286 = vpack.c.bf16 %v2240, %v2238
  %v2287 = vpack.c.bf16 %v2243, %v2241
  %v2288 = vpack.c.bf16 %v2244, %v2242
  %v2289 = vpack.c.bf16 %v2247, %v2245
  %v2290 = vpack.c.bf16 %v2248, %v2246
  %v2291 = vpack.c.bf16 %v2251, %v2249
  %v2292 = vpack.c.bf16 %v2252, %v2250
  %v2293 = vld [vmem:[%s10] sm:$0xff]
  %v2294 = vld [vmem:[%s10 + $0x8] sm:$0xff]
  %v2295 = vld [vmem:[%s10 + $0x10] sm:$0xff]
  %v2296 = vld [vmem:[%s10 + $0x18] sm:$0xff]
  %v2297 = vld [vmem:[%s10 + $0x20] sm:$0xff]
  %v2298 = vld [vmem:[%s10 + $0x28] sm:$0xff]
  %v2299 = vld [vmem:[%s10 + $0x30] sm:$0xff]
  %v2300 = vld [vmem:[%s10 + $0x38] sm:$0xff]
  %v2301 = vld [vmem:[%s10 + $0x40] sm:$0xff]
  %v2302 = vld [vmem:[%s10 + $0x48] sm:$0xff]
  %v2303 = vld [vmem:[%s10 + $0x50] sm:$0xff]
  %v2304 = vld [vmem:[%s10 + $0x58] sm:$0xff]
  %v2305 = vld [vmem:[%s10 + $0x60] sm:$0xff]
  %v2306 = vld [vmem:[%s10 + $0x68] sm:$0xff]
  %v2307 = vld [vmem:[%s10 + $0x70] sm:$0xff]
  %v2308 = vld [vmem:[%s10 + $0x78] sm:$0xff]
  %2310 = vset.pattern.permute.xlu0 0
  %2311 = vperm.xlu0 %2310, %v2293
  %v2312 = vpop.permute.xlu0 %2311
  %2315 = vset.pattern.permute.xlu0 0
  %2316 = vperm.xlu0 %2315, %v2294
  %v2317 = vpop.permute.xlu0 %2316
  %2320 = vset.pattern.permute.xlu0 0
  %2321 = vperm.xlu0 %2320, %v2295
  %v2322 = vpop.permute.xlu0 %2321
  %2325 = vset.pattern.permute.xlu0 0
  %2326 = vperm.xlu0 %2325, %v2296
  %v2327 = vpop.permute.xlu0 %2326
  %2330 = vset.pattern.permute.xlu0 0
  %2331 = vperm.xlu0 %2330, %v2297
  %v2332 = vpop.permute.xlu0 %2331
  %2335 = vset.pattern.permute.xlu0 0
  %2336 = vperm.xlu0 %2335, %v2298
  %v2337 = vpop.permute.xlu0 %2336
  %2340 = vset.pattern.permute.xlu0 0
  %2341 = vperm.xlu0 %2340, %v2299
  %v2342 = vpop.permute.xlu0 %2341
  %2345 = vset.pattern.permute.xlu0 0
  %2346 = vperm.xlu0 %2345, %v2300
  %v2347 = vpop.permute.xlu0 %2346
  %2350 = vset.pattern.permute.xlu0 0
  %2351 = vperm.xlu0 %2350, %v2301
  %v2352 = vpop.permute.xlu0 %2351
  %2355 = vset.pattern.permute.xlu0 0
  %2356 = vperm.xlu0 %2355, %v2302
  %v2357 = vpop.permute.xlu0 %2356
  %2360 = vset.pattern.permute.xlu0 0
  %2361 = vperm.xlu0 %2360, %v2303
  %v2362 = vpop.permute.xlu0 %2361
  %2365 = vset.pattern.permute.xlu0 0
  %2366 = vperm.xlu0 %2365, %v2304
  %v2367 = vpop.permute.xlu0 %2366
  %2370 = vset.pattern.permute.xlu0 0
  %2371 = vperm.xlu0 %2370, %v2305
  %v2372 = vpop.permute.xlu0 %2371
  %2375 = vset.pattern.permute.xlu0 0
  %2376 = vperm.xlu0 %2375, %v2306
  %v2377 = vpop.permute.xlu0 %2376
  %2380 = vset.pattern.permute.xlu0 0
  %2381 = vperm.xlu0 %2380, %v2307
  %v2382 = vpop.permute.xlu0 %2381
  %2385 = vset.pattern.permute.xlu0 0
  %2386 = vperm.xlu0 %2385, %v2308
  %v2387 = vpop.permute.xlu0 %2386
  %v2405 = vunpack.c.l.b16 %v2253
  %v2406 = vunpack.c.h.b16 %v2253
  %v2407 = vunpack.c.l.b16 %v2254
  %v2408 = vunpack.c.h.b16 %v2254
  %v2409 = vunpack.c.l.b16 %v2255
  %v2410 = vunpack.c.h.b16 %v2255
  %v2411 = vunpack.c.l.b16 %v2256
  %v2412 = vunpack.c.h.b16 %v2256
  %v2413 = vunpack.c.l.b16 %v2257
  %v2414 = vunpack.c.h.b16 %v2257
  %v2415 = vunpack.c.l.b16 %v2258
  %v2416 = vunpack.c.h.b16 %v2258
  %v2417 = vunpack.c.l.b16 %v2259
  %v2418 = vunpack.c.h.b16 %v2259
  %v2419 = vunpack.c.l.b16 %v2260
  %v2420 = vunpack.c.h.b16 %v2260
  %v2421 = vunpack.c.l.b16 %v2261
  %v2422 = vunpack.c.h.b16 %v2261
  %v2423 = vunpack.c.l.b16 %v2262
  %v2424 = vunpack.c.h.b16 %v2262
  %v2425 = vunpack.c.l.b16 %v2263
  %v2426 = vunpack.c.h.b16 %v2263
  %v2427 = vunpack.c.l.b16 %v2264
  %v2428 = vunpack.c.h.b16 %v2264
  %v2429 = vunpack.c.l.b16 %v2265
  %v2430 = vunpack.c.h.b16 %v2265
  %v2431 = vunpack.c.l.b16 %v2266
  %v2432 = vunpack.c.h.b16 %v2266
  %v2433 = vunpack.c.l.b16 %v2267
  %v2434 = vunpack.c.h.b16 %v2267
  %v2435 = vunpack.c.l.b16 %v2268
  %v2436 = vunpack.c.h.b16 %v2268
  %v2437 = vpack.c.b16 %v2407, %v2405
  %v2438 = vpack.c.b16 %v2408, %v2406
  %v2439 = vpack.c.b16 %v2411, %v2409
  %v2440 = vpack.c.b16 %v2412, %v2410
  %v2441 = vpack.c.b16 %v2415, %v2413
  %v2442 = vpack.c.b16 %v2416, %v2414
  %v2443 = vpack.c.b16 %v2419, %v2417
  %v2444 = vpack.c.b16 %v2420, %v2418
  %v2445 = vpack.c.b16 %v2423, %v2421
  %v2446 = vpack.c.b16 %v2424, %v2422
  %v2447 = vpack.c.b16 %v2427, %v2425
  %v2448 = vpack.c.b16 %v2428, %v2426
  %v2449 = vpack.c.b16 %v2431, %v2429
  %v2450 = vpack.c.b16 %v2432, %v2430
  %v2451 = vpack.c.b16 %v2435, %v2433
  %v2452 = vpack.c.b16 %v2436, %v2434
  %v2462 = vsel %vm1930, %v2438, 0
  %v2465 = vsel %vm1930, %v2440, 0
  %v2468 = vsel %vm1930, %v2442, 0
  %v2471 = vsel %vm1930, %v2444, 0
  %v2474 = vsel %vm1930, %v2446, 0
  %v2477 = vsel %vm1930, %v2448, 0
  %v2480 = vsel %vm1930, %v2450, 0
  %v2483 = vsel %vm1930, %v2452, 0
  %2485 = vmatpush.bf16.msra.mxu0 %v2283
  %2486 = vmatpush.bf16.msra.mxu0 %v2281
  %2487 = vmatpush.bf16.msra.mxu0 %v2279
  %2488 = vmatpush.bf16.msra.mxu0 %v2277
  %2489 = vmatpush.bf16.msra.mxu0 %v2275
  %2490 = vmatpush.bf16.msra.mxu0 %v2273
  %2491 = vmatpush.bf16.msra.mxu0 %v2271
  %2492 = vmatpush.bf16.msra.mxu0 %v2269
  %2493 = vmatmul.bf16.gmra.mxu0 %v2437
  %v2494 = vpop.f32.mrf.mxu0
  %v2495 = vadd.f32 %v2312, %v2494
  %v2496 = vpop.f32.mrf.mxu0
  %v2497 = vadd.f32 %v2317, %v2496
  %2498 = vmatmul.bf16.gmra.mxu0 %v2439
  %v2499 = vpop.f32.mrf.mxu0
  %v2500 = vadd.f32 %v2322, %v2499
  %v2501 = vpop.f32.mrf.mxu0
  %v2502 = vadd.f32 %v2327, %v2501
  %2503 = vmatmul.bf16.gmra.mxu0 %v2441
  %v2504 = vpop.f32.mrf.mxu0
  %v2505 = vadd.f32 %v2332, %v2504
  %v2506 = vpop.f32.mrf.mxu0
  %v2507 = vadd.f32 %v2337, %v2506
  %2508 = vmatmul.bf16.gmra.mxu0 %v2443
  %v2509 = vpop.f32.mrf.mxu0
  %v2510 = vadd.f32 %v2342, %v2509
  %v2511 = vpop.f32.mrf.mxu0
  %v2512 = vadd.f32 %v2347, %v2511
  %2513 = vmatmul.bf16.gmra.mxu0 %v2445
  %v2514 = vpop.f32.mrf.mxu0
  %v2515 = vadd.f32 %v2352, %v2514
  %v2516 = vpop.f32.mrf.mxu0
  %v2517 = vadd.f32 %v2357, %v2516
  %2518 = vmatmul.bf16.gmra.mxu0 %v2447
  %v2519 = vpop.f32.mrf.mxu0
  %v2520 = vadd.f32 %v2362, %v2519
  %v2521 = vpop.f32.mrf.mxu0
  %v2522 = vadd.f32 %v2367, %v2521
  %2523 = vmatmul.bf16.gmra.mxu0 %v2449
  %v2524 = vpop.f32.mrf.mxu0
  %v2525 = vadd.f32 %v2372, %v2524
  %v2526 = vpop.f32.mrf.mxu0
  %v2527 = vadd.f32 %v2377, %v2526
  %2528 = vmatmul.bf16.gmra.mxu0 %v2451
  %v2529 = vpop.f32.mrf.mxu0
  %v2530 = vadd.f32 %v2382, %v2529
  %v2531 = vpop.f32.mrf.mxu0
  %v2532 = vadd.f32 %v2387, %v2531
  %2533 = vdwg.mxu0
  %2534 = vmatpush.bf16.msra.mxu0 0
  %2535 = vmatpush.bf16.msra.mxu0 0
  %2536 = vmatpush.bf16.msra.mxu0 0
  %2537 = vmatpush.bf16.msra.mxu0 0
  %2538 = vmatpush.bf16.msra.mxu0 %v2291
  %2539 = vmatpush.bf16.msra.mxu0 %v2289
  %2540 = vmatpush.bf16.msra.mxu0 %v2287
  %2541 = vmatpush.bf16.msra.mxu0 %v2285
  %2542 = vmatmul.bf16.gmra.mxu0 %v2462
  %v2543 = vpop.f32.mrf.mxu0
  %v2544 = vadd.f32 %v2495, %v2543
  %v2545 = vpop.f32.mrf.mxu0
  %v2546 = vadd.f32 %v2497, %v2545
  %2547 = vmatmul.bf16.gmra.mxu0 %v2465
  %v2548 = vpop.f32.mrf.mxu0
  %v2549 = vadd.f32 %v2500, %v2548
  %v2550 = vpop.f32.mrf.mxu0
  %v2551 = vadd.f32 %v2502, %v2550
  %2552 = vmatmul.bf16.gmra.mxu0 %v2468
  %v2553 = vpop.f32.mrf.mxu0
  %v2554 = vadd.f32 %v2505, %v2553
  %v2555 = vpop.f32.mrf.mxu0
  %v2556 = vadd.f32 %v2507, %v2555
  %2557 = vmatmul.bf16.gmra.mxu0 %v2471
  %v2558 = vpop.f32.mrf.mxu0
  %v2559 = vadd.f32 %v2510, %v2558
  %v2560 = vpop.f32.mrf.mxu0
  %v2561 = vadd.f32 %v2512, %v2560
  %2562 = vmatmul.bf16.gmra.mxu0 %v2474
  %v2563 = vpop.f32.mrf.mxu0
  %v2564 = vadd.f32 %v2515, %v2563
  %v2565 = vpop.f32.mrf.mxu0
  %v2566 = vadd.f32 %v2517, %v2565
  %2567 = vmatmul.bf16.gmra.mxu0 %v2477
  %v2568 = vpop.f32.mrf.mxu0
  %v2569 = vadd.f32 %v2520, %v2568
  %v2570 = vpop.f32.mrf.mxu0
  %v2571 = vadd.f32 %v2522, %v2570
  %2572 = vmatmul.bf16.gmra.mxu0 %v2480
  %v2573 = vpop.f32.mrf.mxu0
  %v2574 = vadd.f32 %v2525, %v2573
  %v2575 = vpop.f32.mrf.mxu0
  %v2576 = vadd.f32 %v2527, %v2575
  %2577 = vmatmul.bf16.gmra.mxu0 %v2483
  %v2578 = vpop.f32.mrf.mxu0
  %v2579 = vadd.f32 %v2530, %v2578
  %v2580 = vpop.f32.mrf.mxu0
  %v2581 = vadd.f32 %v2532, %v2580
  %2582 = vdwg.mxu0
  %2583 = vmatpush.bf16.msra.mxu0 %v2284
  %2584 = vmatpush.bf16.msra.mxu0 %v2282
  %2585 = vmatpush.bf16.msra.mxu0 %v2280
  %2586 = vmatpush.bf16.msra.mxu0 %v2278
  %2587 = vmatpush.bf16.msra.mxu0 %v2276
  %2588 = vmatpush.bf16.msra.mxu0 %v2274
  %2589 = vmatpush.bf16.msra.mxu0 %v2272
  %2590 = vmatpush.bf16.msra.mxu0 %v2270
  %2591 = vmatmul.bf16.gmra.mxu0 %v2437
  %v2592 = vpop.f32.mrf.mxu0
  %v2593 = vadd.f32 %v2312, %v2592
  %v2594 = vpop.f32.mrf.mxu0
  %v2595 = vadd.f32 %v2317, %v2594
  %2596 = vmatmul.bf16.gmra.mxu0 %v2439
  %v2597 = vpop.f32.mrf.mxu0
  %v2598 = vadd.f32 %v2322, %v2597
  %v2599 = vpop.f32.mrf.mxu0
  %v2600 = vadd.f32 %v2327, %v2599
  %2601 = vmatmul.bf16.gmra.mxu0 %v2441
  %v2602 = vpop.f32.mrf.mxu0
  %v2603 = vadd.f32 %v2332, %v2602
  %v2604 = vpop.f32.mrf.mxu0
  %v2605 = vadd.f32 %v2337, %v2604
  %2606 = vmatmul.bf16.gmra.mxu0 %v2443
  %v2607 = vpop.f32.mrf.mxu0
  %v2608 = vadd.f32 %v2342, %v2607
  %v2609 = vpop.f32.mrf.mxu0
  %v2610 = vadd.f32 %v2347, %v2609
  %2611 = vmatmul.bf16.gmra.mxu0 %v2445
  %v2612 = vpop.f32.mrf.mxu0
  %v2613 = vadd.f32 %v2352, %v2612
  %v2614 = vpop.f32.mrf.mxu0
  %v2615 = vadd.f32 %v2357, %v2614
  %2616 = vmatmul.bf16.gmra.mxu0 %v2447
  %v2617 = vpop.f32.mrf.mxu0
  %v2618 = vadd.f32 %v2362, %v2617
  %v2619 = vpop.f32.mrf.mxu0
  %v2620 = vadd.f32 %v2367, %v2619
  %2621 = vmatmul.bf16.gmra.mxu0 %v2449
  %v2622 = vpop.f32.mrf.mxu0
  %v2623 = vadd.f32 %v2372, %v2622
  %v2624 = vpop.f32.mrf.mxu0
  %v2625 = vadd.f32 %v2377, %v2624
  %2626 = vmatmul.bf16.gmra.mxu0 %v2451
  %v2627 = vpop.f32.mrf.mxu0
  %v2628 = vadd.f32 %v2382, %v2627
  %v2629 = vpop.f32.mrf.mxu0
  %v2630 = vadd.f32 %v2387, %v2629
  %2631 = vdwg.mxu0
  %2632 = vmatpush.bf16.msra.mxu0 0
  %2633 = vmatpush.bf16.msra.mxu0 0
  %2634 = vmatpush.bf16.msra.mxu0 0
  %2635 = vmatpush.bf16.msra.mxu0 0
  %2636 = vmatpush.bf16.msra.mxu0 %v2292
  %2637 = vmatpush.bf16.msra.mxu0 %v2290
  %2638 = vmatpush.bf16.msra.mxu0 %v2288
  %2639 = vmatpush.bf16.msra.mxu0 %v2286
  %2640 = vmatmul.bf16.gmra.mxu0 %v2462
  %v2641 = vpop.f32.mrf.mxu0
  %v2642 = vadd.f32 %v2593, %v2641
  %v2643 = vpop.f32.mrf.mxu0
  %v2644 = vadd.f32 %v2595, %v2643
  %2645 = vmatmul.bf16.gmra.mxu0 %v2465
  %v2646 = vpop.f32.mrf.mxu0
  %v2647 = vadd.f32 %v2598, %v2646
  %v2648 = vpop.f32.mrf.mxu0
  %v2649 = vadd.f32 %v2600, %v2648
  %2650 = vmatmul.bf16.gmra.mxu0 %v2468
  %v2651 = vpop.f32.mrf.mxu0
  %v2652 = vadd.f32 %v2603, %v2651
  %v2653 = vpop.f32.mrf.mxu0
  %v2654 = vadd.f32 %v2605, %v2653
  %2655 = vmatmul.bf16.gmra.mxu0 %v2471
  %v2656 = vpop.f32.mrf.mxu0
  %v2657 = vadd.f32 %v2608, %v2656
  %v2658 = vpop.f32.mrf.mxu0
  %v2659 = vadd.f32 %v2610, %v2658
  %2660 = vmatmul.bf16.gmra.mxu0 %v2474
  %v2661 = vpop.f32.mrf.mxu0
  %v2662 = vadd.f32 %v2613, %v2661
  %v2663 = vpop.f32.mrf.mxu0
  %v2664 = vadd.f32 %v2615, %v2663
  %2665 = vmatmul.bf16.gmra.mxu0 %v2477
  %v2666 = vpop.f32.mrf.mxu0
  %v2667 = vadd.f32 %v2618, %v2666
  %v2668 = vpop.f32.mrf.mxu0
  %v2669 = vadd.f32 %v2620, %v2668
  %2670 = vmatmul.bf16.gmra.mxu0 %v2480
  %v2671 = vpop.f32.mrf.mxu0
  %v2672 = vadd.f32 %v2623, %v2671
  %v2673 = vpop.f32.mrf.mxu0
  %v2674 = vadd.f32 %v2625, %v2673
  %2675 = vmatmul.bf16.gmra.mxu0 %v2483
  %v2676 = vpop.f32.mrf.mxu0
  %v2677 = vadd.f32 %v2628, %v2676
  %v2678 = vpop.f32.mrf.mxu0
  %v2679 = vadd.f32 %v2630, %v2678
  %2680 = vdwg.mxu0
  %v2681 = vadd.f32 %v2544, %v1062
  %v2682 = vadd.f32 %v2642, %v1063
  %v2683 = vadd.f32 %v2546, %v1064
  %v2684 = vadd.f32 %v2644, %v1065
  %v2685 = vadd.f32 %v2549, %v1066
  %v2686 = vadd.f32 %v2647, %v1067
  %v2687 = vadd.f32 %v2551, %v1068
  %v2688 = vadd.f32 %v2649, %v1069
  %v2689 = vadd.f32 %v2554, %v1070
  %v2690 = vadd.f32 %v2652, %v1071
  %v2691 = vadd.f32 %v2556, %v1072
  %v2692 = vadd.f32 %v2654, %v1073
  %v2693 = vadd.f32 %v2559, %v1074
  %v2694 = vadd.f32 %v2657, %v1075
  %v2695 = vadd.f32 %v2561, %v1076
  %v2696 = vadd.f32 %v2659, %v1077
  %v2697 = vxor.u32 %v2564, 2147483648
  %v2698 = vxor.u32 %v2662, 2147483648
  %v2699 = vxor.u32 %v2566, 2147483648
  %v2700 = vxor.u32 %v2664, 2147483648
  %v2701 = vxor.u32 %v2569, 2147483648
  %v2702 = vxor.u32 %v2667, 2147483648
  %v2703 = vxor.u32 %v2571, 2147483648
  %v2704 = vxor.u32 %v2669, 2147483648
  %v2705 = vxor.u32 %v2574, 2147483648
  %v2706 = vxor.u32 %v2672, 2147483648
  %v2707 = vxor.u32 %v2576, 2147483648
  %v2708 = vxor.u32 %v2674, 2147483648
  %v2709 = vxor.u32 %v2579, 2147483648
  %v2710 = vxor.u32 %v2677, 2147483648
  %v2711 = vxor.u32 %v2581, 2147483648
  %v2712 = vxor.u32 %v2679, 2147483648
  %v2713 = vmul.f32 %v2697, 1.442695
  %v2714 = vpow.pop %v2713
  %v2715 = vmul.f32 %v2698, 1.442695
  %v2716 = vpow.pop %v2715
  %v2717 = vmul.f32 %v2699, 1.442695
  %v2718 = vpow.pop %v2717
  %v2719 = vmul.f32 %v2700, 1.442695
  %v2720 = vpow.pop %v2719
  %v2721 = vmul.f32 %v2701, 1.442695
  %v2722 = vpow.pop %v2721
  %v2723 = vmul.f32 %v2702, 1.442695
  %v2724 = vpow.pop %v2723
  %v2725 = vmul.f32 %v2703, 1.442695
  %v2726 = vpow.pop %v2725
  %v2727 = vmul.f32 %v2704, 1.442695
  %v2728 = vpow.pop %v2727
  %v2729 = vmul.f32 %v2705, 1.442695
  %v2730 = vpow.pop %v2729
  %v2731 = vmul.f32 %v2706, 1.442695
  %v2732 = vpow.pop %v2731
  %v2733 = vmul.f32 %v2707, 1.442695
  %v2734 = vpow.pop %v2733
  %v2735 = vmul.f32 %v2708, 1.442695
  %v2736 = vpow.pop %v2735
  %v2737 = vmul.f32 %v2709, 1.442695
  %v2738 = vpow.pop %v2737
  %v2739 = vmul.f32 %v2710, 1.442695
  %v2740 = vpow.pop %v2739
  %v2741 = vmul.f32 %v2711, 1.442695
  %v2742 = vpow.pop %v2741
  %v2743 = vmul.f32 %v2712, 1.442695
  %v2744 = vpow.pop %v2743
  %v2745 = vadd.f32 %v2714, 1.0
  %v2746 = vadd.f32 %v2716, 1.0
  %v2747 = vadd.f32 %v2718, 1.0
  %v2748 = vadd.f32 %v2720, 1.0
  %v2749 = vadd.f32 %v2722, 1.0
  %v2750 = vadd.f32 %v2724, 1.0
  %v2751 = vadd.f32 %v2726, 1.0
  %v2752 = vadd.f32 %v2728, 1.0
  %v2753 = vadd.f32 %v2730, 1.0
  %v2754 = vadd.f32 %v2732, 1.0
  %v2755 = vadd.f32 %v2734, 1.0
  %v2756 = vadd.f32 %v2736, 1.0
  %v2757 = vadd.f32 %v2738, 1.0
  %v2758 = vadd.f32 %v2740, 1.0
  %v2759 = vadd.f32 %v2742, 1.0
  %v2760 = vadd.f32 %v2744, 1.0
  %v2761 = vrcp.pop %v2745
  %v2762 = vmul.f32 %v2745, %v2761
  %v2763 = vsub.f32 1.0, %v2762
  %v2764 = vmul.f32 %v2761, %v2763
  %v2765 = vadd.f32 %v2761, %v2764
  %vm2766 = vweird.f32 %v2745
  %vm2767 = vweird.f32 %v2761
  %vm2768 = vmor %vm2766, %vm2767
  %v2769 = vsel %vm2768, %v2761, %v2765
  %v2770 = vand.u32 2147483647, %v2745
  %vm2771 = vcmp.eq.f32.partialorder %v2770, 8.507059e+37
  %v2772 = vand.u32 %v2745, 2147483648
  %v2773 = vor.u32 1.1754944e-38, %v2772
  %v2774 = vsel %vm2771, %v2773, %v2769
  %v2775 = vmul.f32 1.0, %v2774
  %v2776 = vrcp.pop %v2746
  %v2777 = vmul.f32 %v2746, %v2776
  %v2778 = vsub.f32 1.0, %v2777
  %v2779 = vmul.f32 %v2776, %v2778
  %v2780 = vadd.f32 %v2776, %v2779
  %vm2781 = vweird.f32 %v2746
  %vm2782 = vweird.f32 %v2776
  %vm2783 = vmor %vm2781, %vm2782
  %v2784 = vsel %vm2783, %v2776, %v2780
  %v2785 = vand.u32 2147483647, %v2746
  %vm2786 = vcmp.eq.f32.partialorder %v2785, 8.507059e+37
  %v2787 = vand.u32 %v2746, 2147483648
  %v2788 = vor.u32 1.1754944e-38, %v2787
  %v2789 = vsel %vm2786, %v2788, %v2784
  %v2790 = vmul.f32 1.0, %v2789
  %v2791 = vrcp.pop %v2747
  %v2792 = vmul.f32 %v2747, %v2791
  %v2793 = vsub.f32 1.0, %v2792
  %v2794 = vmul.f32 %v2791, %v2793
  %v2795 = vadd.f32 %v2791, %v2794
  %vm2796 = vweird.f32 %v2747
  %vm2797 = vweird.f32 %v2791
  %vm2798 = vmor %vm2796, %vm2797
  %v2799 = vsel %vm2798, %v2791, %v2795
  %v2800 = vand.u32 2147483647, %v2747
  %vm2801 = vcmp.eq.f32.partialorder %v2800, 8.507059e+37
  %v2802 = vand.u32 %v2747, 2147483648
  %v2803 = vor.u32 1.1754944e-38, %v2802
  %v2804 = vsel %vm2801, %v2803, %v2799
  %v2805 = vmul.f32 1.0, %v2804
  %v2806 = vrcp.pop %v2748
  %v2807 = vmul.f32 %v2748, %v2806
  %v2808 = vsub.f32 1.0, %v2807
  %v2809 = vmul.f32 %v2806, %v2808
  %v2810 = vadd.f32 %v2806, %v2809
  %vm2811 = vweird.f32 %v2748
  %vm2812 = vweird.f32 %v2806
  %vm2813 = vmor %vm2811, %vm2812
  %v2814 = vsel %vm2813, %v2806, %v2810
  %v2815 = vand.u32 2147483647, %v2748
  %vm2816 = vcmp.eq.f32.partialorder %v2815, 8.507059e+37
  %v2817 = vand.u32 %v2748, 2147483648
  %v2818 = vor.u32 1.1754944e-38, %v2817
  %v2819 = vsel %vm2816, %v2818, %v2814
  %v2820 = vmul.f32 1.0, %v2819
  %v2821 = vrcp.pop %v2749
  %v2822 = vmul.f32 %v2749, %v2821
  %v2823 = vsub.f32 1.0, %v2822
  %v2824 = vmul.f32 %v2821, %v2823
  %v2825 = vadd.f32 %v2821, %v2824
  %vm2826 = vweird.f32 %v2749
  %vm2827 = vweird.f32 %v2821
  %vm2828 = vmor %vm2826, %vm2827
  %v2829 = vsel %vm2828, %v2821, %v2825
  %v2830 = vand.u32 2147483647, %v2749
  %vm2831 = vcmp.eq.f32.partialorder %v2830, 8.507059e+37
  %v2832 = vand.u32 %v2749, 2147483648
  %v2833 = vor.u32 1.1754944e-38, %v2832
  %v2834 = vsel %vm2831, %v2833, %v2829
  %v2835 = vmul.f32 1.0, %v2834
  %v2836 = vrcp.pop %v2750
  %v2837 = vmul.f32 %v2750, %v2836
  %v2838 = vsub.f32 1.0, %v2837
  %v2839 = vmul.f32 %v2836, %v2838
  %v2840 = vadd.f32 %v2836, %v2839
  %vm2841 = vweird.f32 %v2750
  %vm2842 = vweird.f32 %v2836
  %vm2843 = vmor %vm2841, %vm2842
  %v2844 = vsel %vm2843, %v2836, %v2840
  %v2845 = vand.u32 2147483647, %v2750
  %vm2846 = vcmp.eq.f32.partialorder %v2845, 8.507059e+37
  %v2847 = vand.u32 %v2750, 2147483648
  %v2848 = vor.u32 1.1754944e-38, %v2847
  %v2849 = vsel %vm2846, %v2848, %v2844
  %v2850 = vmul.f32 1.0, %v2849
  %v2851 = vrcp.pop %v2751
  %v2852 = vmul.f32 %v2751, %v2851
  %v2853 = vsub.f32 1.0, %v2852
  %v2854 = vmul.f32 %v2851, %v2853
  %v2855 = vadd.f32 %v2851, %v2854
  %vm2856 = vweird.f32 %v2751
  %vm2857 = vweird.f32 %v2851
  %vm2858 = vmor %vm2856, %vm2857
  %v2859 = vsel %vm2858, %v2851, %v2855
  %v2860 = vand.u32 2147483647, %v2751
  %vm2861 = vcmp.eq.f32.partialorder %v2860, 8.507059e+37
  %v2862 = vand.u32 %v2751, 2147483648
  %v2863 = vor.u32 1.1754944e-38, %v2862
  %v2864 = vsel %vm2861, %v2863, %v2859
  %v2865 = vmul.f32 1.0, %v2864
  %v2866 = vrcp.pop %v2752
  %v2867 = vmul.f32 %v2752, %v2866
  %v2868 = vsub.f32 1.0, %v2867
  %v2869 = vmul.f32 %v2866, %v2868
  %v2870 = vadd.f32 %v2866, %v2869
  %vm2871 = vweird.f32 %v2752
  %vm2872 = vweird.f32 %v2866
  %vm2873 = vmor %vm2871, %vm2872
  %v2874 = vsel %vm2873, %v2866, %v2870
  %v2875 = vand.u32 2147483647, %v2752
  %vm2876 = vcmp.eq.f32.partialorder %v2875, 8.507059e+37
  %v2877 = vand.u32 %v2752, 2147483648
  %v2878 = vor.u32 1.1754944e-38, %v2877
  %v2879 = vsel %vm2876, %v2878, %v2874
  %v2880 = vmul.f32 1.0, %v2879
  %v2881 = vrcp.pop %v2753
  %v2882 = vmul.f32 %v2753, %v2881
  %v2883 = vsub.f32 1.0, %v2882
  %v2884 = vmul.f32 %v2881, %v2883
  %v2885 = vadd.f32 %v2881, %v2884
  %vm2886 = vweird.f32 %v2753
  %vm2887 = vweird.f32 %v2881
  %vm2888 = vmor %vm2886, %vm2887
  %v2889 = vsel %vm2888, %v2881, %v2885
  %v2890 = vand.u32 2147483647, %v2753
  %vm2891 = vcmp.eq.f32.partialorder %v2890, 8.507059e+37
  %v2892 = vand.u32 %v2753, 2147483648
  %v2893 = vor.u32 1.1754944e-38, %v2892
  %v2894 = vsel %vm2891, %v2893, %v2889
  %v2895 = vmul.f32 1.0, %v2894
  %v2896 = vrcp.pop %v2754
  %v2897 = vmul.f32 %v2754, %v2896
  %v2898 = vsub.f32 1.0, %v2897
  %v2899 = vmul.f32 %v2896, %v2898
  %v2900 = vadd.f32 %v2896, %v2899
  %vm2901 = vweird.f32 %v2754
  %vm2902 = vweird.f32 %v2896
  %vm2903 = vmor %vm2901, %vm2902
  %v2904 = vsel %vm2903, %v2896, %v2900
  %v2905 = vand.u32 2147483647, %v2754
  %vm2906 = vcmp.eq.f32.partialorder %v2905, 8.507059e+37
  %v2907 = vand.u32 %v2754, 2147483648
  %v2908 = vor.u32 1.1754944e-38, %v2907
  %v2909 = vsel %vm2906, %v2908, %v2904
  %v2910 = vmul.f32 1.0, %v2909
  %v2911 = vrcp.pop %v2755
  %v2912 = vmul.f32 %v2755, %v2911
  %v2913 = vsub.f32 1.0, %v2912
  %v2914 = vmul.f32 %v2911, %v2913
  %v2915 = vadd.f32 %v2911, %v2914
  %vm2916 = vweird.f32 %v2755
  %vm2917 = vweird.f32 %v2911
  %vm2918 = vmor %vm2916, %vm2917
  %v2919 = vsel %vm2918, %v2911, %v2915
  %v2920 = vand.u32 2147483647, %v2755
  %vm2921 = vcmp.eq.f32.partialorder %v2920, 8.507059e+37
  %v2922 = vand.u32 %v2755, 2147483648
  %v2923 = vor.u32 1.1754944e-38, %v2922
  %v2924 = vsel %vm2921, %v2923, %v2919
  %v2925 = vmul.f32 1.0, %v2924
  %v2926 = vrcp.pop %v2756
  %v2927 = vmul.f32 %v2756, %v2926
  %v2928 = vsub.f32 1.0, %v2927
  %v2929 = vmul.f32 %v2926, %v2928
  %v2930 = vadd.f32 %v2926, %v2929
  %vm2931 = vweird.f32 %v2756
  %vm2932 = vweird.f32 %v2926
  %vm2933 = vmor %vm2931, %vm2932
  %v2934 = vsel %vm2933, %v2926, %v2930
  %v2935 = vand.u32 2147483647, %v2756
  %vm2936 = vcmp.eq.f32.partialorder %v2935, 8.507059e+37
  %v2937 = vand.u32 %v2756, 2147483648
  %v2938 = vor.u32 1.1754944e-38, %v2937
  %v2939 = vsel %vm2936, %v2938, %v2934
  %v2940 = vmul.f32 1.0, %v2939
  %v2941 = vrcp.pop %v2757
  %v2942 = vmul.f32 %v2757, %v2941
  %v2943 = vsub.f32 1.0, %v2942
  %v2944 = vmul.f32 %v2941, %v2943
  %v2945 = vadd.f32 %v2941, %v2944
  %vm2946 = vweird.f32 %v2757
  %vm2947 = vweird.f32 %v2941
  %vm2948 = vmor %vm2946, %vm2947
  %v2949 = vsel %vm2948, %v2941, %v2945
  %v2950 = vand.u32 2147483647, %v2757
  %vm2951 = vcmp.eq.f32.partialorder %v2950, 8.507059e+37
  %v2952 = vand.u32 %v2757, 2147483648
  %v2953 = vor.u32 1.1754944e-38, %v2952
  %v2954 = vsel %vm2951, %v2953, %v2949
  %v2955 = vmul.f32 1.0, %v2954
  %v2956 = vrcp.pop %v2758
  %v2957 = vmul.f32 %v2758, %v2956
  %v2958 = vsub.f32 1.0, %v2957
  %v2959 = vmul.f32 %v2956, %v2958
  %v2960 = vadd.f32 %v2956, %v2959
  %vm2961 = vweird.f32 %v2758
  %vm2962 = vweird.f32 %v2956
  %vm2963 = vmor %vm2961, %vm2962
  %v2964 = vsel %vm2963, %v2956, %v2960
  %v2965 = vand.u32 2147483647, %v2758
  %vm2966 = vcmp.eq.f32.partialorder %v2965, 8.507059e+37
  %v2967 = vand.u32 %v2758, 2147483648
  %v2968 = vor.u32 1.1754944e-38, %v2967
  %v2969 = vsel %vm2966, %v2968, %v2964
  %v2970 = vmul.f32 1.0, %v2969
  %v2971 = vrcp.pop %v2759
  %v2972 = vmul.f32 %v2759, %v2971
  %v2973 = vsub.f32 1.0, %v2972
  %v2974 = vmul.f32 %v2971, %v2973
  %v2975 = vadd.f32 %v2971, %v2974
  %vm2976 = vweird.f32 %v2759
  %vm2977 = vweird.f32 %v2971
  %vm2978 = vmor %vm2976, %vm2977
  %v2979 = vsel %vm2978, %v2971, %v2975
  %v2980 = vand.u32 2147483647, %v2759
  %vm2981 = vcmp.eq.f32.partialorder %v2980, 8.507059e+37
  %v2982 = vand.u32 %v2759, 2147483648
  %v2983 = vor.u32 1.1754944e-38, %v2982
  %v2984 = vsel %vm2981, %v2983, %v2979
  %v2985 = vmul.f32 1.0, %v2984
  %v2986 = vrcp.pop %v2760
  %v2987 = vmul.f32 %v2760, %v2986
  %v2988 = vsub.f32 1.0, %v2987
  %v2989 = vmul.f32 %v2986, %v2988
  %v2990 = vadd.f32 %v2986, %v2989
  %vm2991 = vweird.f32 %v2760
  %vm2992 = vweird.f32 %v2986
  %vm2993 = vmor %vm2991, %vm2992
  %v2994 = vsel %vm2993, %v2986, %v2990
  %v2995 = vand.u32 2147483647, %v2760
  %vm2996 = vcmp.eq.f32.partialorder %v2995, 8.507059e+37
  %v2997 = vand.u32 %v2760, 2147483648
  %v2998 = vor.u32 1.1754944e-38, %v2997
  %v2999 = vsel %vm2996, %v2998, %v2994
  %v3000 = vmul.f32 1.0, %v2999
  %v3001 = vmul.f32 %v2681, %v2775
  %v3002 = vmul.f32 %v2682, %v2790
  %v3003 = vmul.f32 %v2683, %v2805
  %v3004 = vmul.f32 %v2684, %v2820
  %v3005 = vmul.f32 %v2685, %v2835
  %v3006 = vmul.f32 %v2686, %v2850
  %v3007 = vmul.f32 %v2687, %v2865
  %v3008 = vmul.f32 %v2688, %v2880
  %v3009 = vmul.f32 %v2689, %v2895
  %v3010 = vmul.f32 %v2690, %v2910
  %v3011 = vmul.f32 %v2691, %v2925
  %v3012 = vmul.f32 %v2692, %v2940
  %v3013 = vmul.f32 %v2693, %v2955
  %v3014 = vmul.f32 %v2694, %v2970
  %v3015 = vmul.f32 %v2695, %v2985
  %v3016 = vmul.f32 %v2696, %v3000
  %3017 = vrot.lane.b32.xlu0 %v3001, 1
  %v3018 = vpop.permute.xlu0 %3017
  %3019 = vrot.lane.b32.xlu0 %v3003, 1
  %v3020 = vpop.permute.xlu0 %3019
  %3021 = vrot.lane.b32.xlu0 %v3005, 1
  %v3022 = vpop.permute.xlu0 %3021
  %3023 = vrot.lane.b32.xlu0 %v3007, 1
  %v3024 = vpop.permute.xlu0 %3023
  %3025 = vrot.lane.b32.xlu0 %v3009, 1
  %v3026 = vpop.permute.xlu0 %3025
  %3027 = vrot.lane.b32.xlu0 %v3011, 1
  %v3028 = vpop.permute.xlu0 %3027
  %3029 = vrot.lane.b32.xlu0 %v3013, 1
  %v3030 = vpop.permute.xlu0 %3029
  %3031 = vrot.lane.b32.xlu0 %v3015, 1
  %v3032 = vpop.permute.xlu0 %3031
  %3033 = vrot.lane.b32.xlu0 %v3002, 1
  %v3034 = vpop.permute.xlu0 %3033
  %3035 = vrot.lane.b32.xlu0 %v3004, 1
  %v3036 = vpop.permute.xlu0 %3035
  %3037 = vrot.lane.b32.xlu0 %v3006, 1
  %v3038 = vpop.permute.xlu0 %3037
  %3039 = vrot.lane.b32.xlu0 %v3008, 1
  %v3040 = vpop.permute.xlu0 %3039
  %3041 = vrot.lane.b32.xlu0 %v3010, 1
  %v3042 = vpop.permute.xlu0 %3041
  %3043 = vrot.lane.b32.xlu0 %v3012, 1
  %v3044 = vpop.permute.xlu0 %3043
  %3045 = vrot.lane.b32.xlu0 %v3014, 1
  %v3046 = vpop.permute.xlu0 %3045
  %3047 = vrot.lane.b32.xlu0 %v3016, 1
  %v3048 = vpop.permute.xlu0 %3047
  %v3049 = vsel %vm110, %v3018, %v3034
  %v3050 = vsel %vm110, %v3020, %v3036
  %v3051 = vsel %vm110, %v3022, %v3038
  %v3052 = vsel %vm110, %v3024, %v3040
  %v3053 = vsel %vm110, %v3026, %v3042
  %v3054 = vsel %vm110, %v3028, %v3044
  %v3055 = vsel %vm110, %v3030, %v3046
  %v3056 = vsel %vm110, %v3032, %v3048
  %v3057 = vsel %vm110, %v3034, %v3018
  %v3058 = vsel %vm110, %v3036, %v3020
  %v3059 = vsel %vm110, %v3038, %v3022
  %v3060 = vsel %vm110, %v3040, %v3024
  %v3061 = vsel %vm110, %v3042, %v3026
  %v3062 = vsel %vm110, %v3044, %v3028
  %v3063 = vsel %vm110, %v3046, %v3030
  %v3064 = vsel %vm110, %v3048, %v3032
  %v3065 = vmul.f32 %v3057, %v115
  %v3066 = vmul.f32 %v3049, %v116
  %v3067 = vmul.f32 %v3058, %v115
  %v3068 = vmul.f32 %v3050, %v116
  %v3069 = vmul.f32 %v3059, %v115
  %v3070 = vmul.f32 %v3051, %v116
  %v3071 = vmul.f32 %v3060, %v115
  %v3072 = vmul.f32 %v3052, %v116
  %v3073 = vmul.f32 %v3061, %v115
  %v3074 = vmul.f32 %v3053, %v116
  %v3075 = vmul.f32 %v3062, %v115
  %v3076 = vmul.f32 %v3054, %v116
  %v3077 = vmul.f32 %v3063, %v115
  %v3078 = vmul.f32 %v3055, %v116
  %v3079 = vmul.f32 %v3064, %v115
  %v3080 = vmul.f32 %v3056, %v116
  %v3081 = vmul.f32 %v3001, %v124
  %v3082 = vmul.f32 %v3002, %v125
  %v3083 = vmul.f32 %v3003, %v124
  %v3084 = vmul.f32 %v3004, %v125
  %v3085 = vmul.f32 %v3005, %v124
  %v3086 = vmul.f32 %v3006, %v125
  %v3087 = vmul.f32 %v3007, %v124
  %v3088 = vmul.f32 %v3008, %v125
  %v3089 = vmul.f32 %v3009, %v124
  %v3090 = vmul.f32 %v3010, %v125
  %v3091 = vmul.f32 %v3011, %v124
  %v3092 = vmul.f32 %v3012, %v125
  %v3093 = vmul.f32 %v3013, %v124
  %v3094 = vmul.f32 %v3014, %v125
  %v3095 = vmul.f32 %v3015, %v124
  %v3096 = vmul.f32 %v3016, %v125
  %3097 = vrot.lane.b32.xlu0 %v3001, 127
  %v3098 = vpop.permute.xlu0 %3097
  %3099 = vrot.lane.b32.xlu0 %v3003, 127
  %v3100 = vpop.permute.xlu0 %3099
  %3101 = vrot.lane.b32.xlu0 %v3005, 127
  %v3102 = vpop.permute.xlu0 %3101
  %3103 = vrot.lane.b32.xlu0 %v3007, 127
  %v3104 = vpop.permute.xlu0 %3103
  %3105 = vrot.lane.b32.xlu0 %v3009, 127
  %v3106 = vpop.permute.xlu0 %3105
  %3107 = vrot.lane.b32.xlu0 %v3011, 127
  %v3108 = vpop.permute.xlu0 %3107
  %3109 = vrot.lane.b32.xlu0 %v3013, 127
  %v3110 = vpop.permute.xlu0 %3109
  %3111 = vrot.lane.b32.xlu0 %v3015, 127
  %v3112 = vpop.permute.xlu0 %3111
  %3113 = vrot.lane.b32.xlu0 %v3002, 127
  %v3114 = vpop.permute.xlu0 %3113
  %3115 = vrot.lane.b32.xlu0 %v3004, 127
  %v3116 = vpop.permute.xlu0 %3115
  %3117 = vrot.lane.b32.xlu0 %v3006, 127
  %v3118 = vpop.permute.xlu0 %3117
  %3119 = vrot.lane.b32.xlu0 %v3008, 127
  %v3120 = vpop.permute.xlu0 %3119
  %3121 = vrot.lane.b32.xlu0 %v3010, 127
  %v3122 = vpop.permute.xlu0 %3121
  %3123 = vrot.lane.b32.xlu0 %v3012, 127
  %v3124 = vpop.permute.xlu0 %3123
  %3125 = vrot.lane.b32.xlu0 %v3014, 127
  %v3126 = vpop.permute.xlu0 %3125
  %3127 = vrot.lane.b32.xlu0 %v3016, 127
  %v3128 = vpop.permute.xlu0 %3127
  %v3129 = vsel %vm140, %v3098, %v3114
  %v3130 = vsel %vm140, %v3100, %v3116
  %v3131 = vsel %vm140, %v3102, %v3118
  %v3132 = vsel %vm140, %v3104, %v3120
  %v3133 = vsel %vm140, %v3106, %v3122
  %v3134 = vsel %vm140, %v3108, %v3124
  %v3135 = vsel %vm140, %v3110, %v3126
  %v3136 = vsel %vm140, %v3112, %v3128
  %v3137 = vsel %vm140, %v3114, %v3098
  %v3138 = vsel %vm140, %v3116, %v3100
  %v3139 = vsel %vm140, %v3118, %v3102
  %v3140 = vsel %vm140, %v3120, %v3104
  %v3141 = vsel %vm140, %v3122, %v3106
  %v3142 = vsel %vm140, %v3124, %v3108
  %v3143 = vsel %vm140, %v3126, %v3110
  %v3144 = vsel %vm140, %v3128, %v3112
  %v3145 = vmul.f32 %v3129, %v146
  %v3146 = vmul.f32 %v3137, %v147
  %v3147 = vmul.f32 %v3130, %v146
  %v3148 = vmul.f32 %v3138, %v147
  %v3149 = vmul.f32 %v3131, %v146
  %v3150 = vmul.f32 %v3139, %v147
  %v3151 = vmul.f32 %v3132, %v146
  %v3152 = vmul.f32 %v3140, %v147
  %v3153 = vmul.f32 %v3133, %v146
  %v3154 = vmul.f32 %v3141, %v147
  %v3155 = vmul.f32 %v3134, %v146
  %v3156 = vmul.f32 %v3142, %v147
  %v3157 = vmul.f32 %v3135, %v146
  %v3158 = vmul.f32 %v3143, %v147
  %v3159 = vmul.f32 %v3136, %v146
  %v3160 = vmul.f32 %v3144, %v147
  %v3161 = vld [vmem:[%s11] sm:$0xff]
  %v3162 = vld [vmem:[%s11 + $0x8] sm:$0xff]
  %v3163 = vld [vmem:[%s11 + $0x10] sm:$0xff]
  %v3164 = vld [vmem:[%s11 + $0x18] sm:$0xff]
  %v3165 = vld [vmem:[%s11 + $0x20] sm:$0xff]
  %v3166 = vld [vmem:[%s11 + $0x28] sm:$0xff]
  %v3167 = vld [vmem:[%s11 + $0x30] sm:$0xff]
  %v3168 = vld [vmem:[%s11 + $0x38] sm:$0xff]
  %v3169 = vld [vmem:[%s11 + $0x40] sm:$0xff]
  %v3170 = vld [vmem:[%s11 + $0x48] sm:$0xff]
  %v3171 = vld [vmem:[%s11 + $0x50] sm:$0xff]
  %v3172 = vld [vmem:[%s11 + $0x58] sm:$0xff]
  %v3173 = vld [vmem:[%s11 + $0x60] sm:$0xff]
  %v3174 = vld [vmem:[%s11 + $0x68] sm:$0xff]
  %v3175 = vld [vmem:[%s11 + $0x70] sm:$0xff]
  %v3176 = vld [vmem:[%s11 + $0x78] sm:$0xff]
  %v3177 = vpack.c.bf16 %v3067, %v3065
  %v3178 = vpack.c.bf16 %v3068, %v3066
  %v3179 = vpack.c.bf16 %v3071, %v3069
  %v3180 = vpack.c.bf16 %v3072, %v3070
  %v3181 = vpack.c.bf16 %v3075, %v3073
  %v3182 = vpack.c.bf16 %v3076, %v3074
  %v3183 = vpack.c.bf16 %v3079, %v3077
  %v3184 = vpack.c.bf16 %v3080, %v3078
  %v3185 = vpack.c.bf16 %v3083, %v3081
  %v3186 = vpack.c.bf16 %v3084, %v3082
  %v3187 = vpack.c.bf16 %v3087, %v3085
  %v3188 = vpack.c.bf16 %v3088, %v3086
  %v3189 = vpack.c.bf16 %v3091, %v3089
  %v3190 = vpack.c.bf16 %v3092, %v3090
  %v3191 = vpack.c.bf16 %v3095, %v3093
  %v3192 = vpack.c.bf16 %v3096, %v3094
  %v3193 = vpack.c.bf16 %v3147, %v3145
  %v3194 = vpack.c.bf16 %v3148, %v3146
  %v3195 = vpack.c.bf16 %v3151, %v3149
  %v3196 = vpack.c.bf16 %v3152, %v3150
  %v3197 = vpack.c.bf16 %v3155, %v3153
  %v3198 = vpack.c.bf16 %v3156, %v3154
  %v3199 = vpack.c.bf16 %v3159, %v3157
  %v3200 = vpack.c.bf16 %v3160, %v3158
  %v3201 = vld [vmem:[%s12] sm:$0xff]
  %v3202 = vld [vmem:[%s12 + $0x8] sm:$0xff]
  %v3203 = vld [vmem:[%s12 + $0x10] sm:$0xff]
  %v3204 = vld [vmem:[%s12 + $0x18] sm:$0xff]
  %v3205 = vld [vmem:[%s12 + $0x20] sm:$0xff]
  %v3206 = vld [vmem:[%s12 + $0x28] sm:$0xff]
  %v3207 = vld [vmem:[%s12 + $0x30] sm:$0xff]
  %v3208 = vld [vmem:[%s12 + $0x38] sm:$0xff]
  %v3209 = vld [vmem:[%s12 + $0x40] sm:$0xff]
  %v3210 = vld [vmem:[%s12 + $0x48] sm:$0xff]
  %v3211 = vld [vmem:[%s12 + $0x50] sm:$0xff]
  %v3212 = vld [vmem:[%s12 + $0x58] sm:$0xff]
  %v3213 = vld [vmem:[%s12 + $0x60] sm:$0xff]
  %v3214 = vld [vmem:[%s12 + $0x68] sm:$0xff]
  %v3215 = vld [vmem:[%s12 + $0x70] sm:$0xff]
  %v3216 = vld [vmem:[%s12 + $0x78] sm:$0xff]
  %3218 = vset.pattern.permute.xlu0 0
  %3219 = vperm.xlu0 %3218, %v3201
  %v3220 = vpop.permute.xlu0 %3219
  %3223 = vset.pattern.permute.xlu0 0
  %3224 = vperm.xlu0 %3223, %v3202
  %v3225 = vpop.permute.xlu0 %3224
  %3228 = vset.pattern.permute.xlu0 0
  %3229 = vperm.xlu0 %3228, %v3203
  %v3230 = vpop.permute.xlu0 %3229
  %3233 = vset.pattern.permute.xlu0 0
  %3234 = vperm.xlu0 %3233, %v3204
  %v3235 = vpop.permute.xlu0 %3234
  %3238 = vset.pattern.permute.xlu0 0
  %3239 = vperm.xlu0 %3238, %v3205
  %v3240 = vpop.permute.xlu0 %3239
  %3243 = vset.pattern.permute.xlu0 0
  %3244 = vperm.xlu0 %3243, %v3206
  %v3245 = vpop.permute.xlu0 %3244
  %3248 = vset.pattern.permute.xlu0 0
  %3249 = vperm.xlu0 %3248, %v3207
  %v3250 = vpop.permute.xlu0 %3249
  %3253 = vset.pattern.permute.xlu0 0
  %3254 = vperm.xlu0 %3253, %v3208
  %v3255 = vpop.permute.xlu0 %3254
  %3258 = vset.pattern.permute.xlu0 0
  %3259 = vperm.xlu0 %3258, %v3209
  %v3260 = vpop.permute.xlu0 %3259
  %3263 = vset.pattern.permute.xlu0 0
  %3264 = vperm.xlu0 %3263, %v3210
  %v3265 = vpop.permute.xlu0 %3264
  %3268 = vset.pattern.permute.xlu0 0
  %3269 = vperm.xlu0 %3268, %v3211
  %v3270 = vpop.permute.xlu0 %3269
  %3273 = vset.pattern.permute.xlu0 0
  %3274 = vperm.xlu0 %3273, %v3212
  %v3275 = vpop.permute.xlu0 %3274
  %3278 = vset.pattern.permute.xlu0 0
  %3279 = vperm.xlu0 %3278, %v3213
  %v3280 = vpop.permute.xlu0 %3279
  %3283 = vset.pattern.permute.xlu0 0
  %3284 = vperm.xlu0 %3283, %v3214
  %v3285 = vpop.permute.xlu0 %3284
  %3288 = vset.pattern.permute.xlu0 0
  %3289 = vperm.xlu0 %3288, %v3215
  %v3290 = vpop.permute.xlu0 %3289
  %3293 = vset.pattern.permute.xlu0 0
  %3294 = vperm.xlu0 %3293, %v3216
  %v3295 = vpop.permute.xlu0 %3294
  %v3313 = vunpack.c.l.b16 %v3161
  %v3314 = vunpack.c.h.b16 %v3161
  %v3315 = vunpack.c.l.b16 %v3162
  %v3316 = vunpack.c.h.b16 %v3162
  %v3317 = vunpack.c.l.b16 %v3163
  %v3318 = vunpack.c.h.b16 %v3163
  %v3319 = vunpack.c.l.b16 %v3164
  %v3320 = vunpack.c.h.b16 %v3164
  %v3321 = vunpack.c.l.b16 %v3165
  %v3322 = vunpack.c.h.b16 %v3165
  %v3323 = vunpack.c.l.b16 %v3166
  %v3324 = vunpack.c.h.b16 %v3166
  %v3325 = vunpack.c.l.b16 %v3167
  %v3326 = vunpack.c.h.b16 %v3167
  %v3327 = vunpack.c.l.b16 %v3168
  %v3328 = vunpack.c.h.b16 %v3168
  %v3329 = vunpack.c.l.b16 %v3169
  %v3330 = vunpack.c.h.b16 %v3169
  %v3331 = vunpack.c.l.b16 %v3170
  %v3332 = vunpack.c.h.b16 %v3170
  %v3333 = vunpack.c.l.b16 %v3171
  %v3334 = vunpack.c.h.b16 %v3171
  %v3335 = vunpack.c.l.b16 %v3172
  %v3336 = vunpack.c.h.b16 %v3172
  %v3337 = vunpack.c.l.b16 %v3173
  %v3338 = vunpack.c.h.b16 %v3173
  %v3339 = vunpack.c.l.b16 %v3174
  %v3340 = vunpack.c.h.b16 %v3174
  %v3341 = vunpack.c.l.b16 %v3175
  %v3342 = vunpack.c.h.b16 %v3175
  %v3343 = vunpack.c.l.b16 %v3176
  %v3344 = vunpack.c.h.b16 %v3176
  %v3345 = vpack.c.b16 %v3315, %v3313
  %v3346 = vpack.c.b16 %v3316, %v3314
  %v3347 = vpack.c.b16 %v3319, %v3317
  %v3348 = vpack.c.b16 %v3320, %v3318
  %v3349 = vpack.c.b16 %v3323, %v3321
  %v3350 = vpack.c.b16 %v3324, %v3322
  %v3351 = vpack.c.b16 %v3327, %v3325
  %v3352 = vpack.c.b16 %v3328, %v3326
  %v3353 = vpack.c.b16 %v3331, %v3329
  %v3354 = vpack.c.b16 %v3332, %v3330
  %v3355 = vpack.c.b16 %v3335, %v3333
  %v3356 = vpack.c.b16 %v3336, %v3334
  %v3357 = vpack.c.b16 %v3339, %v3337
  %v3358 = vpack.c.b16 %v3340, %v3338
  %v3359 = vpack.c.b16 %v3343, %v3341
  %v3360 = vpack.c.b16 %v3344, %v3342
  %v3370 = vsel %vm1930, %v3346, 0
  %v3373 = vsel %vm1930, %v3348, 0
  %v3376 = vsel %vm1930, %v3350, 0
  %v3379 = vsel %vm1930, %v3352, 0
  %v3382 = vsel %vm1930, %v3354, 0
  %v3385 = vsel %vm1930, %v3356, 0
  %v3388 = vsel %vm1930, %v3358, 0
  %v3391 = vsel %vm1930, %v3360, 0
  %3393 = vmatpush.bf16.msra.mxu0 %v3191
  %3394 = vmatpush.bf16.msra.mxu0 %v3189
  %3395 = vmatpush.bf16.msra.mxu0 %v3187
  %3396 = vmatpush.bf16.msra.mxu0 %v3185
  %3397 = vmatpush.bf16.msra.mxu0 %v3183
  %3398 = vmatpush.bf16.msra.mxu0 %v3181
  %3399 = vmatpush.bf16.msra.mxu0 %v3179
  %3400 = vmatpush.bf16.msra.mxu0 %v3177
  %3401 = vmatmul.bf16.gmra.mxu0 %v3345
  %v3402 = vpop.f32.mrf.mxu0
  %v3403 = vadd.f32 %v3220, %v3402
  %v3404 = vpop.f32.mrf.mxu0
  %v3405 = vadd.f32 %v3225, %v3404
  %3406 = vmatmul.bf16.gmra.mxu0 %v3347
  %v3407 = vpop.f32.mrf.mxu0
  %v3408 = vadd.f32 %v3230, %v3407
  %v3409 = vpop.f32.mrf.mxu0
  %v3410 = vadd.f32 %v3235, %v3409
  %3411 = vmatmul.bf16.gmra.mxu0 %v3349
  %v3412 = vpop.f32.mrf.mxu0
  %v3413 = vadd.f32 %v3240, %v3412
  %v3414 = vpop.f32.mrf.mxu0
  %v3415 = vadd.f32 %v3245, %v3414
  %3416 = vmatmul.bf16.gmra.mxu0 %v3351
  %v3417 = vpop.f32.mrf.mxu0
  %v3418 = vadd.f32 %v3250, %v3417
  %v3419 = vpop.f32.mrf.mxu0
  %v3420 = vadd.f32 %v3255, %v3419
  %3421 = vmatmul.bf16.gmra.mxu0 %v3353
  %v3422 = vpop.f32.mrf.mxu0
  %v3423 = vadd.f32 %v3260, %v3422
  %v3424 = vpop.f32.mrf.mxu0
  %v3425 = vadd.f32 %v3265, %v3424
  %3426 = vmatmul.bf16.gmra.mxu0 %v3355
  %v3427 = vpop.f32.mrf.mxu0
  %v3428 = vadd.f32 %v3270, %v3427
  %v3429 = vpop.f32.mrf.mxu0
  %v3430 = vadd.f32 %v3275, %v3429
  %3431 = vmatmul.bf16.gmra.mxu0 %v3357
  %v3432 = vpop.f32.mrf.mxu0
  %v3433 = vadd.f32 %v3280, %v3432
  %v3434 = vpop.f32.mrf.mxu0
  %v3435 = vadd.f32 %v3285, %v3434
  %3436 = vmatmul.bf16.gmra.mxu0 %v3359
  %v3437 = vpop.f32.mrf.mxu0
  %v3438 = vadd.f32 %v3290, %v3437
  %v3439 = vpop.f32.mrf.mxu0
  %v3440 = vadd.f32 %v3295, %v3439
  %3441 = vdwg.mxu0
  %3442 = vmatpush.bf16.msra.mxu0 0
  %3443 = vmatpush.bf16.msra.mxu0 0
  %3444 = vmatpush.bf16.msra.mxu0 0
  %3445 = vmatpush.bf16.msra.mxu0 0
  %3446 = vmatpush.bf16.msra.mxu0 %v3199
  %3447 = vmatpush.bf16.msra.mxu0 %v3197
  %3448 = vmatpush.bf16.msra.mxu0 %v3195
  %3449 = vmatpush.bf16.msra.mxu0 %v3193
  %3450 = vmatmul.bf16.gmra.mxu0 %v3370
  %v3451 = vpop.f32.mrf.mxu0
  %v3452 = vadd.f32 %v3403, %v3451
  %v3453 = vpop.f32.mrf.mxu0
  %v3454 = vadd.f32 %v3405, %v3453
  %3455 = vmatmul.bf16.gmra.mxu0 %v3373
  %v3456 = vpop.f32.mrf.mxu0
  %v3457 = vadd.f32 %v3408, %v3456
  %v3458 = vpop.f32.mrf.mxu0
  %v3459 = vadd.f32 %v3410, %v3458
  %3460 = vmatmul.bf16.gmra.mxu0 %v3376
  %v3461 = vpop.f32.mrf.mxu0
  %v3462 = vadd.f32 %v3413, %v3461
  %v3463 = vpop.f32.mrf.mxu0
  %v3464 = vadd.f32 %v3415, %v3463
  %3465 = vmatmul.bf16.gmra.mxu0 %v3379
  %v3466 = vpop.f32.mrf.mxu0
  %v3467 = vadd.f32 %v3418, %v3466
  %v3468 = vpop.f32.mrf.mxu0
  %v3469 = vadd.f32 %v3420, %v3468
  %3470 = vmatmul.bf16.gmra.mxu0 %v3382
  %v3471 = vpop.f32.mrf.mxu0
  %v3472 = vadd.f32 %v3423, %v3471
  %v3473 = vpop.f32.mrf.mxu0
  %v3474 = vadd.f32 %v3425, %v3473
  %3475 = vmatmul.bf16.gmra.mxu0 %v3385
  %v3476 = vpop.f32.mrf.mxu0
  %v3477 = vadd.f32 %v3428, %v3476
  %v3478 = vpop.f32.mrf.mxu0
  %v3479 = vadd.f32 %v3430, %v3478
  %3480 = vmatmul.bf16.gmra.mxu0 %v3388
  %v3481 = vpop.f32.mrf.mxu0
  %v3482 = vadd.f32 %v3433, %v3481
  %v3483 = vpop.f32.mrf.mxu0
  %v3484 = vadd.f32 %v3435, %v3483
  %3485 = vmatmul.bf16.gmra.mxu0 %v3391
  %v3486 = vpop.f32.mrf.mxu0
  %v3487 = vadd.f32 %v3438, %v3486
  %v3488 = vpop.f32.mrf.mxu0
  %v3489 = vadd.f32 %v3440, %v3488
  %3490 = vdwg.mxu0
  %3491 = vmatpush.bf16.msra.mxu0 %v3192
  %3492 = vmatpush.bf16.msra.mxu0 %v3190
  %3493 = vmatpush.bf16.msra.mxu0 %v3188
  %3494 = vmatpush.bf16.msra.mxu0 %v3186
  %3495 = vmatpush.bf16.msra.mxu0 %v3184
  %3496 = vmatpush.bf16.msra.mxu0 %v3182
  %3497 = vmatpush.bf16.msra.mxu0 %v3180
  %3498 = vmatpush.bf16.msra.mxu0 %v3178
  %3499 = vmatmul.bf16.gmra.mxu0 %v3345
  %v3500 = vpop.f32.mrf.mxu0
  %v3501 = vadd.f32 %v3220, %v3500
  %v3502 = vpop.f32.mrf.mxu0
  %v3503 = vadd.f32 %v3225, %v3502
  %3504 = vmatmul.bf16.gmra.mxu0 %v3347
  %v3505 = vpop.f32.mrf.mxu0
  %v3506 = vadd.f32 %v3230, %v3505
  %v3507 = vpop.f32.mrf.mxu0
  %v3508 = vadd.f32 %v3235, %v3507
  %3509 = vmatmul.bf16.gmra.mxu0 %v3349
  %v3510 = vpop.f32.mrf.mxu0
  %v3511 = vadd.f32 %v3240, %v3510
  %v3512 = vpop.f32.mrf.mxu0
  %v3513 = vadd.f32 %v3245, %v3512
  %3514 = vmatmul.bf16.gmra.mxu0 %v3351
  %v3515 = vpop.f32.mrf.mxu0
  %v3516 = vadd.f32 %v3250, %v3515
  %v3517 = vpop.f32.mrf.mxu0
  %v3518 = vadd.f32 %v3255, %v3517
  %3519 = vmatmul.bf16.gmra.mxu0 %v3353
  %v3520 = vpop.f32.mrf.mxu0
  %v3521 = vadd.f32 %v3260, %v3520
  %v3522 = vpop.f32.mrf.mxu0
  %v3523 = vadd.f32 %v3265, %v3522
  %3524 = vmatmul.bf16.gmra.mxu0 %v3355
  %v3525 = vpop.f32.mrf.mxu0
  %v3526 = vadd.f32 %v3270, %v3525
  %v3527 = vpop.f32.mrf.mxu0
  %v3528 = vadd.f32 %v3275, %v3527
  %3529 = vmatmul.bf16.gmra.mxu0 %v3357
  %v3530 = vpop.f32.mrf.mxu0
  %v3531 = vadd.f32 %v3280, %v3530
  %v3532 = vpop.f32.mrf.mxu0
  %v3533 = vadd.f32 %v3285, %v3532
  %3534 = vmatmul.bf16.gmra.mxu0 %v3359
  %v3535 = vpop.f32.mrf.mxu0
  %v3536 = vadd.f32 %v3290, %v3535
  %v3537 = vpop.f32.mrf.mxu0
  %v3538 = vadd.f32 %v3295, %v3537
  %3539 = vdwg.mxu0
  %3540 = vmatpush.bf16.msra.mxu0 0
  %3541 = vmatpush.bf16.msra.mxu0 0
  %3542 = vmatpush.bf16.msra.mxu0 0
  %3543 = vmatpush.bf16.msra.mxu0 0
  %3544 = vmatpush.bf16.msra.mxu0 %v3200
  %3545 = vmatpush.bf16.msra.mxu0 %v3198
  %3546 = vmatpush.bf16.msra.mxu0 %v3196
  %3547 = vmatpush.bf16.msra.mxu0 %v3194
  %3548 = vmatmul.bf16.gmra.mxu0 %v3370
  %v3549 = vpop.f32.mrf.mxu0
  %v3550 = vadd.f32 %v3501, %v3549
  %v3551 = vpop.f32.mrf.mxu0
  %v3552 = vadd.f32 %v3503, %v3551
  %3553 = vmatmul.bf16.gmra.mxu0 %v3373
  %v3554 = vpop.f32.mrf.mxu0
  %v3555 = vadd.f32 %v3506, %v3554
  %v3556 = vpop.f32.mrf.mxu0
  %v3557 = vadd.f32 %v3508, %v3556
  %3558 = vmatmul.bf16.gmra.mxu0 %v3376
  %v3559 = vpop.f32.mrf.mxu0
  %v3560 = vadd.f32 %v3511, %v3559
  %v3561 = vpop.f32.mrf.mxu0
  %v3562 = vadd.f32 %v3513, %v3561
  %3563 = vmatmul.bf16.gmra.mxu0 %v3379
  %v3564 = vpop.f32.mrf.mxu0
  %v3565 = vadd.f32 %v3516, %v3564
  %v3566 = vpop.f32.mrf.mxu0
  %v3567 = vadd.f32 %v3518, %v3566
  %3568 = vmatmul.bf16.gmra.mxu0 %v3382
  %v3569 = vpop.f32.mrf.mxu0
  %v3570 = vadd.f32 %v3521, %v3569
  %v3571 = vpop.f32.mrf.mxu0
  %v3572 = vadd.f32 %v3523, %v3571
  %3573 = vmatmul.bf16.gmra.mxu0 %v3385
  %v3574 = vpop.f32.mrf.mxu0
  %v3575 = vadd.f32 %v3526, %v3574
  %v3576 = vpop.f32.mrf.mxu0
  %v3577 = vadd.f32 %v3528, %v3576
  %3578 = vmatmul.bf16.gmra.mxu0 %v3388
  %v3579 = vpop.f32.mrf.mxu0
  %v3580 = vadd.f32 %v3531, %v3579
  %v3581 = vpop.f32.mrf.mxu0
  %v3582 = vadd.f32 %v3533, %v3581
  %3583 = vmatmul.bf16.gmra.mxu0 %v3391
  %v3584 = vpop.f32.mrf.mxu0
  %v3585 = vadd.f32 %v3536, %v3584
  %v3586 = vpop.f32.mrf.mxu0
  %v3587 = vadd.f32 %v3538, %v3586
  %3588 = vdwg.mxu0
  %v3589 = vpack.c.bf16 %v3550, %v3452
  %v3590 = vpack.c.bf16 %v3552, %v3454
  %v3591 = vpack.c.bf16 %v3555, %v3457
  %v3592 = vpack.c.bf16 %v3557, %v3459
  %v3593 = vpack.c.bf16 %v3560, %v3462
  %v3594 = vpack.c.bf16 %v3562, %v3464
  %v3595 = vpack.c.bf16 %v3565, %v3467
  %v3596 = vpack.c.bf16 %v3567, %v3469
  %v3605 = vunpack.c.l.b16 %v3589
  %v3606 = vunpack.c.h.b16 %v3589
  %v3607 = vunpack.c.l.b16 %v3590
  %v3608 = vunpack.c.h.b16 %v3590
  %v3609 = vunpack.c.l.b16 %v3591
  %v3610 = vunpack.c.h.b16 %v3591
  %v3611 = vunpack.c.l.b16 %v3592
  %v3612 = vunpack.c.h.b16 %v3592
  %v3613 = vunpack.c.l.b16 %v3593
  %v3614 = vunpack.c.h.b16 %v3593
  %v3615 = vunpack.c.l.b16 %v3594
  %v3616 = vunpack.c.h.b16 %v3594
  %v3617 = vunpack.c.l.b16 %v3595
  %v3618 = vunpack.c.h.b16 %v3595
  %v3619 = vunpack.c.l.b16 %v3596
  %v3620 = vunpack.c.h.b16 %v3596
  %v3621 = vpack.c.b16 %v3607, %v3605
  %v3622 = vpack.c.b16 %v3608, %v3606
  %v3623 = vpack.c.b16 %v3611, %v3609
  %v3624 = vpack.c.b16 %v3612, %v3610
  %v3625 = vpack.c.b16 %v3615, %v3613
  %v3626 = vpack.c.b16 %v3616, %v3614
  %v3627 = vpack.c.b16 %v3619, %v3617
  %v3628 = vpack.c.b16 %v3620, %v3618
  %3637 = vmatpush.bf16.msra.mxu0 %v1410
  %3638 = vmatpush.bf16.msra.mxu0 %v1406
  %3639 = vmatpush.bf16.msra.mxu0 %v1402
  %3640 = vmatpush.bf16.msra.mxu0 %v1398
  %3641 = vmatpush.bf16.msra.mxu0 %v1394
  %3642 = vmatpush.bf16.msra.mxu0 %v1390
  %3643 = vmatpush.bf16.msra.mxu0 %v1386
  %3644 = vmatpush.bf16.msra.mxu0 %v1382
  %3645 = vmatmul.bf16.gmra.mxu0 %v3621
  %v3646 = vpop.f32.mrf.mxu0
  %v3647 = vadd.f32 0.0, %v3646
  %v3648 = vpop.f32.mrf.mxu0
  %v3649 = vadd.f32 0.0, %v3648
  %3650 = vmatmul.bf16.gmra.mxu0 %v3623
  %v3651 = vpop.f32.mrf.mxu0
  %v3652 = vadd.f32 0.0, %v3651
  %v3653 = vpop.f32.mrf.mxu0
  %v3654 = vadd.f32 0.0, %v3653
  %3655 = vmatmul.bf16.gmra.mxu0 %v3625
  %v3656 = vpop.f32.mrf.mxu0
  %v3657 = vadd.f32 0.0, %v3656
  %v3658 = vpop.f32.mrf.mxu0
  %v3659 = vadd.f32 0.0, %v3658
  %3660 = vmatmul.bf16.gmra.mxu0 %v3627
  %v3661 = vpop.f32.mrf.mxu0
  %v3662 = vadd.f32 0.0, %v3661
  %v3663 = vpop.f32.mrf.mxu0
  %v3664 = vadd.f32 0.0, %v3663
  %3665 = vdwg.mxu0
  %3666 = vmatpush.bf16.msra.mxu0 %v1442
  %3667 = vmatpush.bf16.msra.mxu0 %v1438
  %3668 = vmatpush.bf16.msra.mxu0 %v1434
  %3669 = vmatpush.bf16.msra.mxu0 %v1430
  %3670 = vmatpush.bf16.msra.mxu0 %v1426
  %3671 = vmatpush.bf16.msra.mxu0 %v1422
  %3672 = vmatpush.bf16.msra.mxu0 %v1418
  %3673 = vmatpush.bf16.msra.mxu0 %v1414
  %3674 = vmatmul.bf16.gmra.mxu0 %v3622
  %v3675 = vpop.f32.mrf.mxu0
  %v3676 = vadd.f32 %v3647, %v3675
  %v3677 = vpop.f32.mrf.mxu0
  %v3678 = vadd.f32 %v3649, %v3677
  %3679 = vmatmul.bf16.gmra.mxu0 %v3624
  %v3680 = vpop.f32.mrf.mxu0
  %v3681 = vadd.f32 %v3652, %v3680
  %v3682 = vpop.f32.mrf.mxu0
  %v3683 = vadd.f32 %v3654, %v3682
  %3684 = vmatmul.bf16.gmra.mxu0 %v3626
  %v3685 = vpop.f32.mrf.mxu0
  %v3686 = vadd.f32 %v3657, %v3685
  %v3687 = vpop.f32.mrf.mxu0
  %v3688 = vadd.f32 %v3659, %v3687
  %3689 = vmatmul.bf16.gmra.mxu0 %v3628
  %v3690 = vpop.f32.mrf.mxu0
  %v3691 = vadd.f32 %v3662, %v3690
  %v3692 = vpop.f32.mrf.mxu0
  %v3693 = vadd.f32 %v3664, %v3692
  %3694 = vdwg.mxu0
  %3695 = vmatpush.bf16.msra.mxu0 %v1411
  %3696 = vmatpush.bf16.msra.mxu0 %v1407
  %3697 = vmatpush.bf16.msra.mxu0 %v1403
  %3698 = vmatpush.bf16.msra.mxu0 %v1399
  %3699 = vmatpush.bf16.msra.mxu0 %v1395
  %3700 = vmatpush.bf16.msra.mxu0 %v1391
  %3701 = vmatpush.bf16.msra.mxu0 %v1387
  %3702 = vmatpush.bf16.msra.mxu0 %v1383
  %3703 = vmatmul.bf16.gmra.mxu0 %v3621
  %v3704 = vpop.f32.mrf.mxu0
  %v3705 = vadd.f32 0.0, %v3704
  %v3706 = vpop.f32.mrf.mxu0
  %v3707 = vadd.f32 0.0, %v3706
  %3708 = vmatmul.bf16.gmra.mxu0 %v3623
  %v3709 = vpop.f32.mrf.mxu0
  %v3710 = vadd.f32 0.0, %v3709
  %v3711 = vpop.f32.mrf.mxu0
  %v3712 = vadd.f32 0.0, %v3711
  %3713 = vmatmul.bf16.gmra.mxu0 %v3625
  %v3714 = vpop.f32.mrf.mxu0
  %v3715 = vadd.f32 0.0, %v3714
  %v3716 = vpop.f32.mrf.mxu0
  %v3717 = vadd.f32 0.0, %v3716
  %3718 = vmatmul.bf16.gmra.mxu0 %v3627
  %v3719 = vpop.f32.mrf.mxu0
  %v3720 = vadd.f32 0.0, %v3719
  %v3721 = vpop.f32.mrf.mxu0
  %v3722 = vadd.f32 0.0, %v3721
  %3723 = vdwg.mxu0
  %3724 = vmatpush.bf16.msra.mxu0 %v1443
  %3725 = vmatpush.bf16.msra.mxu0 %v1439
  %3726 = vmatpush.bf16.msra.mxu0 %v1435
  %3727 = vmatpush.bf16.msra.mxu0 %v1431
  %3728 = vmatpush.bf16.msra.mxu0 %v1427
  %3729 = vmatpush.bf16.msra.mxu0 %v1423
  %3730 = vmatpush.bf16.msra.mxu0 %v1419
  %3731 = vmatpush.bf16.msra.mxu0 %v1415
  %3732 = vmatmul.bf16.gmra.mxu0 %v3622
  %v3733 = vpop.f32.mrf.mxu0
  %v3734 = vadd.f32 %v3705, %v3733
  %v3735 = vpop.f32.mrf.mxu0
  %v3736 = vadd.f32 %v3707, %v3735
  %3737 = vmatmul.bf16.gmra.mxu0 %v3624
  %v3738 = vpop.f32.mrf.mxu0
  %v3739 = vadd.f32 %v3710, %v3738
  %v3740 = vpop.f32.mrf.mxu0
  %v3741 = vadd.f32 %v3712, %v3740
  %3742 = vmatmul.bf16.gmra.mxu0 %v3626
  %v3743 = vpop.f32.mrf.mxu0
  %v3744 = vadd.f32 %v3715, %v3743
  %v3745 = vpop.f32.mrf.mxu0
  %v3746 = vadd.f32 %v3717, %v3745
  %3747 = vmatmul.bf16.gmra.mxu0 %v3628
  %v3748 = vpop.f32.mrf.mxu0
  %v3749 = vadd.f32 %v3720, %v3748
  %v3750 = vpop.f32.mrf.mxu0
  %v3751 = vadd.f32 %v3722, %v3750
  %3752 = vdwg.mxu0
  %3753 = vmatpush.bf16.msra.mxu0 %v1412
  %3754 = vmatpush.bf16.msra.mxu0 %v1408
  %3755 = vmatpush.bf16.msra.mxu0 %v1404
  %3756 = vmatpush.bf16.msra.mxu0 %v1400
  %3757 = vmatpush.bf16.msra.mxu0 %v1396
  %3758 = vmatpush.bf16.msra.mxu0 %v1392
  %3759 = vmatpush.bf16.msra.mxu0 %v1388
  %3760 = vmatpush.bf16.msra.mxu0 %v1384
  %3761 = vmatmul.bf16.gmra.mxu0 %v3621
  %v3762 = vpop.f32.mrf.mxu0
  %v3763 = vadd.f32 0.0, %v3762
  %v3764 = vpop.f32.mrf.mxu0
  %v3765 = vadd.f32 0.0, %v3764
  %3766 = vmatmul.bf16.gmra.mxu0 %v3623
  %v3767 = vpop.f32.mrf.mxu0
  %v3768 = vadd.f32 0.0, %v3767
  %v3769 = vpop.f32.mrf.mxu0
  %v3770 = vadd.f32 0.0, %v3769
  %3771 = vmatmul.bf16.gmra.mxu0 %v3625
  %v3772 = vpop.f32.mrf.mxu0
  %v3773 = vadd.f32 0.0, %v3772
  %v3774 = vpop.f32.mrf.mxu0
  %v3775 = vadd.f32 0.0, %v3774
  %3776 = vmatmul.bf16.gmra.mxu0 %v3627
  %v3777 = vpop.f32.mrf.mxu0
  %v3778 = vadd.f32 0.0, %v3777
  %v3779 = vpop.f32.mrf.mxu0
  %v3780 = vadd.f32 0.0, %v3779
  %3781 = vdwg.mxu0
  %3782 = vmatpush.bf16.msra.mxu0 %v1444
  %3783 = vmatpush.bf16.msra.mxu0 %v1440
  %3784 = vmatpush.bf16.msra.mxu0 %v1436
  %3785 = vmatpush.bf16.msra.mxu0 %v1432
  %3786 = vmatpush.bf16.msra.mxu0 %v1428
  %3787 = vmatpush.bf16.msra.mxu0 %v1424
  %3788 = vmatpush.bf16.msra.mxu0 %v1420
  %3789 = vmatpush.bf16.msra.mxu0 %v1416
  %3790 = vmatmul.bf16.gmra.mxu0 %v3622
  %v3791 = vpop.f32.mrf.mxu0
  %v3792 = vadd.f32 %v3763, %v3791
  %v3793 = vpop.f32.mrf.mxu0
  %v3794 = vadd.f32 %v3765, %v3793
  %3795 = vmatmul.bf16.gmra.mxu0 %v3624
  %v3796 = vpop.f32.mrf.mxu0
  %v3797 = vadd.f32 %v3768, %v3796
  %v3798 = vpop.f32.mrf.mxu0
  %v3799 = vadd.f32 %v3770, %v3798
  %3800 = vmatmul.bf16.gmra.mxu0 %v3626
  %v3801 = vpop.f32.mrf.mxu0
  %v3802 = vadd.f32 %v3773, %v3801
  %v3803 = vpop.f32.mrf.mxu0
  %v3804 = vadd.f32 %v3775, %v3803
  %3805 = vmatmul.bf16.gmra.mxu0 %v3628
  %v3806 = vpop.f32.mrf.mxu0
  %v3807 = vadd.f32 %v3778, %v3806
  %v3808 = vpop.f32.mrf.mxu0
  %v3809 = vadd.f32 %v3780, %v3808
  %3810 = vdwg.mxu0
  %3811 = vmatpush.bf16.msra.mxu0 %v1413
  %3812 = vmatpush.bf16.msra.mxu0 %v1409
  %3813 = vmatpush.bf16.msra.mxu0 %v1405
  %3814 = vmatpush.bf16.msra.mxu0 %v1401
  %3815 = vmatpush.bf16.msra.mxu0 %v1397
  %3816 = vmatpush.bf16.msra.mxu0 %v1393
  %3817 = vmatpush.bf16.msra.mxu0 %v1389
  %3818 = vmatpush.bf16.msra.mxu0 %v1385
  %3819 = vmatmul.bf16.gmra.mxu0 %v3621
  %v3820 = vpop.f32.mrf.mxu0
  %v3821 = vadd.f32 0.0, %v3820
  %v3822 = vpop.f32.mrf.mxu0
  %v3823 = vadd.f32 0.0, %v3822
  %3824 = vmatmul.bf16.gmra.mxu0 %v3623
  %v3825 = vpop.f32.mrf.mxu0
  %v3826 = vadd.f32 0.0, %v3825
  %v3827 = vpop.f32.mrf.mxu0
  %v3828 = vadd.f32 0.0, %v3827
  %3829 = vmatmul.bf16.gmra.mxu0 %v3625
  %v3830 = vpop.f32.mrf.mxu0
  %v3831 = vadd.f32 0.0, %v3830
  %v3832 = vpop.f32.mrf.mxu0
  %v3833 = vadd.f32 0.0, %v3832
  %3834 = vmatmul.bf16.gmra.mxu0 %v3627
  %v3835 = vpop.f32.mrf.mxu0
  %v3836 = vadd.f32 0.0, %v3835
  %v3837 = vpop.f32.mrf.mxu0
  %v3838 = vadd.f32 0.0, %v3837
  %3839 = vdwg.mxu0
  %3840 = vmatpush.bf16.msra.mxu0 %v1445
  %3841 = vmatpush.bf16.msra.mxu0 %v1441
  %3842 = vmatpush.bf16.msra.mxu0 %v1437
  %3843 = vmatpush.bf16.msra.mxu0 %v1433
  %3844 = vmatpush.bf16.msra.mxu0 %v1429
  %3845 = vmatpush.bf16.msra.mxu0 %v1425
  %3846 = vmatpush.bf16.msra.mxu0 %v1421
  %3847 = vmatpush.bf16.msra.mxu0 %v1417
  %3848 = vmatmul.bf16.gmra.mxu0 %v3622
  %v3849 = vpop.f32.mrf.mxu0
  %v3850 = vadd.f32 %v3821, %v3849
  %v3851 = vpop.f32.mrf.mxu0
  %v3852 = vadd.f32 %v3823, %v3851
  %3853 = vmatmul.bf16.gmra.mxu0 %v3624
  %v3854 = vpop.f32.mrf.mxu0
  %v3855 = vadd.f32 %v3826, %v3854
  %v3856 = vpop.f32.mrf.mxu0
  %v3857 = vadd.f32 %v3828, %v3856
  %3858 = vmatmul.bf16.gmra.mxu0 %v3626
  %v3859 = vpop.f32.mrf.mxu0
  %v3860 = vadd.f32 %v3831, %v3859
  %v3861 = vpop.f32.mrf.mxu0
  %v3862 = vadd.f32 %v3833, %v3861
  %3863 = vmatmul.bf16.gmra.mxu0 %v3628
  %v3864 = vpop.f32.mrf.mxu0
  %v3865 = vadd.f32 %v3836, %v3864
  %v3866 = vpop.f32.mrf.mxu0
  %v3867 = vadd.f32 %v3838, %v3866
  %3868 = vdwg.mxu0
  %v3869 = vpack.c.bf16 %v3734, %v3676
  %v3870 = vpack.c.bf16 %v3736, %v3678
  %v3871 = vpack.c.bf16 %v3739, %v3681
  %v3872 = vpack.c.bf16 %v3741, %v3683
  %v3873 = vpack.c.bf16 %v3744, %v3686
  %v3874 = vpack.c.bf16 %v3746, %v3688
  %v3875 = vpack.c.bf16 %v3749, %v3691
  %v3876 = vpack.c.bf16 %v3751, %v3693
  %v3877 = vpack.c.bf16 %v3850, %v3792
  %v3878 = vpack.c.bf16 %v3852, %v3794
  %v3879 = vpack.c.bf16 %v3855, %v3797
  %v3880 = vpack.c.bf16 %v3857, %v3799
  %v3881 = vpack.c.bf16 %v3860, %v3802
  %v3882 = vpack.c.bf16 %v3862, %v3804
  %v3883 = vpack.c.bf16 %v3865, %v3807
  %v3884 = vpack.c.bf16 %v3867, %v3809
  %v3885 = vld [vmem:[%s13] sm:$0xff]
  %v3886 = vld [vmem:[%s13 + $0x8] sm:$0xff]
  %v3887 = vld [vmem:[%s13 + $0x10] sm:$0xff]
  %v3888 = vld [vmem:[%s13 + $0x18] sm:$0xff]
  %v3889 = vld [vmem:[%s13 + $0x20] sm:$0xff]
  %v3890 = vld [vmem:[%s13 + $0x28] sm:$0xff]
  %v3891 = vld [vmem:[%s13 + $0x30] sm:$0xff]
  %v3892 = vld [vmem:[%s13 + $0x38] sm:$0xff]
  %v3901 = vunpack.c.l.b16 %v3869
  %v3902 = vunpack.c.h.b16 %v3869
  %v3903 = vunpack.c.l.b16 %v3870
  %v3904 = vunpack.c.h.b16 %v3870
  %v3905 = vunpack.c.l.b16 %v3871
  %v3906 = vunpack.c.h.b16 %v3871
  %v3907 = vunpack.c.l.b16 %v3872
  %v3908 = vunpack.c.h.b16 %v3872
  %v3909 = vunpack.c.l.b16 %v3873
  %v3910 = vunpack.c.h.b16 %v3873
  %v3911 = vunpack.c.l.b16 %v3874
  %v3912 = vunpack.c.h.b16 %v3874
  %v3913 = vunpack.c.l.b16 %v3875
  %v3914 = vunpack.c.h.b16 %v3875
  %v3915 = vunpack.c.l.b16 %v3876
  %v3916 = vunpack.c.h.b16 %v3876
  %v3917 = vpack.c.b16 %v3903, %v3901
  %v3918 = vpack.c.b16 %v3904, %v3902
  %v3919 = vpack.c.b16 %v3907, %v3905
  %v3920 = vpack.c.b16 %v3908, %v3906
  %v3921 = vpack.c.b16 %v3911, %v3909
  %v3922 = vpack.c.b16 %v3912, %v3910
  %v3923 = vpack.c.b16 %v3915, %v3913
  %v3924 = vpack.c.b16 %v3916, %v3914
  %v3941 = vunpack.c.l.b16 %v3877
  %v3942 = vunpack.c.h.b16 %v3877
  %v3943 = vunpack.c.l.b16 %v3878
  %v3944 = vunpack.c.h.b16 %v3878
  %v3945 = vunpack.c.l.b16 %v3879
  %v3946 = vunpack.c.h.b16 %v3879
  %v3947 = vunpack.c.l.b16 %v3880
  %v3948 = vunpack.c.h.b16 %v3880
  %v3949 = vunpack.c.l.b16 %v3881
  %v3950 = vunpack.c.h.b16 %v3881
  %v3951 = vunpack.c.l.b16 %v3882
  %v3952 = vunpack.c.h.b16 %v3882
  %v3953 = vunpack.c.l.b16 %v3883
  %v3954 = vunpack.c.h.b16 %v3883
  %v3955 = vunpack.c.l.b16 %v3884
  %v3956 = vunpack.c.h.b16 %v3884
  %v3957 = vpack.c.b16 %v3943, %v3941
  %v3958 = vpack.c.b16 %v3944, %v3942
  %v3959 = vpack.c.b16 %v3947, %v3945
  %v3960 = vpack.c.b16 %v3948, %v3946
  %v3961 = vpack.c.b16 %v3951, %v3949
  %v3962 = vpack.c.b16 %v3952, %v3950
  %v3963 = vpack.c.b16 %v3955, %v3953
  %v3964 = vpack.c.b16 %v3956, %v3954
  %v3973 = vld [vmem:[%s14] sm:$0xff]
  %v3974 = vld [vmem:[%s14 + $0x8] sm:$0xff]
  %v3975 = vld [vmem:[%s14 + $0x10] sm:$0xff]
  %v3976 = vld [vmem:[%s14 + $0x18] sm:$0xff]
  %v3977 = vld [vmem:[%s14 + $0x20] sm:$0xff]
  %v3978 = vld [vmem:[%s14 + $0x28] sm:$0xff]
  %v3979 = vld [vmem:[%s14 + $0x30] sm:$0xff]
  %v3980 = vld [vmem:[%s14 + $0x38] sm:$0xff]
  %3982 = vset.pattern.permute.xlu0 0
  %3983 = vperm.xlu0 %3982, %v3973
  %v3984 = vpop.permute.xlu0 %3983
  %3987 = vset.pattern.permute.xlu0 0
  %3988 = vperm.xlu0 %3987, %v3974
  %v3989 = vpop.permute.xlu0 %3988
  %3992 = vset.pattern.permute.xlu0 0
  %3993 = vperm.xlu0 %3992, %v3975
  %v3994 = vpop.permute.xlu0 %3993
  %3997 = vset.pattern.permute.xlu0 0
  %3998 = vperm.xlu0 %3997, %v3976
  %v3999 = vpop.permute.xlu0 %3998
  %4002 = vset.pattern.permute.xlu0 0
  %4003 = vperm.xlu0 %4002, %v3977
  %v4004 = vpop.permute.xlu0 %4003
  %4007 = vset.pattern.permute.xlu0 0
  %4008 = vperm.xlu0 %4007, %v3978
  %v4009 = vpop.permute.xlu0 %4008
  %4012 = vset.pattern.permute.xlu0 0
  %4013 = vperm.xlu0 %4012, %v3979
  %v4014 = vpop.permute.xlu0 %4013
  %4017 = vset.pattern.permute.xlu0 0
  %4018 = vperm.xlu0 %4017, %v3980
  %v4019 = vpop.permute.xlu0 %4018
  %v4029 = vunpack.c.l.b16 %v3885
  %v4030 = vunpack.c.h.b16 %v3885
  %v4031 = vunpack.c.l.b16 %v3886
  %v4032 = vunpack.c.h.b16 %v3886
  %v4033 = vunpack.c.l.b16 %v3887
  %v4034 = vunpack.c.h.b16 %v3887
  %v4035 = vunpack.c.l.b16 %v3888
  %v4036 = vunpack.c.h.b16 %v3888
  %v4037 = vunpack.c.l.b16 %v3889
  %v4038 = vunpack.c.h.b16 %v3889
  %v4039 = vunpack.c.l.b16 %v3890
  %v4040 = vunpack.c.h.b16 %v3890
  %v4041 = vunpack.c.l.b16 %v3891
  %v4042 = vunpack.c.h.b16 %v3891
  %v4043 = vunpack.c.l.b16 %v3892
  %v4044 = vunpack.c.h.b16 %v3892
  %v4045 = vpack.c.b16 %v4031, %v4029
  %v4046 = vpack.c.b16 %v4032, %v4030
  %v4047 = vpack.c.b16 %v4035, %v4033
  %v4048 = vpack.c.b16 %v4036, %v4034
  %v4049 = vpack.c.b16 %v4039, %v4037
  %v4050 = vpack.c.b16 %v4040, %v4038
  %v4051 = vpack.c.b16 %v4043, %v4041
  %v4052 = vpack.c.b16 %v4044, %v4042
  %v4058 = vsel %vm1930, %v4046, 0
  %v4061 = vsel %vm1930, %v4048, 0
  %v4064 = vsel %vm1930, %v4050, 0
  %v4067 = vsel %vm1930, %v4052, 0
  %4069 = vmatpush.bf16.msra.mxu0 %v3923
  %4070 = vmatpush.bf16.msra.mxu0 %v3921
  %4071 = vmatpush.bf16.msra.mxu0 %v3919
  %4072 = vmatpush.bf16.msra.mxu0 %v3917
  %4073 = vmatpush.bf16.msra.mxu0 %v3627
  %4074 = vmatpush.bf16.msra.mxu0 %v3625
  %4075 = vmatpush.bf16.msra.mxu0 %v3623
  %4076 = vmatpush.bf16.msra.mxu0 %v3621
  %4077 = vmatmul.bf16.gmra.mxu0 %v4045
  %v4078 = vpop.f32.mrf.mxu0
  %v4079 = vadd.f32 %v3984, %v4078
  %v4080 = vpop.f32.mrf.mxu0
  %v4081 = vadd.f32 %v3989, %v4080
  %4082 = vmatmul.bf16.gmra.mxu0 %v4047
  %v4083 = vpop.f32.mrf.mxu0
  %v4084 = vadd.f32 %v3994, %v4083
  %v4085 = vpop.f32.mrf.mxu0
  %v4086 = vadd.f32 %v3999, %v4085
  %4087 = vmatmul.bf16.gmra.mxu0 %v4049
  %v4088 = vpop.f32.mrf.mxu0
  %v4089 = vadd.f32 %v4004, %v4088
  %v4090 = vpop.f32.mrf.mxu0
  %v4091 = vadd.f32 %v4009, %v4090
  %4092 = vmatmul.bf16.gmra.mxu0 %v4051
  %v4093 = vpop.f32.mrf.mxu0
  %v4094 = vadd.f32 %v4014, %v4093
  %v4095 = vpop.f32.mrf.mxu0
  %v4096 = vadd.f32 %v4019, %v4095
  %4097 = vdwg.mxu0
  %4098 = vmatpush.bf16.msra.mxu0 0
  %4099 = vmatpush.bf16.msra.mxu0 0
  %4100 = vmatpush.bf16.msra.mxu0 0
  %4101 = vmatpush.bf16.msra.mxu0 0
  %4102 = vmatpush.bf16.msra.mxu0 %v3963
  %4103 = vmatpush.bf16.msra.mxu0 %v3961
  %4104 = vmatpush.bf16.msra.mxu0 %v3959
  %4105 = vmatpush.bf16.msra.mxu0 %v3957
  %4106 = vmatmul.bf16.gmra.mxu0 %v4058
  %v4107 = vpop.f32.mrf.mxu0
  %v4108 = vadd.f32 %v4079, %v4107
  %v4109 = vpop.f32.mrf.mxu0
  %v4110 = vadd.f32 %v4081, %v4109
  %4111 = vmatmul.bf16.gmra.mxu0 %v4061
  %v4112 = vpop.f32.mrf.mxu0
  %v4113 = vadd.f32 %v4084, %v4112
  %v4114 = vpop.f32.mrf.mxu0
  %v4115 = vadd.f32 %v4086, %v4114
  %4116 = vmatmul.bf16.gmra.mxu0 %v4064
  %v4117 = vpop.f32.mrf.mxu0
  %v4118 = vadd.f32 %v4089, %v4117
  %v4119 = vpop.f32.mrf.mxu0
  %v4120 = vadd.f32 %v4091, %v4119
  %4121 = vmatmul.bf16.gmra.mxu0 %v4067
  %v4122 = vpop.f32.mrf.mxu0
  %v4123 = vadd.f32 %v4094, %v4122
  %v4124 = vpop.f32.mrf.mxu0
  %v4125 = vadd.f32 %v4096, %v4124
  %4126 = vdwg.mxu0
  %4127 = vmatpush.bf16.msra.mxu0 %v3924
  %4128 = vmatpush.bf16.msra.mxu0 %v3922
  %4129 = vmatpush.bf16.msra.mxu0 %v3920
  %4130 = vmatpush.bf16.msra.mxu0 %v3918
  %4131 = vmatpush.bf16.msra.mxu0 %v3628
  %4132 = vmatpush.bf16.msra.mxu0 %v3626
  %4133 = vmatpush.bf16.msra.mxu0 %v3624
  %4134 = vmatpush.bf16.msra.mxu0 %v3622
  %4135 = vmatmul.bf16.gmra.mxu0 %v4045
  %v4136 = vpop.f32.mrf.mxu0
  %v4137 = vadd.f32 %v3984, %v4136
  %v4138 = vpop.f32.mrf.mxu0
  %v4139 = vadd.f32 %v3989, %v4138
  %4140 = vmatmul.bf16.gmra.mxu0 %v4047
  %v4141 = vpop.f32.mrf.mxu0
  %v4142 = vadd.f32 %v3994, %v4141
  %v4143 = vpop.f32.mrf.mxu0
  %v4144 = vadd.f32 %v3999, %v4143
  %4145 = vmatmul.bf16.gmra.mxu0 %v4049
  %v4146 = vpop.f32.mrf.mxu0
  %v4147 = vadd.f32 %v4004, %v4146
  %v4148 = vpop.f32.mrf.mxu0
  %v4149 = vadd.f32 %v4009, %v4148
  %4150 = vmatmul.bf16.gmra.mxu0 %v4051
  %v4151 = vpop.f32.mrf.mxu0
  %v4152 = vadd.f32 %v4014, %v4151
  %v4153 = vpop.f32.mrf.mxu0
  %v4154 = vadd.f32 %v4019, %v4153
  %4155 = vdwg.mxu0
  %4156 = vmatpush.bf16.msra.mxu0 0
  %4157 = vmatpush.bf16.msra.mxu0 0
  %4158 = vmatpush.bf16.msra.mxu0 0
  %4159 = vmatpush.bf16.msra.mxu0 0
  %4160 = vmatpush.bf16.msra.mxu0 %v3964
  %4161 = vmatpush.bf16.msra.mxu0 %v3962
  %4162 = vmatpush.bf16.msra.mxu0 %v3960
  %4163 = vmatpush.bf16.msra.mxu0 %v3958
  %4164 = vmatmul.bf16.gmra.mxu0 %v4058
  %v4165 = vpop.f32.mrf.mxu0
  %v4166 = vadd.f32 %v4137, %v4165
  %v4167 = vpop.f32.mrf.mxu0
  %v4168 = vadd.f32 %v4139, %v4167
  %4169 = vmatmul.bf16.gmra.mxu0 %v4061
  %v4170 = vpop.f32.mrf.mxu0
  %v4171 = vadd.f32 %v4142, %v4170
  %v4172 = vpop.f32.mrf.mxu0
  %v4173 = vadd.f32 %v4144, %v4172
  %4174 = vmatmul.bf16.gmra.mxu0 %v4064
  %v4175 = vpop.f32.mrf.mxu0
  %v4176 = vadd.f32 %v4147, %v4175
  %v4177 = vpop.f32.mrf.mxu0
  %v4178 = vadd.f32 %v4149, %v4177
  %4179 = vmatmul.bf16.gmra.mxu0 %v4067
  %v4180 = vpop.f32.mrf.mxu0
  %v4181 = vadd.f32 %v4152, %v4180
  %v4182 = vpop.f32.mrf.mxu0
  %v4183 = vadd.f32 %v4154, %v4182
  %4184 = vdwg.mxu0
  %vm4185 = vcmp.gt.f32.partialorder %v4108, 0.0
  %vm4186 = vcmp.gt.f32.partialorder %v4166, 0.0
  %vm4187 = vcmp.gt.f32.partialorder %v4110, 0.0
  %vm4188 = vcmp.gt.f32.partialorder %v4168, 0.0
  %vm4189 = vcmp.gt.f32.partialorder %v4113, 0.0
  %vm4190 = vcmp.gt.f32.partialorder %v4171, 0.0
  %vm4191 = vcmp.gt.f32.partialorder %v4115, 0.0
  %vm4192 = vcmp.gt.f32.partialorder %v4173, 0.0
  %vm4193 = vcmp.gt.f32.partialorder %v4118, 0.0
  %vm4194 = vcmp.gt.f32.partialorder %v4176, 0.0
  %vm4195 = vcmp.gt.f32.partialorder %v4120, 0.0
  %vm4196 = vcmp.gt.f32.partialorder %v4178, 0.0
  %vm4197 = vcmp.gt.f32.partialorder %v4123, 0.0
  %vm4198 = vcmp.gt.f32.partialorder %v4181, 0.0
  %vm4199 = vcmp.gt.f32.partialorder %v4125, 0.0
  %vm4200 = vcmp.gt.f32.partialorder %v4183, 0.0
  %v4201 = vmul.f32 %v4108, 0.01
  %v4202 = vmul.f32 %v4166, 0.01
  %v4203 = vmul.f32 %v4110, 0.01
  %v4204 = vmul.f32 %v4168, 0.01
  %v4205 = vmul.f32 %v4113, 0.01
  %v4206 = vmul.f32 %v4171, 0.01
  %v4207 = vmul.f32 %v4115, 0.01
  %v4208 = vmul.f32 %v4173, 0.01
  %v4209 = vmul.f32 %v4118, 0.01
  %v4210 = vmul.f32 %v4176, 0.01
  %v4211 = vmul.f32 %v4120, 0.01
  %v4212 = vmul.f32 %v4178, 0.01
  %v4213 = vmul.f32 %v4123, 0.01
  %v4214 = vmul.f32 %v4181, 0.01
  %v4215 = vmul.f32 %v4125, 0.01
  %v4216 = vmul.f32 %v4183, 0.01
  %v4217 = vsel %vm4185, %v4108, %v4201
  %v4218 = vsel %vm4186, %v4166, %v4202
  %v4219 = vsel %vm4187, %v4110, %v4203
  %v4220 = vsel %vm4188, %v4168, %v4204
  %v4221 = vsel %vm4189, %v4113, %v4205
  %v4222 = vsel %vm4190, %v4171, %v4206
  %v4223 = vsel %vm4191, %v4115, %v4207
  %v4224 = vsel %vm4192, %v4173, %v4208
  %v4225 = vsel %vm4193, %v4118, %v4209
  %v4226 = vsel %vm4194, %v4176, %v4210
  %v4227 = vsel %vm4195, %v4120, %v4211
  %v4228 = vsel %vm4196, %v4178, %v4212
  %v4229 = vsel %vm4197, %v4123, %v4213
  %v4230 = vsel %vm4198, %v4181, %v4214
  %v4231 = vsel %vm4199, %v4125, %v4215
  %v4232 = vsel %vm4200, %v4183, %v4216
  %4233 = vrot.lane.b32.xlu0 %v4217, 1
  %v4234 = vpop.permute.xlu0 %4233
  %4235 = vrot.lane.b32.xlu0 %v4219, 1
  %v4236 = vpop.permute.xlu0 %4235
  %4237 = vrot.lane.b32.xlu0 %v4221, 1
  %v4238 = vpop.permute.xlu0 %4237
  %4239 = vrot.lane.b32.xlu0 %v4223, 1
  %v4240 = vpop.permute.xlu0 %4239
  %4241 = vrot.lane.b32.xlu0 %v4225, 1
  %v4242 = vpop.permute.xlu0 %4241
  %4243 = vrot.lane.b32.xlu0 %v4227, 1
  %v4244 = vpop.permute.xlu0 %4243
  %4245 = vrot.lane.b32.xlu0 %v4229, 1
  %v4246 = vpop.permute.xlu0 %4245
  %4247 = vrot.lane.b32.xlu0 %v4231, 1
  %v4248 = vpop.permute.xlu0 %4247
  %4249 = vrot.lane.b32.xlu0 %v4218, 1
  %v4250 = vpop.permute.xlu0 %4249
  %4251 = vrot.lane.b32.xlu0 %v4220, 1
  %v4252 = vpop.permute.xlu0 %4251
  %4253 = vrot.lane.b32.xlu0 %v4222, 1
  %v4254 = vpop.permute.xlu0 %4253
  %4255 = vrot.lane.b32.xlu0 %v4224, 1
  %v4256 = vpop.permute.xlu0 %4255
  %4257 = vrot.lane.b32.xlu0 %v4226, 1
  %v4258 = vpop.permute.xlu0 %4257
  %4259 = vrot.lane.b32.xlu0 %v4228, 1
  %v4260 = vpop.permute.xlu0 %4259
  %4261 = vrot.lane.b32.xlu0 %v4230, 1
  %v4262 = vpop.permute.xlu0 %4261
  %4263 = vrot.lane.b32.xlu0 %v4232, 1
  %v4264 = vpop.permute.xlu0 %4263
  %v4265 = vsel %vm110, %v4234, %v4250
  %v4266 = vsel %vm110, %v4236, %v4252
  %v4267 = vsel %vm110, %v4238, %v4254
  %v4268 = vsel %vm110, %v4240, %v4256
  %v4269 = vsel %vm110, %v4242, %v4258
  %v4270 = vsel %vm110, %v4244, %v4260
  %v4271 = vsel %vm110, %v4246, %v4262
  %v4272 = vsel %vm110, %v4248, %v4264
  %v4273 = vsel %vm110, %v4250, %v4234
  %v4274 = vsel %vm110, %v4252, %v4236
  %v4275 = vsel %vm110, %v4254, %v4238
  %v4276 = vsel %vm110, %v4256, %v4240
  %v4277 = vsel %vm110, %v4258, %v4242
  %v4278 = vsel %vm110, %v4260, %v4244
  %v4279 = vsel %vm110, %v4262, %v4246
  %v4280 = vsel %vm110, %v4264, %v4248
  %v4281 = vmul.f32 %v4273, %v115
  %v4282 = vmul.f32 %v4265, %v116
  %v4283 = vmul.f32 %v4274, %v115
  %v4284 = vmul.f32 %v4266, %v116
  %v4285 = vmul.f32 %v4275, %v115
  %v4286 = vmul.f32 %v4267, %v116
  %v4287 = vmul.f32 %v4276, %v115
  %v4288 = vmul.f32 %v4268, %v116
  %v4289 = vmul.f32 %v4277, %v115
  %v4290 = vmul.f32 %v4269, %v116
  %v4291 = vmul.f32 %v4278, %v115
  %v4292 = vmul.f32 %v4270, %v116
  %v4293 = vmul.f32 %v4279, %v115
  %v4294 = vmul.f32 %v4271, %v116
  %v4295 = vmul.f32 %v4280, %v115
  %v4296 = vmul.f32 %v4272, %v116
  %v4297 = vmul.f32 %v4217, %v124
  %v4298 = vmul.f32 %v4218, %v125
  %v4299 = vmul.f32 %v4219, %v124
  %v4300 = vmul.f32 %v4220, %v125
  %v4301 = vmul.f32 %v4221, %v124
  %v4302 = vmul.f32 %v4222, %v125
  %v4303 = vmul.f32 %v4223, %v124
  %v4304 = vmul.f32 %v4224, %v125
  %v4305 = vmul.f32 %v4225, %v124
  %v4306 = vmul.f32 %v4226, %v125
  %v4307 = vmul.f32 %v4227, %v124
  %v4308 = vmul.f32 %v4228, %v125
  %v4309 = vmul.f32 %v4229, %v124
  %v4310 = vmul.f32 %v4230, %v125
  %v4311 = vmul.f32 %v4231, %v124
  %v4312 = vmul.f32 %v4232, %v125
  %4313 = vrot.lane.b32.xlu0 %v4217, 127
  %v4314 = vpop.permute.xlu0 %4313
  %4315 = vrot.lane.b32.xlu0 %v4219, 127
  %v4316 = vpop.permute.xlu0 %4315
  %4317 = vrot.lane.b32.xlu0 %v4221, 127
  %v4318 = vpop.permute.xlu0 %4317
  %4319 = vrot.lane.b32.xlu0 %v4223, 127
  %v4320 = vpop.permute.xlu0 %4319
  %4321 = vrot.lane.b32.xlu0 %v4225, 127
  %v4322 = vpop.permute.xlu0 %4321
  %4323 = vrot.lane.b32.xlu0 %v4227, 127
  %v4324 = vpop.permute.xlu0 %4323
  %4325 = vrot.lane.b32.xlu0 %v4229, 127
  %v4326 = vpop.permute.xlu0 %4325
  %4327 = vrot.lane.b32.xlu0 %v4231, 127
  %v4328 = vpop.permute.xlu0 %4327
  %4329 = vrot.lane.b32.xlu0 %v4218, 127
  %v4330 = vpop.permute.xlu0 %4329
  %4331 = vrot.lane.b32.xlu0 %v4220, 127
  %v4332 = vpop.permute.xlu0 %4331
  %4333 = vrot.lane.b32.xlu0 %v4222, 127
  %v4334 = vpop.permute.xlu0 %4333
  %4335 = vrot.lane.b32.xlu0 %v4224, 127
  %v4336 = vpop.permute.xlu0 %4335
  %4337 = vrot.lane.b32.xlu0 %v4226, 127
  %v4338 = vpop.permute.xlu0 %4337
  %4339 = vrot.lane.b32.xlu0 %v4228, 127
  %v4340 = vpop.permute.xlu0 %4339
  %4341 = vrot.lane.b32.xlu0 %v4230, 127
  %v4342 = vpop.permute.xlu0 %4341
  %4343 = vrot.lane.b32.xlu0 %v4232, 127
  %v4344 = vpop.permute.xlu0 %4343
  %v4345 = vsel %vm140, %v4314, %v4330
  %v4346 = vsel %vm140, %v4316, %v4332
  %v4347 = vsel %vm140, %v4318, %v4334
  %v4348 = vsel %vm140, %v4320, %v4336
  %v4349 = vsel %vm140, %v4322, %v4338
  %v4350 = vsel %vm140, %v4324, %v4340
  %v4351 = vsel %vm140, %v4326, %v4342
  %v4352 = vsel %vm140, %v4328, %v4344
  %v4353 = vsel %vm140, %v4330, %v4314
  %v4354 = vsel %vm140, %v4332, %v4316
  %v4355 = vsel %vm140, %v4334, %v4318
  %v4356 = vsel %vm140, %v4336, %v4320
  %v4357 = vsel %vm140, %v4338, %v4322
  %v4358 = vsel %vm140, %v4340, %v4324
  %v4359 = vsel %vm140, %v4342, %v4326
  %v4360 = vsel %vm140, %v4344, %v4328
  %v4361 = vmul.f32 %v4345, %v146
  %v4362 = vmul.f32 %v4353, %v147
  %v4363 = vmul.f32 %v4346, %v146
  %v4364 = vmul.f32 %v4354, %v147
  %v4365 = vmul.f32 %v4347, %v146
  %v4366 = vmul.f32 %v4355, %v147
  %v4367 = vmul.f32 %v4348, %v146
  %v4368 = vmul.f32 %v4356, %v147
  %v4369 = vmul.f32 %v4349, %v146
  %v4370 = vmul.f32 %v4357, %v147
  %v4371 = vmul.f32 %v4350, %v146
  %v4372 = vmul.f32 %v4358, %v147
  %v4373 = vmul.f32 %v4351, %v146
  %v4374 = vmul.f32 %v4359, %v147
  %v4375 = vmul.f32 %v4352, %v146
  %v4376 = vmul.f32 %v4360, %v147
  %v4377 = vld [vmem:[%s15] sm:$0xff]
  %v4378 = vld [vmem:[%s15 + $0x8] sm:$0xff]
  %v4379 = vld [vmem:[%s15 + $0x10] sm:$0xff]
  %v4380 = vld [vmem:[%s15 + $0x18] sm:$0xff]
  %v4381 = vld [vmem:[%s15 + $0x20] sm:$0xff]
  %v4382 = vld [vmem:[%s15 + $0x28] sm:$0xff]
  %v4383 = vld [vmem:[%s15 + $0x30] sm:$0xff]
  %v4384 = vld [vmem:[%s15 + $0x38] sm:$0xff]
  %v4385 = vld [vmem:[%s15 + $0x40] sm:$0xff]
  %v4386 = vld [vmem:[%s15 + $0x48] sm:$0xff]
  %v4387 = vld [vmem:[%s15 + $0x50] sm:$0xff]
  %v4388 = vld [vmem:[%s15 + $0x58] sm:$0xff]
  %v4389 = vld [vmem:[%s15 + $0x60] sm:$0xff]
  %v4390 = vld [vmem:[%s15 + $0x68] sm:$0xff]
  %v4391 = vld [vmem:[%s15 + $0x70] sm:$0xff]
  %v4392 = vld [vmem:[%s15 + $0x78] sm:$0xff]
  %v4393 = vpack.c.bf16 %v4283, %v4281
  %v4394 = vpack.c.bf16 %v4284, %v4282
  %v4395 = vpack.c.bf16 %v4287, %v4285
  %v4396 = vpack.c.bf16 %v4288, %v4286
  %v4397 = vpack.c.bf16 %v4291, %v4289
  %v4398 = vpack.c.bf16 %v4292, %v4290
  %v4399 = vpack.c.bf16 %v4295, %v4293
  %v4400 = vpack.c.bf16 %v4296, %v4294
  %v4401 = vpack.c.bf16 %v4299, %v4297
  %v4402 = vpack.c.bf16 %v4300, %v4298
  %v4403 = vpack.c.bf16 %v4303, %v4301
  %v4404 = vpack.c.bf16 %v4304, %v4302
  %v4405 = vpack.c.bf16 %v4307, %v4305
  %v4406 = vpack.c.bf16 %v4308, %v4306
  %v4407 = vpack.c.bf16 %v4311, %v4309
  %v4408 = vpack.c.bf16 %v4312, %v4310
  %v4409 = vpack.c.bf16 %v4363, %v4361
  %v4410 = vpack.c.bf16 %v4364, %v4362
  %v4411 = vpack.c.bf16 %v4367, %v4365
  %v4412 = vpack.c.bf16 %v4368, %v4366
  %v4413 = vpack.c.bf16 %v4371, %v4369
  %v4414 = vpack.c.bf16 %v4372, %v4370
  %v4415 = vpack.c.bf16 %v4375, %v4373
  %v4416 = vpack.c.bf16 %v4376, %v4374
  %v4417 = vld [vmem:[%s16] sm:$0xff]
  %v4418 = vld [vmem:[%s16 + $0x8] sm:$0xff]
  %v4419 = vld [vmem:[%s16 + $0x10] sm:$0xff]
  %v4420 = vld [vmem:[%s16 + $0x18] sm:$0xff]
  %v4421 = vld [vmem:[%s16 + $0x20] sm:$0xff]
  %v4422 = vld [vmem:[%s16 + $0x28] sm:$0xff]
  %v4423 = vld [vmem:[%s16 + $0x30] sm:$0xff]
  %v4424 = vld [vmem:[%s16 + $0x38] sm:$0xff]
  %v4425 = vld [vmem:[%s16 + $0x40] sm:$0xff]
  %v4426 = vld [vmem:[%s16 + $0x48] sm:$0xff]
  %v4427 = vld [vmem:[%s16 + $0x50] sm:$0xff]
  %v4428 = vld [vmem:[%s16 + $0x58] sm:$0xff]
  %v4429 = vld [vmem:[%s16 + $0x60] sm:$0xff]
  %v4430 = vld [vmem:[%s16 + $0x68] sm:$0xff]
  %v4431 = vld [vmem:[%s16 + $0x70] sm:$0xff]
  %v4432 = vld [vmem:[%s16 + $0x78] sm:$0xff]
  %4434 = vset.pattern.permute.xlu0 0
  %4435 = vperm.xlu0 %4434, %v4417
  %v4436 = vpop.permute.xlu0 %4435
  %4439 = vset.pattern.permute.xlu0 0
  %4440 = vperm.xlu0 %4439, %v4418
  %v4441 = vpop.permute.xlu0 %4440
  %4444 = vset.pattern.permute.xlu0 0
  %4445 = vperm.xlu0 %4444, %v4419
  %v4446 = vpop.permute.xlu0 %4445
  %4449 = vset.pattern.permute.xlu0 0
  %4450 = vperm.xlu0 %4449, %v4420
  %v4451 = vpop.permute.xlu0 %4450
  %4454 = vset.pattern.permute.xlu0 0
  %4455 = vperm.xlu0 %4454, %v4421
  %v4456 = vpop.permute.xlu0 %4455
  %4459 = vset.pattern.permute.xlu0 0
  %4460 = vperm.xlu0 %4459, %v4422
  %v4461 = vpop.permute.xlu0 %4460
  %4464 = vset.pattern.permute.xlu0 0
  %4465 = vperm.xlu0 %4464, %v4423
  %v4466 = vpop.permute.xlu0 %4465
  %4469 = vset.pattern.permute.xlu0 0
  %4470 = vperm.xlu0 %4469, %v4424
  %v4471 = vpop.permute.xlu0 %4470
  %4474 = vset.pattern.permute.xlu0 0
  %4475 = vperm.xlu0 %4474, %v4425
  %v4476 = vpop.permute.xlu0 %4475
  %4479 = vset.pattern.permute.xlu0 0
  %4480 = vperm.xlu0 %4479, %v4426
  %v4481 = vpop.permute.xlu0 %4480
  %4484 = vset.pattern.permute.xlu0 0
  %4485 = vperm.xlu0 %4484, %v4427
  %v4486 = vpop.permute.xlu0 %4485
  %4489 = vset.pattern.permute.xlu0 0
  %4490 = vperm.xlu0 %4489, %v4428
  %v4491 = vpop.permute.xlu0 %4490
  %4494 = vset.pattern.permute.xlu0 0
  %4495 = vperm.xlu0 %4494, %v4429
  %v4496 = vpop.permute.xlu0 %4495
  %4499 = vset.pattern.permute.xlu0 0
  %4500 = vperm.xlu0 %4499, %v4430
  %v4501 = vpop.permute.xlu0 %4500
  %4504 = vset.pattern.permute.xlu0 0
  %4505 = vperm.xlu0 %4504, %v4431
  %v4506 = vpop.permute.xlu0 %4505
  %4509 = vset.pattern.permute.xlu0 0
  %4510 = vperm.xlu0 %4509, %v4432
  %v4511 = vpop.permute.xlu0 %4510
  %v4529 = vunpack.c.l.b16 %v4377
  %v4530 = vunpack.c.h.b16 %v4377
  %v4531 = vunpack.c.l.b16 %v4378
  %v4532 = vunpack.c.h.b16 %v4378
  %v4533 = vunpack.c.l.b16 %v4379
  %v4534 = vunpack.c.h.b16 %v4379
  %v4535 = vunpack.c.l.b16 %v4380
  %v4536 = vunpack.c.h.b16 %v4380
  %v4537 = vunpack.c.l.b16 %v4381
  %v4538 = vunpack.c.h.b16 %v4381
  %v4539 = vunpack.c.l.b16 %v4382
  %v4540 = vunpack.c.h.b16 %v4382
  %v4541 = vunpack.c.l.b16 %v4383
  %v4542 = vunpack.c.h.b16 %v4383
  %v4543 = vunpack.c.l.b16 %v4384
  %v4544 = vunpack.c.h.b16 %v4384
  %v4545 = vunpack.c.l.b16 %v4385
  %v4546 = vunpack.c.h.b16 %v4385
  %v4547 = vunpack.c.l.b16 %v4386
  %v4548 = vunpack.c.h.b16 %v4386
  %v4549 = vunpack.c.l.b16 %v4387
  %v4550 = vunpack.c.h.b16 %v4387
  %v4551 = vunpack.c.l.b16 %v4388
  %v4552 = vunpack.c.h.b16 %v4388
  %v4553 = vunpack.c.l.b16 %v4389
  %v4554 = vunpack.c.h.b16 %v4389
  %v4555 = vunpack.c.l.b16 %v4390
  %v4556 = vunpack.c.h.b16 %v4390
  %v4557 = vunpack.c.l.b16 %v4391
  %v4558 = vunpack.c.h.b16 %v4391
  %v4559 = vunpack.c.l.b16 %v4392
  %v4560 = vunpack.c.h.b16 %v4392
  %v4561 = vpack.c.b16 %v4531, %v4529
  %v4562 = vpack.c.b16 %v4532, %v4530
  %v4563 = vpack.c.b16 %v4535, %v4533
  %v4564 = vpack.c.b16 %v4536, %v4534
  %v4565 = vpack.c.b16 %v4539, %v4537
  %v4566 = vpack.c.b16 %v4540, %v4538
  %v4567 = vpack.c.b16 %v4543, %v4541
  %v4568 = vpack.c.b16 %v4544, %v4542
  %v4569 = vpack.c.b16 %v4547, %v4545
  %v4570 = vpack.c.b16 %v4548, %v4546
  %v4571 = vpack.c.b16 %v4551, %v4549
  %v4572 = vpack.c.b16 %v4552, %v4550
  %v4573 = vpack.c.b16 %v4555, %v4553
  %v4574 = vpack.c.b16 %v4556, %v4554
  %v4575 = vpack.c.b16 %v4559, %v4557
  %v4576 = vpack.c.b16 %v4560, %v4558
  %v4586 = vsel %vm1930, %v4562, 0
  %v4589 = vsel %vm1930, %v4564, 0
  %v4592 = vsel %vm1930, %v4566, 0
  %v4595 = vsel %vm1930, %v4568, 0
  %v4598 = vsel %vm1930, %v4570, 0
  %v4601 = vsel %vm1930, %v4572, 0
  %v4604 = vsel %vm1930, %v4574, 0
  %v4607 = vsel %vm1930, %v4576, 0
  %4609 = vmatpush.bf16.msra.mxu0 %v4407
  %4610 = vmatpush.bf16.msra.mxu0 %v4405
  %4611 = vmatpush.bf16.msra.mxu0 %v4403
  %4612 = vmatpush.bf16.msra.mxu0 %v4401
  %4613 = vmatpush.bf16.msra.mxu0 %v4399
  %4614 = vmatpush.bf16.msra.mxu0 %v4397
  %4615 = vmatpush.bf16.msra.mxu0 %v4395
  %4616 = vmatpush.bf16.msra.mxu0 %v4393
  %4617 = vmatmul.bf16.gmra.mxu0 %v4561
  %v4618 = vpop.f32.mrf.mxu0
  %v4619 = vadd.f32 %v4436, %v4618
  %v4620 = vpop.f32.mrf.mxu0
  %v4621 = vadd.f32 %v4441, %v4620
  %4622 = vmatmul.bf16.gmra.mxu0 %v4563
  %v4623 = vpop.f32.mrf.mxu0
  %v4624 = vadd.f32 %v4446, %v4623
  %v4625 = vpop.f32.mrf.mxu0
  %v4626 = vadd.f32 %v4451, %v4625
  %4627 = vmatmul.bf16.gmra.mxu0 %v4565
  %v4628 = vpop.f32.mrf.mxu0
  %v4629 = vadd.f32 %v4456, %v4628
  %v4630 = vpop.f32.mrf.mxu0
  %v4631 = vadd.f32 %v4461, %v4630
  %4632 = vmatmul.bf16.gmra.mxu0 %v4567
  %v4633 = vpop.f32.mrf.mxu0
  %v4634 = vadd.f32 %v4466, %v4633
  %v4635 = vpop.f32.mrf.mxu0
  %v4636 = vadd.f32 %v4471, %v4635
  %4637 = vmatmul.bf16.gmra.mxu0 %v4569
  %v4638 = vpop.f32.mrf.mxu0
  %v4639 = vadd.f32 %v4476, %v4638
  %v4640 = vpop.f32.mrf.mxu0
  %v4641 = vadd.f32 %v4481, %v4640
  %4642 = vmatmul.bf16.gmra.mxu0 %v4571
  %v4643 = vpop.f32.mrf.mxu0
  %v4644 = vadd.f32 %v4486, %v4643
  %v4645 = vpop.f32.mrf.mxu0
  %v4646 = vadd.f32 %v4491, %v4645
  %4647 = vmatmul.bf16.gmra.mxu0 %v4573
  %v4648 = vpop.f32.mrf.mxu0
  %v4649 = vadd.f32 %v4496, %v4648
  %v4650 = vpop.f32.mrf.mxu0
  %v4651 = vadd.f32 %v4501, %v4650
  %4652 = vmatmul.bf16.gmra.mxu0 %v4575
  %v4653 = vpop.f32.mrf.mxu0
  %v4654 = vadd.f32 %v4506, %v4653
  %v4655 = vpop.f32.mrf.mxu0
  %v4656 = vadd.f32 %v4511, %v4655
  %4657 = vdwg.mxu0
  %4658 = vmatpush.bf16.msra.mxu0 0
  %4659 = vmatpush.bf16.msra.mxu0 0
  %4660 = vmatpush.bf16.msra.mxu0 0
  %4661 = vmatpush.bf16.msra.mxu0 0
  %4662 = vmatpush.bf16.msra.mxu0 %v4415
  %4663 = vmatpush.bf16.msra.mxu0 %v4413
  %4664 = vmatpush.bf16.msra.mxu0 %v4411
  %4665 = vmatpush.bf16.msra.mxu0 %v4409
  %4666 = vmatmul.bf16.gmra.mxu0 %v4586
  %v4667 = vpop.f32.mrf.mxu0
  %v4668 = vadd.f32 %v4619, %v4667
  %v4669 = vpop.f32.mrf.mxu0
  %v4670 = vadd.f32 %v4621, %v4669
  %4671 = vmatmul.bf16.gmra.mxu0 %v4589
  %v4672 = vpop.f32.mrf.mxu0
  %v4673 = vadd.f32 %v4624, %v4672
  %v4674 = vpop.f32.mrf.mxu0
  %v4675 = vadd.f32 %v4626, %v4674
  %4676 = vmatmul.bf16.gmra.mxu0 %v4592
  %v4677 = vpop.f32.mrf.mxu0
  %v4678 = vadd.f32 %v4629, %v4677
  %v4679 = vpop.f32.mrf.mxu0
  %v4680 = vadd.f32 %v4631, %v4679
  %4681 = vmatmul.bf16.gmra.mxu0 %v4595
  %v4682 = vpop.f32.mrf.mxu0
  %v4683 = vadd.f32 %v4634, %v4682
  %v4684 = vpop.f32.mrf.mxu0
  %v4685 = vadd.f32 %v4636, %v4684
  %4686 = vmatmul.bf16.gmra.mxu0 %v4598
  %v4687 = vpop.f32.mrf.mxu0
  %v4688 = vadd.f32 %v4639, %v4687
  %v4689 = vpop.f32.mrf.mxu0
  %v4690 = vadd.f32 %v4641, %v4689
  %4691 = vmatmul.bf16.gmra.mxu0 %v4601
  %v4692 = vpop.f32.mrf.mxu0
  %v4693 = vadd.f32 %v4644, %v4692
  %v4694 = vpop.f32.mrf.mxu0
  %v4695 = vadd.f32 %v4646, %v4694
  %4696 = vmatmul.bf16.gmra.mxu0 %v4604
  %v4697 = vpop.f32.mrf.mxu0
  %v4698 = vadd.f32 %v4649, %v4697
  %v4699 = vpop.f32.mrf.mxu0
  %v4700 = vadd.f32 %v4651, %v4699
  %4701 = vmatmul.bf16.gmra.mxu0 %v4607
  %v4702 = vpop.f32.mrf.mxu0
  %v4703 = vadd.f32 %v4654, %v4702
  %v4704 = vpop.f32.mrf.mxu0
  %v4705 = vadd.f32 %v4656, %v4704
  %4706 = vdwg.mxu0
  %4707 = vmatpush.bf16.msra.mxu0 %v4408
  %4708 = vmatpush.bf16.msra.mxu0 %v4406
  %4709 = vmatpush.bf16.msra.mxu0 %v4404
  %4710 = vmatpush.bf16.msra.mxu0 %v4402
  %4711 = vmatpush.bf16.msra.mxu0 %v4400
  %4712 = vmatpush.bf16.msra.mxu0 %v4398
  %4713 = vmatpush.bf16.msra.mxu0 %v4396
  %4714 = vmatpush.bf16.msra.mxu0 %v4394
  %4715 = vmatmul.bf16.gmra.mxu0 %v4561
  %v4716 = vpop.f32.mrf.mxu0
  %v4717 = vadd.f32 %v4436, %v4716
  %v4718 = vpop.f32.mrf.mxu0
  %v4719 = vadd.f32 %v4441, %v4718
  %4720 = vmatmul.bf16.gmra.mxu0 %v4563
  %v4721 = vpop.f32.mrf.mxu0
  %v4722 = vadd.f32 %v4446, %v4721
  %v4723 = vpop.f32.mrf.mxu0
  %v4724 = vadd.f32 %v4451, %v4723
  %4725 = vmatmul.bf16.gmra.mxu0 %v4565
  %v4726 = vpop.f32.mrf.mxu0
  %v4727 = vadd.f32 %v4456, %v4726
  %v4728 = vpop.f32.mrf.mxu0
  %v4729 = vadd.f32 %v4461, %v4728
  %4730 = vmatmul.bf16.gmra.mxu0 %v4567
  %v4731 = vpop.f32.mrf.mxu0
  %v4732 = vadd.f32 %v4466, %v4731
  %v4733 = vpop.f32.mrf.mxu0
  %v4734 = vadd.f32 %v4471, %v4733
  %4735 = vmatmul.bf16.gmra.mxu0 %v4569
  %v4736 = vpop.f32.mrf.mxu0
  %v4737 = vadd.f32 %v4476, %v4736
  %v4738 = vpop.f32.mrf.mxu0
  %v4739 = vadd.f32 %v4481, %v4738
  %4740 = vmatmul.bf16.gmra.mxu0 %v4571
  %v4741 = vpop.f32.mrf.mxu0
  %v4742 = vadd.f32 %v4486, %v4741
  %v4743 = vpop.f32.mrf.mxu0
  %v4744 = vadd.f32 %v4491, %v4743
  %4745 = vmatmul.bf16.gmra.mxu0 %v4573
  %v4746 = vpop.f32.mrf.mxu0
  %v4747 = vadd.f32 %v4496, %v4746
  %v4748 = vpop.f32.mrf.mxu0
  %v4749 = vadd.f32 %v4501, %v4748
  %4750 = vmatmul.bf16.gmra.mxu0 %v4575
  %v4751 = vpop.f32.mrf.mxu0
  %v4752 = vadd.f32 %v4506, %v4751
  %v4753 = vpop.f32.mrf.mxu0
  %v4754 = vadd.f32 %v4511, %v4753
  %4755 = vdwg.mxu0
  %4756 = vmatpush.bf16.msra.mxu0 0
  %4757 = vmatpush.bf16.msra.mxu0 0
  %4758 = vmatpush.bf16.msra.mxu0 0
  %4759 = vmatpush.bf16.msra.mxu0 0
  %4760 = vmatpush.bf16.msra.mxu0 %v4416
  %4761 = vmatpush.bf16.msra.mxu0 %v4414
  %4762 = vmatpush.bf16.msra.mxu0 %v4412
  %4763 = vmatpush.bf16.msra.mxu0 %v4410
  %4764 = vmatmul.bf16.gmra.mxu0 %v4586
  %v4765 = vpop.f32.mrf.mxu0
  %v4766 = vadd.f32 %v4717, %v4765
  %v4767 = vpop.f32.mrf.mxu0
  %v4768 = vadd.f32 %v4719, %v4767
  %4769 = vmatmul.bf16.gmra.mxu0 %v4589
  %v4770 = vpop.f32.mrf.mxu0
  %v4771 = vadd.f32 %v4722, %v4770
  %v4772 = vpop.f32.mrf.mxu0
  %v4773 = vadd.f32 %v4724, %v4772
  %4774 = vmatmul.bf16.gmra.mxu0 %v4592
  %v4775 = vpop.f32.mrf.mxu0
  %v4776 = vadd.f32 %v4727, %v4775
  %v4777 = vpop.f32.mrf.mxu0
  %v4778 = vadd.f32 %v4729, %v4777
  %4779 = vmatmul.bf16.gmra.mxu0 %v4595
  %v4780 = vpop.f32.mrf.mxu0
  %v4781 = vadd.f32 %v4732, %v4780
  %v4782 = vpop.f32.mrf.mxu0
  %v4783 = vadd.f32 %v4734, %v4782
  %4784 = vmatmul.bf16.gmra.mxu0 %v4598
  %v4785 = vpop.f32.mrf.mxu0
  %v4786 = vadd.f32 %v4737, %v4785
  %v4787 = vpop.f32.mrf.mxu0
  %v4788 = vadd.f32 %v4739, %v4787
  %4789 = vmatmul.bf16.gmra.mxu0 %v4601
  %v4790 = vpop.f32.mrf.mxu0
  %v4791 = vadd.f32 %v4742, %v4790
  %v4792 = vpop.f32.mrf.mxu0
  %v4793 = vadd.f32 %v4744, %v4792
  %4794 = vmatmul.bf16.gmra.mxu0 %v4604
  %v4795 = vpop.f32.mrf.mxu0
  %v4796 = vadd.f32 %v4747, %v4795
  %v4797 = vpop.f32.mrf.mxu0
  %v4798 = vadd.f32 %v4749, %v4797
  %4799 = vmatmul.bf16.gmra.mxu0 %v4607
  %v4800 = vpop.f32.mrf.mxu0
  %v4801 = vadd.f32 %v4752, %v4800
  %v4802 = vpop.f32.mrf.mxu0
  %v4803 = vadd.f32 %v4754, %v4802
  %4804 = vdwg.mxu0
  %v4805 = vadd.f32 %v4668, %v3472
  %v4806 = vadd.f32 %v4766, %v3570
  %v4807 = vadd.f32 %v4670, %v3474
  %v4808 = vadd.f32 %v4768, %v3572
  %v4809 = vadd.f32 %v4673, %v3477
  %v4810 = vadd.f32 %v4771, %v3575
  %v4811 = vadd.f32 %v4675, %v3479
  %v4812 = vadd.f32 %v4773, %v3577
  %v4813 = vadd.f32 %v4678, %v3482
  %v4814 = vadd.f32 %v4776, %v3580
  %v4815 = vadd.f32 %v4680, %v3484
  %v4816 = vadd.f32 %v4778, %v3582
  %v4817 = vadd.f32 %v4683, %v3487
  %v4818 = vadd.f32 %v4781, %v3585
  %v4819 = vadd.f32 %v4685, %v3489
  %v4820 = vadd.f32 %v4783, %v3587
  %v4821 = vxor.u32 %v4688, 2147483648
  %v4822 = vxor.u32 %v4786, 2147483648
  %v4823 = vxor.u32 %v4690, 2147483648
  %v4824 = vxor.u32 %v4788, 2147483648
  %v4825 = vxor.u32 %v4693, 2147483648
  %v4826 = vxor.u32 %v4791, 2147483648
  %v4827 = vxor.u32 %v4695, 2147483648
  %v4828 = vxor.u32 %v4793, 2147483648
  %v4829 = vxor.u32 %v4698, 2147483648
  %v4830 = vxor.u32 %v4796, 2147483648
  %v4831 = vxor.u32 %v4700, 2147483648
  %v4832 = vxor.u32 %v4798, 2147483648
  %v4833 = vxor.u32 %v4703, 2147483648
  %v4834 = vxor.u32 %v4801, 2147483648
  %v4835 = vxor.u32 %v4705, 2147483648
  %v4836 = vxor.u32 %v4803, 2147483648
  %v4837 = vmul.f32 %v4821, 1.442695
  %v4838 = vpow.pop %v4837
  %v4839 = vmul.f32 %v4822, 1.442695
  %v4840 = vpow.pop %v4839
  %v4841 = vmul.f32 %v4823, 1.442695
  %v4842 = vpow.pop %v4841
  %v4843 = vmul.f32 %v4824, 1.442695
  %v4844 = vpow.pop %v4843
  %v4845 = vmul.f32 %v4825, 1.442695
  %v4846 = vpow.pop %v4845
  %v4847 = vmul.f32 %v4826, 1.442695
  %v4848 = vpow.pop %v4847
  %v4849 = vmul.f32 %v4827, 1.442695
  %v4850 = vpow.pop %v4849
  %v4851 = vmul.f32 %v4828, 1.442695
  %v4852 = vpow.pop %v4851
  %v4853 = vmul.f32 %v4829, 1.442695
  %v4854 = vpow.pop %v4853
  %v4855 = vmul.f32 %v4830, 1.442695
  %v4856 = vpow.pop %v4855
  %v4857 = vmul.f32 %v4831, 1.442695
  %v4858 = vpow.pop %v4857
  %v4859 = vmul.f32 %v4832, 1.442695
  %v4860 = vpow.pop %v4859
  %v4861 = vmul.f32 %v4833, 1.442695
  %v4862 = vpow.pop %v4861
  %v4863 = vmul.f32 %v4834, 1.442695
  %v4864 = vpow.pop %v4863
  %v4865 = vmul.f32 %v4835, 1.442695
  %v4866 = vpow.pop %v4865
  %v4867 = vmul.f32 %v4836, 1.442695
  %v4868 = vpow.pop %v4867
  %v4869 = vadd.f32 %v4838, 1.0
  %v4870 = vadd.f32 %v4840, 1.0
  %v4871 = vadd.f32 %v4842, 1.0
  %v4872 = vadd.f32 %v4844, 1.0
  %v4873 = vadd.f32 %v4846, 1.0
  %v4874 = vadd.f32 %v4848, 1.0
  %v4875 = vadd.f32 %v4850, 1.0
  %v4876 = vadd.f32 %v4852, 1.0
  %v4877 = vadd.f32 %v4854, 1.0
  %v4878 = vadd.f32 %v4856, 1.0
  %v4879 = vadd.f32 %v4858, 1.0
  %v4880 = vadd.f32 %v4860, 1.0
  %v4881 = vadd.f32 %v4862, 1.0
  %v4882 = vadd.f32 %v4864, 1.0
  %v4883 = vadd.f32 %v4866, 1.0
  %v4884 = vadd.f32 %v4868, 1.0
  %v4885 = vrcp.pop %v4869
  %v4886 = vmul.f32 %v4869, %v4885
  %v4887 = vsub.f32 1.0, %v4886
  %v4888 = vmul.f32 %v4885, %v4887
  %v4889 = vadd.f32 %v4885, %v4888
  %vm4890 = vweird.f32 %v4869
  %vm4891 = vweird.f32 %v4885
  %vm4892 = vmor %vm4890, %vm4891
  %v4893 = vsel %vm4892, %v4885, %v4889
  %v4894 = vand.u32 2147483647, %v4869
  %vm4895 = vcmp.eq.f32.partialorder %v4894, 8.507059e+37
  %v4896 = vand.u32 %v4869, 2147483648
  %v4897 = vor.u32 1.1754944e-38, %v4896
  %v4898 = vsel %vm4895, %v4897, %v4893
  %v4899 = vmul.f32 1.0, %v4898
  %v4900 = vrcp.pop %v4870
  %v4901 = vmul.f32 %v4870, %v4900
  %v4902 = vsub.f32 1.0, %v4901
  %v4903 = vmul.f32 %v4900, %v4902
  %v4904 = vadd.f32 %v4900, %v4903
  %vm4905 = vweird.f32 %v4870
  %vm4906 = vweird.f32 %v4900
  %vm4907 = vmor %vm4905, %vm4906
  %v4908 = vsel %vm4907, %v4900, %v4904
  %v4909 = vand.u32 2147483647, %v4870
  %vm4910 = vcmp.eq.f32.partialorder %v4909, 8.507059e+37
  %v4911 = vand.u32 %v4870, 2147483648
  %v4912 = vor.u32 1.1754944e-38, %v4911
  %v4913 = vsel %vm4910, %v4912, %v4908
  %v4914 = vmul.f32 1.0, %v4913
  %v4915 = vrcp.pop %v4871
  %v4916 = vmul.f32 %v4871, %v4915
  %v4917 = vsub.f32 1.0, %v4916
  %v4918 = vmul.f32 %v4915, %v4917
  %v4919 = vadd.f32 %v4915, %v4918
  %vm4920 = vweird.f32 %v4871
  %vm4921 = vweird.f32 %v4915
  %vm4922 = vmor %vm4920, %vm4921
  %v4923 = vsel %vm4922, %v4915, %v4919
  %v4924 = vand.u32 2147483647, %v4871
  %vm4925 = vcmp.eq.f32.partialorder %v4924, 8.507059e+37
  %v4926 = vand.u32 %v4871, 2147483648
  %v4927 = vor.u32 1.1754944e-38, %v4926
  %v4928 = vsel %vm4925, %v4927, %v4923
  %v4929 = vmul.f32 1.0, %v4928
  %v4930 = vrcp.pop %v4872
  %v4931 = vmul.f32 %v4872, %v4930
  %v4932 = vsub.f32 1.0, %v4931
  %v4933 = vmul.f32 %v4930, %v4932
  %v4934 = vadd.f32 %v4930, %v4933
  %vm4935 = vweird.f32 %v4872
  %vm4936 = vweird.f32 %v4930
  %vm4937 = vmor %vm4935, %vm4936
  %v4938 = vsel %vm4937, %v4930, %v4934
  %v4939 = vand.u32 2147483647, %v4872
  %vm4940 = vcmp.eq.f32.partialorder %v4939, 8.507059e+37
  %v4941 = vand.u32 %v4872, 2147483648
  %v4942 = vor.u32 1.1754944e-38, %v4941
  %v4943 = vsel %vm4940, %v4942, %v4938
  %v4944 = vmul.f32 1.0, %v4943
  %v4945 = vrcp.pop %v4873
  %v4946 = vmul.f32 %v4873, %v4945
  %v4947 = vsub.f32 1.0, %v4946
  %v4948 = vmul.f32 %v4945, %v4947
  %v4949 = vadd.f32 %v4945, %v4948
  %vm4950 = vweird.f32 %v4873
  %vm4951 = vweird.f32 %v4945
  %vm4952 = vmor %vm4950, %vm4951
  %v4953 = vsel %vm4952, %v4945, %v4949
  %v4954 = vand.u32 2147483647, %v4873
  %vm4955 = vcmp.eq.f32.partialorder %v4954, 8.507059e+37
  %v4956 = vand.u32 %v4873, 2147483648
  %v4957 = vor.u32 1.1754944e-38, %v4956
  %v4958 = vsel %vm4955, %v4957, %v4953
  %v4959 = vmul.f32 1.0, %v4958
  %v4960 = vrcp.pop %v4874
  %v4961 = vmul.f32 %v4874, %v4960
  %v4962 = vsub.f32 1.0, %v4961
  %v4963 = vmul.f32 %v4960, %v4962
  %v4964 = vadd.f32 %v4960, %v4963
  %vm4965 = vweird.f32 %v4874
  %vm4966 = vweird.f32 %v4960
  %vm4967 = vmor %vm4965, %vm4966
  %v4968 = vsel %vm4967, %v4960, %v4964
  %v4969 = vand.u32 2147483647, %v4874
  %vm4970 = vcmp.eq.f32.partialorder %v4969, 8.507059e+37
  %v4971 = vand.u32 %v4874, 2147483648
  %v4972 = vor.u32 1.1754944e-38, %v4971
  %v4973 = vsel %vm4970, %v4972, %v4968
  %v4974 = vmul.f32 1.0, %v4973
  %v4975 = vrcp.pop %v4875
  %v4976 = vmul.f32 %v4875, %v4975
  %v4977 = vsub.f32 1.0, %v4976
  %v4978 = vmul.f32 %v4975, %v4977
  %v4979 = vadd.f32 %v4975, %v4978
  %vm4980 = vweird.f32 %v4875
  %vm4981 = vweird.f32 %v4975
  %vm4982 = vmor %vm4980, %vm4981
  %v4983 = vsel %vm4982, %v4975, %v4979
  %v4984 = vand.u32 2147483647, %v4875
  %vm4985 = vcmp.eq.f32.partialorder %v4984, 8.507059e+37
  %v4986 = vand.u32 %v4875, 2147483648
  %v4987 = vor.u32 1.1754944e-38, %v4986
  %v4988 = vsel %vm4985, %v4987, %v4983
  %v4989 = vmul.f32 1.0, %v4988
  %v4990 = vrcp.pop %v4876
  %v4991 = vmul.f32 %v4876, %v4990
  %v4992 = vsub.f32 1.0, %v4991
  %v4993 = vmul.f32 %v4990, %v4992
  %v4994 = vadd.f32 %v4990, %v4993
  %vm4995 = vweird.f32 %v4876
  %vm4996 = vweird.f32 %v4990
  %vm4997 = vmor %vm4995, %vm4996
  %v4998 = vsel %vm4997, %v4990, %v4994
  %v4999 = vand.u32 2147483647, %v4876
  %vm5000 = vcmp.eq.f32.partialorder %v4999, 8.507059e+37
  %v5001 = vand.u32 %v4876, 2147483648
  %v5002 = vor.u32 1.1754944e-38, %v5001
  %v5003 = vsel %vm5000, %v5002, %v4998
  %v5004 = vmul.f32 1.0, %v5003
  %v5005 = vrcp.pop %v4877
  %v5006 = vmul.f32 %v4877, %v5005
  %v5007 = vsub.f32 1.0, %v5006
  %v5008 = vmul.f32 %v5005, %v5007
  %v5009 = vadd.f32 %v5005, %v5008
  %vm5010 = vweird.f32 %v4877
  %vm5011 = vweird.f32 %v5005
  %vm5012 = vmor %vm5010, %vm5011
  %v5013 = vsel %vm5012, %v5005, %v5009
  %v5014 = vand.u32 2147483647, %v4877
  %vm5015 = vcmp.eq.f32.partialorder %v5014, 8.507059e+37
  %v5016 = vand.u32 %v4877, 2147483648
  %v5017 = vor.u32 1.1754944e-38, %v5016
  %v5018 = vsel %vm5015, %v5017, %v5013
  %v5019 = vmul.f32 1.0, %v5018
  %v5020 = vrcp.pop %v4878
  %v5021 = vmul.f32 %v4878, %v5020
  %v5022 = vsub.f32 1.0, %v5021
  %v5023 = vmul.f32 %v5020, %v5022
  %v5024 = vadd.f32 %v5020, %v5023
  %vm5025 = vweird.f32 %v4878
  %vm5026 = vweird.f32 %v5020
  %vm5027 = vmor %vm5025, %vm5026
  %v5028 = vsel %vm5027, %v5020, %v5024
  %v5029 = vand.u32 2147483647, %v4878
  %vm5030 = vcmp.eq.f32.partialorder %v5029, 8.507059e+37
  %v5031 = vand.u32 %v4878, 2147483648
  %v5032 = vor.u32 1.1754944e-38, %v5031
  %v5033 = vsel %vm5030, %v5032, %v5028
  %v5034 = vmul.f32 1.0, %v5033
  %v5035 = vrcp.pop %v4879
  %v5036 = vmul.f32 %v4879, %v5035
  %v5037 = vsub.f32 1.0, %v5036
  %v5038 = vmul.f32 %v5035, %v5037
  %v5039 = vadd.f32 %v5035, %v5038
  %vm5040 = vweird.f32 %v4879
  %vm5041 = vweird.f32 %v5035
  %vm5042 = vmor %vm5040, %vm5041
  %v5043 = vsel %vm5042, %v5035, %v5039
  %v5044 = vand.u32 2147483647, %v4879
  %vm5045 = vcmp.eq.f32.partialorder %v5044, 8.507059e+37
  %v5046 = vand.u32 %v4879, 2147483648
  %v5047 = vor.u32 1.1754944e-38, %v5046
  %v5048 = vsel %vm5045, %v5047, %v5043
  %v5049 = vmul.f32 1.0, %v5048
  %v5050 = vrcp.pop %v4880
  %v5051 = vmul.f32 %v4880, %v5050
  %v5052 = vsub.f32 1.0, %v5051
  %v5053 = vmul.f32 %v5050, %v5052
  %v5054 = vadd.f32 %v5050, %v5053
  %vm5055 = vweird.f32 %v4880
  %vm5056 = vweird.f32 %v5050
  %vm5057 = vmor %vm5055, %vm5056
  %v5058 = vsel %vm5057, %v5050, %v5054
  %v5059 = vand.u32 2147483647, %v4880
  %vm5060 = vcmp.eq.f32.partialorder %v5059, 8.507059e+37
  %v5061 = vand.u32 %v4880, 2147483648
  %v5062 = vor.u32 1.1754944e-38, %v5061
  %v5063 = vsel %vm5060, %v5062, %v5058
  %v5064 = vmul.f32 1.0, %v5063
  %v5065 = vrcp.pop %v4881
  %v5066 = vmul.f32 %v4881, %v5065
  %v5067 = vsub.f32 1.0, %v5066
  %v5068 = vmul.f32 %v5065, %v5067
  %v5069 = vadd.f32 %v5065, %v5068
  %vm5070 = vweird.f32 %v4881
  %vm5071 = vweird.f32 %v5065
  %vm5072 = vmor %vm5070, %vm5071
  %v5073 = vsel %vm5072, %v5065, %v5069
  %v5074 = vand.u32 2147483647, %v4881
  %vm5075 = vcmp.eq.f32.partialorder %v5074, 8.507059e+37
  %v5076 = vand.u32 %v4881, 2147483648
  %v5077 = vor.u32 1.1754944e-38, %v5076
  %v5078 = vsel %vm5075, %v5077, %v5073
  %v5079 = vmul.f32 1.0, %v5078
  %v5080 = vrcp.pop %v4882
  %v5081 = vmul.f32 %v4882, %v5080
  %v5082 = vsub.f32 1.0, %v5081
  %v5083 = vmul.f32 %v5080, %v5082
  %v5084 = vadd.f32 %v5080, %v5083
  %vm5085 = vweird.f32 %v4882
  %vm5086 = vweird.f32 %v5080
  %vm5087 = vmor %vm5085, %vm5086
  %v5088 = vsel %vm5087, %v5080, %v5084
  %v5089 = vand.u32 2147483647, %v4882
  %vm5090 = vcmp.eq.f32.partialorder %v5089, 8.507059e+37
  %v5091 = vand.u32 %v4882, 2147483648
  %v5092 = vor.u32 1.1754944e-38, %v5091
  %v5093 = vsel %vm5090, %v5092, %v5088
  %v5094 = vmul.f32 1.0, %v5093
  %v5095 = vrcp.pop %v4883
  %v5096 = vmul.f32 %v4883, %v5095
  %v5097 = vsub.f32 1.0, %v5096
  %v5098 = vmul.f32 %v5095, %v5097
  %v5099 = vadd.f32 %v5095, %v5098
  %vm5100 = vweird.f32 %v4883
  %vm5101 = vweird.f32 %v5095
  %vm5102 = vmor %vm5100, %vm5101
  %v5103 = vsel %vm5102, %v5095, %v5099
  %v5104 = vand.u32 2147483647, %v4883
  %vm5105 = vcmp.eq.f32.partialorder %v5104, 8.507059e+37
  %v5106 = vand.u32 %v4883, 2147483648
  %v5107 = vor.u32 1.1754944e-38, %v5106
  %v5108 = vsel %vm5105, %v5107, %v5103
  %v5109 = vmul.f32 1.0, %v5108
  %v5110 = vrcp.pop %v4884
  %v5111 = vmul.f32 %v4884, %v5110
  %v5112 = vsub.f32 1.0, %v5111
  %v5113 = vmul.f32 %v5110, %v5112
  %v5114 = vadd.f32 %v5110, %v5113
  %vm5115 = vweird.f32 %v4884
  %vm5116 = vweird.f32 %v5110
  %vm5117 = vmor %vm5115, %vm5116
  %v5118 = vsel %vm5117, %v5110, %v5114
  %v5119 = vand.u32 2147483647, %v4884
  %vm5120 = vcmp.eq.f32.partialorder %v5119, 8.507059e+37
  %v5121 = vand.u32 %v4884, 2147483648
  %v5122 = vor.u32 1.1754944e-38, %v5121
  %v5123 = vsel %vm5120, %v5122, %v5118
  %v5124 = vmul.f32 1.0, %v5123
  %v5125 = vmul.f32 %v4805, %v4899
  %v5126 = vmul.f32 %v4806, %v4914
  %v5127 = vmul.f32 %v4807, %v4929
  %v5128 = vmul.f32 %v4808, %v4944
  %v5129 = vmul.f32 %v4809, %v4959
  %v5130 = vmul.f32 %v4810, %v4974
  %v5131 = vmul.f32 %v4811, %v4989
  %v5132 = vmul.f32 %v4812, %v5004
  %v5133 = vmul.f32 %v4813, %v5019
  %v5134 = vmul.f32 %v4814, %v5034
  %v5135 = vmul.f32 %v4815, %v5049
  %v5136 = vmul.f32 %v4816, %v5064
  %v5137 = vmul.f32 %v4817, %v5079
  %v5138 = vmul.f32 %v4818, %v5094
  %v5139 = vmul.f32 %v4819, %v5109
  %v5140 = vmul.f32 %v4820, %v5124
  %5141 = vrot.lane.b32.xlu0 %v5125, 1
  %v5142 = vpop.permute.xlu0 %5141
  %5143 = vrot.lane.b32.xlu0 %v5127, 1
  %v5144 = vpop.permute.xlu0 %5143
  %5145 = vrot.lane.b32.xlu0 %v5129, 1
  %v5146 = vpop.permute.xlu0 %5145
  %5147 = vrot.lane.b32.xlu0 %v5131, 1
  %v5148 = vpop.permute.xlu0 %5147
  %5149 = vrot.lane.b32.xlu0 %v5133, 1
  %v5150 = vpop.permute.xlu0 %5149
  %5151 = vrot.lane.b32.xlu0 %v5135, 1
  %v5152 = vpop.permute.xlu0 %5151
  %5153 = vrot.lane.b32.xlu0 %v5137, 1
  %v5154 = vpop.permute.xlu0 %5153
  %5155 = vrot.lane.b32.xlu0 %v5139, 1
  %v5156 = vpop.permute.xlu0 %5155
  %5157 = vrot.lane.b32.xlu0 %v5126, 1
  %v5158 = vpop.permute.xlu0 %5157
  %5159 = vrot.lane.b32.xlu0 %v5128, 1
  %v5160 = vpop.permute.xlu0 %5159
  %5161 = vrot.lane.b32.xlu0 %v5130, 1
  %v5162 = vpop.permute.xlu0 %5161
  %5163 = vrot.lane.b32.xlu0 %v5132, 1
  %v5164 = vpop.permute.xlu0 %5163
  %5165 = vrot.lane.b32.xlu0 %v5134, 1
  %v5166 = vpop.permute.xlu0 %5165
  %5167 = vrot.lane.b32.xlu0 %v5136, 1
  %v5168 = vpop.permute.xlu0 %5167
  %5169 = vrot.lane.b32.xlu0 %v5138, 1
  %v5170 = vpop.permute.xlu0 %5169
  %5171 = vrot.lane.b32.xlu0 %v5140, 1
  %v5172 = vpop.permute.xlu0 %5171
  %v5173 = vsel %vm110, %v5142, %v5158
  %v5174 = vsel %vm110, %v5144, %v5160
  %v5175 = vsel %vm110, %v5146, %v5162
  %v5176 = vsel %vm110, %v5148, %v5164
  %v5177 = vsel %vm110, %v5150, %v5166
  %v5178 = vsel %vm110, %v5152, %v5168
  %v5179 = vsel %vm110, %v5154, %v5170
  %v5180 = vsel %vm110, %v5156, %v5172
  %v5181 = vsel %vm110, %v5158, %v5142
  %v5182 = vsel %vm110, %v5160, %v5144
  %v5183 = vsel %vm110, %v5162, %v5146
  %v5184 = vsel %vm110, %v5164, %v5148
  %v5185 = vsel %vm110, %v5166, %v5150
  %v5186 = vsel %vm110, %v5168, %v5152
  %v5187 = vsel %vm110, %v5170, %v5154
  %v5188 = vsel %vm110, %v5172, %v5156
  %v5189 = vmul.f32 %v5181, %v115
  %v5190 = vmul.f32 %v5173, %v116
  %v5191 = vmul.f32 %v5182, %v115
  %v5192 = vmul.f32 %v5174, %v116
  %v5193 = vmul.f32 %v5183, %v115
  %v5194 = vmul.f32 %v5175, %v116
  %v5195 = vmul.f32 %v5184, %v115
  %v5196 = vmul.f32 %v5176, %v116
  %v5197 = vmul.f32 %v5185, %v115
  %v5198 = vmul.f32 %v5177, %v116
  %v5199 = vmul.f32 %v5186, %v115
  %v5200 = vmul.f32 %v5178, %v116
  %v5201 = vmul.f32 %v5187, %v115
  %v5202 = vmul.f32 %v5179, %v116
  %v5203 = vmul.f32 %v5188, %v115
  %v5204 = vmul.f32 %v5180, %v116
  %v5205 = vmul.f32 %v5125, %v124
  %v5206 = vmul.f32 %v5126, %v125
  %v5207 = vmul.f32 %v5127, %v124
  %v5208 = vmul.f32 %v5128, %v125
  %v5209 = vmul.f32 %v5129, %v124
  %v5210 = vmul.f32 %v5130, %v125
  %v5211 = vmul.f32 %v5131, %v124
  %v5212 = vmul.f32 %v5132, %v125
  %v5213 = vmul.f32 %v5133, %v124
  %v5214 = vmul.f32 %v5134, %v125
  %v5215 = vmul.f32 %v5135, %v124
  %v5216 = vmul.f32 %v5136, %v125
  %v5217 = vmul.f32 %v5137, %v124
  %v5218 = vmul.f32 %v5138, %v125
  %v5219 = vmul.f32 %v5139, %v124
  %v5220 = vmul.f32 %v5140, %v125
  %5221 = vrot.lane.b32.xlu0 %v5125, 127
  %v5222 = vpop.permute.xlu0 %5221
  %5223 = vrot.lane.b32.xlu0 %v5127, 127
  %v5224 = vpop.permute.xlu0 %5223
  %5225 = vrot.lane.b32.xlu0 %v5129, 127
  %v5226 = vpop.permute.xlu0 %5225
  %5227 = vrot.lane.b32.xlu0 %v5131, 127
  %v5228 = vpop.permute.xlu0 %5227
  %5229 = vrot.lane.b32.xlu0 %v5133, 127
  %v5230 = vpop.permute.xlu0 %5229
  %5231 = vrot.lane.b32.xlu0 %v5135, 127
  %v5232 = vpop.permute.xlu0 %5231
  %5233 = vrot.lane.b32.xlu0 %v5137, 127
  %v5234 = vpop.permute.xlu0 %5233
  %5235 = vrot.lane.b32.xlu0 %v5139, 127
  %v5236 = vpop.permute.xlu0 %5235
  %5237 = vrot.lane.b32.xlu0 %v5126, 127
  %v5238 = vpop.permute.xlu0 %5237
  %5239 = vrot.lane.b32.xlu0 %v5128, 127
  %v5240 = vpop.permute.xlu0 %5239
  %5241 = vrot.lane.b32.xlu0 %v5130, 127
  %v5242 = vpop.permute.xlu0 %5241
  %5243 = vrot.lane.b32.xlu0 %v5132, 127
  %v5244 = vpop.permute.xlu0 %5243
  %5245 = vrot.lane.b32.xlu0 %v5134, 127
  %v5246 = vpop.permute.xlu0 %5245
  %5247 = vrot.lane.b32.xlu0 %v5136, 127
  %v5248 = vpop.permute.xlu0 %5247
  %5249 = vrot.lane.b32.xlu0 %v5138, 127
  %v5250 = vpop.permute.xlu0 %5249
  %5251 = vrot.lane.b32.xlu0 %v5140, 127
  %v5252 = vpop.permute.xlu0 %5251
  %v5253 = vsel %vm140, %v5222, %v5238
  %v5254 = vsel %vm140, %v5224, %v5240
  %v5255 = vsel %vm140, %v5226, %v5242
  %v5256 = vsel %vm140, %v5228, %v5244
  %v5257 = vsel %vm140, %v5230, %v5246
  %v5258 = vsel %vm140, %v5232, %v5248
  %v5259 = vsel %vm140, %v5234, %v5250
  %v5260 = vsel %vm140, %v5236, %v5252
  %v5261 = vsel %vm140, %v5238, %v5222
  %v5262 = vsel %vm140, %v5240, %v5224
  %v5263 = vsel %vm140, %v5242, %v5226
  %v5264 = vsel %vm140, %v5244, %v5228
  %v5265 = vsel %vm140, %v5246, %v5230
  %v5266 = vsel %vm140, %v5248, %v5232
  %v5267 = vsel %vm140, %v5250, %v5234
  %v5268 = vsel %vm140, %v5252, %v5236
  %v5269 = vmul.f32 %v5253, %v146
  %v5270 = vmul.f32 %v5261, %v147
  %v5271 = vmul.f32 %v5254, %v146
  %v5272 = vmul.f32 %v5262, %v147
  %v5273 = vmul.f32 %v5255, %v146
  %v5274 = vmul.f32 %v5263, %v147
  %v5275 = vmul.f32 %v5256, %v146
  %v5276 = vmul.f32 %v5264, %v147
  %v5277 = vmul.f32 %v5257, %v146
  %v5278 = vmul.f32 %v5265, %v147
  %v5279 = vmul.f32 %v5258, %v146
  %v5280 = vmul.f32 %v5266, %v147
  %v5281 = vmul.f32 %v5259, %v146
  %v5282 = vmul.f32 %v5267, %v147
  %v5283 = vmul.f32 %v5260, %v146
  %v5284 = vmul.f32 %v5268, %v147
  %v5285 = vld [vmem:[%s17] sm:$0xff]
  %v5286 = vld [vmem:[%s17 + $0x8] sm:$0xff]
  %v5287 = vld [vmem:[%s17 + $0x10] sm:$0xff]
  %v5288 = vld [vmem:[%s17 + $0x18] sm:$0xff]
  %v5289 = vld [vmem:[%s17 + $0x20] sm:$0xff]
  %v5290 = vld [vmem:[%s17 + $0x28] sm:$0xff]
  %v5291 = vld [vmem:[%s17 + $0x30] sm:$0xff]
  %v5292 = vld [vmem:[%s17 + $0x38] sm:$0xff]
  %v5293 = vld [vmem:[%s17 + $0x40] sm:$0xff]
  %v5294 = vld [vmem:[%s17 + $0x48] sm:$0xff]
  %v5295 = vld [vmem:[%s17 + $0x50] sm:$0xff]
  %v5296 = vld [vmem:[%s17 + $0x58] sm:$0xff]
  %v5297 = vld [vmem:[%s17 + $0x60] sm:$0xff]
  %v5298 = vld [vmem:[%s17 + $0x68] sm:$0xff]
  %v5299 = vld [vmem:[%s17 + $0x70] sm:$0xff]
  %v5300 = vld [vmem:[%s17 + $0x78] sm:$0xff]
  %v5301 = vpack.c.bf16 %v5191, %v5189
  %v5302 = vpack.c.bf16 %v5192, %v5190
  %v5303 = vpack.c.bf16 %v5195, %v5193
  %v5304 = vpack.c.bf16 %v5196, %v5194
  %v5305 = vpack.c.bf16 %v5199, %v5197
  %v5306 = vpack.c.bf16 %v5200, %v5198
  %v5307 = vpack.c.bf16 %v5203, %v5201
  %v5308 = vpack.c.bf16 %v5204, %v5202
  %v5309 = vpack.c.bf16 %v5207, %v5205
  %v5310 = vpack.c.bf16 %v5208, %v5206
  %v5311 = vpack.c.bf16 %v5211, %v5209
  %v5312 = vpack.c.bf16 %v5212, %v5210
  %v5313 = vpack.c.bf16 %v5215, %v5213
  %v5314 = vpack.c.bf16 %v5216, %v5214
  %v5315 = vpack.c.bf16 %v5219, %v5217
  %v5316 = vpack.c.bf16 %v5220, %v5218
  %v5317 = vpack.c.bf16 %v5271, %v5269
  %v5318 = vpack.c.bf16 %v5272, %v5270
  %v5319 = vpack.c.bf16 %v5275, %v5273
  %v5320 = vpack.c.bf16 %v5276, %v5274
  %v5321 = vpack.c.bf16 %v5279, %v5277
  %v5322 = vpack.c.bf16 %v5280, %v5278
  %v5323 = vpack.c.bf16 %v5283, %v5281
  %v5324 = vpack.c.bf16 %v5284, %v5282
  %v5325 = vld [vmem:[%s18] sm:$0xff]
  %v5326 = vld [vmem:[%s18 + $0x8] sm:$0xff]
  %v5327 = vld [vmem:[%s18 + $0x10] sm:$0xff]
  %v5328 = vld [vmem:[%s18 + $0x18] sm:$0xff]
  %v5329 = vld [vmem:[%s18 + $0x20] sm:$0xff]
  %v5330 = vld [vmem:[%s18 + $0x28] sm:$0xff]
  %v5331 = vld [vmem:[%s18 + $0x30] sm:$0xff]
  %v5332 = vld [vmem:[%s18 + $0x38] sm:$0xff]
  %v5333 = vld [vmem:[%s18 + $0x40] sm:$0xff]
  %v5334 = vld [vmem:[%s18 + $0x48] sm:$0xff]
  %v5335 = vld [vmem:[%s18 + $0x50] sm:$0xff]
  %v5336 = vld [vmem:[%s18 + $0x58] sm:$0xff]
  %v5337 = vld [vmem:[%s18 + $0x60] sm:$0xff]
  %v5338 = vld [vmem:[%s18 + $0x68] sm:$0xff]
  %v5339 = vld [vmem:[%s18 + $0x70] sm:$0xff]
  %v5340 = vld [vmem:[%s18 + $0x78] sm:$0xff]
  %5342 = vset.pattern.permute.xlu0 0
  %5343 = vperm.xlu0 %5342, %v5325
  %v5344 = vpop.permute.xlu0 %5343
  %5347 = vset.pattern.permute.xlu0 0
  %5348 = vperm.xlu0 %5347, %v5326
  %v5349 = vpop.permute.xlu0 %5348
  %5352 = vset.pattern.permute.xlu0 0
  %5353 = vperm.xlu0 %5352, %v5327
  %v5354 = vpop.permute.xlu0 %5353
  %5357 = vset.pattern.permute.xlu0 0
  %5358 = vperm.xlu0 %5357, %v5328
  %v5359 = vpop.permute.xlu0 %5358
  %5362 = vset.pattern.permute.xlu0 0
  %5363 = vperm.xlu0 %5362, %v5329
  %v5364 = vpop.permute.xlu0 %5363
  %5367 = vset.pattern.permute.xlu0 0
  %5368 = vperm.xlu0 %5367, %v5330
  %v5369 = vpop.permute.xlu0 %5368
  %5372 = vset.pattern.permute.xlu0 0
  %5373 = vperm.xlu0 %5372, %v5331
  %v5374 = vpop.permute.xlu0 %5373
  %5377 = vset.pattern.permute.xlu0 0
  %5378 = vperm.xlu0 %5377, %v5332
  %v5379 = vpop.permute.xlu0 %5378
  %5382 = vset.pattern.permute.xlu0 0
  %5383 = vperm.xlu0 %5382, %v5333
  %v5384 = vpop.permute.xlu0 %5383
  %5387 = vset.pattern.permute.xlu0 0
  %5388 = vperm.xlu0 %5387, %v5334
  %v5389 = vpop.permute.xlu0 %5388
  %5392 = vset.pattern.permute.xlu0 0
  %5393 = vperm.xlu0 %5392, %v5335
  %v5394 = vpop.permute.xlu0 %5393
  %5397 = vset.pattern.permute.xlu0 0
  %5398 = vperm.xlu0 %5397, %v5336
  %v5399 = vpop.permute.xlu0 %5398
  %5402 = vset.pattern.permute.xlu0 0
  %5403 = vperm.xlu0 %5402, %v5337
  %v5404 = vpop.permute.xlu0 %5403
  %5407 = vset.pattern.permute.xlu0 0
  %5408 = vperm.xlu0 %5407, %v5338
  %v5409 = vpop.permute.xlu0 %5408
  %5412 = vset.pattern.permute.xlu0 0
  %5413 = vperm.xlu0 %5412, %v5339
  %v5414 = vpop.permute.xlu0 %5413
  %5417 = vset.pattern.permute.xlu0 0
  %5418 = vperm.xlu0 %5417, %v5340
  %v5419 = vpop.permute.xlu0 %5418
  %v5437 = vunpack.c.l.b16 %v5285
  %v5438 = vunpack.c.h.b16 %v5285
  %v5439 = vunpack.c.l.b16 %v5286
  %v5440 = vunpack.c.h.b16 %v5286
  %v5441 = vunpack.c.l.b16 %v5287
  %v5442 = vunpack.c.h.b16 %v5287
  %v5443 = vunpack.c.l.b16 %v5288
  %v5444 = vunpack.c.h.b16 %v5288
  %v5445 = vunpack.c.l.b16 %v5289
  %v5446 = vunpack.c.h.b16 %v5289
  %v5447 = vunpack.c.l.b16 %v5290
  %v5448 = vunpack.c.h.b16 %v5290
  %v5449 = vunpack.c.l.b16 %v5291
  %v5450 = vunpack.c.h.b16 %v5291
  %v5451 = vunpack.c.l.b16 %v5292
  %v5452 = vunpack.c.h.b16 %v5292
  %v5453 = vunpack.c.l.b16 %v5293
  %v5454 = vunpack.c.h.b16 %v5293
  %v5455 = vunpack.c.l.b16 %v5294
  %v5456 = vunpack.c.h.b16 %v5294
  %v5457 = vunpack.c.l.b16 %v5295
  %v5458 = vunpack.c.h.b16 %v5295
  %v5459 = vunpack.c.l.b16 %v5296
  %v5460 = vunpack.c.h.b16 %v5296
  %v5461 = vunpack.c.l.b16 %v5297
  %v5462 = vunpack.c.h.b16 %v5297
  %v5463 = vunpack.c.l.b16 %v5298
  %v5464 = vunpack.c.h.b16 %v5298
  %v5465 = vunpack.c.l.b16 %v5299
  %v5466 = vunpack.c.h.b16 %v5299
  %v5467 = vunpack.c.l.b16 %v5300
  %v5468 = vunpack.c.h.b16 %v5300
  %v5469 = vpack.c.b16 %v5439, %v5437
  %v5470 = vpack.c.b16 %v5440, %v5438
  %v5471 = vpack.c.b16 %v5443, %v5441
  %v5472 = vpack.c.b16 %v5444, %v5442
  %v5473 = vpack.c.b16 %v5447, %v5445
  %v5474 = vpack.c.b16 %v5448, %v5446
  %v5475 = vpack.c.b16 %v5451, %v5449
  %v5476 = vpack.c.b16 %v5452, %v5450
  %v5477 = vpack.c.b16 %v5455, %v5453
  %v5478 = vpack.c.b16 %v5456, %v5454
  %v5479 = vpack.c.b16 %v5459, %v5457
  %v5480 = vpack.c.b16 %v5460, %v5458
  %v5481 = vpack.c.b16 %v5463, %v5461
  %v5482 = vpack.c.b16 %v5464, %v5462
  %v5483 = vpack.c.b16 %v5467, %v5465
  %v5484 = vpack.c.b16 %v5468, %v5466
  %v5494 = vsel %vm1930, %v5470, 0
  %v5497 = vsel %vm1930, %v5472, 0
  %v5500 = vsel %vm1930, %v5474, 0
  %v5503 = vsel %vm1930, %v5476, 0
  %v5506 = vsel %vm1930, %v5478, 0
  %v5509 = vsel %vm1930, %v5480, 0
  %v5512 = vsel %vm1930, %v5482, 0
  %v5515 = vsel %vm1930, %v5484, 0
  %5517 = vmatpush.bf16.msra.mxu0 %v5315
  %5518 = vmatpush.bf16.msra.mxu0 %v5313
  %5519 = vmatpush.bf16.msra.mxu0 %v5311
  %5520 = vmatpush.bf16.msra.mxu0 %v5309
  %5521 = vmatpush.bf16.msra.mxu0 %v5307
  %5522 = vmatpush.bf16.msra.mxu0 %v5305
  %5523 = vmatpush.bf16.msra.mxu0 %v5303
  %5524 = vmatpush.bf16.msra.mxu0 %v5301
  %5525 = vmatmul.bf16.gmra.mxu0 %v5469
  %v5526 = vpop.f32.mrf.mxu0
  %v5527 = vadd.f32 %v5344, %v5526
  %v5528 = vpop.f32.mrf.mxu0
  %v5529 = vadd.f32 %v5349, %v5528
  %5530 = vmatmul.bf16.gmra.mxu0 %v5471
  %v5531 = vpop.f32.mrf.mxu0
  %v5532 = vadd.f32 %v5354, %v5531
  %v5533 = vpop.f32.mrf.mxu0
  %v5534 = vadd.f32 %v5359, %v5533
  %5535 = vmatmul.bf16.gmra.mxu0 %v5473
  %v5536 = vpop.f32.mrf.mxu0
  %v5537 = vadd.f32 %v5364, %v5536
  %v5538 = vpop.f32.mrf.mxu0
  %v5539 = vadd.f32 %v5369, %v5538
  %5540 = vmatmul.bf16.gmra.mxu0 %v5475
  %v5541 = vpop.f32.mrf.mxu0
  %v5542 = vadd.f32 %v5374, %v5541
  %v5543 = vpop.f32.mrf.mxu0
  %v5544 = vadd.f32 %v5379, %v5543
  %5545 = vmatmul.bf16.gmra.mxu0 %v5477
  %v5546 = vpop.f32.mrf.mxu0
  %v5547 = vadd.f32 %v5384, %v5546
  %v5548 = vpop.f32.mrf.mxu0
  %v5549 = vadd.f32 %v5389, %v5548
  %5550 = vmatmul.bf16.gmra.mxu0 %v5479
  %v5551 = vpop.f32.mrf.mxu0
  %v5552 = vadd.f32 %v5394, %v5551
  %v5553 = vpop.f32.mrf.mxu0
  %v5554 = vadd.f32 %v5399, %v5553
  %5555 = vmatmul.bf16.gmra.mxu0 %v5481
  %v5556 = vpop.f32.mrf.mxu0
  %v5557 = vadd.f32 %v5404, %v5556
  %v5558 = vpop.f32.mrf.mxu0
  %v5559 = vadd.f32 %v5409, %v5558
  %5560 = vmatmul.bf16.gmra.mxu0 %v5483
  %v5561 = vpop.f32.mrf.mxu0
  %v5562 = vadd.f32 %v5414, %v5561
  %v5563 = vpop.f32.mrf.mxu0
  %v5564 = vadd.f32 %v5419, %v5563
  %5565 = vdwg.mxu0
  %5566 = vmatpush.bf16.msra.mxu0 0
  %5567 = vmatpush.bf16.msra.mxu0 0
  %5568 = vmatpush.bf16.msra.mxu0 0
  %5569 = vmatpush.bf16.msra.mxu0 0
  %5570 = vmatpush.bf16.msra.mxu0 %v5323
  %5571 = vmatpush.bf16.msra.mxu0 %v5321
  %5572 = vmatpush.bf16.msra.mxu0 %v5319
  %5573 = vmatpush.bf16.msra.mxu0 %v5317
  %5574 = vmatmul.bf16.gmra.mxu0 %v5494
  %v5575 = vpop.f32.mrf.mxu0
  %v5576 = vadd.f32 %v5527, %v5575
  %v5577 = vpop.f32.mrf.mxu0
  %v5578 = vadd.f32 %v5529, %v5577
  %5579 = vmatmul.bf16.gmra.mxu0 %v5497
  %v5580 = vpop.f32.mrf.mxu0
  %v5581 = vadd.f32 %v5532, %v5580
  %v5582 = vpop.f32.mrf.mxu0
  %v5583 = vadd.f32 %v5534, %v5582
  %5584 = vmatmul.bf16.gmra.mxu0 %v5500
  %v5585 = vpop.f32.mrf.mxu0
  %v5586 = vadd.f32 %v5537, %v5585
  %v5587 = vpop.f32.mrf.mxu0
  %v5588 = vadd.f32 %v5539, %v5587
  %5589 = vmatmul.bf16.gmra.mxu0 %v5503
  %v5590 = vpop.f32.mrf.mxu0
  %v5591 = vadd.f32 %v5542, %v5590
  %v5592 = vpop.f32.mrf.mxu0
  %v5593 = vadd.f32 %v5544, %v5592
  %5594 = vmatmul.bf16.gmra.mxu0 %v5506
  %v5595 = vpop.f32.mrf.mxu0
  %v5596 = vadd.f32 %v5547, %v5595
  %v5597 = vpop.f32.mrf.mxu0
  %v5598 = vadd.f32 %v5549, %v5597
  %5599 = vmatmul.bf16.gmra.mxu0 %v5509
  %v5600 = vpop.f32.mrf.mxu0
  %v5601 = vadd.f32 %v5552, %v5600
  %v5602 = vpop.f32.mrf.mxu0
  %v5603 = vadd.f32 %v5554, %v5602
  %5604 = vmatmul.bf16.gmra.mxu0 %v5512
  %v5605 = vpop.f32.mrf.mxu0
  %v5606 = vadd.f32 %v5557, %v5605
  %v5607 = vpop.f32.mrf.mxu0
  %v5608 = vadd.f32 %v5559, %v5607
  %5609 = vmatmul.bf16.gmra.mxu0 %v5515
  %v5610 = vpop.f32.mrf.mxu0
  %v5611 = vadd.f32 %v5562, %v5610
  %v5612 = vpop.f32.mrf.mxu0
  %v5613 = vadd.f32 %v5564, %v5612
  %5614 = vdwg.mxu0
  %5615 = vmatpush.bf16.msra.mxu0 %v5316
  %5616 = vmatpush.bf16.msra.mxu0 %v5314
  %5617 = vmatpush.bf16.msra.mxu0 %v5312
  %5618 = vmatpush.bf16.msra.mxu0 %v5310
  %5619 = vmatpush.bf16.msra.mxu0 %v5308
  %5620 = vmatpush.bf16.msra.mxu0 %v5306
  %5621 = vmatpush.bf16.msra.mxu0 %v5304
  %5622 = vmatpush.bf16.msra.mxu0 %v5302
  %5623 = vmatmul.bf16.gmra.mxu0 %v5469
  %v5624 = vpop.f32.mrf.mxu0
  %v5625 = vadd.f32 %v5344, %v5624
  %v5626 = vpop.f32.mrf.mxu0
  %v5627 = vadd.f32 %v5349, %v5626
  %5628 = vmatmul.bf16.gmra.mxu0 %v5471
  %v5629 = vpop.f32.mrf.mxu0
  %v5630 = vadd.f32 %v5354, %v5629
  %v5631 = vpop.f32.mrf.mxu0
  %v5632 = vadd.f32 %v5359, %v5631
  %5633 = vmatmul.bf16.gmra.mxu0 %v5473
  %v5634 = vpop.f32.mrf.mxu0
  %v5635 = vadd.f32 %v5364, %v5634
  %v5636 = vpop.f32.mrf.mxu0
  %v5637 = vadd.f32 %v5369, %v5636
  %5638 = vmatmul.bf16.gmra.mxu0 %v5475
  %v5639 = vpop.f32.mrf.mxu0
  %v5640 = vadd.f32 %v5374, %v5639
  %v5641 = vpop.f32.mrf.mxu0
  %v5642 = vadd.f32 %v5379, %v5641
  %5643 = vmatmul.bf16.gmra.mxu0 %v5477
  %v5644 = vpop.f32.mrf.mxu0
  %v5645 = vadd.f32 %v5384, %v5644
  %v5646 = vpop.f32.mrf.mxu0
  %v5647 = vadd.f32 %v5389, %v5646
  %5648 = vmatmul.bf16.gmra.mxu0 %v5479
  %v5649 = vpop.f32.mrf.mxu0
  %v5650 = vadd.f32 %v5394, %v5649
  %v5651 = vpop.f32.mrf.mxu0
  %v5652 = vadd.f32 %v5399, %v5651
  %5653 = vmatmul.bf16.gmra.mxu0 %v5481
  %v5654 = vpop.f32.mrf.mxu0
  %v5655 = vadd.f32 %v5404, %v5654
  %v5656 = vpop.f32.mrf.mxu0
  %v5657 = vadd.f32 %v5409, %v5656
  %5658 = vmatmul.bf16.gmra.mxu0 %v5483
  %v5659 = vpop.f32.mrf.mxu0
  %v5660 = vadd.f32 %v5414, %v5659
  %v5661 = vpop.f32.mrf.mxu0
  %v5662 = vadd.f32 %v5419, %v5661
  %5663 = vdwg.mxu0
  %5664 = vmatpush.bf16.msra.mxu0 0
  %5665 = vmatpush.bf16.msra.mxu0 0
  %5666 = vmatpush.bf16.msra.mxu0 0
  %5667 = vmatpush.bf16.msra.mxu0 0
  %5668 = vmatpush.bf16.msra.mxu0 %v5324
  %5669 = vmatpush.bf16.msra.mxu0 %v5322
  %5670 = vmatpush.bf16.msra.mxu0 %v5320
  %5671 = vmatpush.bf16.msra.mxu0 %v5318
  %5672 = vmatmul.bf16.gmra.mxu0 %v5494
  %v5673 = vpop.f32.mrf.mxu0
  %v5674 = vadd.f32 %v5625, %v5673
  %v5675 = vpop.f32.mrf.mxu0
  %v5676 = vadd.f32 %v5627, %v5675
  %5677 = vmatmul.bf16.gmra.mxu0 %v5497
  %v5678 = vpop.f32.mrf.mxu0
  %v5679 = vadd.f32 %v5630, %v5678
  %v5680 = vpop.f32.mrf.mxu0
  %v5681 = vadd.f32 %v5632, %v5680
  %5682 = vmatmul.bf16.gmra.mxu0 %v5500
  %v5683 = vpop.f32.mrf.mxu0
  %v5684 = vadd.f32 %v5635, %v5683
  %v5685 = vpop.f32.mrf.mxu0
  %v5686 = vadd.f32 %v5637, %v5685
  %5687 = vmatmul.bf16.gmra.mxu0 %v5503
  %v5688 = vpop.f32.mrf.mxu0
  %v5689 = vadd.f32 %v5640, %v5688
  %v5690 = vpop.f32.mrf.mxu0
  %v5691 = vadd.f32 %v5642, %v5690
  %5692 = vmatmul.bf16.gmra.mxu0 %v5506
  %v5693 = vpop.f32.mrf.mxu0
  %v5694 = vadd.f32 %v5645, %v5693
  %v5695 = vpop.f32.mrf.mxu0
  %v5696 = vadd.f32 %v5647, %v5695
  %5697 = vmatmul.bf16.gmra.mxu0 %v5509
  %v5698 = vpop.f32.mrf.mxu0
  %v5699 = vadd.f32 %v5650, %v5698
  %v5700 = vpop.f32.mrf.mxu0
  %v5701 = vadd.f32 %v5652, %v5700
  %5702 = vmatmul.bf16.gmra.mxu0 %v5512
  %v5703 = vpop.f32.mrf.mxu0
  %v5704 = vadd.f32 %v5655, %v5703
  %v5705 = vpop.f32.mrf.mxu0
  %v5706 = vadd.f32 %v5657, %v5705
  %5707 = vmatmul.bf16.gmra.mxu0 %v5515
  %v5708 = vpop.f32.mrf.mxu0
  %v5709 = vadd.f32 %v5660, %v5708
  %v5710 = vpop.f32.mrf.mxu0
  %v5711 = vadd.f32 %v5662, %v5710
  %5712 = vdwg.mxu0
  %v5713 = vpack.c.bf16 %v5674, %v5576
  %v5714 = vpack.c.bf16 %v5676, %v5578
  %v5715 = vpack.c.bf16 %v5679, %v5581
  %v5716 = vpack.c.bf16 %v5681, %v5583
  %v5717 = vpack.c.bf16 %v5684, %v5586
  %v5718 = vpack.c.bf16 %v5686, %v5588
  %v5719 = vpack.c.bf16 %v5689, %v5591
  %v5720 = vpack.c.bf16 %v5691, %v5593
  %v5729 = vunpack.c.l.b16 %v5713
  %v5730 = vunpack.c.h.b16 %v5713
  %v5731 = vunpack.c.l.b16 %v5714
  %v5732 = vunpack.c.h.b16 %v5714
  %v5733 = vunpack.c.l.b16 %v5715
  %v5734 = vunpack.c.h.b16 %v5715
  %v5735 = vunpack.c.l.b16 %v5716
  %v5736 = vunpack.c.h.b16 %v5716
  %v5737 = vunpack.c.l.b16 %v5717
  %v5738 = vunpack.c.h.b16 %v5717
  %v5739 = vunpack.c.l.b16 %v5718
  %v5740 = vunpack.c.h.b16 %v5718
  %v5741 = vunpack.c.l.b16 %v5719
  %v5742 = vunpack.c.h.b16 %v5719
  %v5743 = vunpack.c.l.b16 %v5720
  %v5744 = vunpack.c.h.b16 %v5720
  %v5745 = vpack.c.b16 %v5731, %v5729
  %v5746 = vpack.c.b16 %v5732, %v5730
  %v5747 = vpack.c.b16 %v5735, %v5733
  %v5748 = vpack.c.b16 %v5736, %v5734
  %v5749 = vpack.c.b16 %v5739, %v5737
  %v5750 = vpack.c.b16 %v5740, %v5738
  %v5751 = vpack.c.b16 %v5743, %v5741
  %v5752 = vpack.c.b16 %v5744, %v5742
  %5761 = vmatpush.bf16.msra.mxu0 %v1410
  %5762 = vmatpush.bf16.msra.mxu0 %v1406
  %5763 = vmatpush.bf16.msra.mxu0 %v1402
  %5764 = vmatpush.bf16.msra.mxu0 %v1398
  %5765 = vmatpush.bf16.msra.mxu0 %v1394
  %5766 = vmatpush.bf16.msra.mxu0 %v1390
  %5767 = vmatpush.bf16.msra.mxu0 %v1386
  %5768 = vmatpush.bf16.msra.mxu0 %v1382
  %5769 = vmatmul.bf16.gmra.mxu0 %v5745
  %v5770 = vpop.f32.mrf.mxu0
  %v5771 = vadd.f32 0.0, %v5770
  %v5772 = vpop.f32.mrf.mxu0
  %v5773 = vadd.f32 0.0, %v5772
  %5774 = vmatmul.bf16.gmra.mxu0 %v5747
  %v5775 = vpop.f32.mrf.mxu0
  %v5776 = vadd.f32 0.0, %v5775
  %v5777 = vpop.f32.mrf.mxu0
  %v5778 = vadd.f32 0.0, %v5777
  %5779 = vmatmul.bf16.gmra.mxu0 %v5749
  %v5780 = vpop.f32.mrf.mxu0
  %v5781 = vadd.f32 0.0, %v5780
  %v5782 = vpop.f32.mrf.mxu0
  %v5783 = vadd.f32 0.0, %v5782
  %5784 = vmatmul.bf16.gmra.mxu0 %v5751
  %v5785 = vpop.f32.mrf.mxu0
  %v5786 = vadd.f32 0.0, %v5785
  %v5787 = vpop.f32.mrf.mxu0
  %v5788 = vadd.f32 0.0, %v5787
  %5789 = vdwg.mxu0
  %5790 = vmatpush.bf16.msra.mxu0 %v1442
  %5791 = vmatpush.bf16.msra.mxu0 %v1438
  %5792 = vmatpush.bf16.msra.mxu0 %v1434
  %5793 = vmatpush.bf16.msra.mxu0 %v1430
  %5794 = vmatpush.bf16.msra.mxu0 %v1426
  %5795 = vmatpush.bf16.msra.mxu0 %v1422
  %5796 = vmatpush.bf16.msra.mxu0 %v1418
  %5797 = vmatpush.bf16.msra.mxu0 %v1414
  %5798 = vmatmul.bf16.gmra.mxu0 %v5746
  %v5799 = vpop.f32.mrf.mxu0
  %v5800 = vadd.f32 %v5771, %v5799
  %v5801 = vpop.f32.mrf.mxu0
  %v5802 = vadd.f32 %v5773, %v5801
  %5803 = vmatmul.bf16.gmra.mxu0 %v5748
  %v5804 = vpop.f32.mrf.mxu0
  %v5805 = vadd.f32 %v5776, %v5804
  %v5806 = vpop.f32.mrf.mxu0
  %v5807 = vadd.f32 %v5778, %v5806
  %5808 = vmatmul.bf16.gmra.mxu0 %v5750
  %v5809 = vpop.f32.mrf.mxu0
  %v5810 = vadd.f32 %v5781, %v5809
  %v5811 = vpop.f32.mrf.mxu0
  %v5812 = vadd.f32 %v5783, %v5811
  %5813 = vmatmul.bf16.gmra.mxu0 %v5752
  %v5814 = vpop.f32.mrf.mxu0
  %v5815 = vadd.f32 %v5786, %v5814
  %v5816 = vpop.f32.mrf.mxu0
  %v5817 = vadd.f32 %v5788, %v5816
  %5818 = vdwg.mxu0
  %5819 = vmatpush.bf16.msra.mxu0 %v1411
  %5820 = vmatpush.bf16.msra.mxu0 %v1407
  %5821 = vmatpush.bf16.msra.mxu0 %v1403
  %5822 = vmatpush.bf16.msra.mxu0 %v1399
  %5823 = vmatpush.bf16.msra.mxu0 %v1395
  %5824 = vmatpush.bf16.msra.mxu0 %v1391
  %5825 = vmatpush.bf16.msra.mxu0 %v1387
  %5826 = vmatpush.bf16.msra.mxu0 %v1383
  %5827 = vmatmul.bf16.gmra.mxu0 %v5745
  %v5828 = vpop.f32.mrf.mxu0
  %v5829 = vadd.f32 0.0, %v5828
  %v5830 = vpop.f32.mrf.mxu0
  %v5831 = vadd.f32 0.0, %v5830
  %5832 = vmatmul.bf16.gmra.mxu0 %v5747
  %v5833 = vpop.f32.mrf.mxu0
  %v5834 = vadd.f32 0.0, %v5833
  %v5835 = vpop.f32.mrf.mxu0
  %v5836 = vadd.f32 0.0, %v5835
  %5837 = vmatmul.bf16.gmra.mxu0 %v5749
  %v5838 = vpop.f32.mrf.mxu0
  %v5839 = vadd.f32 0.0, %v5838
  %v5840 = vpop.f32.mrf.mxu0
  %v5841 = vadd.f32 0.0, %v5840
  %5842 = vmatmul.bf16.gmra.mxu0 %v5751
  %v5843 = vpop.f32.mrf.mxu0
  %v5844 = vadd.f32 0.0, %v5843
  %v5845 = vpop.f32.mrf.mxu0
  %v5846 = vadd.f32 0.0, %v5845
  %5847 = vdwg.mxu0
  %5848 = vmatpush.bf16.msra.mxu0 %v1443
  %5849 = vmatpush.bf16.msra.mxu0 %v1439
  %5850 = vmatpush.bf16.msra.mxu0 %v1435
  %5851 = vmatpush.bf16.msra.mxu0 %v1431
  %5852 = vmatpush.bf16.msra.mxu0 %v1427
  %5853 = vmatpush.bf16.msra.mxu0 %v1423
  %5854 = vmatpush.bf16.msra.mxu0 %v1419
  %5855 = vmatpush.bf16.msra.mxu0 %v1415
  %5856 = vmatmul.bf16.gmra.mxu0 %v5746
  %v5857 = vpop.f32.mrf.mxu0
  %v5858 = vadd.f32 %v5829, %v5857
  %v5859 = vpop.f32.mrf.mxu0
  %v5860 = vadd.f32 %v5831, %v5859
  %5861 = vmatmul.bf16.gmra.mxu0 %v5748
  %v5862 = vpop.f32.mrf.mxu0
  %v5863 = vadd.f32 %v5834, %v5862
  %v5864 = vpop.f32.mrf.mxu0
  %v5865 = vadd.f32 %v5836, %v5864
  %5866 = vmatmul.bf16.gmra.mxu0 %v5750
  %v5867 = vpop.f32.mrf.mxu0
  %v5868 = vadd.f32 %v5839, %v5867
  %v5869 = vpop.f32.mrf.mxu0
  %v5870 = vadd.f32 %v5841, %v5869
  %5871 = vmatmul.bf16.gmra.mxu0 %v5752
  %v5872 = vpop.f32.mrf.mxu0
  %v5873 = vadd.f32 %v5844, %v5872
  %v5874 = vpop.f32.mrf.mxu0
  %v5875 = vadd.f32 %v5846, %v5874
  %5876 = vdwg.mxu0
  %5877 = vmatpush.bf16.msra.mxu0 %v1412
  %5878 = vmatpush.bf16.msra.mxu0 %v1408
  %5879 = vmatpush.bf16.msra.mxu0 %v1404
  %5880 = vmatpush.bf16.msra.mxu0 %v1400
  %5881 = vmatpush.bf16.msra.mxu0 %v1396
  %5882 = vmatpush.bf16.msra.mxu0 %v1392
  %5883 = vmatpush.bf16.msra.mxu0 %v1388
  %5884 = vmatpush.bf16.msra.mxu0 %v1384
  %5885 = vmatmul.bf16.gmra.mxu0 %v5745
  %v5886 = vpop.f32.mrf.mxu0
  %v5887 = vadd.f32 0.0, %v5886
  %v5888 = vpop.f32.mrf.mxu0
  %v5889 = vadd.f32 0.0, %v5888
  %5890 = vmatmul.bf16.gmra.mxu0 %v5747
  %v5891 = vpop.f32.mrf.mxu0
  %v5892 = vadd.f32 0.0, %v5891
  %v5893 = vpop.f32.mrf.mxu0
  %v5894 = vadd.f32 0.0, %v5893
  %5895 = vmatmul.bf16.gmra.mxu0 %v5749
  %v5896 = vpop.f32.mrf.mxu0
  %v5897 = vadd.f32 0.0, %v5896
  %v5898 = vpop.f32.mrf.mxu0
  %v5899 = vadd.f32 0.0, %v5898
  %5900 = vmatmul.bf16.gmra.mxu0 %v5751
  %v5901 = vpop.f32.mrf.mxu0
  %v5902 = vadd.f32 0.0, %v5901
  %v5903 = vpop.f32.mrf.mxu0
  %v5904 = vadd.f32 0.0, %v5903
  %5905 = vdwg.mxu0
  %5906 = vmatpush.bf16.msra.mxu0 %v1444
  %5907 = vmatpush.bf16.msra.mxu0 %v1440
  %5908 = vmatpush.bf16.msra.mxu0 %v1436
  %5909 = vmatpush.bf16.msra.mxu0 %v1432
  %5910 = vmatpush.bf16.msra.mxu0 %v1428
  %5911 = vmatpush.bf16.msra.mxu0 %v1424
  %5912 = vmatpush.bf16.msra.mxu0 %v1420
  %5913 = vmatpush.bf16.msra.mxu0 %v1416
  %5914 = vmatmul.bf16.gmra.mxu0 %v5746
  %v5915 = vpop.f32.mrf.mxu0
  %v5916 = vadd.f32 %v5887, %v5915
  %v5917 = vpop.f32.mrf.mxu0
  %v5918 = vadd.f32 %v5889, %v5917
  %5919 = vmatmul.bf16.gmra.mxu0 %v5748
  %v5920 = vpop.f32.mrf.mxu0
  %v5921 = vadd.f32 %v5892, %v5920
  %v5922 = vpop.f32.mrf.mxu0
  %v5923 = vadd.f32 %v5894, %v5922
  %5924 = vmatmul.bf16.gmra.mxu0 %v5750
  %v5925 = vpop.f32.mrf.mxu0
  %v5926 = vadd.f32 %v5897, %v5925
  %v5927 = vpop.f32.mrf.mxu0
  %v5928 = vadd.f32 %v5899, %v5927
  %5929 = vmatmul.bf16.gmra.mxu0 %v5752
  %v5930 = vpop.f32.mrf.mxu0
  %v5931 = vadd.f32 %v5902, %v5930
  %v5932 = vpop.f32.mrf.mxu0
  %v5933 = vadd.f32 %v5904, %v5932
  %5934 = vdwg.mxu0
  %5935 = vmatpush.bf16.msra.mxu0 %v1413
  %5936 = vmatpush.bf16.msra.mxu0 %v1409
  %5937 = vmatpush.bf16.msra.mxu0 %v1405
  %5938 = vmatpush.bf16.msra.mxu0 %v1401
  %5939 = vmatpush.bf16.msra.mxu0 %v1397
  %5940 = vmatpush.bf16.msra.mxu0 %v1393
  %5941 = vmatpush.bf16.msra.mxu0 %v1389
  %5942 = vmatpush.bf16.msra.mxu0 %v1385
  %5943 = vmatmul.bf16.gmra.mxu0 %v5745
  %v5944 = vpop.f32.mrf.mxu0
  %v5945 = vadd.f32 0.0, %v5944
  %v5946 = vpop.f32.mrf.mxu0
  %v5947 = vadd.f32 0.0, %v5946
  %5948 = vmatmul.bf16.gmra.mxu0 %v5747
  %v5949 = vpop.f32.mrf.mxu0
  %v5950 = vadd.f32 0.0, %v5949
  %v5951 = vpop.f32.mrf.mxu0
  %v5952 = vadd.f32 0.0, %v5951
  %5953 = vmatmul.bf16.gmra.mxu0 %v5749
  %v5954 = vpop.f32.mrf.mxu0
  %v5955 = vadd.f32 0.0, %v5954
  %v5956 = vpop.f32.mrf.mxu0
  %v5957 = vadd.f32 0.0, %v5956
  %5958 = vmatmul.bf16.gmra.mxu0 %v5751
  %v5959 = vpop.f32.mrf.mxu0
  %v5960 = vadd.f32 0.0, %v5959
  %v5961 = vpop.f32.mrf.mxu0
  %v5962 = vadd.f32 0.0, %v5961
  %5963 = vdwg.mxu0
  %5964 = vmatpush.bf16.msra.mxu0 %v1445
  %5965 = vmatpush.bf16.msra.mxu0 %v1441
  %5966 = vmatpush.bf16.msra.mxu0 %v1437
  %5967 = vmatpush.bf16.msra.mxu0 %v1433
  %5968 = vmatpush.bf16.msra.mxu0 %v1429
  %5969 = vmatpush.bf16.msra.mxu0 %v1425
  %5970 = vmatpush.bf16.msra.mxu0 %v1421
  %5971 = vmatpush.bf16.msra.mxu0 %v1417
  %5972 = vmatmul.bf16.gmra.mxu0 %v5746
  %v5973 = vpop.f32.mrf.mxu0
  %v5974 = vadd.f32 %v5945, %v5973
  %v5975 = vpop.f32.mrf.mxu0
  %v5976 = vadd.f32 %v5947, %v5975
  %5977 = vmatmul.bf16.gmra.mxu0 %v5748
  %v5978 = vpop.f32.mrf.mxu0
  %v5979 = vadd.f32 %v5950, %v5978
  %v5980 = vpop.f32.mrf.mxu0
  %v5981 = vadd.f32 %v5952, %v5980
  %5982 = vmatmul.bf16.gmra.mxu0 %v5750
  %v5983 = vpop.f32.mrf.mxu0
  %v5984 = vadd.f32 %v5955, %v5983
  %v5985 = vpop.f32.mrf.mxu0
  %v5986 = vadd.f32 %v5957, %v5985
  %5987 = vmatmul.bf16.gmra.mxu0 %v5752
  %v5988 = vpop.f32.mrf.mxu0
  %v5989 = vadd.f32 %v5960, %v5988
  %v5990 = vpop.f32.mrf.mxu0
  %v5991 = vadd.f32 %v5962, %v5990
  %5992 = vdwg.mxu0
  %v5993 = vpack.c.bf16 %v5858, %v5800
  %v5994 = vpack.c.bf16 %v5860, %v5802
  %v5995 = vpack.c.bf16 %v5863, %v5805
  %v5996 = vpack.c.bf16 %v5865, %v5807
  %v5997 = vpack.c.bf16 %v5868, %v5810
  %v5998 = vpack.c.bf16 %v5870, %v5812
  %v5999 = vpack.c.bf16 %v5873, %v5815
  %v6000 = vpack.c.bf16 %v5875, %v5817
  %v6001 = vpack.c.bf16 %v5974, %v5916
  %v6002 = vpack.c.bf16 %v5976, %v5918
  %v6003 = vpack.c.bf16 %v5979, %v5921
  %v6004 = vpack.c.bf16 %v5981, %v5923
  %v6005 = vpack.c.bf16 %v5984, %v5926
  %v6006 = vpack.c.bf16 %v5986, %v5928
  %v6007 = vpack.c.bf16 %v5989, %v5931
  %v6008 = vpack.c.bf16 %v5991, %v5933
  %v6009 = vld [vmem:[%s19] sm:$0xff]
  %v6010 = vld [vmem:[%s19 + $0x8] sm:$0xff]
  %v6011 = vld [vmem:[%s19 + $0x10] sm:$0xff]
  %v6012 = vld [vmem:[%s19 + $0x18] sm:$0xff]
  %v6013 = vld [vmem:[%s19 + $0x20] sm:$0xff]
  %v6014 = vld [vmem:[%s19 + $0x28] sm:$0xff]
  %v6015 = vld [vmem:[%s19 + $0x30] sm:$0xff]
  %v6016 = vld [vmem:[%s19 + $0x38] sm:$0xff]
  %v6025 = vunpack.c.l.b16 %v5993
  %v6026 = vunpack.c.h.b16 %v5993
  %v6027 = vunpack.c.l.b16 %v5994
  %v6028 = vunpack.c.h.b16 %v5994
  %v6029 = vunpack.c.l.b16 %v5995
  %v6030 = vunpack.c.h.b16 %v5995
  %v6031 = vunpack.c.l.b16 %v5996
  %v6032 = vunpack.c.h.b16 %v5996
  %v6033 = vunpack.c.l.b16 %v5997
  %v6034 = vunpack.c.h.b16 %v5997
  %v6035 = vunpack.c.l.b16 %v5998
  %v6036 = vunpack.c.h.b16 %v5998
  %v6037 = vunpack.c.l.b16 %v5999
  %v6038 = vunpack.c.h.b16 %v5999
  %v6039 = vunpack.c.l.b16 %v6000
  %v6040 = vunpack.c.h.b16 %v6000
  %v6041 = vpack.c.b16 %v6027, %v6025
  %v6042 = vpack.c.b16 %v6028, %v6026
  %v6043 = vpack.c.b16 %v6031, %v6029
  %v6044 = vpack.c.b16 %v6032, %v6030
  %v6045 = vpack.c.b16 %v6035, %v6033
  %v6046 = vpack.c.b16 %v6036, %v6034
  %v6047 = vpack.c.b16 %v6039, %v6037
  %v6048 = vpack.c.b16 %v6040, %v6038
  %v6065 = vunpack.c.l.b16 %v6001
  %v6066 = vunpack.c.h.b16 %v6001
  %v6067 = vunpack.c.l.b16 %v6002
  %v6068 = vunpack.c.h.b16 %v6002
  %v6069 = vunpack.c.l.b16 %v6003
  %v6070 = vunpack.c.h.b16 %v6003
  %v6071 = vunpack.c.l.b16 %v6004
  %v6072 = vunpack.c.h.b16 %v6004
  %v6073 = vunpack.c.l.b16 %v6005
  %v6074 = vunpack.c.h.b16 %v6005
  %v6075 = vunpack.c.l.b16 %v6006
  %v6076 = vunpack.c.h.b16 %v6006
  %v6077 = vunpack.c.l.b16 %v6007
  %v6078 = vunpack.c.h.b16 %v6007
  %v6079 = vunpack.c.l.b16 %v6008
  %v6080 = vunpack.c.h.b16 %v6008
  %v6081 = vpack.c.b16 %v6067, %v6065
  %v6082 = vpack.c.b16 %v6068, %v6066
  %v6083 = vpack.c.b16 %v6071, %v6069
  %v6084 = vpack.c.b16 %v6072, %v6070
  %v6085 = vpack.c.b16 %v6075, %v6073
  %v6086 = vpack.c.b16 %v6076, %v6074
  %v6087 = vpack.c.b16 %v6079, %v6077
  %v6088 = vpack.c.b16 %v6080, %v6078
  %v6097 = vld [vmem:[%s20] sm:$0xff]
  %v6098 = vld [vmem:[%s20 + $0x8] sm:$0xff]
  %v6099 = vld [vmem:[%s20 + $0x10] sm:$0xff]
  %v6100 = vld [vmem:[%s20 + $0x18] sm:$0xff]
  %v6101 = vld [vmem:[%s20 + $0x20] sm:$0xff]
  %v6102 = vld [vmem:[%s20 + $0x28] sm:$0xff]
  %v6103 = vld [vmem:[%s20 + $0x30] sm:$0xff]
  %v6104 = vld [vmem:[%s20 + $0x38] sm:$0xff]
  %6106 = vset.pattern.permute.xlu0 0
  %6107 = vperm.xlu0 %6106, %v6097
  %v6108 = vpop.permute.xlu0 %6107
  %6111 = vset.pattern.permute.xlu0 0
  %6112 = vperm.xlu0 %6111, %v6098
  %v6113 = vpop.permute.xlu0 %6112
  %6116 = vset.pattern.permute.xlu0 0
  %6117 = vperm.xlu0 %6116, %v6099
  %v6118 = vpop.permute.xlu0 %6117
  %6121 = vset.pattern.permute.xlu0 0
  %6122 = vperm.xlu0 %6121, %v6100
  %v6123 = vpop.permute.xlu0 %6122
  %6126 = vset.pattern.permute.xlu0 0
  %6127 = vperm.xlu0 %6126, %v6101
  %v6128 = vpop.permute.xlu0 %6127
  %6131 = vset.pattern.permute.xlu0 0
  %6132 = vperm.xlu0 %6131, %v6102
  %v6133 = vpop.permute.xlu0 %6132
  %6136 = vset.pattern.permute.xlu0 0
  %6137 = vperm.xlu0 %6136, %v6103
  %v6138 = vpop.permute.xlu0 %6137
  %6141 = vset.pattern.permute.xlu0 0
  %6142 = vperm.xlu0 %6141, %v6104
  %v6143 = vpop.permute.xlu0 %6142
  %v6153 = vunpack.c.l.b16 %v6009
  %v6154 = vunpack.c.h.b16 %v6009
  %v6155 = vunpack.c.l.b16 %v6010
  %v6156 = vunpack.c.h.b16 %v6010
  %v6157 = vunpack.c.l.b16 %v6011
  %v6158 = vunpack.c.h.b16 %v6011
  %v6159 = vunpack.c.l.b16 %v6012
  %v6160 = vunpack.c.h.b16 %v6012
  %v6161 = vunpack.c.l.b16 %v6013
  %v6162 = vunpack.c.h.b16 %v6013
  %v6163 = vunpack.c.l.b16 %v6014
  %v6164 = vunpack.c.h.b16 %v6014
  %v6165 = vunpack.c.l.b16 %v6015
  %v6166 = vunpack.c.h.b16 %v6015
  %v6167 = vunpack.c.l.b16 %v6016
  %v6168 = vunpack.c.h.b16 %v6016
  %v6169 = vpack.c.b16 %v6155, %v6153
  %v6170 = vpack.c.b16 %v6156, %v6154
  %v6171 = vpack.c.b16 %v6159, %v6157
  %v6172 = vpack.c.b16 %v6160, %v6158
  %v6173 = vpack.c.b16 %v6163, %v6161
  %v6174 = vpack.c.b16 %v6164, %v6162
  %v6175 = vpack.c.b16 %v6167, %v6165
  %v6176 = vpack.c.b16 %v6168, %v6166
  %v6182 = vsel %vm1930, %v6170, 0
  %v6185 = vsel %vm1930, %v6172, 0
  %v6188 = vsel %vm1930, %v6174, 0
  %v6191 = vsel %vm1930, %v6176, 0
  %6193 = vmatpush.bf16.msra.mxu0 %v6047
  %6194 = vmatpush.bf16.msra.mxu0 %v6045
  %6195 = vmatpush.bf16.msra.mxu0 %v6043
  %6196 = vmatpush.bf16.msra.mxu0 %v6041
  %6197 = vmatpush.bf16.msra.mxu0 %v5751
  %6198 = vmatpush.bf16.msra.mxu0 %v5749
  %6199 = vmatpush.bf16.msra.mxu0 %v5747
  %6200 = vmatpush.bf16.msra.mxu0 %v5745
  %6201 = vmatmul.bf16.gmra.mxu0 %v6169
  %v6202 = vpop.f32.mrf.mxu0
  %v6203 = vadd.f32 %v6108, %v6202
  %v6204 = vpop.f32.mrf.mxu0
  %v6205 = vadd.f32 %v6113, %v6204
  %6206 = vmatmul.bf16.gmra.mxu0 %v6171
  %v6207 = vpop.f32.mrf.mxu0
  %v6208 = vadd.f32 %v6118, %v6207
  %v6209 = vpop.f32.mrf.mxu0
  %v6210 = vadd.f32 %v6123, %v6209
  %6211 = vmatmul.bf16.gmra.mxu0 %v6173
  %v6212 = vpop.f32.mrf.mxu0
  %v6213 = vadd.f32 %v6128, %v6212
  %v6214 = vpop.f32.mrf.mxu0
  %v6215 = vadd.f32 %v6133, %v6214
  %6216 = vmatmul.bf16.gmra.mxu0 %v6175
  %v6217 = vpop.f32.mrf.mxu0
  %v6218 = vadd.f32 %v6138, %v6217
  %v6219 = vpop.f32.mrf.mxu0
  %v6220 = vadd.f32 %v6143, %v6219
  %6221 = vdwg.mxu0
  %6222 = vmatpush.bf16.msra.mxu0 0
  %6223 = vmatpush.bf16.msra.mxu0 0
  %6224 = vmatpush.bf16.msra.mxu0 0
  %6225 = vmatpush.bf16.msra.mxu0 0
  %6226 = vmatpush.bf16.msra.mxu0 %v6087
  %6227 = vmatpush.bf16.msra.mxu0 %v6085
  %6228 = vmatpush.bf16.msra.mxu0 %v6083
  %6229 = vmatpush.bf16.msra.mxu0 %v6081
  %6230 = vmatmul.bf16.gmra.mxu0 %v6182
  %v6231 = vpop.f32.mrf.mxu0
  %v6232 = vadd.f32 %v6203, %v6231
  %v6233 = vpop.f32.mrf.mxu0
  %v6234 = vadd.f32 %v6205, %v6233
  %6235 = vmatmul.bf16.gmra.mxu0 %v6185
  %v6236 = vpop.f32.mrf.mxu0
  %v6237 = vadd.f32 %v6208, %v6236
  %v6238 = vpop.f32.mrf.mxu0
  %v6239 = vadd.f32 %v6210, %v6238
  %6240 = vmatmul.bf16.gmra.mxu0 %v6188
  %v6241 = vpop.f32.mrf.mxu0
  %v6242 = vadd.f32 %v6213, %v6241
  %v6243 = vpop.f32.mrf.mxu0
  %v6244 = vadd.f32 %v6215, %v6243
  %6245 = vmatmul.bf16.gmra.mxu0 %v6191
  %v6246 = vpop.f32.mrf.mxu0
  %v6247 = vadd.f32 %v6218, %v6246
  %v6248 = vpop.f32.mrf.mxu0
  %v6249 = vadd.f32 %v6220, %v6248
  %6250 = vdwg.mxu0
  %6251 = vmatpush.bf16.msra.mxu0 %v6048
  %6252 = vmatpush.bf16.msra.mxu0 %v6046
  %6253 = vmatpush.bf16.msra.mxu0 %v6044
  %6254 = vmatpush.bf16.msra.mxu0 %v6042
  %6255 = vmatpush.bf16.msra.mxu0 %v5752
  %6256 = vmatpush.bf16.msra.mxu0 %v5750
  %6257 = vmatpush.bf16.msra.mxu0 %v5748
  %6258 = vmatpush.bf16.msra.mxu0 %v5746
  %6259 = vmatmul.bf16.gmra.mxu0 %v6169
  %v6260 = vpop.f32.mrf.mxu0
  %v6261 = vadd.f32 %v6108, %v6260
  %v6262 = vpop.f32.mrf.mxu0
  %v6263 = vadd.f32 %v6113, %v6262
  %6264 = vmatmul.bf16.gmra.mxu0 %v6171
  %v6265 = vpop.f32.mrf.mxu0
  %v6266 = vadd.f32 %v6118, %v6265
  %v6267 = vpop.f32.mrf.mxu0
  %v6268 = vadd.f32 %v6123, %v6267
  %6269 = vmatmul.bf16.gmra.mxu0 %v6173
  %v6270 = vpop.f32.mrf.mxu0
  %v6271 = vadd.f32 %v6128, %v6270
  %v6272 = vpop.f32.mrf.mxu0
  %v6273 = vadd.f32 %v6133, %v6272
  %6274 = vmatmul.bf16.gmra.mxu0 %v6175
  %v6275 = vpop.f32.mrf.mxu0
  %v6276 = vadd.f32 %v6138, %v6275
  %v6277 = vpop.f32.mrf.mxu0
  %v6278 = vadd.f32 %v6143, %v6277
  %6279 = vdwg.mxu0
  %6280 = vmatpush.bf16.msra.mxu0 0
  %6281 = vmatpush.bf16.msra.mxu0 0
  %6282 = vmatpush.bf16.msra.mxu0 0
  %6283 = vmatpush.bf16.msra.mxu0 0
  %6284 = vmatpush.bf16.msra.mxu0 %v6088
  %6285 = vmatpush.bf16.msra.mxu0 %v6086
  %6286 = vmatpush.bf16.msra.mxu0 %v6084
  %6287 = vmatpush.bf16.msra.mxu0 %v6082
  %6288 = vmatmul.bf16.gmra.mxu0 %v6182
  %v6289 = vpop.f32.mrf.mxu0
  %v6290 = vadd.f32 %v6261, %v6289
  %v6291 = vpop.f32.mrf.mxu0
  %v6292 = vadd.f32 %v6263, %v6291
  %6293 = vmatmul.bf16.gmra.mxu0 %v6185
  %v6294 = vpop.f32.mrf.mxu0
  %v6295 = vadd.f32 %v6266, %v6294
  %v6296 = vpop.f32.mrf.mxu0
  %v6297 = vadd.f32 %v6268, %v6296
  %6298 = vmatmul.bf16.gmra.mxu0 %v6188
  %v6299 = vpop.f32.mrf.mxu0
  %v6300 = vadd.f32 %v6271, %v6299
  %v6301 = vpop.f32.mrf.mxu0
  %v6302 = vadd.f32 %v6273, %v6301
  %6303 = vmatmul.bf16.gmra.mxu0 %v6191
  %v6304 = vpop.f32.mrf.mxu0
  %v6305 = vadd.f32 %v6276, %v6304
  %v6306 = vpop.f32.mrf.mxu0
  %v6307 = vadd.f32 %v6278, %v6306
  %6308 = vdwg.mxu0
  %vm6309 = vcmp.gt.f32.partialorder %v6232, 0.0
  %vm6310 = vcmp.gt.f32.partialorder %v6290, 0.0
  %vm6311 = vcmp.gt.f32.partialorder %v6234, 0.0
  %vm6312 = vcmp.gt.f32.partialorder %v6292, 0.0
  %vm6313 = vcmp.gt.f32.partialorder %v6237, 0.0
  %vm6314 = vcmp.gt.f32.partialorder %v6295, 0.0
  %vm6315 = vcmp.gt.f32.partialorder %v6239, 0.0
  %vm6316 = vcmp.gt.f32.partialorder %v6297, 0.0
  %vm6317 = vcmp.gt.f32.partialorder %v6242, 0.0
  %vm6318 = vcmp.gt.f32.partialorder %v6300, 0.0
  %vm6319 = vcmp.gt.f32.partialorder %v6244, 0.0
  %vm6320 = vcmp.gt.f32.partialorder %v6302, 0.0
  %vm6321 = vcmp.gt.f32.partialorder %v6247, 0.0
  %vm6322 = vcmp.gt.f32.partialorder %v6305, 0.0
  %vm6323 = vcmp.gt.f32.partialorder %v6249, 0.0
  %vm6324 = vcmp.gt.f32.partialorder %v6307, 0.0
  %v6325 = vmul.f32 %v6232, 0.01
  %v6326 = vmul.f32 %v6290, 0.01
  %v6327 = vmul.f32 %v6234, 0.01
  %v6328 = vmul.f32 %v6292, 0.01
  %v6329 = vmul.f32 %v6237, 0.01
  %v6330 = vmul.f32 %v6295, 0.01
  %v6331 = vmul.f32 %v6239, 0.01
  %v6332 = vmul.f32 %v6297, 0.01
  %v6333 = vmul.f32 %v6242, 0.01
  %v6334 = vmul.f32 %v6300, 0.01
  %v6335 = vmul.f32 %v6244, 0.01
  %v6336 = vmul.f32 %v6302, 0.01
  %v6337 = vmul.f32 %v6247, 0.01
  %v6338 = vmul.f32 %v6305, 0.01
  %v6339 = vmul.f32 %v6249, 0.01
  %v6340 = vmul.f32 %v6307, 0.01
  %v6341 = vsel %vm6309, %v6232, %v6325
  %v6342 = vsel %vm6310, %v6290, %v6326
  %v6343 = vsel %vm6311, %v6234, %v6327
  %v6344 = vsel %vm6312, %v6292, %v6328
  %v6345 = vsel %vm6313, %v6237, %v6329
  %v6346 = vsel %vm6314, %v6295, %v6330
  %v6347 = vsel %vm6315, %v6239, %v6331
  %v6348 = vsel %vm6316, %v6297, %v6332
  %v6349 = vsel %vm6317, %v6242, %v6333
  %v6350 = vsel %vm6318, %v6300, %v6334
  %v6351 = vsel %vm6319, %v6244, %v6335
  %v6352 = vsel %vm6320, %v6302, %v6336
  %v6353 = vsel %vm6321, %v6247, %v6337
  %v6354 = vsel %vm6322, %v6305, %v6338
  %v6355 = vsel %vm6323, %v6249, %v6339
  %v6356 = vsel %vm6324, %v6307, %v6340
  %6357 = vrot.lane.b32.xlu0 %v6341, 1
  %v6358 = vpop.permute.xlu0 %6357
  %6359 = vrot.lane.b32.xlu0 %v6343, 1
  %v6360 = vpop.permute.xlu0 %6359
  %6361 = vrot.lane.b32.xlu0 %v6345, 1
  %v6362 = vpop.permute.xlu0 %6361
  %6363 = vrot.lane.b32.xlu0 %v6347, 1
  %v6364 = vpop.permute.xlu0 %6363
  %6365 = vrot.lane.b32.xlu0 %v6349, 1
  %v6366 = vpop.permute.xlu0 %6365
  %6367 = vrot.lane.b32.xlu0 %v6351, 1
  %v6368 = vpop.permute.xlu0 %6367
  %6369 = vrot.lane.b32.xlu0 %v6353, 1
  %v6370 = vpop.permute.xlu0 %6369
  %6371 = vrot.lane.b32.xlu0 %v6355, 1
  %v6372 = vpop.permute.xlu0 %6371
  %6373 = vrot.lane.b32.xlu0 %v6342, 1
  %v6374 = vpop.permute.xlu0 %6373
  %6375 = vrot.lane.b32.xlu0 %v6344, 1
  %v6376 = vpop.permute.xlu0 %6375
  %6377 = vrot.lane.b32.xlu0 %v6346, 1
  %v6378 = vpop.permute.xlu0 %6377
  %6379 = vrot.lane.b32.xlu0 %v6348, 1
  %v6380 = vpop.permute.xlu0 %6379
  %6381 = vrot.lane.b32.xlu0 %v6350, 1
  %v6382 = vpop.permute.xlu0 %6381
  %6383 = vrot.lane.b32.xlu0 %v6352, 1
  %v6384 = vpop.permute.xlu0 %6383
  %6385 = vrot.lane.b32.xlu0 %v6354, 1
  %v6386 = vpop.permute.xlu0 %6385
  %6387 = vrot.lane.b32.xlu0 %v6356, 1
  %v6388 = vpop.permute.xlu0 %6387
  %v6389 = vsel %vm110, %v6358, %v6374
  %v6390 = vsel %vm110, %v6360, %v6376
  %v6391 = vsel %vm110, %v6362, %v6378
  %v6392 = vsel %vm110, %v6364, %v6380
  %v6393 = vsel %vm110, %v6366, %v6382
  %v6394 = vsel %vm110, %v6368, %v6384
  %v6395 = vsel %vm110, %v6370, %v6386
  %v6396 = vsel %vm110, %v6372, %v6388
  %v6397 = vsel %vm110, %v6374, %v6358
  %v6398 = vsel %vm110, %v6376, %v6360
  %v6399 = vsel %vm110, %v6378, %v6362
  %v6400 = vsel %vm110, %v6380, %v6364
  %v6401 = vsel %vm110, %v6382, %v6366
  %v6402 = vsel %vm110, %v6384, %v6368
  %v6403 = vsel %vm110, %v6386, %v6370
  %v6404 = vsel %vm110, %v6388, %v6372
  %v6405 = vmul.f32 %v6397, %v115
  %v6406 = vmul.f32 %v6389, %v116
  %v6407 = vmul.f32 %v6398, %v115
  %v6408 = vmul.f32 %v6390, %v116
  %v6409 = vmul.f32 %v6399, %v115
  %v6410 = vmul.f32 %v6391, %v116
  %v6411 = vmul.f32 %v6400, %v115
  %v6412 = vmul.f32 %v6392, %v116
  %v6413 = vmul.f32 %v6401, %v115
  %v6414 = vmul.f32 %v6393, %v116
  %v6415 = vmul.f32 %v6402, %v115
  %v6416 = vmul.f32 %v6394, %v116
  %v6417 = vmul.f32 %v6403, %v115
  %v6418 = vmul.f32 %v6395, %v116
  %v6419 = vmul.f32 %v6404, %v115
  %v6420 = vmul.f32 %v6396, %v116
  %v6421 = vmul.f32 %v6341, %v124
  %v6422 = vmul.f32 %v6342, %v125
  %v6423 = vmul.f32 %v6343, %v124
  %v6424 = vmul.f32 %v6344, %v125
  %v6425 = vmul.f32 %v6345, %v124
  %v6426 = vmul.f32 %v6346, %v125
  %v6427 = vmul.f32 %v6347, %v124
  %v6428 = vmul.f32 %v6348, %v125
  %v6429 = vmul.f32 %v6349, %v124
  %v6430 = vmul.f32 %v6350, %v125
  %v6431 = vmul.f32 %v6351, %v124
  %v6432 = vmul.f32 %v6352, %v125
  %v6433 = vmul.f32 %v6353, %v124
  %v6434 = vmul.f32 %v6354, %v125
  %v6435 = vmul.f32 %v6355, %v124
  %v6436 = vmul.f32 %v6356, %v125
  %6437 = vrot.lane.b32.xlu0 %v6341, 127
  %v6438 = vpop.permute.xlu0 %6437
  %6439 = vrot.lane.b32.xlu0 %v6343, 127
  %v6440 = vpop.permute.xlu0 %6439
  %6441 = vrot.lane.b32.xlu0 %v6345, 127
  %v6442 = vpop.permute.xlu0 %6441
  %6443 = vrot.lane.b32.xlu0 %v6347, 127
  %v6444 = vpop.permute.xlu0 %6443
  %6445 = vrot.lane.b32.xlu0 %v6349, 127
  %v6446 = vpop.permute.xlu0 %6445
  %6447 = vrot.lane.b32.xlu0 %v6351, 127
  %v6448 = vpop.permute.xlu0 %6447
  %6449 = vrot.lane.b32.xlu0 %v6353, 127
  %v6450 = vpop.permute.xlu0 %6449
  %6451 = vrot.lane.b32.xlu0 %v6355, 127
  %v6452 = vpop.permute.xlu0 %6451
  %6453 = vrot.lane.b32.xlu0 %v6342, 127
  %v6454 = vpop.permute.xlu0 %6453
  %6455 = vrot.lane.b32.xlu0 %v6344, 127
  %v6456 = vpop.permute.xlu0 %6455
  %6457 = vrot.lane.b32.xlu0 %v6346, 127
  %v6458 = vpop.permute.xlu0 %6457
  %6459 = vrot.lane.b32.xlu0 %v6348, 127
  %v6460 = vpop.permute.xlu0 %6459
  %6461 = vrot.lane.b32.xlu0 %v6350, 127
  %v6462 = vpop.permute.xlu0 %6461
  %6463 = vrot.lane.b32.xlu0 %v6352, 127
  %v6464 = vpop.permute.xlu0 %6463
  %6465 = vrot.lane.b32.xlu0 %v6354, 127
  %v6466 = vpop.permute.xlu0 %6465
  %6467 = vrot.lane.b32.xlu0 %v6356, 127
  %v6468 = vpop.permute.xlu0 %6467
  %v6469 = vsel %vm140, %v6438, %v6454
  %v6470 = vsel %vm140, %v6440, %v6456
  %v6471 = vsel %vm140, %v6442, %v6458
  %v6472 = vsel %vm140, %v6444, %v6460
  %v6473 = vsel %vm140, %v6446, %v6462
  %v6474 = vsel %vm140, %v6448, %v6464
  %v6475 = vsel %vm140, %v6450, %v6466
  %v6476 = vsel %vm140, %v6452, %v6468
  %v6477 = vsel %vm140, %v6454, %v6438
  %v6478 = vsel %vm140, %v6456, %v6440
  %v6479 = vsel %vm140, %v6458, %v6442
  %v6480 = vsel %vm140, %v6460, %v6444
  %v6481 = vsel %vm140, %v6462, %v6446
  %v6482 = vsel %vm140, %v6464, %v6448
  %v6483 = vsel %vm140, %v6466, %v6450
  %v6484 = vsel %vm140, %v6468, %v6452
  %v6485 = vmul.f32 %v6469, %v146
  %v6486 = vmul.f32 %v6477, %v147
  %v6487 = vmul.f32 %v6470, %v146
  %v6488 = vmul.f32 %v6478, %v147
  %v6489 = vmul.f32 %v6471, %v146
  %v6490 = vmul.f32 %v6479, %v147
  %v6491 = vmul.f32 %v6472, %v146
  %v6492 = vmul.f32 %v6480, %v147
  %v6493 = vmul.f32 %v6473, %v146
  %v6494 = vmul.f32 %v6481, %v147
  %v6495 = vmul.f32 %v6474, %v146
  %v6496 = vmul.f32 %v6482, %v147
  %v6497 = vmul.f32 %v6475, %v146
  %v6498 = vmul.f32 %v6483, %v147
  %v6499 = vmul.f32 %v6476, %v146
  %v6500 = vmul.f32 %v6484, %v147
  %v6501 = vld [vmem:[%s21] sm:$0xff]
  %v6502 = vld [vmem:[%s21 + $0x8] sm:$0xff]
  %v6503 = vld [vmem:[%s21 + $0x10] sm:$0xff]
  %v6504 = vld [vmem:[%s21 + $0x18] sm:$0xff]
  %v6505 = vld [vmem:[%s21 + $0x20] sm:$0xff]
  %v6506 = vld [vmem:[%s21 + $0x28] sm:$0xff]
  %v6507 = vld [vmem:[%s21 + $0x30] sm:$0xff]
  %v6508 = vld [vmem:[%s21 + $0x38] sm:$0xff]
  %v6509 = vld [vmem:[%s21 + $0x40] sm:$0xff]
  %v6510 = vld [vmem:[%s21 + $0x48] sm:$0xff]
  %v6511 = vld [vmem:[%s21 + $0x50] sm:$0xff]
  %v6512 = vld [vmem:[%s21 + $0x58] sm:$0xff]
  %v6513 = vld [vmem:[%s21 + $0x60] sm:$0xff]
  %v6514 = vld [vmem:[%s21 + $0x68] sm:$0xff]
  %v6515 = vld [vmem:[%s21 + $0x70] sm:$0xff]
  %v6516 = vld [vmem:[%s21 + $0x78] sm:$0xff]
  %v6517 = vpack.c.bf16 %v6407, %v6405
  %v6518 = vpack.c.bf16 %v6408, %v6406
  %v6519 = vpack.c.bf16 %v6411, %v6409
  %v6520 = vpack.c.bf16 %v6412, %v6410
  %v6521 = vpack.c.bf16 %v6415, %v6413
  %v6522 = vpack.c.bf16 %v6416, %v6414
  %v6523 = vpack.c.bf16 %v6419, %v6417
  %v6524 = vpack.c.bf16 %v6420, %v6418
  %v6525 = vpack.c.bf16 %v6423, %v6421
  %v6526 = vpack.c.bf16 %v6424, %v6422
  %v6527 = vpack.c.bf16 %v6427, %v6425
  %v6528 = vpack.c.bf16 %v6428, %v6426
  %v6529 = vpack.c.bf16 %v6431, %v6429
  %v6530 = vpack.c.bf16 %v6432, %v6430
  %v6531 = vpack.c.bf16 %v6435, %v6433
  %v6532 = vpack.c.bf16 %v6436, %v6434
  %v6533 = vpack.c.bf16 %v6487, %v6485
  %v6534 = vpack.c.bf16 %v6488, %v6486
  %v6535 = vpack.c.bf16 %v6491, %v6489
  %v6536 = vpack.c.bf16 %v6492, %v6490
  %v6537 = vpack.c.bf16 %v6495, %v6493
  %v6538 = vpack.c.bf16 %v6496, %v6494
  %v6539 = vpack.c.bf16 %v6499, %v6497
  %v6540 = vpack.c.bf16 %v6500, %v6498
  %v6541 = vld [vmem:[%s22] sm:$0xff]
  %v6542 = vld [vmem:[%s22 + $0x8] sm:$0xff]
  %v6543 = vld [vmem:[%s22 + $0x10] sm:$0xff]
  %v6544 = vld [vmem:[%s22 + $0x18] sm:$0xff]
  %v6545 = vld [vmem:[%s22 + $0x20] sm:$0xff]
  %v6546 = vld [vmem:[%s22 + $0x28] sm:$0xff]
  %v6547 = vld [vmem:[%s22 + $0x30] sm:$0xff]
  %v6548 = vld [vmem:[%s22 + $0x38] sm:$0xff]
  %v6549 = vld [vmem:[%s22 + $0x40] sm:$0xff]
  %v6550 = vld [vmem:[%s22 + $0x48] sm:$0xff]
  %v6551 = vld [vmem:[%s22 + $0x50] sm:$0xff]
  %v6552 = vld [vmem:[%s22 + $0x58] sm:$0xff]
  %v6553 = vld [vmem:[%s22 + $0x60] sm:$0xff]
  %v6554 = vld [vmem:[%s22 + $0x68] sm:$0xff]
  %v6555 = vld [vmem:[%s22 + $0x70] sm:$0xff]
  %v6556 = vld [vmem:[%s22 + $0x78] sm:$0xff]
  %6558 = vset.pattern.permute.xlu0 0
  %6559 = vperm.xlu0 %6558, %v6541
  %v6560 = vpop.permute.xlu0 %6559
  %6563 = vset.pattern.permute.xlu0 0
  %6564 = vperm.xlu0 %6563, %v6542
  %v6565 = vpop.permute.xlu0 %6564
  %6568 = vset.pattern.permute.xlu0 0
  %6569 = vperm.xlu0 %6568, %v6543
  %v6570 = vpop.permute.xlu0 %6569
  %6573 = vset.pattern.permute.xlu0 0
  %6574 = vperm.xlu0 %6573, %v6544
  %v6575 = vpop.permute.xlu0 %6574
  %6578 = vset.pattern.permute.xlu0 0
  %6579 = vperm.xlu0 %6578, %v6545
  %v6580 = vpop.permute.xlu0 %6579
  %6583 = vset.pattern.permute.xlu0 0
  %6584 = vperm.xlu0 %6583, %v6546
  %v6585 = vpop.permute.xlu0 %6584
  %6588 = vset.pattern.permute.xlu0 0
  %6589 = vperm.xlu0 %6588, %v6547
  %v6590 = vpop.permute.xlu0 %6589
  %6593 = vset.pattern.permute.xlu0 0
  %6594 = vperm.xlu0 %6593, %v6548
  %v6595 = vpop.permute.xlu0 %6594
  %6598 = vset.pattern.permute.xlu0 0
  %6599 = vperm.xlu0 %6598, %v6549
  %v6600 = vpop.permute.xlu0 %6599
  %6603 = vset.pattern.permute.xlu0 0
  %6604 = vperm.xlu0 %6603, %v6550
  %v6605 = vpop.permute.xlu0 %6604
  %6608 = vset.pattern.permute.xlu0 0
  %6609 = vperm.xlu0 %6608, %v6551
  %v6610 = vpop.permute.xlu0 %6609
  %6613 = vset.pattern.permute.xlu0 0
  %6614 = vperm.xlu0 %6613, %v6552
  %v6615 = vpop.permute.xlu0 %6614
  %6618 = vset.pattern.permute.xlu0 0
  %6619 = vperm.xlu0 %6618, %v6553
  %v6620 = vpop.permute.xlu0 %6619
  %6623 = vset.pattern.permute.xlu0 0
  %6624 = vperm.xlu0 %6623, %v6554
  %v6625 = vpop.permute.xlu0 %6624
  %6628 = vset.pattern.permute.xlu0 0
  %6629 = vperm.xlu0 %6628, %v6555
  %v6630 = vpop.permute.xlu0 %6629
  %6633 = vset.pattern.permute.xlu0 0
  %6634 = vperm.xlu0 %6633, %v6556
  %v6635 = vpop.permute.xlu0 %6634
  %v6653 = vunpack.c.l.b16 %v6501
  %v6654 = vunpack.c.h.b16 %v6501
  %v6655 = vunpack.c.l.b16 %v6502
  %v6656 = vunpack.c.h.b16 %v6502
  %v6657 = vunpack.c.l.b16 %v6503
  %v6658 = vunpack.c.h.b16 %v6503
  %v6659 = vunpack.c.l.b16 %v6504
  %v6660 = vunpack.c.h.b16 %v6504
  %v6661 = vunpack.c.l.b16 %v6505
  %v6662 = vunpack.c.h.b16 %v6505
  %v6663 = vunpack.c.l.b16 %v6506
  %v6664 = vunpack.c.h.b16 %v6506
  %v6665 = vunpack.c.l.b16 %v6507
  %v6666 = vunpack.c.h.b16 %v6507
  %v6667 = vunpack.c.l.b16 %v6508
  %v6668 = vunpack.c.h.b16 %v6508
  %v6669 = vunpack.c.l.b16 %v6509
  %v6670 = vunpack.c.h.b16 %v6509
  %v6671 = vunpack.c.l.b16 %v6510
  %v6672 = vunpack.c.h.b16 %v6510
  %v6673 = vunpack.c.l.b16 %v6511
  %v6674 = vunpack.c.h.b16 %v6511
  %v6675 = vunpack.c.l.b16 %v6512
  %v6676 = vunpack.c.h.b16 %v6512
  %v6677 = vunpack.c.l.b16 %v6513
  %v6678 = vunpack.c.h.b16 %v6513
  %v6679 = vunpack.c.l.b16 %v6514
  %v6680 = vunpack.c.h.b16 %v6514
  %v6681 = vunpack.c.l.b16 %v6515
  %v6682 = vunpack.c.h.b16 %v6515
  %v6683 = vunpack.c.l.b16 %v6516
  %v6684 = vunpack.c.h.b16 %v6516
  %v6685 = vpack.c.b16 %v6655, %v6653
  %v6686 = vpack.c.b16 %v6656, %v6654
  %v6687 = vpack.c.b16 %v6659, %v6657
  %v6688 = vpack.c.b16 %v6660, %v6658
  %v6689 = vpack.c.b16 %v6663, %v6661
  %v6690 = vpack.c.b16 %v6664, %v6662
  %v6691 = vpack.c.b16 %v6667, %v6665
  %v6692 = vpack.c.b16 %v6668, %v6666
  %v6693 = vpack.c.b16 %v6671, %v6669
  %v6694 = vpack.c.b16 %v6672, %v6670
  %v6695 = vpack.c.b16 %v6675, %v6673
  %v6696 = vpack.c.b16 %v6676, %v6674
  %v6697 = vpack.c.b16 %v6679, %v6677
  %v6698 = vpack.c.b16 %v6680, %v6678
  %v6699 = vpack.c.b16 %v6683, %v6681
  %v6700 = vpack.c.b16 %v6684, %v6682
  %v6710 = vsel %vm1930, %v6686, 0
  %v6713 = vsel %vm1930, %v6688, 0
  %v6716 = vsel %vm1930, %v6690, 0
  %v6719 = vsel %vm1930, %v6692, 0
  %v6722 = vsel %vm1930, %v6694, 0
  %v6725 = vsel %vm1930, %v6696, 0
  %v6728 = vsel %vm1930, %v6698, 0
  %v6731 = vsel %vm1930, %v6700, 0
  %6733 = vmatpush.bf16.msra.mxu0 %v6531
  %6734 = vmatpush.bf16.msra.mxu0 %v6529
  %6735 = vmatpush.bf16.msra.mxu0 %v6527
  %6736 = vmatpush.bf16.msra.mxu0 %v6525
  %6737 = vmatpush.bf16.msra.mxu0 %v6523
  %6738 = vmatpush.bf16.msra.mxu0 %v6521
  %6739 = vmatpush.bf16.msra.mxu0 %v6519
  %6740 = vmatpush.bf16.msra.mxu0 %v6517
  %6741 = vmatmul.bf16.gmra.mxu0 %v6685
  %v6742 = vpop.f32.mrf.mxu0
  %v6743 = vadd.f32 %v6560, %v6742
  %v6744 = vpop.f32.mrf.mxu0
  %v6745 = vadd.f32 %v6565, %v6744
  %6746 = vmatmul.bf16.gmra.mxu0 %v6687
  %v6747 = vpop.f32.mrf.mxu0
  %v6748 = vadd.f32 %v6570, %v6747
  %v6749 = vpop.f32.mrf.mxu0
  %v6750 = vadd.f32 %v6575, %v6749
  %6751 = vmatmul.bf16.gmra.mxu0 %v6689
  %v6752 = vpop.f32.mrf.mxu0
  %v6753 = vadd.f32 %v6580, %v6752
  %v6754 = vpop.f32.mrf.mxu0
  %v6755 = vadd.f32 %v6585, %v6754
  %6756 = vmatmul.bf16.gmra.mxu0 %v6691
  %v6757 = vpop.f32.mrf.mxu0
  %v6758 = vadd.f32 %v6590, %v6757
  %v6759 = vpop.f32.mrf.mxu0
  %v6760 = vadd.f32 %v6595, %v6759
  %6761 = vmatmul.bf16.gmra.mxu0 %v6693
  %v6762 = vpop.f32.mrf.mxu0
  %v6763 = vadd.f32 %v6600, %v6762
  %v6764 = vpop.f32.mrf.mxu0
  %v6765 = vadd.f32 %v6605, %v6764
  %6766 = vmatmul.bf16.gmra.mxu0 %v6695
  %v6767 = vpop.f32.mrf.mxu0
  %v6768 = vadd.f32 %v6610, %v6767
  %v6769 = vpop.f32.mrf.mxu0
  %v6770 = vadd.f32 %v6615, %v6769
  %6771 = vmatmul.bf16.gmra.mxu0 %v6697
  %v6772 = vpop.f32.mrf.mxu0
  %v6773 = vadd.f32 %v6620, %v6772
  %v6774 = vpop.f32.mrf.mxu0
  %v6775 = vadd.f32 %v6625, %v6774
  %6776 = vmatmul.bf16.gmra.mxu0 %v6699
  %v6777 = vpop.f32.mrf.mxu0
  %v6778 = vadd.f32 %v6630, %v6777
  %v6779 = vpop.f32.mrf.mxu0
  %v6780 = vadd.f32 %v6635, %v6779
  %6781 = vdwg.mxu0
  %6782 = vmatpush.bf16.msra.mxu0 0
  %6783 = vmatpush.bf16.msra.mxu0 0
  %6784 = vmatpush.bf16.msra.mxu0 0
  %6785 = vmatpush.bf16.msra.mxu0 0
  %6786 = vmatpush.bf16.msra.mxu0 %v6539
  %6787 = vmatpush.bf16.msra.mxu0 %v6537
  %6788 = vmatpush.bf16.msra.mxu0 %v6535
  %6789 = vmatpush.bf16.msra.mxu0 %v6533
  %6790 = vmatmul.bf16.gmra.mxu0 %v6710
  %v6791 = vpop.f32.mrf.mxu0
  %v6792 = vadd.f32 %v6743, %v6791
  %v6793 = vpop.f32.mrf.mxu0
  %v6794 = vadd.f32 %v6745, %v6793
  %6795 = vmatmul.bf16.gmra.mxu0 %v6713
  %v6796 = vpop.f32.mrf.mxu0
  %v6797 = vadd.f32 %v6748, %v6796
  %v6798 = vpop.f32.mrf.mxu0
  %v6799 = vadd.f32 %v6750, %v6798
  %6800 = vmatmul.bf16.gmra.mxu0 %v6716
  %v6801 = vpop.f32.mrf.mxu0
  %v6802 = vadd.f32 %v6753, %v6801
  %v6803 = vpop.f32.mrf.mxu0
  %v6804 = vadd.f32 %v6755, %v6803
  %6805 = vmatmul.bf16.gmra.mxu0 %v6719
  %v6806 = vpop.f32.mrf.mxu0
  %v6807 = vadd.f32 %v6758, %v6806
  %v6808 = vpop.f32.mrf.mxu0
  %v6809 = vadd.f32 %v6760, %v6808
  %6810 = vmatmul.bf16.gmra.mxu0 %v6722
  %v6811 = vpop.f32.mrf.mxu0
  %v6812 = vadd.f32 %v6763, %v6811
  %v6813 = vpop.f32.mrf.mxu0
  %v6814 = vadd.f32 %v6765, %v6813
  %6815 = vmatmul.bf16.gmra.mxu0 %v6725
  %v6816 = vpop.f32.mrf.mxu0
  %v6817 = vadd.f32 %v6768, %v6816
  %v6818 = vpop.f32.mrf.mxu0
  %v6819 = vadd.f32 %v6770, %v6818
  %6820 = vmatmul.bf16.gmra.mxu0 %v6728
  %v6821 = vpop.f32.mrf.mxu0
  %v6822 = vadd.f32 %v6773, %v6821
  %v6823 = vpop.f32.mrf.mxu0
  %v6824 = vadd.f32 %v6775, %v6823
  %6825 = vmatmul.bf16.gmra.mxu0 %v6731
  %v6826 = vpop.f32.mrf.mxu0
  %v6827 = vadd.f32 %v6778, %v6826
  %v6828 = vpop.f32.mrf.mxu0
  %v6829 = vadd.f32 %v6780, %v6828
  %6830 = vdwg.mxu0
  %6831 = vmatpush.bf16.msra.mxu0 %v6532
  %6832 = vmatpush.bf16.msra.mxu0 %v6530
  %6833 = vmatpush.bf16.msra.mxu0 %v6528
  %6834 = vmatpush.bf16.msra.mxu0 %v6526
  %6835 = vmatpush.bf16.msra.mxu0 %v6524
  %6836 = vmatpush.bf16.msra.mxu0 %v6522
  %6837 = vmatpush.bf16.msra.mxu0 %v6520
  %6838 = vmatpush.bf16.msra.mxu0 %v6518
  %6839 = vmatmul.bf16.gmra.mxu0 %v6685
  %v6840 = vpop.f32.mrf.mxu0
  %v6841 = vadd.f32 %v6560, %v6840
  %v6842 = vpop.f32.mrf.mxu0
  %v6843 = vadd.f32 %v6565, %v6842
  %6844 = vmatmul.bf16.gmra.mxu0 %v6687
  %v6845 = vpop.f32.mrf.mxu0
  %v6846 = vadd.f32 %v6570, %v6845
  %v6847 = vpop.f32.mrf.mxu0
  %v6848 = vadd.f32 %v6575, %v6847
  %6849 = vmatmul.bf16.gmra.mxu0 %v6689
  %v6850 = vpop.f32.mrf.mxu0
  %v6851 = vadd.f32 %v6580, %v6850
  %v6852 = vpop.f32.mrf.mxu0
  %v6853 = vadd.f32 %v6585, %v6852
  %6854 = vmatmul.bf16.gmra.mxu0 %v6691
  %v6855 = vpop.f32.mrf.mxu0
  %v6856 = vadd.f32 %v6590, %v6855
  %v6857 = vpop.f32.mrf.mxu0
  %v6858 = vadd.f32 %v6595, %v6857
  %6859 = vmatmul.bf16.gmra.mxu0 %v6693
  %v6860 = vpop.f32.mrf.mxu0
  %v6861 = vadd.f32 %v6600, %v6860
  %v6862 = vpop.f32.mrf.mxu0
  %v6863 = vadd.f32 %v6605, %v6862
  %6864 = vmatmul.bf16.gmra.mxu0 %v6695
  %v6865 = vpop.f32.mrf.mxu0
  %v6866 = vadd.f32 %v6610, %v6865
  %v6867 = vpop.f32.mrf.mxu0
  %v6868 = vadd.f32 %v6615, %v6867
  %6869 = vmatmul.bf16.gmra.mxu0 %v6697
  %v6870 = vpop.f32.mrf.mxu0
  %v6871 = vadd.f32 %v6620, %v6870
  %v6872 = vpop.f32.mrf.mxu0
  %v6873 = vadd.f32 %v6625, %v6872
  %6874 = vmatmul.bf16.gmra.mxu0 %v6699
  %v6875 = vpop.f32.mrf.mxu0
  %v6876 = vadd.f32 %v6630, %v6875
  %v6877 = vpop.f32.mrf.mxu0
  %v6878 = vadd.f32 %v6635, %v6877
  %6879 = vdwg.mxu0
  %6880 = vmatpush.bf16.msra.mxu0 0
  %6881 = vmatpush.bf16.msra.mxu0 0
  %6882 = vmatpush.bf16.msra.mxu0 0
  %6883 = vmatpush.bf16.msra.mxu0 0
  %6884 = vmatpush.bf16.msra.mxu0 %v6540
  %6885 = vmatpush.bf16.msra.mxu0 %v6538
  %6886 = vmatpush.bf16.msra.mxu0 %v6536
  %6887 = vmatpush.bf16.msra.mxu0 %v6534
  %6888 = vmatmul.bf16.gmra.mxu0 %v6710
  %v6889 = vpop.f32.mrf.mxu0
  %v6890 = vadd.f32 %v6841, %v6889
  %v6891 = vpop.f32.mrf.mxu0
  %v6892 = vadd.f32 %v6843, %v6891
  %6893 = vmatmul.bf16.gmra.mxu0 %v6713
  %v6894 = vpop.f32.mrf.mxu0
  %v6895 = vadd.f32 %v6846, %v6894
  %v6896 = vpop.f32.mrf.mxu0
  %v6897 = vadd.f32 %v6848, %v6896
  %6898 = vmatmul.bf16.gmra.mxu0 %v6716
  %v6899 = vpop.f32.mrf.mxu0
  %v6900 = vadd.f32 %v6851, %v6899
  %v6901 = vpop.f32.mrf.mxu0
  %v6902 = vadd.f32 %v6853, %v6901
  %6903 = vmatmul.bf16.gmra.mxu0 %v6719
  %v6904 = vpop.f32.mrf.mxu0
  %v6905 = vadd.f32 %v6856, %v6904
  %v6906 = vpop.f32.mrf.mxu0
  %v6907 = vadd.f32 %v6858, %v6906
  %6908 = vmatmul.bf16.gmra.mxu0 %v6722
  %v6909 = vpop.f32.mrf.mxu0
  %v6910 = vadd.f32 %v6861, %v6909
  %v6911 = vpop.f32.mrf.mxu0
  %v6912 = vadd.f32 %v6863, %v6911
  %6913 = vmatmul.bf16.gmra.mxu0 %v6725
  %v6914 = vpop.f32.mrf.mxu0
  %v6915 = vadd.f32 %v6866, %v6914
  %v6916 = vpop.f32.mrf.mxu0
  %v6917 = vadd.f32 %v6868, %v6916
  %6918 = vmatmul.bf16.gmra.mxu0 %v6728
  %v6919 = vpop.f32.mrf.mxu0
  %v6920 = vadd.f32 %v6871, %v6919
  %v6921 = vpop.f32.mrf.mxu0
  %v6922 = vadd.f32 %v6873, %v6921
  %6923 = vmatmul.bf16.gmra.mxu0 %v6731
  %v6924 = vpop.f32.mrf.mxu0
  %v6925 = vadd.f32 %v6876, %v6924
  %v6926 = vpop.f32.mrf.mxu0
  %v6927 = vadd.f32 %v6878, %v6926
  %6928 = vdwg.mxu0
  %v6929 = vadd.f32 %v6792, %v5596
  %v6930 = vadd.f32 %v6890, %v5694
  %v6931 = vadd.f32 %v6794, %v5598
  %v6932 = vadd.f32 %v6892, %v5696
  %v6933 = vadd.f32 %v6797, %v5601
  %v6934 = vadd.f32 %v6895, %v5699
  %v6935 = vadd.f32 %v6799, %v5603
  %v6936 = vadd.f32 %v6897, %v5701
  %v6937 = vadd.f32 %v6802, %v5606
  %v6938 = vadd.f32 %v6900, %v5704
  %v6939 = vadd.f32 %v6804, %v5608
  %v6940 = vadd.f32 %v6902, %v5706
  %v6941 = vadd.f32 %v6807, %v5611
  %v6942 = vadd.f32 %v6905, %v5709
  %v6943 = vadd.f32 %v6809, %v5613
  %v6944 = vadd.f32 %v6907, %v5711
  %v6945 = vxor.u32 %v6812, 2147483648
  %v6946 = vxor.u32 %v6910, 2147483648
  %v6947 = vxor.u32 %v6814, 2147483648
  %v6948 = vxor.u32 %v6912, 2147483648
  %v6949 = vxor.u32 %v6817, 2147483648
  %v6950 = vxor.u32 %v6915, 2147483648
  %v6951 = vxor.u32 %v6819, 2147483648
  %v6952 = vxor.u32 %v6917, 2147483648
  %v6953 = vxor.u32 %v6822, 2147483648
  %v6954 = vxor.u32 %v6920, 2147483648
  %v6955 = vxor.u32 %v6824, 2147483648
  %v6956 = vxor.u32 %v6922, 2147483648
  %v6957 = vxor.u32 %v6827, 2147483648
  %v6958 = vxor.u32 %v6925, 2147483648
  %v6959 = vxor.u32 %v6829, 2147483648
  %v6960 = vxor.u32 %v6927, 2147483648
  %v6961 = vmul.f32 %v6945, 1.442695
  %v6962 = vpow.pop %v6961
  %v6963 = vmul.f32 %v6946, 1.442695
  %v6964 = vpow.pop %v6963
  %v6965 = vmul.f32 %v6947, 1.442695
  %v6966 = vpow.pop %v6965
  %v6967 = vmul.f32 %v6948, 1.442695
  %v6968 = vpow.pop %v6967
  %v6969 = vmul.f32 %v6949, 1.442695
  %v6970 = vpow.pop %v6969
  %v6971 = vmul.f32 %v6950, 1.442695
  %v6972 = vpow.pop %v6971
  %v6973 = vmul.f32 %v6951, 1.442695
  %v6974 = vpow.pop %v6973
  %v6975 = vmul.f32 %v6952, 1.442695
  %v6976 = vpow.pop %v6975
  %v6977 = vmul.f32 %v6953, 1.442695
  %v6978 = vpow.pop %v6977
  %v6979 = vmul.f32 %v6954, 1.442695
  %v6980 = vpow.pop %v6979
  %v6981 = vmul.f32 %v6955, 1.442695
  %v6982 = vpow.pop %v6981
  %v6983 = vmul.f32 %v6956, 1.442695
  %v6984 = vpow.pop %v6983
  %v6985 = vmul.f32 %v6957, 1.442695
  %v6986 = vpow.pop %v6985
  %v6987 = vmul.f32 %v6958, 1.442695
  %v6988 = vpow.pop %v6987
  %v6989 = vmul.f32 %v6959, 1.442695
  %v6990 = vpow.pop %v6989
  %v6991 = vmul.f32 %v6960, 1.442695
  %v6992 = vpow.pop %v6991
  %v6993 = vadd.f32 %v6962, 1.0
  %v6994 = vadd.f32 %v6964, 1.0
  %v6995 = vadd.f32 %v6966, 1.0
  %v6996 = vadd.f32 %v6968, 1.0
  %v6997 = vadd.f32 %v6970, 1.0
  %v6998 = vadd.f32 %v6972, 1.0
  %v6999 = vadd.f32 %v6974, 1.0
  %v7000 = vadd.f32 %v6976, 1.0
  %v7001 = vadd.f32 %v6978, 1.0
  %v7002 = vadd.f32 %v6980, 1.0
  %v7003 = vadd.f32 %v6982, 1.0
  %v7004 = vadd.f32 %v6984, 1.0
  %v7005 = vadd.f32 %v6986, 1.0
  %v7006 = vadd.f32 %v6988, 1.0
  %v7007 = vadd.f32 %v6990, 1.0
  %v7008 = vadd.f32 %v6992, 1.0
  %v7009 = vrcp.pop %v6993
  %v7010 = vmul.f32 %v6993, %v7009
  %v7011 = vsub.f32 1.0, %v7010
  %v7012 = vmul.f32 %v7009, %v7011
  %v7013 = vadd.f32 %v7009, %v7012
  %vm7014 = vweird.f32 %v6993
  %vm7015 = vweird.f32 %v7009
  %vm7016 = vmor %vm7014, %vm7015
  %v7017 = vsel %vm7016, %v7009, %v7013
  %v7018 = vand.u32 2147483647, %v6993
  %vm7019 = vcmp.eq.f32.partialorder %v7018, 8.507059e+37
  %v7020 = vand.u32 %v6993, 2147483648
  %v7021 = vor.u32 1.1754944e-38, %v7020
  %v7022 = vsel %vm7019, %v7021, %v7017
  %v7023 = vmul.f32 1.0, %v7022
  %v7024 = vrcp.pop %v6994
  %v7025 = vmul.f32 %v6994, %v7024
  %v7026 = vsub.f32 1.0, %v7025
  %v7027 = vmul.f32 %v7024, %v7026
  %v7028 = vadd.f32 %v7024, %v7027
  %vm7029 = vweird.f32 %v6994
  %vm7030 = vweird.f32 %v7024
  %vm7031 = vmor %vm7029, %vm7030
  %v7032 = vsel %vm7031, %v7024, %v7028
  %v7033 = vand.u32 2147483647, %v6994
  %vm7034 = vcmp.eq.f32.partialorder %v7033, 8.507059e+37
  %v7035 = vand.u32 %v6994, 2147483648
  %v7036 = vor.u32 1.1754944e-38, %v7035
  %v7037 = vsel %vm7034, %v7036, %v7032
  %v7038 = vmul.f32 1.0, %v7037
  %v7039 = vrcp.pop %v6995
  %v7040 = vmul.f32 %v6995, %v7039
  %v7041 = vsub.f32 1.0, %v7040
  %v7042 = vmul.f32 %v7039, %v7041
  %v7043 = vadd.f32 %v7039, %v7042
  %vm7044 = vweird.f32 %v6995
  %vm7045 = vweird.f32 %v7039
  %vm7046 = vmor %vm7044, %vm7045
  %v7047 = vsel %vm7046, %v7039, %v7043
  %v7048 = vand.u32 2147483647, %v6995
  %vm7049 = vcmp.eq.f32.partialorder %v7048, 8.507059e+37
  %v7050 = vand.u32 %v6995, 2147483648
  %v7051 = vor.u32 1.1754944e-38, %v7050
  %v7052 = vsel %vm7049, %v7051, %v7047
  %v7053 = vmul.f32 1.0, %v7052
  %v7054 = vrcp.pop %v6996
  %v7055 = vmul.f32 %v6996, %v7054
  %v7056 = vsub.f32 1.0, %v7055
  %v7057 = vmul.f32 %v7054, %v7056
  %v7058 = vadd.f32 %v7054, %v7057
  %vm7059 = vweird.f32 %v6996
  %vm7060 = vweird.f32 %v7054
  %vm7061 = vmor %vm7059, %vm7060
  %v7062 = vsel %vm7061, %v7054, %v7058
  %v7063 = vand.u32 2147483647, %v6996
  %vm7064 = vcmp.eq.f32.partialorder %v7063, 8.507059e+37
  %v7065 = vand.u32 %v6996, 2147483648
  %v7066 = vor.u32 1.1754944e-38, %v7065
  %v7067 = vsel %vm7064, %v7066, %v7062
  %v7068 = vmul.f32 1.0, %v7067
  %v7069 = vrcp.pop %v6997
  %v7070 = vmul.f32 %v6997, %v7069
  %v7071 = vsub.f32 1.0, %v7070
  %v7072 = vmul.f32 %v7069, %v7071
  %v7073 = vadd.f32 %v7069, %v7072
  %vm7074 = vweird.f32 %v6997
  %vm7075 = vweird.f32 %v7069
  %vm7076 = vmor %vm7074, %vm7075
  %v7077 = vsel %vm7076, %v7069, %v7073
  %v7078 = vand.u32 2147483647, %v6997
  %vm7079 = vcmp.eq.f32.partialorder %v7078, 8.507059e+37
  %v7080 = vand.u32 %v6997, 2147483648
  %v7081 = vor.u32 1.1754944e-38, %v7080
  %v7082 = vsel %vm7079, %v7081, %v7077
  %v7083 = vmul.f32 1.0, %v7082
  %v7084 = vrcp.pop %v6998
  %v7085 = vmul.f32 %v6998, %v7084
  %v7086 = vsub.f32 1.0, %v7085
  %v7087 = vmul.f32 %v7084, %v7086
  %v7088 = vadd.f32 %v7084, %v7087
  %vm7089 = vweird.f32 %v6998
  %vm7090 = vweird.f32 %v7084
  %vm7091 = vmor %vm7089, %vm7090
  %v7092 = vsel %vm7091, %v7084, %v7088
  %v7093 = vand.u32 2147483647, %v6998
  %vm7094 = vcmp.eq.f32.partialorder %v7093, 8.507059e+37
  %v7095 = vand.u32 %v6998, 2147483648
  %v7096 = vor.u32 1.1754944e-38, %v7095
  %v7097 = vsel %vm7094, %v7096, %v7092
  %v7098 = vmul.f32 1.0, %v7097
  %v7099 = vrcp.pop %v6999
  %v7100 = vmul.f32 %v6999, %v7099
  %v7101 = vsub.f32 1.0, %v7100
  %v7102 = vmul.f32 %v7099, %v7101
  %v7103 = vadd.f32 %v7099, %v7102
  %vm7104 = vweird.f32 %v6999
  %vm7105 = vweird.f32 %v7099
  %vm7106 = vmor %vm7104, %vm7105
  %v7107 = vsel %vm7106, %v7099, %v7103
  %v7108 = vand.u32 2147483647, %v6999
  %vm7109 = vcmp.eq.f32.partialorder %v7108, 8.507059e+37
  %v7110 = vand.u32 %v6999, 2147483648
  %v7111 = vor.u32 1.1754944e-38, %v7110
  %v7112 = vsel %vm7109, %v7111, %v7107
  %v7113 = vmul.f32 1.0, %v7112
  %v7114 = vrcp.pop %v7000
  %v7115 = vmul.f32 %v7000, %v7114
  %v7116 = vsub.f32 1.0, %v7115
  %v7117 = vmul.f32 %v7114, %v7116
  %v7118 = vadd.f32 %v7114, %v7117
  %vm7119 = vweird.f32 %v7000
  %vm7120 = vweird.f32 %v7114
  %vm7121 = vmor %vm7119, %vm7120
  %v7122 = vsel %vm7121, %v7114, %v7118
  %v7123 = vand.u32 2147483647, %v7000
  %vm7124 = vcmp.eq.f32.partialorder %v7123, 8.507059e+37
  %v7125 = vand.u32 %v7000, 2147483648
  %v7126 = vor.u32 1.1754944e-38, %v7125
  %v7127 = vsel %vm7124, %v7126, %v7122
  %v7128 = vmul.f32 1.0, %v7127
  %v7129 = vrcp.pop %v7001
  %v7130 = vmul.f32 %v7001, %v7129
  %v7131 = vsub.f32 1.0, %v7130
  %v7132 = vmul.f32 %v7129, %v7131
  %v7133 = vadd.f32 %v7129, %v7132
  %vm7134 = vweird.f32 %v7001
  %vm7135 = vweird.f32 %v7129
  %vm7136 = vmor %vm7134, %vm7135
  %v7137 = vsel %vm7136, %v7129, %v7133
  %v7138 = vand.u32 2147483647, %v7001
  %vm7139 = vcmp.eq.f32.partialorder %v7138, 8.507059e+37
  %v7140 = vand.u32 %v7001, 2147483648
  %v7141 = vor.u32 1.1754944e-38, %v7140
  %v7142 = vsel %vm7139, %v7141, %v7137
  %v7143 = vmul.f32 1.0, %v7142
  %v7144 = vrcp.pop %v7002
  %v7145 = vmul.f32 %v7002, %v7144
  %v7146 = vsub.f32 1.0, %v7145
  %v7147 = vmul.f32 %v7144, %v7146
  %v7148 = vadd.f32 %v7144, %v7147
  %vm7149 = vweird.f32 %v7002
  %vm7150 = vweird.f32 %v7144
  %vm7151 = vmor %vm7149, %vm7150
  %v7152 = vsel %vm7151, %v7144, %v7148
  %v7153 = vand.u32 2147483647, %v7002
  %vm7154 = vcmp.eq.f32.partialorder %v7153, 8.507059e+37
  %v7155 = vand.u32 %v7002, 2147483648
  %v7156 = vor.u32 1.1754944e-38, %v7155
  %v7157 = vsel %vm7154, %v7156, %v7152
  %v7158 = vmul.f32 1.0, %v7157
  %v7159 = vrcp.pop %v7003
  %v7160 = vmul.f32 %v7003, %v7159
  %v7161 = vsub.f32 1.0, %v7160
  %v7162 = vmul.f32 %v7159, %v7161
  %v7163 = vadd.f32 %v7159, %v7162
  %vm7164 = vweird.f32 %v7003
  %vm7165 = vweird.f32 %v7159
  %vm7166 = vmor %vm7164, %vm7165
  %v7167 = vsel %vm7166, %v7159, %v7163
  %v7168 = vand.u32 2147483647, %v7003
  %vm7169 = vcmp.eq.f32.partialorder %v7168, 8.507059e+37
  %v7170 = vand.u32 %v7003, 2147483648
  %v7171 = vor.u32 1.1754944e-38, %v7170
  %v7172 = vsel %vm7169, %v7171, %v7167
  %v7173 = vmul.f32 1.0, %v7172
  %v7174 = vrcp.pop %v7004
  %v7175 = vmul.f32 %v7004, %v7174
  %v7176 = vsub.f32 1.0, %v7175
  %v7177 = vmul.f32 %v7174, %v7176
  %v7178 = vadd.f32 %v7174, %v7177
  %vm7179 = vweird.f32 %v7004
  %vm7180 = vweird.f32 %v7174
  %vm7181 = vmor %vm7179, %vm7180
  %v7182 = vsel %vm7181, %v7174, %v7178
  %v7183 = vand.u32 2147483647, %v7004
  %vm7184 = vcmp.eq.f32.partialorder %v7183, 8.507059e+37
  %v7185 = vand.u32 %v7004, 2147483648
  %v7186 = vor.u32 1.1754944e-38, %v7185
  %v7187 = vsel %vm7184, %v7186, %v7182
  %v7188 = vmul.f32 1.0, %v7187
  %v7189 = vrcp.pop %v7005
  %v7190 = vmul.f32 %v7005, %v7189
  %v7191 = vsub.f32 1.0, %v7190
  %v7192 = vmul.f32 %v7189, %v7191
  %v7193 = vadd.f32 %v7189, %v7192
  %vm7194 = vweird.f32 %v7005
  %vm7195 = vweird.f32 %v7189
  %vm7196 = vmor %vm7194, %vm7195
  %v7197 = vsel %vm7196, %v7189, %v7193
  %v7198 = vand.u32 2147483647, %v7005
  %vm7199 = vcmp.eq.f32.partialorder %v7198, 8.507059e+37
  %v7200 = vand.u32 %v7005, 2147483648
  %v7201 = vor.u32 1.1754944e-38, %v7200
  %v7202 = vsel %vm7199, %v7201, %v7197
  %v7203 = vmul.f32 1.0, %v7202
  %v7204 = vrcp.pop %v7006
  %v7205 = vmul.f32 %v7006, %v7204
  %v7206 = vsub.f32 1.0, %v7205
  %v7207 = vmul.f32 %v7204, %v7206
  %v7208 = vadd.f32 %v7204, %v7207
  %vm7209 = vweird.f32 %v7006
  %vm7210 = vweird.f32 %v7204
  %vm7211 = vmor %vm7209, %vm7210
  %v7212 = vsel %vm7211, %v7204, %v7208
  %v7213 = vand.u32 2147483647, %v7006
  %vm7214 = vcmp.eq.f32.partialorder %v7213, 8.507059e+37
  %v7215 = vand.u32 %v7006, 2147483648
  %v7216 = vor.u32 1.1754944e-38, %v7215
  %v7217 = vsel %vm7214, %v7216, %v7212
  %v7218 = vmul.f32 1.0, %v7217
  %v7219 = vrcp.pop %v7007
  %v7220 = vmul.f32 %v7007, %v7219
  %v7221 = vsub.f32 1.0, %v7220
  %v7222 = vmul.f32 %v7219, %v7221
  %v7223 = vadd.f32 %v7219, %v7222
  %vm7224 = vweird.f32 %v7007
  %vm7225 = vweird.f32 %v7219
  %vm7226 = vmor %vm7224, %vm7225
  %v7227 = vsel %vm7226, %v7219, %v7223
  %v7228 = vand.u32 2147483647, %v7007
  %vm7229 = vcmp.eq.f32.partialorder %v7228, 8.507059e+37
  %v7230 = vand.u32 %v7007, 2147483648
  %v7231 = vor.u32 1.1754944e-38, %v7230
  %v7232 = vsel %vm7229, %v7231, %v7227
  %v7233 = vmul.f32 1.0, %v7232
  %v7234 = vrcp.pop %v7008
  %v7235 = vmul.f32 %v7008, %v7234
  %v7236 = vsub.f32 1.0, %v7235
  %v7237 = vmul.f32 %v7234, %v7236
  %v7238 = vadd.f32 %v7234, %v7237
  %vm7239 = vweird.f32 %v7008
  %vm7240 = vweird.f32 %v7234
  %vm7241 = vmor %vm7239, %vm7240
  %v7242 = vsel %vm7241, %v7234, %v7238
  %v7243 = vand.u32 2147483647, %v7008
  %vm7244 = vcmp.eq.f32.partialorder %v7243, 8.507059e+37
  %v7245 = vand.u32 %v7008, 2147483648
  %v7246 = vor.u32 1.1754944e-38, %v7245
  %v7247 = vsel %vm7244, %v7246, %v7242
  %v7248 = vmul.f32 1.0, %v7247
  %v7249 = vmul.f32 %v6929, %v7023
  %v7250 = vmul.f32 %v6930, %v7038
  %v7251 = vmul.f32 %v6931, %v7053
  %v7252 = vmul.f32 %v6932, %v7068
  %v7253 = vmul.f32 %v6933, %v7083
  %v7254 = vmul.f32 %v6934, %v7098
  %v7255 = vmul.f32 %v6935, %v7113
  %v7256 = vmul.f32 %v6936, %v7128
  %v7257 = vmul.f32 %v6937, %v7143
  %v7258 = vmul.f32 %v6938, %v7158
  %v7259 = vmul.f32 %v6939, %v7173
  %v7260 = vmul.f32 %v6940, %v7188
  %v7261 = vmul.f32 %v6941, %v7203
  %v7262 = vmul.f32 %v6942, %v7218
  %v7263 = vmul.f32 %v6943, %v7233
  %v7264 = vmul.f32 %v6944, %v7248
  %7265 = vst [vmem:[%s23] sm:$0xff] %v7249
  %7266 = vst [vmem:[%s23 + $0x8] sm:$0xff] %v7250
  %7267 = vst [vmem:[%s23 + $0x10] sm:$0xff] %v7251
  %7268 = vst [vmem:[%s23 + $0x18] sm:$0xff] %v7252
  %7269 = vst [vmem:[%s23 + $0x20] sm:$0xff] %v7253
  %7270 = vst [vmem:[%s23 + $0x28] sm:$0xff] %v7254
  %7271 = vst [vmem:[%s23 + $0x30] sm:$0xff] %v7255
  %7272 = vst [vmem:[%s23 + $0x38] sm:$0xff] %v7256
  %7273 = vst [vmem:[%s23 + $0x40] sm:$0xff] %v7257
  %7274 = vst [vmem:[%s23 + $0x48] sm:$0xff] %v7258
  %7275 = vst [vmem:[%s23 + $0x50] sm:$0xff] %v7259
  %7276 = vst [vmem:[%s23 + $0x58] sm:$0xff] %v7260
  %7277 = vst [vmem:[%s23 + $0x60] sm:$0xff] %v7261
  %7278 = vst [vmem:[%s23 + $0x68] sm:$0xff] %v7262
  %7279 = vst [vmem:[%s23 + $0x70] sm:$0xff] %v7263
  %7280 = vst [vmem:[%s23 + $0x78] sm:$0xff] %v7264
  // Predicated region
  $region94: #{gated_stgcn_forward.1} parent=0 // pred_check
    _
  $region95: #{gated_stgcn_forward.1} parent=0 // pred_check_branch
    %7282 = sbr.rel (0) target = $region97
  $region96: #{gated_stgcn_forward.1} parent=0 // pred_region
    _
  $region97: #{gated_stgcn_forward.1} parent=0 // pred_fallthru
    _
  // Predicated region
  $region98: #{gated_stgcn_forward.1} parent=0 // pred_check
    _
  $region99: #{gated_stgcn_forward.1} parent=0 // pred_check_branch
    %7284 = sbr.rel (0) target = $region101
  $region100: #{gated_stgcn_forward.1} parent=0 // pred_region
    _
  $region101: #{gated_stgcn_forward.1} parent=0 // pred_fallthru
    _

</llo_original>
